<compile_context>
chip_gen: v7x
topology: tpu7x:2x2x1
jax: 0.10.0
libtpu: 0.0.40
codegen_flags: <defaults>
</compile_context>

<pallas_src>
import functools

import numpy as np
import jax
import jax.numpy as jnp
from jax import lax
from jax.experimental import pallas as pl
from jax.experimental.pallas import tpu as pltpu


# ------------------------------ fused kernel ------------------------------- #

def _dense_block_kernel(*refs, H, W, in_ch, unit_ksize, unit_ch, unit_count,
                        has_coords):
    # refs = [x, (coords), 6*unit_count params, final_s, final_b, o_ref]
    x_ref = refs[0]
    base = 2 if has_coords else 1
    coords_ref = refs[1] if has_coords else None
    fs_ref = refs[base + 6 * unit_count]
    fb_ref = refs[base + 6 * unit_count + 1]
    o_ref = refs[base + 6 * unit_count + 2]

    HW = H * W
    k1, k2 = unit_ksize
    c0, c1 = unit_ch

    # Seed the running feature slab (= the output block, already VMEM-resident).
    o_ref[:, 0:in_ch] = x_ref[...]

    # Precompute boundary masks once per grid step (reused by every unit).
    masks = {}
    if has_coords:
        row_i = coords_ref[:, 0:1]          # (HW, 1) int32: spatial row
        col_j = coords_ref[:, 1:2]          # (HW, 1) int32: spatial col
        for k in sorted({kk for kk in (k1, k2) if kk > 1}):
            p = k // 2
            for dh in range(k):
                for dw in range(k):
                    if dh == p and dw == p:
                        continue
                    iv = (row_i >= (p - dh)) & (row_i < (H + p - dh))
                    jv = (col_j >= (p - dw)) & (col_j < (W + p - dw))
                    masks[(k, dh, dw)] = (iv & jv).astype(jnp.float32)

    def bn_relu(x, s_ref, b_ref):
        # x: (HW, C); s/b: (1, C) folded inference-mode BN params.
        return jnp.maximum(x * s_ref[...] + b_ref[...], 0.0)

    def conv_same(a, k, w_ref):
        """'same' conv. a: (HW, cin); w_ref: (k*k, cin, cout) block-diag taps.

        k == 1: a single matmul.  k > 1: per-tap shifted operand (pltpu.roll on
        the sublane axis) * boundary mask, accumulated across the k*k taps in
        f32 — no padded buffer, no im2col temporary.
        """
        if k == 1:
            return jnp.dot(a, w_ref[0], preferred_element_type=jnp.float32)
        p = k // 2
        acc = None
        for dh in range(k):
            for dw in range(k):
                s = (dh - p) * W + (dw - p)   # flat offset of this tap
                # operand[r] = a[r + s]  (valid positions only; rest masked to 0)
                t = a if s == 0 else pltpu.roll(a, (-s) % HW, axis=0)
                if dh != p or dw != p:
                    t = t * masks[(k, dh, dw)]
                r = jnp.dot(t, w_ref[dh * k + dw],
                            preferred_element_type=jnp.float32)
                acc = r if acc is None else acc + r
        return acc

    cin_u = in_ch
    for u in range(unit_count):
        s1, b1, w1, s2, b2, w2 = refs[base + 6 * u: base + 6 * (u + 1)]
        a1 = bn_relu(o_ref[:, 0:cin_u], s1, b1)
        h = conv_same(a1, k1, w1)                       # conv1 (groups = 1)
        a2 = bn_relu(h, s2, b2)
        # conv2 (grouped) lowered block-diagonally -> one full-width store.
        o_ref[:, cin_u:cin_u + c1] = conv_same(a2, k2, w2)
        cin_u += c1

    # Final BN -> ReLU over the whole slab, in place.
    o_ref[...] = jnp.maximum(o_ref[...] * fs_ref[...] + fb_ref[...], 0.0)


# ------------------------------ host wrapper ------------------------------- #

def _prep_weight(w_hwio, groups):
    """HWIO (k,k,cin_g,cout) -> per-tap block-diagonal (k*k, cin, cout)."""
    KH, KW, cin_g, cout = w_hwio.shape
    cin = cin_g * groups
    cout_g = cout // groups
    wr = w_hwio.reshape(KH * KW, cin_g, cout)
    if groups == 1:
        return wr
    w_taps = jnp.zeros((KH * KW, cin, cout), w_hwio.dtype)
    for g in range(groups):
        w_taps = w_taps.at[:, g * cin_g:(g + 1) * cin_g,
                           g * cout_g:(g + 1) * cout_g].set(
            wr[:, :, g * cout_g:(g + 1) * cout_g])
    return w_taps


def dense_block_forward(params, x_nhwc, unit_ksize, unit_ch, split=1):
    """x_nhwc: (N,H,W,in_ch) f32 -> (N,H,W,in_ch + unit_count*unit_ch[1])."""
    N, H, W, c_in = x_nhwc.shape
    units = params["units"]
    unit_count = len(units)
    k1, k2 = unit_ksize
    c0, c1 = unit_ch
    assert c0 % split == 0 and c1 % split == 0, "split must divide unit_ch"
    c_total = c_in + unit_count * c1
    HW = H * W
    any_big_k = (k1 > 1) or (k2 > 1)

    def const_spec(shape):
        nd = len(shape)
        return pl.BlockSpec(shape, lambda n, _nd=nd: (0,) * _nd)

    inputs = [x_nhwc.reshape(N, HW, c_in)]
    in_specs = [pl.BlockSpec((None, HW, c_in), lambda n: (n, 0, 0))]

    if any_big_k:
        # (HW, 2) int32 [row, col] indices -> boundary masks without any
        # in-kernel integer div/mod.
        ii = jnp.repeat(jnp.arange(H, dtype=jnp.int32), W)
        jj = jnp.tile(jnp.arange(W, dtype=jnp.int32), H)
        coords = jnp.stack([ii, jj], axis=-1)
        inputs.append(coords)
        in_specs.append(const_spec(coords.shape))

    for u in units:
        prepped = [
            u["s1"].reshape(1, -1), u["b1"].reshape(1, -1),
            _prep_weight(u["w1"], 1),
            u["s2"].reshape(1, -1), u["b2"].reshape(1, -1),
            _prep_weight(u["w2"], split),
        ]
        for arr in prepped:
            inputs.append(arr)
            in_specs.append(const_spec(arr.shape))

    for arr in (params["final_s"].reshape(1, -1),
                params["final_b"].reshape(1, -1)):
        inputs.append(arr)
        in_specs.append(const_spec(arr.shape))

    kernel = functools.partial(
        _dense_block_kernel, H=H, W=W, in_ch=c_in,
        unit_ksize=(k1, k2), unit_ch=(c0, c1), unit_count=unit_count,
        has_coords=any_big_k)

    # Explicit VMEM budget (default scoped limit is only 16/32 MiB).
    try:
        vmem_cap = int(pltpu.get_tpu_info().vmem_capacity_bytes)
    except Exception:
        vmem_cap = 64 * 1024 * 1024
    vmem_limit = int(min(int(vmem_cap * 0.8), 100 * 1024 * 1024))

    out = pl.pallas_call(
        kernel,
        out_shape=jax.ShapeDtypeStruct((N, HW, c_total), jnp.float32),
        grid=(N,),
        in_specs=in_specs,
        out_specs=pl.BlockSpec((None, HW, c_total), lambda n: (n, 0, 0)),
        compiler_params=pltpu.CompilerParams(
            dimension_semantics=("parallel",),
            vmem_limit_bytes=vmem_limit),
    )(*inputs)
    return out.reshape(N, H, W, c_total)


# ------------------------- parameters / reference -------------------------- #

def _fold_bn(gamma, beta, mean, var, eps=1e-5):
    scale = gamma / jnp.sqrt(var + eps)
    return scale, beta - mean * scale


def init_dense_block_params(key, in_ch, unit_ksize, unit_ch, unit_count, split=1):
    def next_key():
        nonlocal key
        key, sub = jax.random.split(key)
        return sub

    def bn_params(c):
        gamma = 1.0 + 0.1 * jax.random.normal(next_key(), (c,), jnp.float32)
        beta = 0.1 * jax.random.normal(next_key(), (c,), jnp.float32)
        mean = 0.1 * jax.random.normal(next_key(), (c,), jnp.float32)
        var = 1.0 + 0.1 * jnp.abs(jax.random.normal(next_key(), (c,), jnp.float32))
        return _fold_bn(gamma, beta, mean, var)

    units = []
    unit_in_ch = in_ch
    for _ in range(unit_count):
        s1, b1 = bn_params(unit_in_ch)
        w1 = 0.1 * jax.random.normal(
            next_key(), (unit_ksize[0], unit_ksize[0], unit_in_ch, unit_ch[0]),
            jnp.float32)
        s2, b2 = bn_params(unit_ch[0])
        w2 = 0.1 * jax.random.normal(
            next_key(),
            (unit_ksize[1], unit_ksize[1], unit_ch[0] // split, unit_ch[1]),
            jnp.float32)
        units.append(dict(s1=s1, b1=b1, w1=w1, s2=s2, b2=b2, w2=w2))
        unit_in_ch += unit_ch[1]

    fs, fb = bn_params(unit_in_ch)
    return dict(units=units, final_s=fs, final_b=fb)


def ref_forward(params, x_nhwc, unit_ksize, split=1):
    def bnrelu(x, s, b):
        return jnp.maximum(x * s + b, 0.0)

    def conv(x, w, k, groups):
        p = k // 2
        return lax.conv_general_dilated(
            x, w, window_strides=(1, 1), padding=[(p, p), (p, p)],
            dimension_numbers=("NHWC", "HWIO", "NHWC"),
            feature_group_count=groups)

    prev = x_nhwc
    for u in params["units"]:
        h = conv(bnrelu(prev, u["s1"], u["b1"]), u["w1"], unit_ksize[0], 1)
        new = conv(bnrelu(h, u["s2"], u["b2"]), u["w2"], unit_ksize[1], split)
        prev = jnp.concatenate([prev, new], axis=-1)
    return bnrelu(prev, params["final_s"], params["final_b"])


# ---------------------------------- main ----------------------------------- #

if __name__ == "__main__":
    key = jax.random.PRNGKey(0)

    # DenseBlock(in_ch=4, unit_ksize=[1, 3], unit_ch=[8, 4], unit_count=2)
    in_ch = 4
    unit_ksize = (1, 3)
    unit_ch = (8, 4)
    unit_count = 2
    N, H, W = 2, 16, 16

    key, k_x = jax.random.split(key)
    x_nchw = jax.random.normal(k_x, (N, in_ch, H, W), jnp.float32)  # PyTorch NCHW
    x_nhwc = jnp.transpose(x_nchw, (0, 2, 3, 1))                    # kernel layout

    expected_ch = in_ch + unit_count * unit_ch[-1]
    for split in (1, 2):   # split=2 exercises the grouped (block-diag) 2nd conv
        key, k_p = jax.random.split(key)
        params = init_dense_block_params(k_p, in_ch, unit_ksize, unit_ch,
                                         unit_count, split=split)

        out = jax.block_until_ready(
            dense_block_forward(params, x_nhwc, unit_ksize, unit_ch, split=split))
        ref = jax.block_until_ready(
            ref_forward(params, x_nhwc, unit_ksize, split=split))

        assert out.shape == (N, H, W, expected_ch), out.shape
        np.testing.assert_allclose(np.asarray(out), np.asarray(ref),
                                   rtol=1e-4, atol=1e-4)

    print("KERNEL_OK")
</pallas_src>

<mosaic_0001>
module attributes {stable_mosaic.version = 11 : i64} {
  func.func @_dense_block_kernel(%arg0: i32, %arg1: memref<1x256x4xf32, #tpu.memory_space<vmem>>, %arg2: memref<256x2xi32, #tpu.memory_space<vmem>>, %arg3: memref<1x4xf32, #tpu.memory_space<vmem>>, %arg4: memref<1x4xf32, #tpu.memory_space<vmem>>, %arg5: memref<1x4x8xf32, #tpu.memory_space<vmem>>, %arg6: memref<1x8xf32, #tpu.memory_space<vmem>>, %arg7: memref<1x8xf32, #tpu.memory_space<vmem>>, %arg8: memref<9x8x4xf32, #tpu.memory_space<vmem>>, %arg9: memref<1x8xf32, #tpu.memory_space<vmem>>, %arg10: memref<1x8xf32, #tpu.memory_space<vmem>>, %arg11: memref<1x8x8xf32, #tpu.memory_space<vmem>>, %arg12: memref<1x8xf32, #tpu.memory_space<vmem>>, %arg13: memref<1x8xf32, #tpu.memory_space<vmem>>, %arg14: memref<9x8x4xf32, #tpu.memory_space<vmem>>, %arg15: memref<1x12xf32, #tpu.memory_space<vmem>>, %arg16: memref<1x12xf32, #tpu.memory_space<vmem>>, %arg17: memref<1x256x12xf32, #tpu.memory_space<vmem>>) attributes {dimension_semantics = [#tpu.dimension_semantics<parallel>], iteration_bounds = array<i64: 2>, scalar_prefetch = 0 : i64, scratch_operands = 0 : i64, tpu.core_type = #tpu.core_type<tc>, window_params = [{transform_indices = @transform_0, window_bounds = array<i64: 1, 256, 4>}, {pipeline_mode = #tpu.pipeline_mode<synchronous>, transform_indices = @transform_1, window_bounds = array<i64: 256, 2>}, {pipeline_mode = #tpu.pipeline_mode<synchronous>, transform_indices = @transform_2, window_bounds = array<i64: 1, 4>}, {pipeline_mode = #tpu.pipeline_mode<synchronous>, transform_indices = @transform_3, window_bounds = array<i64: 1, 4>}, {pipeline_mode = #tpu.pipeline_mode<synchronous>, transform_indices = @transform_4, window_bounds = array<i64: 1, 4, 8>}, {pipeline_mode = #tpu.pipeline_mode<synchronous>, transform_indices = @transform_5, window_bounds = array<i64: 1, 8>}, {pipeline_mode = #tpu.pipeline_mode<synchronous>, transform_indices = @transform_6, window_bounds = array<i64: 1, 8>}, {pipeline_mode = #tpu.pipeline_mode<synchronous>, transform_indices = @transform_7, window_bounds = array<i64: 9, 8, 4>}, {pipeline_mode = #tpu.pipeline_mode<synchronous>, transform_indices = @transform_8, window_bounds = array<i64: 1, 8>}, {pipeline_mode = #tpu.pipeline_mode<synchronous>, transform_indices = @transform_9, window_bounds = array<i64: 1, 8>}, {pipeline_mode = #tpu.pipeline_mode<synchronous>, transform_indices = @transform_10, window_bounds = array<i64: 1, 8, 8>}, {pipeline_mode = #tpu.pipeline_mode<synchronous>, transform_indices = @transform_11, window_bounds = array<i64: 1, 8>}, {pipeline_mode = #tpu.pipeline_mode<synchronous>, transform_indices = @transform_12, window_bounds = array<i64: 1, 8>}, {pipeline_mode = #tpu.pipeline_mode<synchronous>, transform_indices = @transform_13, window_bounds = array<i64: 9, 8, 4>}, {pipeline_mode = #tpu.pipeline_mode<synchronous>, transform_indices = @transform_14, window_bounds = array<i64: 1, 12>}, {pipeline_mode = #tpu.pipeline_mode<synchronous>, transform_indices = @transform_15, window_bounds = array<i64: 1, 12>}, {transform_indices = @transform_16, window_bounds = array<i64: 1, 256, 12>}]} {
    %c0 = arith.constant 0 : index
    %c0_0 = arith.constant 0 : index
    %c0_1 = arith.constant 0 : index
    %0 = vector.load %arg1[%c0, %c0_0, %c0_1] : memref<1x256x4xf32, #tpu.memory_space<vmem>>, vector<1x256x4xf32>
    %1 = vector.shape_cast %0 : vector<1x256x4xf32> to vector<256x4xf32>
    %c0_2 = arith.constant 0 : index
    %c0_3 = arith.constant 0 : index
    %c0_4 = arith.constant 0 : index
    %2 = vector.load %arg17[%c0_2, %c0_3, %c0_4] : memref<1x256x12xf32, #tpu.memory_space<vmem>>, vector<1x256x4xf32>
    %3 = vector.shape_cast %2 : vector<1x256x4xf32> to vector<256x4xf32>
    %4 = vector.shape_cast %1 : vector<256x4xf32> to vector<1x256x4xf32>
    tpu.vector_store %arg17[%c0_2, %c0_3, %c0_4], %4 {strides = array<i32>} : memref<1x256x12xf32, #tpu.memory_space<vmem>>, vector<1x256x4xf32>,
    %c0_5 = arith.constant 0 : index
    %c0_6 = arith.constant 0 : index
    %5 = vector.load %arg2[%c0_5, %c0_6] : memref<256x2xi32, #tpu.memory_space<vmem>>, vector<256x1xi32>
    %c0_7 = arith.constant 0 : index
    %c1 = arith.constant 1 : index
    %6 = vector.load %arg2[%c0_7, %c1] : memref<256x2xi32, #tpu.memory_space<vmem>>, vector<256x1xi32>
    %c1_i32 = arith.constant 1 : i32
    %7 = vector.broadcast %c1_i32 : i32 to vector<256x1xi32>
    %8 = arith.cmpi sge, %5, %7 : vector<256x1xi32>
    %c17_i32 = arith.constant 17 : i32
    %9 = vector.broadcast %c17_i32 : i32 to vector<256x1xi32>
    %10 = arith.cmpi slt, %5, %9 : vector<256x1xi32>
    %11 = arith.andi %8, %10 : vector<256x1xi1>
    %c1_i32_8 = arith.constant 1 : i32
    %12 = vector.broadcast %c1_i32_8 : i32 to vector<256x1xi32>
    %13 = arith.cmpi sge, %6, %12 : vector<256x1xi32>
    %c17_i32_9 = arith.constant 17 : i32
    %14 = vector.broadcast %c17_i32_9 : i32 to vector<256x1xi32>
    %15 = arith.cmpi slt, %6, %14 : vector<256x1xi32>
    %16 = arith.andi %13, %15 : vector<256x1xi1>
    %17 = arith.andi %11, %16 : vector<256x1xi1>
    %18 = arith.extui %17 : vector<256x1xi1> to vector<256x1xi32>
    %19 = arith.sitofp %18 : vector<256x1xi32> to vector<256x1xf32>
    %c1_i32_10 = arith.constant 1 : i32
    %20 = vector.broadcast %c1_i32_10 : i32 to vector<256x1xi32>
    %21 = arith.cmpi sge, %5, %20 : vector<256x1xi32>
    %c17_i32_11 = arith.constant 17 : i32
    %22 = vector.broadcast %c17_i32_11 : i32 to vector<256x1xi32>
    %23 = arith.cmpi slt, %5, %22 : vector<256x1xi32>
    %24 = arith.andi %21, %23 : vector<256x1xi1>
    %c0_i32 = arith.constant 0 : i32
    %25 = vector.broadcast %c0_i32 : i32 to vector<256x1xi32>
    %26 = arith.cmpi sge, %6, %25 : vector<256x1xi32>
    %c16_i32 = arith.constant 16 : i32
    %27 = vector.broadcast %c16_i32 : i32 to vector<256x1xi32>
    %28 = arith.cmpi slt, %6, %27 : vector<256x1xi32>
    %29 = arith.andi %26, %28 : vector<256x1xi1>
    %30 = arith.andi %24, %29 : vector<256x1xi1>
    %31 = arith.extui %30 : vector<256x1xi1> to vector<256x1xi32>
    %32 = arith.sitofp %31 : vector<256x1xi32> to vector<256x1xf32>
    %c1_i32_12 = arith.constant 1 : i32
    %33 = vector.broadcast %c1_i32_12 : i32 to vector<256x1xi32>
    %34 = arith.cmpi sge, %5, %33 : vector<256x1xi32>
    %c17_i32_13 = arith.constant 17 : i32
    %35 = vector.broadcast %c17_i32_13 : i32 to vector<256x1xi32>
    %36 = arith.cmpi slt, %5, %35 : vector<256x1xi32>
    %37 = arith.andi %34, %36 : vector<256x1xi1>
    %c-1_i32 = arith.constant -1 : i32
    %38 = vector.broadcast %c-1_i32 : i32 to vector<256x1xi32>
    %39 = arith.cmpi sge, %6, %38 : vector<256x1xi32>
    %c15_i32 = arith.constant 15 : i32
    %40 = vector.broadcast %c15_i32 : i32 to vector<256x1xi32>
    %41 = arith.cmpi slt, %6, %40 : vector<256x1xi32>
    %42 = arith.andi %39, %41 : vector<256x1xi1>
    %43 = arith.andi %37, %42 : vector<256x1xi1>
    %44 = arith.extui %43 : vector<256x1xi1> to vector<256x1xi32>
    %45 = arith.sitofp %44 : vector<256x1xi32> to vector<256x1xf32>
    %c0_i32_14 = arith.constant 0 : i32
    %46 = vector.broadcast %c0_i32_14 : i32 to vector<256x1xi32>
    %47 = arith.cmpi sge, %5, %46 : vector<256x1xi32>
    %c16_i32_15 = arith.constant 16 : i32
    %48 = vector.broadcast %c16_i32_15 : i32 to vector<256x1xi32>
    %49 = arith.cmpi slt, %5, %48 : vector<256x1xi32>
    %50 = arith.andi %47, %49 : vector<256x1xi1>
    %c1_i32_16 = arith.constant 1 : i32
    %51 = vector.broadcast %c1_i32_16 : i32 to vector<256x1xi32>
    %52 = arith.cmpi sge, %6, %51 : vector<256x1xi32>
    %c17_i32_17 = arith.constant 17 : i32
    %53 = vector.broadcast %c17_i32_17 : i32 to vector<256x1xi32>
    %54 = arith.cmpi slt, %6, %53 : vector<256x1xi32>
    %55 = arith.andi %52, %54 : vector<256x1xi1>
    %56 = arith.andi %50, %55 : vector<256x1xi1>
    %57 = arith.extui %56 : vector<256x1xi1> to vector<256x1xi32>
    %58 = arith.sitofp %57 : vector<256x1xi32> to vector<256x1xf32>
    %c0_i32_18 = arith.constant 0 : i32
    %59 = vector.broadcast %c0_i32_18 : i32 to vector<256x1xi32>
    %60 = arith.cmpi sge, %5, %59 : vector<256x1xi32>
    %c16_i32_19 = arith.constant 16 : i32
    %61 = vector.broadcast %c16_i32_19 : i32 to vector<256x1xi32>
    %62 = arith.cmpi slt, %5, %61 : vector<256x1xi32>
    %63 = arith.andi %60, %62 : vector<256x1xi1>
    %c-1_i32_20 = arith.constant -1 : i32
    %64 = vector.broadcast %c-1_i32_20 : i32 to vector<256x1xi32>
    %65 = arith.cmpi sge, %6, %64 : vector<256x1xi32>
    %c15_i32_21 = arith.constant 15 : i32
    %66 = vector.broadcast %c15_i32_21 : i32 to vector<256x1xi32>
    %67 = arith.cmpi slt, %6, %66 : vector<256x1xi32>
    %68 = arith.andi %65, %67 : vector<256x1xi1>
    %69 = arith.andi %63, %68 : vector<256x1xi1>
    %70 = arith.extui %69 : vector<256x1xi1> to vector<256x1xi32>
    %71 = arith.sitofp %70 : vector<256x1xi32> to vector<256x1xf32>
    %c-1_i32_22 = arith.constant -1 : i32
    %72 = vector.broadcast %c-1_i32_22 : i32 to vector<256x1xi32>
    %73 = arith.cmpi sge, %5, %72 : vector<256x1xi32>
    %c15_i32_23 = arith.constant 15 : i32
    %74 = vector.broadcast %c15_i32_23 : i32 to vector<256x1xi32>
    %75 = arith.cmpi slt, %5, %74 : vector<256x1xi32>
    %76 = arith.andi %73, %75 : vector<256x1xi1>
    %c1_i32_24 = arith.constant 1 : i32
    %77 = vector.broadcast %c1_i32_24 : i32 to vector<256x1xi32>
    %78 = arith.cmpi sge, %6, %77 : vector<256x1xi32>
    %c17_i32_25 = arith.constant 17 : i32
    %79 = vector.broadcast %c17_i32_25 : i32 to vector<256x1xi32>
    %80 = arith.cmpi slt, %6, %79 : vector<256x1xi32>
    %81 = arith.andi %78, %80 : vector<256x1xi1>
    %82 = arith.andi %76, %81 : vector<256x1xi1>
    %83 = arith.extui %82 : vector<256x1xi1> to vector<256x1xi32>
    %84 = arith.sitofp %83 : vector<256x1xi32> to vector<256x1xf32>
    %c-1_i32_26 = arith.constant -1 : i32
    %85 = vector.broadcast %c-1_i32_26 : i32 to vector<256x1xi32>
    %86 = arith.cmpi sge, %5, %85 : vector<256x1xi32>
    %c15_i32_27 = arith.constant 15 : i32
    %87 = vector.broadcast %c15_i32_27 : i32 to vector<256x1xi32>
    %88 = arith.cmpi slt, %5, %87 : vector<256x1xi32>
    %89 = arith.andi %86, %88 : vector<256x1xi1>
    %c0_i32_28 = arith.constant 0 : i32
    %90 = vector.broadcast %c0_i32_28 : i32 to vector<256x1xi32>
    %91 = arith.cmpi sge, %6, %90 : vector<256x1xi32>
    %c16_i32_29 = arith.constant 16 : i32
    %92 = vector.broadcast %c16_i32_29 : i32 to vector<256x1xi32>
    %93 = arith.cmpi slt, %6, %92 : vector<256x1xi32>
    %94 = arith.andi %91, %93 : vector<256x1xi1>
    %95 = arith.andi %89, %94 : vector<256x1xi1>
    %96 = arith.extui %95 : vector<256x1xi1> to vector<256x1xi32>
    %97 = arith.sitofp %96 : vector<256x1xi32> to vector<256x1xf32>
    %c-1_i32_30 = arith.constant -1 : i32
    %98 = vector.broadcast %c-1_i32_30 : i32 to vector<256x1xi32>
    %99 = arith.cmpi sge, %5, %98 : vector<256x1xi32>
    %c15_i32_31 = arith.constant 15 : i32
    %100 = vector.broadcast %c15_i32_31 : i32 to vector<256x1xi32>
    %101 = arith.cmpi slt, %5, %100 : vector<256x1xi32>
    %102 = arith.andi %99, %101 : vector<256x1xi1>
    %c-1_i32_32 = arith.constant -1 : i32
    %103 = vector.broadcast %c-1_i32_32 : i32 to vector<256x1xi32>
    %104 = arith.cmpi sge, %6, %103 : vector<256x1xi32>
    %c15_i32_33 = arith.constant 15 : i32
    %105 = vector.broadcast %c15_i32_33 : i32 to vector<256x1xi32>
    %106 = arith.cmpi slt, %6, %105 : vector<256x1xi32>
    %107 = arith.andi %104, %106 : vector<256x1xi1>
    %108 = arith.andi %102, %107 : vector<256x1xi1>
    %109 = arith.extui %108 : vector<256x1xi1> to vector<256x1xi32>
    %110 = arith.sitofp %109 : vector<256x1xi32> to vector<256x1xf32>
    %c0_34 = arith.constant 0 : index
    %c0_35 = arith.constant 0 : index
    %c0_36 = arith.constant 0 : index
    %111 = vector.load %arg17[%c0_34, %c0_35, %c0_36] : memref<1x256x12xf32, #tpu.memory_space<vmem>>, vector<1x256x4xf32>
    %112 = vector.shape_cast %111 : vector<1x256x4xf32> to vector<256x4xf32>
    %c0_37 = arith.constant 0 : index
    %c0_38 = arith.constant 0 : index
    %113 = vector.load %arg3[%c0_37, %c0_38] : memref<1x4xf32, #tpu.memory_space<vmem>>, vector<1x4xf32>
    %114 = vector.broadcast %113 : vector<1x4xf32> to vector<256x4xf32>
    %115 = arith.mulf %112, %114 : vector<256x4xf32>
    %c0_39 = arith.constant 0 : index
    %c0_40 = arith.constant 0 : index
    %116 = vector.load %arg4[%c0_39, %c0_40] : memref<1x4xf32, #tpu.memory_space<vmem>>, vector<1x4xf32>
    %117 = vector.broadcast %116 : vector<1x4xf32> to vector<256x4xf32>
    %118 = arith.addf %115, %117 : vector<256x4xf32>
    %cst = arith.constant 0.000000e+00 : f32
    %119 = vector.broadcast %cst : f32 to vector<256x4xf32>
    %120 = arith.maximumf %118, %119 : vector<256x4xf32>
    %c0_41 = arith.constant 0 : index
    %c0_42 = arith.constant 0 : index
    %c0_43 = arith.constant 0 : index
    %121 = vector.load %arg5[%c0_41, %c0_42, %c0_43] : memref<1x4x8xf32, #tpu.memory_space<vmem>>, vector<1x4x8xf32>
    %122 = vector.shape_cast %121 : vector<1x4x8xf32> to vector<4x8xf32>
    %cst_44 = arith.constant dense<0.000000e+00> : vector<256x8xf32>
    %123 = tpu.matmul %120, %122, %cst_44 {dimension_numbers = #tpu.dot_dimension_numbers<[1], [0], [0], [1], [0, 0, 1, 1], [], []>} : vector<256x4xf32>, vector<4x8xf32>, vector<256x8xf32> -> vector<256x8xf32>
    %c0_45 = arith.constant 0 : index
    %c0_46 = arith.constant 0 : index
    %124 = vector.load %arg6[%c0_45, %c0_46] : memref<1x8xf32, #tpu.memory_space<vmem>>, vector<1x8xf32>
    %125 = vector.broadcast %124 : vector<1x8xf32> to vector<256x8xf32>
    %126 = arith.mulf %123, %125 : vector<256x8xf32>
    %c0_47 = arith.constant 0 : index
    %c0_48 = arith.constant 0 : index
    %127 = vector.load %arg7[%c0_47, %c0_48] : memref<1x8xf32, #tpu.memory_space<vmem>>, vector<1x8xf32>
    %128 = vector.broadcast %127 : vector<1x8xf32> to vector<256x8xf32>
    %129 = arith.addf %126, %128 : vector<256x8xf32>
    %cst_49 = arith.constant 0.000000e+00 : f32
    %130 = vector.broadcast %cst_49 : f32 to vector<256x8xf32>
    %131 = arith.maximumf %129, %130 : vector<256x8xf32>
    %c17_i32_50 = arith.constant 17 : i32
    %132 = tpu.dynamic_rotate %131 by %c17_i32_50 dim 0 : vector<256x8xf32>, i32 -> vector<256x8xf32>
    %133 = vector.broadcast %19 : vector<256x1xf32> to vector<256x8xf32>
    %134 = arith.mulf %132, %133 : vector<256x8xf32>
    %c0_51 = arith.constant 0 : index
    %c0_52 = arith.constant 0 : index
    %c0_53 = arith.constant 0 : index
    %135 = vector.load %arg8[%c0_51, %c0_52, %c0_53] : memref<9x8x4xf32, #tpu.memory_space<vmem>>, vector<1x8x4xf32>
    %136 = vector.shape_cast %135 : vector<1x8x4xf32> to vector<8x4xf32>
    %cst_54 = arith.constant dense<0.000000e+00> : vector<256x4xf32>
    %137 = tpu.matmul %134, %136, %cst_54 {dimension_numbers = #tpu.dot_dimension_numbers<[1], [0], [0], [1], [0, 0, 1, 1], [], []>} : vector<256x8xf32>, vector<8x4xf32>, vector<256x4xf32> -> vector<256x4xf32>
    %c16_i32_55 = arith.constant 16 : i32
    %138 = tpu.dynamic_rotate %131 by %c16_i32_55 dim 0 : vector<256x8xf32>, i32 -> vector<256x8xf32>
    %139 = vector.broadcast %32 : vector<256x1xf32> to vector<256x8xf32>
    %140 = arith.mulf %138, %139 : vector<256x8xf32>
    %c1_56 = arith.constant 1 : index
    %c0_57 = arith.constant 0 : index
    %c0_58 = arith.constant 0 : index
    %141 = vector.load %arg8[%c1_56, %c0_57, %c0_58] : memref<9x8x4xf32, #tpu.memory_space<vmem>>, vector<1x8x4xf32>
    %142 = vector.shape_cast %141 : vector<1x8x4xf32> to vector<8x4xf32>
    %cst_59 = arith.constant dense<0.000000e+00> : vector<256x4xf32>
    %143 = tpu.matmul %140, %142, %cst_59 {dimension_numbers = #tpu.dot_dimension_numbers<[1], [0], [0], [1], [0, 0, 1, 1], [], []>} : vector<256x8xf32>, vector<8x4xf32>, vector<256x4xf32> -> vector<256x4xf32>
    %144 = arith.addf %137, %143 : vector<256x4xf32>
    %c15_i32_60 = arith.constant 15 : i32
    %145 = tpu.dynamic_rotate %131 by %c15_i32_60 dim 0 : vector<256x8xf32>, i32 -> vector<256x8xf32>
    %146 = vector.broadcast %45 : vector<256x1xf32> to vector<256x8xf32>
    %147 = arith.mulf %145, %146 : vector<256x8xf32>
    %c2 = arith.constant 2 : index
    %c0_61 = arith.constant 0 : index
    %c0_62 = arith.constant 0 : index
    %148 = vector.load %arg8[%c2, %c0_61, %c0_62] : memref<9x8x4xf32, #tpu.memory_space<vmem>>, vector<1x8x4xf32>
    %149 = vector.shape_cast %148 : vector<1x8x4xf32> to vector<8x4xf32>
    %cst_63 = arith.constant dense<0.000000e+00> : vector<256x4xf32>
    %150 = tpu.matmul %147, %149, %cst_63 {dimension_numbers = #tpu.dot_dimension_numbers<[1], [0], [0], [1], [0, 0, 1, 1], [], []>} : vector<256x8xf32>, vector<8x4xf32>, vector<256x4xf32> -> vector<256x4xf32>
    %151 = arith.addf %144, %150 : vector<256x4xf32>
    %c1_i32_64 = arith.constant 1 : i32
    %152 = tpu.dynamic_rotate %131 by %c1_i32_64 dim 0 : vector<256x8xf32>, i32 -> vector<256x8xf32>
    %153 = vector.broadcast %58 : vector<256x1xf32> to vector<256x8xf32>
    %154 = arith.mulf %152, %153 : vector<256x8xf32>
    %c3 = arith.constant 3 : index
    %c0_65 = arith.constant 0 : index
    %c0_66 = arith.constant 0 : index
    %155 = vector.load %arg8[%c3, %c0_65, %c0_66] : memref<9x8x4xf32, #tpu.memory_space<vmem>>, vector<1x8x4xf32>
    %156 = vector.shape_cast %155 : vector<1x8x4xf32> to vector<8x4xf32>
    %cst_67 = arith.constant dense<0.000000e+00> : vector<256x4xf32>
    %157 = tpu.matmul %154, %156, %cst_67 {dimension_numbers = #tpu.dot_dimension_numbers<[1], [0], [0], [1], [0, 0, 1, 1], [], []>} : vector<256x8xf32>, vector<8x4xf32>, vector<256x4xf32> -> vector<256x4xf32>
    %158 = arith.addf %151, %157 : vector<256x4xf32>
    %c4 = arith.constant 4 : index
    %c0_68 = arith.constant 0 : index
    %c0_69 = arith.constant 0 : index
    %159 = vector.load %arg8[%c4, %c0_68, %c0_69] : memref<9x8x4xf32, #tpu.memory_space<vmem>>, vector<1x8x4xf32>
    %160 = vector.shape_cast %159 : vector<1x8x4xf32> to vector<8x4xf32>
    %cst_70 = arith.constant dense<0.000000e+00> : vector<256x4xf32>
    %161 = tpu.matmul %131, %160, %cst_70 {dimension_numbers = #tpu.dot_dimension_numbers<[1], [0], [0], [1], [0, 0, 1, 1], [], []>} : vector<256x8xf32>, vector<8x4xf32>, vector<256x4xf32> -> vector<256x4xf32>
    %162 = arith.addf %158, %161 : vector<256x4xf32>
    %c255_i32 = arith.constant 255 : i32
    %163 = tpu.dynamic_rotate %131 by %c255_i32 dim 0 : vector<256x8xf32>, i32 -> vector<256x8xf32>
    %164 = vector.broadcast %71 : vector<256x1xf32> to vector<256x8xf32>
    %165 = arith.mulf %163, %164 : vector<256x8xf32>
    %c5 = arith.constant 5 : index
    %c0_71 = arith.constant 0 : index
    %c0_72 = arith.constant 0 : index
    %166 = vector.load %arg8[%c5, %c0_71, %c0_72] : memref<9x8x4xf32, #tpu.memory_space<vmem>>, vector<1x8x4xf32>
    %167 = vector.shape_cast %166 : vector<1x8x4xf32> to vector<8x4xf32>
    %cst_73 = arith.constant dense<0.000000e+00> : vector<256x4xf32>
    %168 = tpu.matmul %165, %167, %cst_73 {dimension_numbers = #tpu.dot_dimension_numbers<[1], [0], [0], [1], [0, 0, 1, 1], [], []>} : vector<256x8xf32>, vector<8x4xf32>, vector<256x4xf32> -> vector<256x4xf32>
    %169 = arith.addf %162, %168 : vector<256x4xf32>
    %c241_i32 = arith.constant 241 : i32
    %170 = tpu.dynamic_rotate %131 by %c241_i32 dim 0 : vector<256x8xf32>, i32 -> vector<256x8xf32>
    %171 = vector.broadcast %84 : vector<256x1xf32> to vector<256x8xf32>
    %172 = arith.mulf %170, %171 : vector<256x8xf32>
    %c6 = arith.constant 6 : index
    %c0_74 = arith.constant 0 : index
    %c0_75 = arith.constant 0 : index
    %173 = vector.load %arg8[%c6, %c0_74, %c0_75] : memref<9x8x4xf32, #tpu.memory_space<vmem>>, vector<1x8x4xf32>
    %174 = vector.shape_cast %173 : vector<1x8x4xf32> to vector<8x4xf32>
    %cst_76 = arith.constant dense<0.000000e+00> : vector<256x4xf32>
    %175 = tpu.matmul %172, %174, %cst_76 {dimension_numbers = #tpu.dot_dimension_numbers<[1], [0], [0], [1], [0, 0, 1, 1], [], []>} : vector<256x8xf32>, vector<8x4xf32>, vector<256x4xf32> -> vector<256x4xf32>
    %176 = arith.addf %169, %175 : vector<256x4xf32>
    %c240_i32 = arith.constant 240 : i32
    %177 = tpu.dynamic_rotate %131 by %c240_i32 dim 0 : vector<256x8xf32>, i32 -> vector<256x8xf32>
    %178 = vector.broadcast %97 : vector<256x1xf32> to vector<256x8xf32>
    %179 = arith.mulf %177, %178 : vector<256x8xf32>
    %c7 = arith.constant 7 : index
    %c0_77 = arith.constant 0 : index
    %c0_78 = arith.constant 0 : index
    %180 = vector.load %arg8[%c7, %c0_77, %c0_78] : memref<9x8x4xf32, #tpu.memory_space<vmem>>, vector<1x8x4xf32>
    %181 = vector.shape_cast %180 : vector<1x8x4xf32> to vector<8x4xf32>
    %cst_79 = arith.constant dense<0.000000e+00> : vector<256x4xf32>
    %182 = tpu.matmul %179, %181, %cst_79 {dimension_numbers = #tpu.dot_dimension_numbers<[1], [0], [0], [1], [0, 0, 1, 1], [], []>} : vector<256x8xf32>, vector<8x4xf32>, vector<256x4xf32> -> vector<256x4xf32>
    %183 = arith.addf %176, %182 : vector<256x4xf32>
    %c239_i32 = arith.constant 239 : i32
    %184 = tpu.dynamic_rotate %131 by %c239_i32 dim 0 : vector<256x8xf32>, i32 -> vector<256x8xf32>
    %185 = vector.broadcast %110 : vector<256x1xf32> to vector<256x8xf32>
    %186 = arith.mulf %184, %185 : vector<256x8xf32>
    %c8 = arith.constant 8 : index
    %c0_80 = arith.constant 0 : index
    %c0_81 = arith.constant 0 : index
    %187 = vector.load %arg8[%c8, %c0_80, %c0_81] : memref<9x8x4xf32, #tpu.memory_space<vmem>>, vector<1x8x4xf32>
    %188 = vector.shape_cast %187 : vector<1x8x4xf32> to vector<8x4xf32>
    %cst_82 = arith.constant dense<0.000000e+00> : vector<256x4xf32>
    %189 = tpu.matmul %186, %188, %cst_82 {dimension_numbers = #tpu.dot_dimension_numbers<[1], [0], [0], [1], [0, 0, 1, 1], [], []>} : vector<256x8xf32>, vector<8x4xf32>, vector<256x4xf32> -> vector<256x4xf32>
    %190 = arith.addf %183, %189 : vector<256x4xf32>
    %c0_83 = arith.constant 0 : index
    %c0_84 = arith.constant 0 : index
    %c4_85 = arith.constant 4 : index
    %191 = vector.load %arg17[%c0_83, %c0_84, %c4_85] : memref<1x256x12xf32, #tpu.memory_space<vmem>>, vector<1x256x4xf32>
    %192 = vector.shape_cast %191 : vector<1x256x4xf32> to vector<256x4xf32>
    %193 = vector.shape_cast %190 : vector<256x4xf32> to vector<1x256x4xf32>
    tpu.vector_store %arg17[%c0_83, %c0_84, %c4_85], %193 {strides = array<i32>} : memref<1x256x12xf32, #tpu.memory_space<vmem>>, vector<1x256x4xf32>,
    %c0_86 = arith.constant 0 : index
    %c0_87 = arith.constant 0 : index
    %c0_88 = arith.constant 0 : index
    %194 = vector.load %arg17[%c0_86, %c0_87, %c0_88] : memref<1x256x12xf32, #tpu.memory_space<vmem>>, vector<1x256x8xf32>
    %195 = vector.shape_cast %194 : vector<1x256x8xf32> to vector<256x8xf32>
    %c0_89 = arith.constant 0 : index
    %c0_90 = arith.constant 0 : index
    %196 = vector.load %arg9[%c0_89, %c0_90] : memref<1x8xf32, #tpu.memory_space<vmem>>, vector<1x8xf32>
    %197 = vector.broadcast %196 : vector<1x8xf32> to vector<256x8xf32>
    %198 = arith.mulf %195, %197 : vector<256x8xf32>
    %c0_91 = arith.constant 0 : index
    %c0_92 = arith.constant 0 : index
    %199 = vector.load %arg10[%c0_91, %c0_92] : memref<1x8xf32, #tpu.memory_space<vmem>>, vector<1x8xf32>
    %200 = vector.broadcast %199 : vector<1x8xf32> to vector<256x8xf32>
    %201 = arith.addf %198, %200 : vector<256x8xf32>
    %cst_93 = arith.constant 0.000000e+00 : f32
    %202 = vector.broadcast %cst_93 : f32 to vector<256x8xf32>
    %203 = arith.maximumf %201, %202 : vector<256x8xf32>
    %c0_94 = arith.constant 0 : index
    %c0_95 = arith.constant 0 : index
    %c0_96 = arith.constant 0 : index
    %204 = vector.load %arg11[%c0_94, %c0_95, %c0_96] : memref<1x8x8xf32, #tpu.memory_space<vmem>>, vector<1x8x8xf32>
    %205 = vector.shape_cast %204 : vector<1x8x8xf32> to vector<8x8xf32>
    %cst_97 = arith.constant dense<0.000000e+00> : vector<256x8xf32>
    %206 = tpu.matmul %203, %205, %cst_97 {dimension_numbers = #tpu.dot_dimension_numbers<[1], [0], [0], [1], [0, 0, 1, 1], [], []>} : vector<256x8xf32>, vector<8x8xf32>, vector<256x8xf32> -> vector<256x8xf32>
    %c0_98 = arith.constant 0 : index
    %c0_99 = arith.constant 0 : index
    %207 = vector.load %arg12[%c0_98, %c0_99] : memref<1x8xf32, #tpu.memory_space<vmem>>, vector<1x8xf32>
    %208 = vector.broadcast %207 : vector<1x8xf32> to vector<256x8xf32>
    %209 = arith.mulf %206, %208 : vector<256x8xf32>
    %c0_100 = arith.constant 0 : index
    %c0_101 = arith.constant 0 : index
    %210 = vector.load %arg13[%c0_100, %c0_101] : memref<1x8xf32, #tpu.memory_space<vmem>>, vector<1x8xf32>
    %211 = vector.broadcast %210 : vector<1x8xf32> to vector<256x8xf32>
    %212 = arith.addf %209, %211 : vector<256x8xf32>
    %cst_102 = arith.constant 0.000000e+00 : f32
    %213 = vector.broadcast %cst_102 : f32 to vector<256x8xf32>
    %214 = arith.maximumf %212, %213 : vector<256x8xf32>
    %c17_i32_103 = arith.constant 17 : i32
    %215 = tpu.dynamic_rotate %214 by %c17_i32_103 dim 0 : vector<256x8xf32>, i32 -> vector<256x8xf32>
    %216 = vector.broadcast %19 : vector<256x1xf32> to vector<256x8xf32>
    %217 = arith.mulf %215, %216 : vector<256x8xf32>
    %c0_104 = arith.constant 0 : index
    %c0_105 = arith.constant 0 : index
    %c0_106 = arith.constant 0 : index
    %218 = vector.load %arg14[%c0_104, %c0_105, %c0_106] : memref<9x8x4xf32, #tpu.memory_space<vmem>>, vector<1x8x4xf32>
    %219 = vector.shape_cast %218 : vector<1x8x4xf32> to vector<8x4xf32>
    %cst_107 = arith.constant dense<0.000000e+00> : vector<256x4xf32>
    %220 = tpu.matmul %217, %219, %cst_107 {dimension_numbers = #tpu.dot_dimension_numbers<[1], [0], [0], [1], [0, 0, 1, 1], [], []>} : vector<256x8xf32>, vector<8x4xf32>, vector<256x4xf32> -> vector<256x4xf32>
    %c16_i32_108 = arith.constant 16 : i32
    %221 = tpu.dynamic_rotate %214 by %c16_i32_108 dim 0 : vector<256x8xf32>, i32 -> vector<256x8xf32>
    %222 = vector.broadcast %32 : vector<256x1xf32> to vector<256x8xf32>
    %223 = arith.mulf %221, %222 : vector<256x8xf32>
    %c1_109 = arith.constant 1 : index
    %c0_110 = arith.constant 0 : index
    %c0_111 = arith.constant 0 : index
    %224 = vector.load %arg14[%c1_109, %c0_110, %c0_111] : memref<9x8x4xf32, #tpu.memory_space<vmem>>, vector<1x8x4xf32>
    %225 = vector.shape_cast %224 : vector<1x8x4xf32> to vector<8x4xf32>
    %cst_112 = arith.constant dense<0.000000e+00> : vector<256x4xf32>
    %226 = tpu.matmul %223, %225, %cst_112 {dimension_numbers = #tpu.dot_dimension_numbers<[1], [0], [0], [1], [0, 0, 1, 1], [], []>} : vector<256x8xf32>, vector<8x4xf32>, vector<256x4xf32> -> vector<256x4xf32>
    %227 = arith.addf %220, %226 : vector<256x4xf32>
    %c15_i32_113 = arith.constant 15 : i32
    %228 = tpu.dynamic_rotate %214 by %c15_i32_113 dim 0 : vector<256x8xf32>, i32 -> vector<256x8xf32>
    %229 = vector.broadcast %45 : vector<256x1xf32> to vector<256x8xf32>
    %230 = arith.mulf %228, %229 : vector<256x8xf32>
    %c2_114 = arith.constant 2 : index
    %c0_115 = arith.constant 0 : index
    %c0_116 = arith.constant 0 : index
    %231 = vector.load %arg14[%c2_114, %c0_115, %c0_116] : memref<9x8x4xf32, #tpu.memory_space<vmem>>, vector<1x8x4xf32>
    %232 = vector.shape_cast %231 : vector<1x8x4xf32> to vector<8x4xf32>
    %cst_117 = arith.constant dense<0.000000e+00> : vector<256x4xf32>
    %233 = tpu.matmul %230, %232, %cst_117 {dimension_numbers = #tpu.dot_dimension_numbers<[1], [0], [0], [1], [0, 0, 1, 1], [], []>} : vector<256x8xf32>, vector<8x4xf32>, vector<256x4xf32> -> vector<256x4xf32>
    %234 = arith.addf %227, %233 : vector<256x4xf32>
    %c1_i32_118 = arith.constant 1 : i32
    %235 = tpu.dynamic_rotate %214 by %c1_i32_118 dim 0 : vector<256x8xf32>, i32 -> vector<256x8xf32>
    %236 = vector.broadcast %58 : vector<256x1xf32> to vector<256x8xf32>
    %237 = arith.mulf %235, %236 : vector<256x8xf32>
    %c3_119 = arith.constant 3 : index
    %c0_120 = arith.constant 0 : index
    %c0_121 = arith.constant 0 : index
    %238 = vector.load %arg14[%c3_119, %c0_120, %c0_121] : memref<9x8x4xf32, #tpu.memory_space<vmem>>, vector<1x8x4xf32>
    %239 = vector.shape_cast %238 : vector<1x8x4xf32> to vector<8x4xf32>
    %cst_122 = arith.constant dense<0.000000e+00> : vector<256x4xf32>
    %240 = tpu.matmul %237, %239, %cst_122 {dimension_numbers = #tpu.dot_dimension_numbers<[1], [0], [0], [1], [0, 0, 1, 1], [], []>} : vector<256x8xf32>, vector<8x4xf32>, vector<256x4xf32> -> vector<256x4xf32>
    %241 = arith.addf %234, %240 : vector<256x4xf32>
    %c4_123 = arith.constant 4 : index
    %c0_124 = arith.constant 0 : index
    %c0_125 = arith.constant 0 : index
    %242 = vector.load %arg14[%c4_123, %c0_124, %c0_125] : memref<9x8x4xf32, #tpu.memory_space<vmem>>, vector<1x8x4xf32>
    %243 = vector.shape_cast %242 : vector<1x8x4xf32> to vector<8x4xf32>
    %cst_126 = arith.constant dense<0.000000e+00> : vector<256x4xf32>
    %244 = tpu.matmul %214, %243, %cst_126 {dimension_numbers = #tpu.dot_dimension_numbers<[1], [0], [0], [1], [0, 0, 1, 1], [], []>} : vector<256x8xf32>, vector<8x4xf32>, vector<256x4xf32> -> vector<256x4xf32>
    %245 = arith.addf %241, %244 : vector<256x4xf32>
    %c255_i32_127 = arith.constant 255 : i32
    %246 = tpu.dynamic_rotate %214 by %c255_i32_127 dim 0 : vector<256x8xf32>, i32 -> vector<256x8xf32>
    %247 = vector.broadcast %71 : vector<256x1xf32> to vector<256x8xf32>
    %248 = arith.mulf %246, %247 : vector<256x8xf32>
    %c5_128 = arith.constant 5 : index
    %c0_129 = arith.constant 0 : index
    %c0_130 = arith.constant 0 : index
    %249 = vector.load %arg14[%c5_128, %c0_129, %c0_130] : memref<9x8x4xf32, #tpu.memory_space<vmem>>, vector<1x8x4xf32>
    %250 = vector.shape_cast %249 : vector<1x8x4xf32> to vector<8x4xf32>
    %cst_131 = arith.constant dense<0.000000e+00> : vector<256x4xf32>
    %251 = tpu.matmul %248, %250, %cst_131 {dimension_numbers = #tpu.dot_dimension_numbers<[1], [0], [0], [1], [0, 0, 1, 1], [], []>} : vector<256x8xf32>, vector<8x4xf32>, vector<256x4xf32> -> vector<256x4xf32>
    %252 = arith.addf %245, %251 : vector<256x4xf32>
    %c241_i32_132 = arith.constant 241 : i32
    %253 = tpu.dynamic_rotate %214 by %c241_i32_132 dim 0 : vector<256x8xf32>, i32 -> vector<256x8xf32>
    %254 = vector.broadcast %84 : vector<256x1xf32> to vector<256x8xf32>
    %255 = arith.mulf %253, %254 : vector<256x8xf32>
    %c6_133 = arith.constant 6 : index
    %c0_134 = arith.constant 0 : index
    %c0_135 = arith.constant 0 : index
    %256 = vector.load %arg14[%c6_133, %c0_134, %c0_135] : memref<9x8x4xf32, #tpu.memory_space<vmem>>, vector<1x8x4xf32>
    %257 = vector.shape_cast %256 : vector<1x8x4xf32> to vector<8x4xf32>
    %cst_136 = arith.constant dense<0.000000e+00> : vector<256x4xf32>
    %258 = tpu.matmul %255, %257, %cst_136 {dimension_numbers = #tpu.dot_dimension_numbers<[1], [0], [0], [1], [0, 0, 1, 1], [], []>} : vector<256x8xf32>, vector<8x4xf32>, vector<256x4xf32> -> vector<256x4xf32>
    %259 = arith.addf %252, %258 : vector<256x4xf32>
    %c240_i32_137 = arith.constant 240 : i32
    %260 = tpu.dynamic_rotate %214 by %c240_i32_137 dim 0 : vector<256x8xf32>, i32 -> vector<256x8xf32>
    %261 = vector.broadcast %97 : vector<256x1xf32> to vector<256x8xf32>
    %262 = arith.mulf %260, %261 : vector<256x8xf32>
    %c7_138 = arith.constant 7 : index
    %c0_139 = arith.constant 0 : index
    %c0_140 = arith.constant 0 : index
    %263 = vector.load %arg14[%c7_138, %c0_139, %c0_140] : memref<9x8x4xf32, #tpu.memory_space<vmem>>, vector<1x8x4xf32>
    %264 = vector.shape_cast %263 : vector<1x8x4xf32> to vector<8x4xf32>
    %cst_141 = arith.constant dense<0.000000e+00> : vector<256x4xf32>
    %265 = tpu.matmul %262, %264, %cst_141 {dimension_numbers = #tpu.dot_dimension_numbers<[1], [0], [0], [1], [0, 0, 1, 1], [], []>} : vector<256x8xf32>, vector<8x4xf32>, vector<256x4xf32> -> vector<256x4xf32>
    %266 = arith.addf %259, %265 : vector<256x4xf32>
    %c239_i32_142 = arith.constant 239 : i32
    %267 = tpu.dynamic_rotate %214 by %c239_i32_142 dim 0 : vector<256x8xf32>, i32 -> vector<256x8xf32>
    %268 = vector.broadcast %110 : vector<256x1xf32> to vector<256x8xf32>
    %269 = arith.mulf %267, %268 : vector<256x8xf32>
    %c8_143 = arith.constant 8 : index
    %c0_144 = arith.constant 0 : index
    %c0_145 = arith.constant 0 : index
    %270 = vector.load %arg14[%c8_143, %c0_144, %c0_145] : memref<9x8x4xf32, #tpu.memory_space<vmem>>, vector<1x8x4xf32>
    %271 = vector.shape_cast %270 : vector<1x8x4xf32> to vector<8x4xf32>
    %cst_146 = arith.constant dense<0.000000e+00> : vector<256x4xf32>
    %272 = tpu.matmul %269, %271, %cst_146 {dimension_numbers = #tpu.dot_dimension_numbers<[1], [0], [0], [1], [0, 0, 1, 1], [], []>} : vector<256x8xf32>, vector<8x4xf32>, vector<256x4xf32> -> vector<256x4xf32>
    %273 = arith.addf %266, %272 : vector<256x4xf32>
    %c0_147 = arith.constant 0 : index
    %c0_148 = arith.constant 0 : index
    %c8_149 = arith.constant 8 : index
    %274 = vector.load %arg17[%c0_147, %c0_148, %c8_149] : memref<1x256x12xf32, #tpu.memory_space<vmem>>, vector<1x256x4xf32>
    %275 = vector.shape_cast %274 : vector<1x256x4xf32> to vector<256x4xf32>
    %276 = vector.shape_cast %273 : vector<256x4xf32> to vector<1x256x4xf32>
    tpu.vector_store %arg17[%c0_147, %c0_148, %c8_149], %276 {strides = array<i32>} : memref<1x256x12xf32, #tpu.memory_space<vmem>>, vector<1x256x4xf32>,
    %c0_150 = arith.constant 0 : index
    %c0_151 = arith.constant 0 : index
    %c0_152 = arith.constant 0 : index
    %277 = vector.load %arg17[%c0_150, %c0_151, %c0_152] : memref<1x256x12xf32, #tpu.memory_space<vmem>>, vector<1x256x12xf32>
    %278 = vector.shape_cast %277 : vector<1x256x12xf32> to vector<256x12xf32>
    %c0_153 = arith.constant 0 : index
    %c0_154 = arith.constant 0 : index
    %279 = vector.load %arg15[%c0_153, %c0_154] : memref<1x12xf32, #tpu.memory_space<vmem>>, vector<1x12xf32>
    %280 = vector.broadcast %279 : vector<1x12xf32> to vector<256x12xf32>
    %281 = arith.mulf %278, %280 : vector<256x12xf32>
    %c0_155 = arith.constant 0 : index
    %c0_156 = arith.constant 0 : index
    %282 = vector.load %arg16[%c0_155, %c0_156] : memref<1x12xf32, #tpu.memory_space<vmem>>, vector<1x12xf32>
    %283 = vector.broadcast %282 : vector<1x12xf32> to vector<256x12xf32>
    %284 = arith.addf %281, %283 : vector<256x12xf32>
    %cst_157 = arith.constant 0.000000e+00 : f32
    %285 = vector.broadcast %cst_157 : f32 to vector<256x12xf32>
    %286 = arith.maximumf %284, %285 : vector<256x12xf32>
    %c0_158 = arith.constant 0 : index
    %c0_159 = arith.constant 0 : index
    %c0_160 = arith.constant 0 : index
    %287 = vector.load %arg17[%c0_158, %c0_159, %c0_160] : memref<1x256x12xf32, #tpu.memory_space<vmem>>, vector<1x256x12xf32>
    %288 = vector.shape_cast %287 : vector<1x256x12xf32> to vector<256x12xf32>
    %289 = vector.shape_cast %286 : vector<256x12xf32> to vector<1x256x12xf32>
    tpu.vector_store %arg17[%c0_158, %c0_159, %c0_160], %289 {strides = array<i32>} : memref<1x256x12xf32, #tpu.memory_space<vmem>>, vector<1x256x12xf32>,
    return
  }
  func.func @transform_0(%arg0: i32) -> (i32, i32, i32) {
    %c0_i32 = arith.constant 0 : i32
    %c0_i32_0 = arith.constant 0 : i32
    %c0_i32_1 = arith.constant 0 : i32
    return %arg0, %c0_i32, %c0_i32_0 : i32, i32, i32
  }
  func.func @transform_1(%arg0: i32) -> (i32, i32) {
    %c0_i32 = arith.constant 0 : i32
    %c0_i32_0 = arith.constant 0 : i32
    %c0_i32_1 = arith.constant 0 : i32
    return %c0_i32, %c0_i32_0 : i32, i32
  }
  func.func @transform_2(%arg0: i32) -> (i32, i32) {
    %c0_i32 = arith.constant 0 : i32
    %c0_i32_0 = arith.constant 0 : i32
    %c0_i32_1 = arith.constant 0 : i32
    return %c0_i32, %c0_i32_0 : i32, i32
  }
  func.func @transform_3(%arg0: i32) -> (i32, i32) {
    %c0_i32 = arith.constant 0 : i32
    %c0_i32_0 = arith.constant 0 : i32
    %c0_i32_1 = arith.constant 0 : i32
    return %c0_i32, %c0_i32_0 : i32, i32
  }
  func.func @transform_4(%arg0: i32) -> (i32, i32, i32) {
    %c0_i32 = arith.constant 0 : i32
    %c0_i32_0 = arith.constant 0 : i32
    %c0_i32_1 = arith.constant 0 : i32
    %c0_i32_2 = arith.constant 0 : i32
    return %c0_i32, %c0_i32_0, %c0_i32_1 : i32, i32, i32
  }
  func.func @transform_5(%arg0: i32) -> (i32, i32) {
    %c0_i32 = arith.constant 0 : i32
    %c0_i32_0 = arith.constant 0 : i32
    %c0_i32_1 = arith.constant 0 : i32
    return %c0_i32, %c0_i32_0 : i32, i32
  }
  func.func @transform_6(%arg0: i32) -> (i32, i32) {
    %c0_i32 = arith.constant 0 : i32
    %c0_i32_0 = arith.constant 0 : i32
    %c0_i32_1 = arith.constant 0 : i32
    return %c0_i32, %c0_i32_0 : i32, i32
  }
  func.func @transform_7(%arg0: i32) -> (i32, i32, i32) {
    %c0_i32 = arith.constant 0 : i32
    %c0_i32_0 = arith.constant 0 : i32
    %c0_i32_1 = arith.constant 0 : i32
    %c0_i32_2 = arith.constant 0 : i32
    return %c0_i32, %c0_i32_0, %c0_i32_1 : i32, i32, i32
  }
  func.func @transform_8(%arg0: i32) -> (i32, i32) {
    %c0_i32 = arith.constant 0 : i32
    %c0_i32_0 = arith.constant 0 : i32
    %c0_i32_1 = arith.constant 0 : i32
    return %c0_i32, %c0_i32_0 : i32, i32
  }
  func.func @transform_9(%arg0: i32) -> (i32, i32) {
    %c0_i32 = arith.constant 0 : i32
    %c0_i32_0 = arith.constant 0 : i32
    %c0_i32_1 = arith.constant 0 : i32
    return %c0_i32, %c0_i32_0 : i32, i32
  }
  func.func @transform_10(%arg0: i32) -> (i32, i32, i32) {
    %c0_i32 = arith.constant 0 : i32
    %c0_i32_0 = arith.constant 0 : i32
    %c0_i32_1 = arith.constant 0 : i32
    %c0_i32_2 = arith.constant 0 : i32
    return %c0_i32, %c0_i32_0, %c0_i32_1 : i32, i32, i32
  }
  func.func @transform_11(%arg0: i32) -> (i32, i32) {
    %c0_i32 = arith.constant 0 : i32
    %c0_i32_0 = arith.constant 0 : i32
    %c0_i32_1 = arith.constant 0 : i32
    return %c0_i32, %c0_i32_0 : i32, i32
  }
  func.func @transform_12(%arg0: i32) -> (i32, i32) {
    %c0_i32 = arith.constant 0 : i32
    %c0_i32_0 = arith.constant 0 : i32
    %c0_i32_1 = arith.constant 0 : i32
    return %c0_i32, %c0_i32_0 : i32, i32
  }
  func.func @transform_13(%arg0: i32) -> (i32, i32, i32) {
    %c0_i32 = arith.constant 0 : i32
    %c0_i32_0 = arith.constant 0 : i32
    %c0_i32_1 = arith.constant 0 : i32
    %c0_i32_2 = arith.constant 0 : i32
    return %c0_i32, %c0_i32_0, %c0_i32_1 : i32, i32, i32
  }
  func.func @transform_14(%arg0: i32) -> (i32, i32) {
    %c0_i32 = arith.constant 0 : i32
    %c0_i32_0 = arith.constant 0 : i32
    %c0_i32_1 = arith.constant 0 : i32
    return %c0_i32, %c0_i32_0 : i32, i32
  }
  func.func @transform_15(%arg0: i32) -> (i32, i32) {
    %c0_i32 = arith.constant 0 : i32
    %c0_i32_0 = arith.constant 0 : i32
    %c0_i32_1 = arith.constant 0 : i32
    return %c0_i32, %c0_i32_0 : i32, i32
  }
  func.func @transform_16(%arg0: i32) -> (i32, i32, i32) {
    %c0_i32 = arith.constant 0 : i32
    %c0_i32_0 = arith.constant 0 : i32
    %c0_i32_1 = arith.constant 0 : i32
    return %arg0, %c0_i32, %c0_i32_0 : i32, i32, i32
  }
}

</mosaic_0001>

<llo_original>
// kernel: tpu_custom_call.1
$region0: #{tpu_custom_call.1}
  #allocation0 [shape = 'u32[]', space=smem, size = 0x4, offset = 0x4, fixed_abs, tag = 'smem constant byte address 0x4 - core index']
  #allocation1 [shape = 'u32[144,128]{1,0:T(1,128)}', space=vmem, size = 0x12000, scoped, tag = 'internal scratch']
  %s0 = inlined_call_operand.vmem [shape: f32[2,256,4], index: 0, kind: input, shape index: {}]
  %s1 = inlined_call_operand.vmem [shape: s32[256,2], index: 1, kind: input, shape index: {}]
  %s2 = inlined_call_operand.vmem [shape: f32[1,4], index: 2, kind: input, shape index: {}]
  %s3 = inlined_call_operand.vmem [shape: f32[1,4], index: 3, kind: input, shape index: {}]
  %s4 = inlined_call_operand.vmem [shape: f32[1,4,8], index: 4, kind: input, shape index: {}]
  %s5 = inlined_call_operand.vmem [shape: f32[1,8], index: 5, kind: input, shape index: {}]
  %s6 = inlined_call_operand.vmem [shape: f32[1,8], index: 6, kind: input, shape index: {}]
  %s7 = inlined_call_operand.vmem [shape: f32[9,8,4], index: 7, kind: input, shape index: {}]
  %s8 = inlined_call_operand.vmem [shape: f32[1,8], index: 8, kind: input, shape index: {}]
  %s9 = inlined_call_operand.vmem [shape: f32[1,8], index: 9, kind: input, shape index: {}]
  %s10 = inlined_call_operand.vmem [shape: f32[1,8,8], index: 10, kind: input, shape index: {}]
  %s11 = inlined_call_operand.vmem [shape: f32[1,8], index: 11, kind: input, shape index: {}]
  %s12 = inlined_call_operand.vmem [shape: f32[1,8], index: 12, kind: input, shape index: {}]
  %s13 = inlined_call_operand.vmem [shape: f32[9,8,4], index: 13, kind: input, shape index: {}]
  %s14 = inlined_call_operand.vmem [shape: f32[1,12], index: 14, kind: input, shape index: {}]
  %s15 = inlined_call_operand.vmem [shape: f32[1,12], index: 15, kind: input, shape index: {}]
  %s16 = inlined_call_operand.vmem [shape: f32[2,256,12], index: 16, kind: output, shape index: {}]
  %s17 = sld [smem:[#allocation0]]
  $region97: #{tpu_custom_call.1} parent=0
    _
  %s19 = ssub.s32 1, %s17
  %s20 = scalar_select 0, %s19, %s17
  loop: start=0, step=1, limit=4
  $region2: #{tpu_custom_call.1} parent=0 // loop_pre_header
    _
  $region3: #{tpu_custom_call.1} parent=0 // loop_header
    %s22 = sphi 0, %s26
    %p23 = scmp.ge.s32.totalorder %s22, 4
    %s32 = sphi 0, %s34
    %s35 = sphi 0, %s32
    %s36 = sphi 0, %s35
    %s52 = sphi 0, %s36
    %s56 = sphi 0, %s56
    %s58 = sphi 0, %s56
    %s59 = sphi 0, %s58
    %s73 = sphi 0, %s59
    %s77 = sphi 0, %s77
    %s79 = sphi 0, %s77
    %s80 = sphi 0, %s79
    %s94 = sphi 0, %s80
    %s98 = sphi 0, %s98
    %s100 = sphi 0, %s98
    %s101 = sphi 0, %s100
    %s115 = sphi 0, %s101
    %s119 = sphi 0, %s119
    %s121 = sphi 0, %s119
    %s122 = sphi 0, %s121
    %s136 = sphi 0, %s122
    %s140 = sphi 0, %s140
    %s142 = sphi 0, %s140
    %s143 = sphi 0, %s142
    %s157 = sphi 0, %s143
    %s161 = sphi 0, %s161
    %s163 = sphi 0, %s161
    %s164 = sphi 0, %s163
    %s178 = sphi 0, %s164
    %s182 = sphi 0, %s182
    %s184 = sphi 0, %s182
    %s185 = sphi 0, %s184
    %s199 = sphi 0, %s185
    %s203 = sphi 0, %s203
    %s205 = sphi 0, %s203
    %s206 = sphi 0, %s205
    %s220 = sphi 0, %s206
    %s224 = sphi 0, %s224
    %s226 = sphi 0, %s224
    %s227 = sphi 0, %s226
    %s241 = sphi 0, %s227
    %s245 = sphi 0, %s245
    %s247 = sphi 0, %s245
    %s248 = sphi 0, %s247
    %s262 = sphi 0, %s248
    %s266 = sphi 0, %s266
    %s268 = sphi 0, %s266
    %s269 = sphi 0, %s268
    %s283 = sphi 0, %s269
    %s287 = sphi 0, %s287
    %s289 = sphi 0, %s287
    %s290 = sphi 0, %s289
    %s304 = sphi 0, %s290
    %s308 = sphi 0, %s308
    %s310 = sphi 0, %s308
    %s311 = sphi 0, %s310
    %s325 = sphi 0, %s311
    %s329 = sphi 0, %s329
    %s331 = sphi 0, %s329
    %s332 = sphi 0, %s331
    %s346 = sphi 0, %s332
    %s350 = sphi 0, %s350
    %s352 = sphi 0, %s350
    %s353 = sphi 0, %s352
    %s367 = sphi 0, %s353
    %s373 = sphi 0, %s375
    %s376 = sphi 0, %s373
    %s377 = sphi 0, %s376
    %s393 = sphi 0, %s377
  $region4: #{tpu_custom_call.1} parent=0 // loop_header_branch
    %25 = sbr.rel (%p23) target = $region8
  $region5: #{tpu_custom_call.1} parent=0 // loop_body
    %s27 = ssub.s32 %s22, 1
    %s28 = ssub.s32 %s22, 2
    %s29 = sadd.s32 %s22, 1
    %s30 = ssub.s32 %s22, %s29
    %p31 = scmp.eq.s32.totalorder %s30, 0
    %s33 = sadd.s32 %s32, 1
    %s34 = scalar_select %p31, %s32, %s33
    %p37 = pneg %p31
    %p38 = scmp.eq.s32.totalorder %s22, 1
    %p39 = por %p37, %p38
    %p40 = scmp.ne.s32.totalorder %s32, %s35
    %p41 = scmp.eq.s32.totalorder %s22, 0
    %p42 = por %p40, %p41
    %p43 = scmp.ne.s32.totalorder %s32, %s35
    %p44 = scmp.eq.s32.totalorder %s27, 1
    %p45 = por %p43, %p44
    %p46 = scmp.ne.s32.totalorder %s35, %s36
    %p47 = scmp.eq.s32.totalorder %s27, 0
    %p48 = por %p46, %p47
    %p49 = scmp.ne.s32.totalorder %s35, %s36
    %p50 = scmp.eq.s32.totalorder %s28, 1
    %p51 = por %p49, %p50
    %p53 = scmp.ne.s32.totalorder %s36, %s52
    %p54 = scmp.eq.s32.totalorder %s28, 0
    %p55 = por %p53, %p54
    %s57 = sadd.s32 %s56, 1
    %p60 = scmp.eq.s32.totalorder %s22, 1
    %p61 = scmp.ne.s32.totalorder %s56, %s58
    %p62 = scmp.eq.s32.totalorder %s22, 0
    %p63 = por %p61, %p62
    %p64 = scmp.ne.s32.totalorder %s56, %s58
    %p65 = scmp.eq.s32.totalorder %s27, 1
    %p66 = por %p64, %p65
    %p67 = scmp.ne.s32.totalorder %s58, %s59
    %p68 = scmp.eq.s32.totalorder %s27, 0
    %p69 = por %p67, %p68
    %p70 = scmp.ne.s32.totalorder %s58, %s59
    %p71 = scmp.eq.s32.totalorder %s28, 1
    %p72 = por %p70, %p71
    %p74 = scmp.ne.s32.totalorder %s59, %s73
    %p75 = scmp.eq.s32.totalorder %s28, 0
    %p76 = por %p74, %p75
    %s78 = sadd.s32 %s77, 1
    %p81 = scmp.eq.s32.totalorder %s22, 1
    %p82 = scmp.ne.s32.totalorder %s77, %s79
    %p83 = scmp.eq.s32.totalorder %s22, 0
    %p84 = por %p82, %p83
    %p85 = scmp.ne.s32.totalorder %s77, %s79
    %p86 = scmp.eq.s32.totalorder %s27, 1
    %p87 = por %p85, %p86
    %p88 = scmp.ne.s32.totalorder %s79, %s80
    %p89 = scmp.eq.s32.totalorder %s27, 0
    %p90 = por %p88, %p89
    %p91 = scmp.ne.s32.totalorder %s79, %s80
    %p92 = scmp.eq.s32.totalorder %s28, 1
    %p93 = por %p91, %p92
    %p95 = scmp.ne.s32.totalorder %s80, %s94
    %p96 = scmp.eq.s32.totalorder %s28, 0
    %p97 = por %p95, %p96
    %s99 = sadd.s32 %s98, 1
    %p102 = scmp.eq.s32.totalorder %s22, 1
    %p103 = scmp.ne.s32.totalorder %s98, %s100
    %p104 = scmp.eq.s32.totalorder %s22, 0
    %p105 = por %p103, %p104
    %p106 = scmp.ne.s32.totalorder %s98, %s100
    %p107 = scmp.eq.s32.totalorder %s27, 1
    %p108 = por %p106, %p107
    %p109 = scmp.ne.s32.totalorder %s100, %s101
    %p110 = scmp.eq.s32.totalorder %s27, 0
    %p111 = por %p109, %p110
    %p112 = scmp.ne.s32.totalorder %s100, %s101
    %p113 = scmp.eq.s32.totalorder %s28, 1
    %p114 = por %p112, %p113
    %p116 = scmp.ne.s32.totalorder %s101, %s115
    %p117 = scmp.eq.s32.totalorder %s28, 0
    %p118 = por %p116, %p117
    %s120 = sadd.s32 %s119, 1
    %p123 = scmp.eq.s32.totalorder %s22, 1
    %p124 = scmp.ne.s32.totalorder %s119, %s121
    %p125 = scmp.eq.s32.totalorder %s22, 0
    %p126 = por %p124, %p125
    %p127 = scmp.ne.s32.totalorder %s119, %s121
    %p128 = scmp.eq.s32.totalorder %s27, 1
    %p129 = por %p127, %p128
    %p130 = scmp.ne.s32.totalorder %s121, %s122
    %p131 = scmp.eq.s32.totalorder %s27, 0
    %p132 = por %p130, %p131
    %p133 = scmp.ne.s32.totalorder %s121, %s122
    %p134 = scmp.eq.s32.totalorder %s28, 1
    %p135 = por %p133, %p134
    %p137 = scmp.ne.s32.totalorder %s122, %s136
    %p138 = scmp.eq.s32.totalorder %s28, 0
    %p139 = por %p137, %p138
    %s141 = sadd.s32 %s140, 1
    %p144 = scmp.eq.s32.totalorder %s22, 1
    %p145 = scmp.ne.s32.totalorder %s140, %s142
    %p146 = scmp.eq.s32.totalorder %s22, 0
    %p147 = por %p145, %p146
    %p148 = scmp.ne.s32.totalorder %s140, %s142
    %p149 = scmp.eq.s32.totalorder %s27, 1
    %p150 = por %p148, %p149
    %p151 = scmp.ne.s32.totalorder %s142, %s143
    %p152 = scmp.eq.s32.totalorder %s27, 0
    %p153 = por %p151, %p152
    %p154 = scmp.ne.s32.totalorder %s142, %s143
    %p155 = scmp.eq.s32.totalorder %s28, 1
    %p156 = por %p154, %p155
    %p158 = scmp.ne.s32.totalorder %s143, %s157
    %p159 = scmp.eq.s32.totalorder %s28, 0
    %p160 = por %p158, %p159
    %s162 = sadd.s32 %s161, 1
    %p165 = scmp.eq.s32.totalorder %s22, 1
    %p166 = scmp.ne.s32.totalorder %s161, %s163
    %p167 = scmp.eq.s32.totalorder %s22, 0
    %p168 = por %p166, %p167
    %p169 = scmp.ne.s32.totalorder %s161, %s163
    %p170 = scmp.eq.s32.totalorder %s27, 1
    %p171 = por %p169, %p170
    %p172 = scmp.ne.s32.totalorder %s163, %s164
    %p173 = scmp.eq.s32.totalorder %s27, 0
    %p174 = por %p172, %p173
    %p175 = scmp.ne.s32.totalorder %s163, %s164
    %p176 = scmp.eq.s32.totalorder %s28, 1
    %p177 = por %p175, %p176
    %p179 = scmp.ne.s32.totalorder %s164, %s178
    %p180 = scmp.eq.s32.totalorder %s28, 0
    %p181 = por %p179, %p180
    %s183 = sadd.s32 %s182, 1
    %p186 = scmp.eq.s32.totalorder %s22, 1
    %p187 = scmp.ne.s32.totalorder %s182, %s184
    %p188 = scmp.eq.s32.totalorder %s22, 0
    %p189 = por %p187, %p188
    %p190 = scmp.ne.s32.totalorder %s182, %s184
    %p191 = scmp.eq.s32.totalorder %s27, 1
    %p192 = por %p190, %p191
    %p193 = scmp.ne.s32.totalorder %s184, %s185
    %p194 = scmp.eq.s32.totalorder %s27, 0
    %p195 = por %p193, %p194
    %p196 = scmp.ne.s32.totalorder %s184, %s185
    %p197 = scmp.eq.s32.totalorder %s28, 1
    %p198 = por %p196, %p197
    %p200 = scmp.ne.s32.totalorder %s185, %s199
    %p201 = scmp.eq.s32.totalorder %s28, 0
    %p202 = por %p200, %p201
    %s204 = sadd.s32 %s203, 1
    %p207 = scmp.eq.s32.totalorder %s22, 1
    %p208 = scmp.ne.s32.totalorder %s203, %s205
    %p209 = scmp.eq.s32.totalorder %s22, 0
    %p210 = por %p208, %p209
    %p211 = scmp.ne.s32.totalorder %s203, %s205
    %p212 = scmp.eq.s32.totalorder %s27, 1
    %p213 = por %p211, %p212
    %p214 = scmp.ne.s32.totalorder %s205, %s206
    %p215 = scmp.eq.s32.totalorder %s27, 0
    %p216 = por %p214, %p215
    %p217 = scmp.ne.s32.totalorder %s205, %s206
    %p218 = scmp.eq.s32.totalorder %s28, 1
    %p219 = por %p217, %p218
    %p221 = scmp.ne.s32.totalorder %s206, %s220
    %p222 = scmp.eq.s32.totalorder %s28, 0
    %p223 = por %p221, %p222
    %s225 = sadd.s32 %s224, 1
    %p228 = scmp.eq.s32.totalorder %s22, 1
    %p229 = scmp.ne.s32.totalorder %s224, %s226
    %p230 = scmp.eq.s32.totalorder %s22, 0
    %p231 = por %p229, %p230
    %p232 = scmp.ne.s32.totalorder %s224, %s226
    %p233 = scmp.eq.s32.totalorder %s27, 1
    %p234 = por %p232, %p233
    %p235 = scmp.ne.s32.totalorder %s226, %s227
    %p236 = scmp.eq.s32.totalorder %s27, 0
    %p237 = por %p235, %p236
    %p238 = scmp.ne.s32.totalorder %s226, %s227
    %p239 = scmp.eq.s32.totalorder %s28, 1
    %p240 = por %p238, %p239
    %p242 = scmp.ne.s32.totalorder %s227, %s241
    %p243 = scmp.eq.s32.totalorder %s28, 0
    %p244 = por %p242, %p243
    %s246 = sadd.s32 %s245, 1
    %p249 = scmp.eq.s32.totalorder %s22, 1
    %p250 = scmp.ne.s32.totalorder %s245, %s247
    %p251 = scmp.eq.s32.totalorder %s22, 0
    %p252 = por %p250, %p251
    %p253 = scmp.ne.s32.totalorder %s245, %s247
    %p254 = scmp.eq.s32.totalorder %s27, 1
    %p255 = por %p253, %p254
    %p256 = scmp.ne.s32.totalorder %s247, %s248
    %p257 = scmp.eq.s32.totalorder %s27, 0
    %p258 = por %p256, %p257
    %p259 = scmp.ne.s32.totalorder %s247, %s248
    %p260 = scmp.eq.s32.totalorder %s28, 1
    %p261 = por %p259, %p260
    %p263 = scmp.ne.s32.totalorder %s248, %s262
    %p264 = scmp.eq.s32.totalorder %s28, 0
    %p265 = por %p263, %p264
    %s267 = sadd.s32 %s266, 1
    %p270 = scmp.eq.s32.totalorder %s22, 1
    %p271 = scmp.ne.s32.totalorder %s266, %s268
    %p272 = scmp.eq.s32.totalorder %s22, 0
    %p273 = por %p271, %p272
    %p274 = scmp.ne.s32.totalorder %s266, %s268
    %p275 = scmp.eq.s32.totalorder %s27, 1
    %p276 = por %p274, %p275
    %p277 = scmp.ne.s32.totalorder %s268, %s269
    %p278 = scmp.eq.s32.totalorder %s27, 0
    %p279 = por %p277, %p278
    %p280 = scmp.ne.s32.totalorder %s268, %s269
    %p281 = scmp.eq.s32.totalorder %s28, 1
    %p282 = por %p280, %p281
    %p284 = scmp.ne.s32.totalorder %s269, %s283
    %p285 = scmp.eq.s32.totalorder %s28, 0
    %p286 = por %p284, %p285
    %s288 = sadd.s32 %s287, 1
    %p291 = scmp.eq.s32.totalorder %s22, 1
    %p292 = scmp.ne.s32.totalorder %s287, %s289
    %p293 = scmp.eq.s32.totalorder %s22, 0
    %p294 = por %p292, %p293
    %p295 = scmp.ne.s32.totalorder %s287, %s289
    %p296 = scmp.eq.s32.totalorder %s27, 1
    %p297 = por %p295, %p296
    %p298 = scmp.ne.s32.totalorder %s289, %s290
    %p299 = scmp.eq.s32.totalorder %s27, 0
    %p300 = por %p298, %p299
    %p301 = scmp.ne.s32.totalorder %s289, %s290
    %p302 = scmp.eq.s32.totalorder %s28, 1
    %p303 = por %p301, %p302
    %p305 = scmp.ne.s32.totalorder %s290, %s304
    %p306 = scmp.eq.s32.totalorder %s28, 0
    %p307 = por %p305, %p306
    %s309 = sadd.s32 %s308, 1
    %p312 = scmp.eq.s32.totalorder %s22, 1
    %p313 = scmp.ne.s32.totalorder %s308, %s310
    %p314 = scmp.eq.s32.totalorder %s22, 0
    %p315 = por %p313, %p314
    %p316 = scmp.ne.s32.totalorder %s308, %s310
    %p317 = scmp.eq.s32.totalorder %s27, 1
    %p318 = por %p316, %p317
    %p319 = scmp.ne.s32.totalorder %s310, %s311
    %p320 = scmp.eq.s32.totalorder %s27, 0
    %p321 = por %p319, %p320
    %p322 = scmp.ne.s32.totalorder %s310, %s311
    %p323 = scmp.eq.s32.totalorder %s28, 1
    %p324 = por %p322, %p323
    %p326 = scmp.ne.s32.totalorder %s311, %s325
    %p327 = scmp.eq.s32.totalorder %s28, 0
    %p328 = por %p326, %p327
    %s330 = sadd.s32 %s329, 1
    %p333 = scmp.eq.s32.totalorder %s22, 1
    %p334 = scmp.ne.s32.totalorder %s329, %s331
    %p335 = scmp.eq.s32.totalorder %s22, 0
    %p336 = por %p334, %p335
    %p337 = scmp.ne.s32.totalorder %s329, %s331
    %p338 = scmp.eq.s32.totalorder %s27, 1
    %p339 = por %p337, %p338
    %p340 = scmp.ne.s32.totalorder %s331, %s332
    %p341 = scmp.eq.s32.totalorder %s27, 0
    %p342 = por %p340, %p341
    %p343 = scmp.ne.s32.totalorder %s331, %s332
    %p344 = scmp.eq.s32.totalorder %s28, 1
    %p345 = por %p343, %p344
    %p347 = scmp.ne.s32.totalorder %s332, %s346
    %p348 = scmp.eq.s32.totalorder %s28, 0
    %p349 = por %p347, %p348
    %s351 = sadd.s32 %s350, 1
    %p354 = scmp.eq.s32.totalorder %s22, 1
    %p355 = scmp.ne.s32.totalorder %s350, %s352
    %p356 = scmp.eq.s32.totalorder %s22, 0
    %p357 = por %p355, %p356
    %p358 = scmp.ne.s32.totalorder %s350, %s352
    %p359 = scmp.eq.s32.totalorder %s27, 1
    %p360 = por %p358, %p359
    %p361 = scmp.ne.s32.totalorder %s352, %s353
    %p362 = scmp.eq.s32.totalorder %s27, 0
    %p363 = por %p361, %p362
    %p364 = scmp.ne.s32.totalorder %s352, %s353
    %p365 = scmp.eq.s32.totalorder %s28, 1
    %p366 = por %p364, %p365
    %p368 = scmp.ne.s32.totalorder %s353, %s367
    %p369 = scmp.eq.s32.totalorder %s28, 0
    %p370 = por %p368, %p369
    %s371 = ssub.s32 %s22, %s29
    %p372 = scmp.eq.s32.totalorder %s371, 0
    %s374 = sadd.s32 %s373, 1
    %s375 = scalar_select %p372, %s373, %s374
    %p378 = pneg %p372
    %p379 = scmp.eq.s32.totalorder %s22, 1
    %p380 = por %p378, %p379
    %p381 = scmp.ne.s32.totalorder %s373, %s376
    %p382 = scmp.eq.s32.totalorder %s22, 0
    %p383 = por %p381, %p382
    %p384 = scmp.ne.s32.totalorder %s373, %s376
    %p385 = scmp.eq.s32.totalorder %s27, 1
    %p386 = por %p384, %p385
    %p387 = scmp.ne.s32.totalorder %s376, %s377
    %p388 = scmp.eq.s32.totalorder %s27, 0
    %p389 = por %p387, %p388
    %p390 = scmp.ne.s32.totalorder %s376, %s377
    %p391 = scmp.eq.s32.totalorder %s28, 1
    %p392 = por %p390, %p391
    %p394 = scmp.ne.s32.totalorder %s377, %s393
    %p395 = scmp.eq.s32.totalorder %s28, 0
    %p396 = por %p394, %p395
    %p397 = scmp.le.s32.totalorder 1, %s22
    %p398 = scmp.lt.s32.totalorder %s22, 3
    %p399 = pnand %p397, %p398
    %p400 = pneg %p399
    // Predicated region
    $region9: #{tpu_custom_call.1} parent=5 // pred_check
      _
    $region10: #{tpu_custom_call.1} parent=5 // pred_check_branch
      %402 = sbr.rel (%p399) target = $region12
    $region11: #{tpu_custom_call.1} parent=5 // pred_region
      %s403 = ssub.s32 %s22, 1
      // Predicated region
      $region13: #{tpu_custom_call.1} parent=11 // pred_check
        %p404 = pneg %p69
      $region14: #{tpu_custom_call.1} parent=11 // pred_check_branch
        %406 = sbr.rel (%p404) target = $region16
      $region15: #{tpu_custom_call.1} parent=11 // pred_region
        _
      $region16: #{tpu_custom_call.1} parent=11 // pred_fallthru
        _
      // Predicated region
      $region17: #{tpu_custom_call.1} parent=11 // pred_check
        %p407 = pneg %p90
      $region18: #{tpu_custom_call.1} parent=11 // pred_check_branch
        %409 = sbr.rel (%p407) target = $region20
      $region19: #{tpu_custom_call.1} parent=11 // pred_region
        _
      $region20: #{tpu_custom_call.1} parent=11 // pred_fallthru
        _
      // Predicated region
      $region21: #{tpu_custom_call.1} parent=11 // pred_check
        %p410 = pneg %p111
      $region22: #{tpu_custom_call.1} parent=11 // pred_check_branch
        %412 = sbr.rel (%p410) target = $region24
      $region23: #{tpu_custom_call.1} parent=11 // pred_region
        _
      $region24: #{tpu_custom_call.1} parent=11 // pred_fallthru
        _
      // Predicated region
      $region25: #{tpu_custom_call.1} parent=11 // pred_check
        %p413 = pneg %p132
      $region26: #{tpu_custom_call.1} parent=11 // pred_check_branch
        %415 = sbr.rel (%p413) target = $region28
      $region27: #{tpu_custom_call.1} parent=11 // pred_region
        _
      $region28: #{tpu_custom_call.1} parent=11 // pred_fallthru
        _
      // Predicated region
      $region29: #{tpu_custom_call.1} parent=11 // pred_check
        %p416 = pneg %p153
      $region30: #{tpu_custom_call.1} parent=11 // pred_check_branch
        %418 = sbr.rel (%p416) target = $region32
      $region31: #{tpu_custom_call.1} parent=11 // pred_region
        _
      $region32: #{tpu_custom_call.1} parent=11 // pred_fallthru
        _
      // Predicated region
      $region33: #{tpu_custom_call.1} parent=11 // pred_check
        %p419 = pneg %p174
      $region34: #{tpu_custom_call.1} parent=11 // pred_check_branch
        %421 = sbr.rel (%p419) target = $region36
      $region35: #{tpu_custom_call.1} parent=11 // pred_region
        _
      $region36: #{tpu_custom_call.1} parent=11 // pred_fallthru
        _
      // Predicated region
      $region37: #{tpu_custom_call.1} parent=11 // pred_check
        %p422 = pneg %p195
      $region38: #{tpu_custom_call.1} parent=11 // pred_check_branch
        %424 = sbr.rel (%p422) target = $region40
      $region39: #{tpu_custom_call.1} parent=11 // pred_region
        _
      $region40: #{tpu_custom_call.1} parent=11 // pred_fallthru
        _
      // Predicated region
      $region41: #{tpu_custom_call.1} parent=11 // pred_check
        %p425 = pneg %p216
      $region42: #{tpu_custom_call.1} parent=11 // pred_check_branch
        %427 = sbr.rel (%p425) target = $region44
      $region43: #{tpu_custom_call.1} parent=11 // pred_region
        _
      $region44: #{tpu_custom_call.1} parent=11 // pred_fallthru
        _
      // Predicated region
      $region45: #{tpu_custom_call.1} parent=11 // pred_check
        %p428 = pneg %p237
      $region46: #{tpu_custom_call.1} parent=11 // pred_check_branch
        %430 = sbr.rel (%p428) target = $region48
      $region47: #{tpu_custom_call.1} parent=11 // pred_region
        _
      $region48: #{tpu_custom_call.1} parent=11 // pred_fallthru
        _
      // Predicated region
      $region49: #{tpu_custom_call.1} parent=11 // pred_check
        %p431 = pneg %p258
      $region50: #{tpu_custom_call.1} parent=11 // pred_check_branch
        %433 = sbr.rel (%p431) target = $region52
      $region51: #{tpu_custom_call.1} parent=11 // pred_region
        _
      $region52: #{tpu_custom_call.1} parent=11 // pred_fallthru
        _
      // Predicated region
      $region53: #{tpu_custom_call.1} parent=11 // pred_check
        %p434 = pneg %p279
      $region54: #{tpu_custom_call.1} parent=11 // pred_check_branch
        %436 = sbr.rel (%p434) target = $region56
      $region55: #{tpu_custom_call.1} parent=11 // pred_region
        _
      $region56: #{tpu_custom_call.1} parent=11 // pred_fallthru
        _
      // Predicated region
      $region57: #{tpu_custom_call.1} parent=11 // pred_check
        %p437 = pneg %p300
      $region58: #{tpu_custom_call.1} parent=11 // pred_check_branch
        %439 = sbr.rel (%p437) target = $region60
      $region59: #{tpu_custom_call.1} parent=11 // pred_region
        _
      $region60: #{tpu_custom_call.1} parent=11 // pred_fallthru
        _
      // Predicated region
      $region61: #{tpu_custom_call.1} parent=11 // pred_check
        %p440 = pneg %p321
      $region62: #{tpu_custom_call.1} parent=11 // pred_check_branch
        %442 = sbr.rel (%p440) target = $region64
      $region63: #{tpu_custom_call.1} parent=11 // pred_region
        _
      $region64: #{tpu_custom_call.1} parent=11 // pred_fallthru
        _
      // Predicated region
      $region65: #{tpu_custom_call.1} parent=11 // pred_check
        %p443 = pneg %p342
      $region66: #{tpu_custom_call.1} parent=11 // pred_check_branch
        %445 = sbr.rel (%p443) target = $region68
      $region67: #{tpu_custom_call.1} parent=11 // pred_region
        _
      $region68: #{tpu_custom_call.1} parent=11 // pred_fallthru
        _
      // Predicated region
      $region69: #{tpu_custom_call.1} parent=11 // pred_check
        %p446 = pneg %p363
      $region70: #{tpu_custom_call.1} parent=11 // pred_check_branch
        %448 = sbr.rel (%p446) target = $region72
      $region71: #{tpu_custom_call.1} parent=11 // pred_region
        _
      $region72: #{tpu_custom_call.1} parent=11 // pred_fallthru
        _
    $region12: #{tpu_custom_call.1} parent=5 // pred_fallthru
      _
    %p449 = scmp.lt.s32.totalorder %s22, 2
    // Predicated region
    $region73: #{tpu_custom_call.1} parent=5 // pred_check
      %p450 = pneg %p449
    $region74: #{tpu_custom_call.1} parent=5 // pred_check_branch
      %452 = sbr.rel (%p450) target = $region76
    $region75: #{tpu_custom_call.1} parent=5 // pred_region
      // Predicated region
      $region77: #{tpu_custom_call.1} parent=75 // pred_check
        %p453 = pneg %p42
      $region78: #{tpu_custom_call.1} parent=75 // pred_check_branch
        %455 = sbr.rel (%p453) target = $region80
      $region79: #{tpu_custom_call.1} parent=75 // pred_region
        %p456 = scmp.lt.s32.totalorder %s22, 1
        %s457 = scalar_select %p456, %s22, 1
        %s458 = smul.addr %s457, 32
        %s459 = smul.addr %s458, 8
        %s460 = scalar_lea.vmem %s0, %s459
      $region80: #{tpu_custom_call.1} parent=75 // pred_fallthru
        _
    $region76: #{tpu_custom_call.1} parent=5 // pred_fallthru
      _
    %p461 = scmp.le.s32.totalorder 1, %s22
    %p462 = scmp.lt.s32.totalorder %s22, 3
    %p463 = pnand %p461, %p462
    %p464 = pneg %p463
    // Predicated region
    $region81: #{tpu_custom_call.1} parent=5 // pred_check
      _
    $region82: #{tpu_custom_call.1} parent=5 // pred_check_branch
      %466 = sbr.rel (%p463) target = $region84
    $region83: #{tpu_custom_call.1} parent=5 // pred_region
      %s467 = ssub.s32 %s22, 1
      %p468 = scmp.lt.s32.totalorder %s27, 1
      %s469 = scalar_select %p468, %s27, 1
      %s470 = smul.addr %s469, 32
      %s471 = smul.addr %s470, 8
      %s472 = scalar_lea.vmem %s0, %s471
      %p473 = pneg %p48
      %p474 = pneg %p45
      %p475 = pneg %p69
      %p476 = pneg %p66
      %p477 = pneg %p90
      %p478 = pneg %p87
      %p479 = pneg %p111
      %p480 = pneg %p108
      %p481 = pneg %p132
      %p482 = pneg %p129
      %p483 = pneg %p153
      %p484 = pneg %p150
      %p485 = pneg %p174
      %p486 = pneg %p171
      %p487 = pneg %p195
      %p488 = pneg %p192
      %p489 = pneg %p216
      %p490 = pneg %p213
      %p491 = pneg %p237
      %p492 = pneg %p234
      %p493 = pneg %p258
      %p494 = pneg %p255
      %p495 = pneg %p279
      %p496 = pneg %p276
      %p497 = pneg %p300
      %p498 = pneg %p297
      %p499 = pneg %p321
      %p500 = pneg %p318
      %p501 = pneg %p342
      %p502 = pneg %p339
      %p503 = pneg %p363
      %p504 = pneg %p360
      %p505 = pneg %p389
      %p506 = pneg %p386
      %p507 = scmp.lt.s32.totalorder %s27, 1
      %s508 = scalar_select %p507, %s27, 1
      %s509 = smul.addr %s508, 32
      %s510 = smul.addr %s509, 8
      %s511 = scalar_lea.vmem %s16, %s510
      %p512 = scmp.lt.s32.totalorder %s27, 1
      %s513 = scalar_select %p512, %s27, 1
      %s514 = smul.addr %s513, 32
      %s515 = smul.addr %s514, 8
      %s516 = scalar_lea.vmem %s0, %s515
      %p517 = scmp.lt.s32.totalorder %s27, 1
      %s518 = scalar_select %p517, %s27, 1
      %s519 = smul.addr %s518, 32
      %s520 = smul.addr %s519, 8
      %s521 = scalar_lea.vmem %s16, %s520
      %v522 = vld [vmem:[%s516] sm:$0xff]
      %v523 = vld [vmem:[%s516 + $0x8] sm:$0xff]
      %v524 = vld [vmem:[%s516 + $0x10] sm:$0xff]
      %v525 = vld [vmem:[%s516 + $0x18] sm:$0xff]
      %v526 = vld [vmem:[%s516 + $0x20] sm:$0xff]
      %v527 = vld [vmem:[%s516 + $0x28] sm:$0xff]
      %v528 = vld [vmem:[%s516 + $0x30] sm:$0xff]
      %v529 = vld [vmem:[%s516 + $0x38] sm:$0xff]
      %v530 = vld [vmem:[%s516 + $0x40] sm:$0xff]
      %v531 = vld [vmem:[%s516 + $0x48] sm:$0xff]
      %v532 = vld [vmem:[%s516 + $0x50] sm:$0xff]
      %v533 = vld [vmem:[%s516 + $0x58] sm:$0xff]
      %v534 = vld [vmem:[%s516 + $0x60] sm:$0xff]
      %v535 = vld [vmem:[%s516 + $0x68] sm:$0xff]
      %v536 = vld [vmem:[%s516 + $0x70] sm:$0xff]
      %v537 = vld [vmem:[%s516 + $0x78] sm:$0xff]
      %v538 = vld [vmem:[%s516 + $0x80] sm:$0xff]
      %v539 = vld [vmem:[%s516 + $0x88] sm:$0xff]
      %v540 = vld [vmem:[%s516 + $0x90] sm:$0xff]
      %v541 = vld [vmem:[%s516 + $0x98] sm:$0xff]
      %v542 = vld [vmem:[%s516 + $0xa0] sm:$0xff]
      %v543 = vld [vmem:[%s516 + $0xa8] sm:$0xff]
      %v544 = vld [vmem:[%s516 + $0xb0] sm:$0xff]
      %v545 = vld [vmem:[%s516 + $0xb8] sm:$0xff]
      %v546 = vld [vmem:[%s516 + $0xc0] sm:$0xff]
      %v547 = vld [vmem:[%s516 + $0xc8] sm:$0xff]
      %v548 = vld [vmem:[%s516 + $0xd0] sm:$0xff]
      %v549 = vld [vmem:[%s516 + $0xd8] sm:$0xff]
      %v550 = vld [vmem:[%s516 + $0xe0] sm:$0xff]
      %v551 = vld [vmem:[%s516 + $0xe8] sm:$0xff]
      %v552 = vld [vmem:[%s516 + $0xf0] sm:$0xff]
      %v553 = vld [vmem:[%s516 + $0xf8] sm:$0xff]
      %vm554 = vcmask 31744
      %555 = vst.msk [vmem:[%s521] sm:$0xff] %vm554, %v522
      %556 = vst.msk [vmem:[%s521 + $0x8] sm:$0xff] %vm554, %v523
      %557 = vst.msk [vmem:[%s521 + $0x10] sm:$0xff] %vm554, %v524
      %558 = vst.msk [vmem:[%s521 + $0x18] sm:$0xff] %vm554, %v525
      %559 = vst.msk [vmem:[%s521 + $0x20] sm:$0xff] %vm554, %v526
      %560 = vst.msk [vmem:[%s521 + $0x28] sm:$0xff] %vm554, %v527
      %561 = vst.msk [vmem:[%s521 + $0x30] sm:$0xff] %vm554, %v528
      %562 = vst.msk [vmem:[%s521 + $0x38] sm:$0xff] %vm554, %v529
      %563 = vst.msk [vmem:[%s521 + $0x40] sm:$0xff] %vm554, %v530
      %564 = vst.msk [vmem:[%s521 + $0x48] sm:$0xff] %vm554, %v531
      %565 = vst.msk [vmem:[%s521 + $0x50] sm:$0xff] %vm554, %v532
      %566 = vst.msk [vmem:[%s521 + $0x58] sm:$0xff] %vm554, %v533
      %567 = vst.msk [vmem:[%s521 + $0x60] sm:$0xff] %vm554, %v534
      %568 = vst.msk [vmem:[%s521 + $0x68] sm:$0xff] %vm554, %v535
      %569 = vst.msk [vmem:[%s521 + $0x70] sm:$0xff] %vm554, %v536
      %570 = vst.msk [vmem:[%s521 + $0x78] sm:$0xff] %vm554, %v537
      %571 = vst.msk [vmem:[%s521 + $0x80] sm:$0xff] %vm554, %v538
      %572 = vst.msk [vmem:[%s521 + $0x88] sm:$0xff] %vm554, %v539
      %573 = vst.msk [vmem:[%s521 + $0x90] sm:$0xff] %vm554, %v540
      %574 = vst.msk [vmem:[%s521 + $0x98] sm:$0xff] %vm554, %v541
      %575 = vst.msk [vmem:[%s521 + $0xa0] sm:$0xff] %vm554, %v542
      %576 = vst.msk [vmem:[%s521 + $0xa8] sm:$0xff] %vm554, %v543
      %577 = vst.msk [vmem:[%s521 + $0xb0] sm:$0xff] %vm554, %v544
      %578 = vst.msk [vmem:[%s521 + $0xb8] sm:$0xff] %vm554, %v545
      %579 = vst.msk [vmem:[%s521 + $0xc0] sm:$0xff] %vm554, %v546
      %580 = vst.msk [vmem:[%s521 + $0xc8] sm:$0xff] %vm554, %v547
      %581 = vst.msk [vmem:[%s521 + $0xd0] sm:$0xff] %vm554, %v548
      %582 = vst.msk [vmem:[%s521 + $0xd8] sm:$0xff] %vm554, %v549
      %583 = vst.msk [vmem:[%s521 + $0xe0] sm:$0xff] %vm554, %v550
      %584 = vst.msk [vmem:[%s521 + $0xe8] sm:$0xff] %vm554, %v551
      %585 = vst.msk [vmem:[%s521 + $0xf0] sm:$0xff] %vm554, %v552
      %586 = vst.msk [vmem:[%s521 + $0xf8] sm:$0xff] %vm554, %v553
      %v587 = vld [vmem:[%s1] sm:$0xff]
      %v588 = vld [vmem:[%s1 + $0x8] sm:$0xff]
      %v589 = vld [vmem:[%s1 + $0x10] sm:$0xff]
      %v590 = vld [vmem:[%s1 + $0x18] sm:$0xff]
      %v591 = vld [vmem:[%s1 + $0x20] sm:$0xff]
      %v592 = vld [vmem:[%s1 + $0x28] sm:$0xff]
      %v593 = vld [vmem:[%s1 + $0x30] sm:$0xff]
      %v594 = vld [vmem:[%s1 + $0x38] sm:$0xff]
      %v595 = vld [vmem:[%s1 + $0x40] sm:$0xff]
      %v596 = vld [vmem:[%s1 + $0x48] sm:$0xff]
      %v597 = vld [vmem:[%s1 + $0x50] sm:$0xff]
      %v598 = vld [vmem:[%s1 + $0x58] sm:$0xff]
      %v599 = vld [vmem:[%s1 + $0x60] sm:$0xff]
      %v600 = vld [vmem:[%s1 + $0x68] sm:$0xff]
      %v601 = vld [vmem:[%s1 + $0x70] sm:$0xff]
      %v602 = vld [vmem:[%s1 + $0x78] sm:$0xff]
      %v603 = vld [vmem:[%s1 + $0x80] sm:$0xff]
      %v604 = vld [vmem:[%s1 + $0x88] sm:$0xff]
      %v605 = vld [vmem:[%s1 + $0x90] sm:$0xff]
      %v606 = vld [vmem:[%s1 + $0x98] sm:$0xff]
      %v607 = vld [vmem:[%s1 + $0xa0] sm:$0xff]
      %v608 = vld [vmem:[%s1 + $0xa8] sm:$0xff]
      %v609 = vld [vmem:[%s1 + $0xb0] sm:$0xff]
      %v610 = vld [vmem:[%s1 + $0xb8] sm:$0xff]
      %v611 = vld [vmem:[%s1 + $0xc0] sm:$0xff]
      %v612 = vld [vmem:[%s1 + $0xc8] sm:$0xff]
      %v613 = vld [vmem:[%s1 + $0xd0] sm:$0xff]
      %v614 = vld [vmem:[%s1 + $0xd8] sm:$0xff]
      %v615 = vld [vmem:[%s1 + $0xe0] sm:$0xff]
      %v616 = vld [vmem:[%s1 + $0xe8] sm:$0xff]
      %v617 = vld [vmem:[%s1 + $0xf0] sm:$0xff]
      %v618 = vld [vmem:[%s1 + $0xf8] sm:$0xff]
      %vm619 = vcmp.ge.s32.totalorder %v587, 1
      %vm620 = vcmp.ge.s32.totalorder %v588, 1
      %vm621 = vcmp.ge.s32.totalorder %v589, 1
      %vm622 = vcmp.ge.s32.totalorder %v590, 1
      %vm623 = vcmp.ge.s32.totalorder %v591, 1
      %vm624 = vcmp.ge.s32.totalorder %v592, 1
      %vm625 = vcmp.ge.s32.totalorder %v593, 1
      %vm626 = vcmp.ge.s32.totalorder %v594, 1
      %vm627 = vcmp.ge.s32.totalorder %v595, 1
      %vm628 = vcmp.ge.s32.totalorder %v596, 1
      %vm629 = vcmp.ge.s32.totalorder %v597, 1
      %vm630 = vcmp.ge.s32.totalorder %v598, 1
      %vm631 = vcmp.ge.s32.totalorder %v599, 1
      %vm632 = vcmp.ge.s32.totalorder %v600, 1
      %vm633 = vcmp.ge.s32.totalorder %v601, 1
      %vm634 = vcmp.ge.s32.totalorder %v602, 1
      %vm635 = vcmp.ge.s32.totalorder %v603, 1
      %vm636 = vcmp.ge.s32.totalorder %v604, 1
      %vm637 = vcmp.ge.s32.totalorder %v605, 1
      %vm638 = vcmp.ge.s32.totalorder %v606, 1
      %vm639 = vcmp.ge.s32.totalorder %v607, 1
      %vm640 = vcmp.ge.s32.totalorder %v608, 1
      %vm641 = vcmp.ge.s32.totalorder %v609, 1
      %vm642 = vcmp.ge.s32.totalorder %v610, 1
      %vm643 = vcmp.ge.s32.totalorder %v611, 1
      %vm644 = vcmp.ge.s32.totalorder %v612, 1
      %vm645 = vcmp.ge.s32.totalorder %v613, 1
      %vm646 = vcmp.ge.s32.totalorder %v614, 1
      %vm647 = vcmp.ge.s32.totalorder %v615, 1
      %vm648 = vcmp.ge.s32.totalorder %v616, 1
      %vm649 = vcmp.ge.s32.totalorder %v617, 1
      %vm650 = vcmp.ge.s32.totalorder %v618, 1
      %vm651 = vcmp.lt.s32.totalorder %v587, 17
      %vm652 = vcmp.lt.s32.totalorder %v588, 17
      %vm653 = vcmp.lt.s32.totalorder %v589, 17
      %vm654 = vcmp.lt.s32.totalorder %v590, 17
      %vm655 = vcmp.lt.s32.totalorder %v591, 17
      %vm656 = vcmp.lt.s32.totalorder %v592, 17
      %vm657 = vcmp.lt.s32.totalorder %v593, 17
      %vm658 = vcmp.lt.s32.totalorder %v594, 17
      %vm659 = vcmp.lt.s32.totalorder %v595, 17
      %vm660 = vcmp.lt.s32.totalorder %v596, 17
      %vm661 = vcmp.lt.s32.totalorder %v597, 17
      %vm662 = vcmp.lt.s32.totalorder %v598, 17
      %vm663 = vcmp.lt.s32.totalorder %v599, 17
      %vm664 = vcmp.lt.s32.totalorder %v600, 17
      %vm665 = vcmp.lt.s32.totalorder %v601, 17
      %vm666 = vcmp.lt.s32.totalorder %v602, 17
      %vm667 = vcmp.lt.s32.totalorder %v603, 17
      %vm668 = vcmp.lt.s32.totalorder %v604, 17
      %vm669 = vcmp.lt.s32.totalorder %v605, 17
      %vm670 = vcmp.lt.s32.totalorder %v606, 17
      %vm671 = vcmp.lt.s32.totalorder %v607, 17
      %vm672 = vcmp.lt.s32.totalorder %v608, 17
      %vm673 = vcmp.lt.s32.totalorder %v609, 17
      %vm674 = vcmp.lt.s32.totalorder %v610, 17
      %vm675 = vcmp.lt.s32.totalorder %v611, 17
      %vm676 = vcmp.lt.s32.totalorder %v612, 17
      %vm677 = vcmp.lt.s32.totalorder %v613, 17
      %vm678 = vcmp.lt.s32.totalorder %v614, 17
      %vm679 = vcmp.lt.s32.totalorder %v615, 17
      %vm680 = vcmp.lt.s32.totalorder %v616, 17
      %vm681 = vcmp.lt.s32.totalorder %v617, 17
      %vm682 = vcmp.lt.s32.totalorder %v618, 17
      %vm683 = vmand %vm619, %vm651
      %vm684 = vmand %vm620, %vm652
      %vm685 = vmand %vm621, %vm653
      %vm686 = vmand %vm622, %vm654
      %vm687 = vmand %vm623, %vm655
      %vm688 = vmand %vm624, %vm656
      %vm689 = vmand %vm625, %vm657
      %vm690 = vmand %vm626, %vm658
      %vm691 = vmand %vm627, %vm659
      %vm692 = vmand %vm628, %vm660
      %vm693 = vmand %vm629, %vm661
      %vm694 = vmand %vm630, %vm662
      %vm695 = vmand %vm631, %vm663
      %vm696 = vmand %vm632, %vm664
      %vm697 = vmand %vm633, %vm665
      %vm698 = vmand %vm634, %vm666
      %vm699 = vmand %vm635, %vm667
      %vm700 = vmand %vm636, %vm668
      %vm701 = vmand %vm637, %vm669
      %vm702 = vmand %vm638, %vm670
      %vm703 = vmand %vm639, %vm671
      %vm704 = vmand %vm640, %vm672
      %vm705 = vmand %vm641, %vm673
      %vm706 = vmand %vm642, %vm674
      %vm707 = vmand %vm643, %vm675
      %vm708 = vmand %vm644, %vm676
      %vm709 = vmand %vm645, %vm677
      %vm710 = vmand %vm646, %vm678
      %vm711 = vmand %vm647, %vm679
      %vm712 = vmand %vm648, %vm680
      %vm713 = vmand %vm649, %vm681
      %vm714 = vmand %vm650, %vm682
      %v715 = vsel %vm683, 1, 0
      %v716 = vsel %vm684, 1, 0
      %v717 = vsel %vm685, 1, 0
      %v718 = vsel %vm686, 1, 0
      %v719 = vsel %vm687, 1, 0
      %v720 = vsel %vm688, 1, 0
      %v721 = vsel %vm689, 1, 0
      %v722 = vsel %vm690, 1, 0
      %v723 = vsel %vm691, 1, 0
      %v724 = vsel %vm692, 1, 0
      %v725 = vsel %vm693, 1, 0
      %v726 = vsel %vm694, 1, 0
      %v727 = vsel %vm695, 1, 0
      %v728 = vsel %vm696, 1, 0
      %v729 = vsel %vm697, 1, 0
      %v730 = vsel %vm698, 1, 0
      %v731 = vsel %vm699, 1, 0
      %v732 = vsel %vm700, 1, 0
      %v733 = vsel %vm701, 1, 0
      %v734 = vsel %vm702, 1, 0
      %v735 = vsel %vm703, 1, 0
      %v736 = vsel %vm704, 1, 0
      %v737 = vsel %vm705, 1, 0
      %v738 = vsel %vm706, 1, 0
      %v739 = vsel %vm707, 1, 0
      %v740 = vsel %vm708, 1, 0
      %v741 = vsel %vm709, 1, 0
      %v742 = vsel %vm710, 1, 0
      %v743 = vsel %vm711, 1, 0
      %v744 = vsel %vm712, 1, 0
      %v745 = vsel %vm713, 1, 0
      %v746 = vsel %vm714, 1, 0
      %747 = vrot.lane.b32.xlu0 %v715, 127
      %v748 = vpop.permute.xlu0 %747
      %749 = vrot.lane.b32.xlu0 %v716, 127
      %v750 = vpop.permute.xlu0 %749
      %751 = vrot.lane.b32.xlu0 %v717, 127
      %v752 = vpop.permute.xlu0 %751
      %753 = vrot.lane.b32.xlu0 %v718, 127
      %v754 = vpop.permute.xlu0 %753
      %755 = vrot.lane.b32.xlu0 %v719, 127
      %v756 = vpop.permute.xlu0 %755
      %757 = vrot.lane.b32.xlu0 %v720, 127
      %v758 = vpop.permute.xlu0 %757
      %759 = vrot.lane.b32.xlu0 %v721, 127
      %v760 = vpop.permute.xlu0 %759
      %761 = vrot.lane.b32.xlu0 %v722, 127
      %v762 = vpop.permute.xlu0 %761
      %763 = vrot.lane.b32.xlu0 %v723, 127
      %v764 = vpop.permute.xlu0 %763
      %765 = vrot.lane.b32.xlu0 %v724, 127
      %v766 = vpop.permute.xlu0 %765
      %767 = vrot.lane.b32.xlu0 %v725, 127
      %v768 = vpop.permute.xlu0 %767
      %769 = vrot.lane.b32.xlu0 %v726, 127
      %v770 = vpop.permute.xlu0 %769
      %771 = vrot.lane.b32.xlu0 %v727, 127
      %v772 = vpop.permute.xlu0 %771
      %773 = vrot.lane.b32.xlu0 %v728, 127
      %v774 = vpop.permute.xlu0 %773
      %775 = vrot.lane.b32.xlu0 %v729, 127
      %v776 = vpop.permute.xlu0 %775
      %777 = vrot.lane.b32.xlu0 %v730, 127
      %v778 = vpop.permute.xlu0 %777
      %779 = vrot.lane.b32.xlu0 %v731, 127
      %v780 = vpop.permute.xlu0 %779
      %781 = vrot.lane.b32.xlu0 %v732, 127
      %v782 = vpop.permute.xlu0 %781
      %783 = vrot.lane.b32.xlu0 %v733, 127
      %v784 = vpop.permute.xlu0 %783
      %785 = vrot.lane.b32.xlu0 %v734, 127
      %v786 = vpop.permute.xlu0 %785
      %787 = vrot.lane.b32.xlu0 %v735, 127
      %v788 = vpop.permute.xlu0 %787
      %789 = vrot.lane.b32.xlu0 %v736, 127
      %v790 = vpop.permute.xlu0 %789
      %791 = vrot.lane.b32.xlu0 %v737, 127
      %v792 = vpop.permute.xlu0 %791
      %793 = vrot.lane.b32.xlu0 %v738, 127
      %v794 = vpop.permute.xlu0 %793
      %795 = vrot.lane.b32.xlu0 %v739, 127
      %v796 = vpop.permute.xlu0 %795
      %797 = vrot.lane.b32.xlu0 %v740, 127
      %v798 = vpop.permute.xlu0 %797
      %799 = vrot.lane.b32.xlu0 %v741, 127
      %v800 = vpop.permute.xlu0 %799
      %801 = vrot.lane.b32.xlu0 %v742, 127
      %v802 = vpop.permute.xlu0 %801
      %803 = vrot.lane.b32.xlu0 %v743, 127
      %v804 = vpop.permute.xlu0 %803
      %805 = vrot.lane.b32.xlu0 %v744, 127
      %v806 = vpop.permute.xlu0 %805
      %807 = vrot.lane.b32.xlu0 %v745, 127
      %v808 = vpop.permute.xlu0 %807
      %809 = vrot.lane.b32.xlu0 %v746, 127
      %v810 = vpop.permute.xlu0 %809
      %vm811 = vcmp.ne.s32.totalorder %v748, 0
      %vm812 = vcmp.ne.s32.totalorder %v750, 0
      %vm813 = vcmp.ne.s32.totalorder %v752, 0
      %vm814 = vcmp.ne.s32.totalorder %v754, 0
      %vm815 = vcmp.ne.s32.totalorder %v756, 0
      %vm816 = vcmp.ne.s32.totalorder %v758, 0
      %vm817 = vcmp.ne.s32.totalorder %v760, 0
      %vm818 = vcmp.ne.s32.totalorder %v762, 0
      %vm819 = vcmp.ne.s32.totalorder %v764, 0
      %vm820 = vcmp.ne.s32.totalorder %v766, 0
      %vm821 = vcmp.ne.s32.totalorder %v768, 0
      %vm822 = vcmp.ne.s32.totalorder %v770, 0
      %vm823 = vcmp.ne.s32.totalorder %v772, 0
      %vm824 = vcmp.ne.s32.totalorder %v774, 0
      %vm825 = vcmp.ne.s32.totalorder %v776, 0
      %vm826 = vcmp.ne.s32.totalorder %v778, 0
      %vm827 = vcmp.ne.s32.totalorder %v780, 0
      %vm828 = vcmp.ne.s32.totalorder %v782, 0
      %vm829 = vcmp.ne.s32.totalorder %v784, 0
      %vm830 = vcmp.ne.s32.totalorder %v786, 0
      %vm831 = vcmp.ne.s32.totalorder %v788, 0
      %vm832 = vcmp.ne.s32.totalorder %v790, 0
      %vm833 = vcmp.ne.s32.totalorder %v792, 0
      %vm834 = vcmp.ne.s32.totalorder %v794, 0
      %vm835 = vcmp.ne.s32.totalorder %v796, 0
      %vm836 = vcmp.ne.s32.totalorder %v798, 0
      %vm837 = vcmp.ne.s32.totalorder %v800, 0
      %vm838 = vcmp.ne.s32.totalorder %v802, 0
      %vm839 = vcmp.ne.s32.totalorder %v804, 0
      %vm840 = vcmp.ne.s32.totalorder %v806, 0
      %vm841 = vcmp.ne.s32.totalorder %v808, 0
      %vm842 = vcmp.ne.s32.totalorder %v810, 0
      %vm843 = vmand %vm683, %vm811
      %vm844 = vmand %vm684, %vm812
      %vm845 = vmand %vm685, %vm813
      %vm846 = vmand %vm686, %vm814
      %vm847 = vmand %vm687, %vm815
      %vm848 = vmand %vm688, %vm816
      %vm849 = vmand %vm689, %vm817
      %vm850 = vmand %vm690, %vm818
      %vm851 = vmand %vm691, %vm819
      %vm852 = vmand %vm692, %vm820
      %vm853 = vmand %vm693, %vm821
      %vm854 = vmand %vm694, %vm822
      %vm855 = vmand %vm695, %vm823
      %vm856 = vmand %vm696, %vm824
      %vm857 = vmand %vm697, %vm825
      %vm858 = vmand %vm698, %vm826
      %vm859 = vmand %vm699, %vm827
      %vm860 = vmand %vm700, %vm828
      %vm861 = vmand %vm701, %vm829
      %vm862 = vmand %vm702, %vm830
      %vm863 = vmand %vm703, %vm831
      %vm864 = vmand %vm704, %vm832
      %vm865 = vmand %vm705, %vm833
      %vm866 = vmand %vm706, %vm834
      %vm867 = vmand %vm707, %vm835
      %vm868 = vmand %vm708, %vm836
      %vm869 = vmand %vm709, %vm837
      %vm870 = vmand %vm710, %vm838
      %vm871 = vmand %vm711, %vm839
      %vm872 = vmand %vm712, %vm840
      %vm873 = vmand %vm713, %vm841
      %vm874 = vmand %vm714, %vm842
      %v875 = vsel %vm843, 1, 0
      %v876 = vsel %vm844, 1, 0
      %v877 = vsel %vm845, 1, 0
      %v878 = vsel %vm846, 1, 0
      %v879 = vsel %vm847, 1, 0
      %v880 = vsel %vm848, 1, 0
      %v881 = vsel %vm849, 1, 0
      %v882 = vsel %vm850, 1, 0
      %v883 = vsel %vm851, 1, 0
      %v884 = vsel %vm852, 1, 0
      %v885 = vsel %vm853, 1, 0
      %v886 = vsel %vm854, 1, 0
      %v887 = vsel %vm855, 1, 0
      %v888 = vsel %vm856, 1, 0
      %v889 = vsel %vm857, 1, 0
      %v890 = vsel %vm858, 1, 0
      %v891 = vsel %vm859, 1, 0
      %v892 = vsel %vm860, 1, 0
      %v893 = vsel %vm861, 1, 0
      %v894 = vsel %vm862, 1, 0
      %v895 = vsel %vm863, 1, 0
      %v896 = vsel %vm864, 1, 0
      %v897 = vsel %vm865, 1, 0
      %v898 = vsel %vm866, 1, 0
      %v899 = vsel %vm867, 1, 0
      %v900 = vsel %vm868, 1, 0
      %v901 = vsel %vm869, 1, 0
      %v902 = vsel %vm870, 1, 0
      %v903 = vsel %vm871, 1, 0
      %v904 = vsel %vm872, 1, 0
      %v905 = vsel %vm873, 1, 0
      %v906 = vsel %vm874, 1, 0
      %v907 = vcvt.s32.f32 %v875
      %v908 = vcvt.s32.f32 %v876
      %v909 = vcvt.s32.f32 %v877
      %v910 = vcvt.s32.f32 %v878
      %v911 = vcvt.s32.f32 %v879
      %v912 = vcvt.s32.f32 %v880
      %v913 = vcvt.s32.f32 %v881
      %v914 = vcvt.s32.f32 %v882
      %v915 = vcvt.s32.f32 %v883
      %v916 = vcvt.s32.f32 %v884
      %v917 = vcvt.s32.f32 %v885
      %v918 = vcvt.s32.f32 %v886
      %v919 = vcvt.s32.f32 %v887
      %v920 = vcvt.s32.f32 %v888
      %v921 = vcvt.s32.f32 %v889
      %v922 = vcvt.s32.f32 %v890
      %v923 = vcvt.s32.f32 %v891
      %v924 = vcvt.s32.f32 %v892
      %v925 = vcvt.s32.f32 %v893
      %v926 = vcvt.s32.f32 %v894
      %v927 = vcvt.s32.f32 %v895
      %v928 = vcvt.s32.f32 %v896
      %v929 = vcvt.s32.f32 %v897
      %v930 = vcvt.s32.f32 %v898
      %v931 = vcvt.s32.f32 %v899
      %v932 = vcvt.s32.f32 %v900
      %v933 = vcvt.s32.f32 %v901
      %v934 = vcvt.s32.f32 %v902
      %v935 = vcvt.s32.f32 %v903
      %v936 = vcvt.s32.f32 %v904
      %v937 = vcvt.s32.f32 %v905
      %v938 = vcvt.s32.f32 %v906
      %vm939 = vcmp.ge.s32.totalorder %v587, 0
      %vm940 = vcmp.ge.s32.totalorder %v588, 0
      %vm941 = vcmp.ge.s32.totalorder %v589, 0
      %vm942 = vcmp.ge.s32.totalorder %v590, 0
      %vm943 = vcmp.ge.s32.totalorder %v591, 0
      %vm944 = vcmp.ge.s32.totalorder %v592, 0
      %vm945 = vcmp.ge.s32.totalorder %v593, 0
      %vm946 = vcmp.ge.s32.totalorder %v594, 0
      %vm947 = vcmp.ge.s32.totalorder %v595, 0
      %vm948 = vcmp.ge.s32.totalorder %v596, 0
      %vm949 = vcmp.ge.s32.totalorder %v597, 0
      %vm950 = vcmp.ge.s32.totalorder %v598, 0
      %vm951 = vcmp.ge.s32.totalorder %v599, 0
      %vm952 = vcmp.ge.s32.totalorder %v600, 0
      %vm953 = vcmp.ge.s32.totalorder %v601, 0
      %vm954 = vcmp.ge.s32.totalorder %v602, 0
      %vm955 = vcmp.ge.s32.totalorder %v603, 0
      %vm956 = vcmp.ge.s32.totalorder %v604, 0
      %vm957 = vcmp.ge.s32.totalorder %v605, 0
      %vm958 = vcmp.ge.s32.totalorder %v606, 0
      %vm959 = vcmp.ge.s32.totalorder %v607, 0
      %vm960 = vcmp.ge.s32.totalorder %v608, 0
      %vm961 = vcmp.ge.s32.totalorder %v609, 0
      %vm962 = vcmp.ge.s32.totalorder %v610, 0
      %vm963 = vcmp.ge.s32.totalorder %v611, 0
      %vm964 = vcmp.ge.s32.totalorder %v612, 0
      %vm965 = vcmp.ge.s32.totalorder %v613, 0
      %vm966 = vcmp.ge.s32.totalorder %v614, 0
      %vm967 = vcmp.ge.s32.totalorder %v615, 0
      %vm968 = vcmp.ge.s32.totalorder %v616, 0
      %vm969 = vcmp.ge.s32.totalorder %v617, 0
      %vm970 = vcmp.ge.s32.totalorder %v618, 0
      %vm971 = vcmp.lt.s32.totalorder %v587, 16
      %vm972 = vcmp.lt.s32.totalorder %v588, 16
      %vm973 = vcmp.lt.s32.totalorder %v589, 16
      %vm974 = vcmp.lt.s32.totalorder %v590, 16
      %vm975 = vcmp.lt.s32.totalorder %v591, 16
      %vm976 = vcmp.lt.s32.totalorder %v592, 16
      %vm977 = vcmp.lt.s32.totalorder %v593, 16
      %vm978 = vcmp.lt.s32.totalorder %v594, 16
      %vm979 = vcmp.lt.s32.totalorder %v595, 16
      %vm980 = vcmp.lt.s32.totalorder %v596, 16
      %vm981 = vcmp.lt.s32.totalorder %v597, 16
      %vm982 = vcmp.lt.s32.totalorder %v598, 16
      %vm983 = vcmp.lt.s32.totalorder %v599, 16
      %vm984 = vcmp.lt.s32.totalorder %v600, 16
      %vm985 = vcmp.lt.s32.totalorder %v601, 16
      %vm986 = vcmp.lt.s32.totalorder %v602, 16
      %vm987 = vcmp.lt.s32.totalorder %v603, 16
      %vm988 = vcmp.lt.s32.totalorder %v604, 16
      %vm989 = vcmp.lt.s32.totalorder %v605, 16
      %vm990 = vcmp.lt.s32.totalorder %v606, 16
      %vm991 = vcmp.lt.s32.totalorder %v607, 16
      %vm992 = vcmp.lt.s32.totalorder %v608, 16
      %vm993 = vcmp.lt.s32.totalorder %v609, 16
      %vm994 = vcmp.lt.s32.totalorder %v610, 16
      %vm995 = vcmp.lt.s32.totalorder %v611, 16
      %vm996 = vcmp.lt.s32.totalorder %v612, 16
      %vm997 = vcmp.lt.s32.totalorder %v613, 16
      %vm998 = vcmp.lt.s32.totalorder %v614, 16
      %vm999 = vcmp.lt.s32.totalorder %v615, 16
      %vm1000 = vcmp.lt.s32.totalorder %v616, 16
      %vm1001 = vcmp.lt.s32.totalorder %v617, 16
      %vm1002 = vcmp.lt.s32.totalorder %v618, 16
      %vm1003 = vmand %vm939, %vm971
      %vm1004 = vmand %vm940, %vm972
      %vm1005 = vmand %vm941, %vm973
      %vm1006 = vmand %vm942, %vm974
      %vm1007 = vmand %vm943, %vm975
      %vm1008 = vmand %vm944, %vm976
      %vm1009 = vmand %vm945, %vm977
      %vm1010 = vmand %vm946, %vm978
      %vm1011 = vmand %vm947, %vm979
      %vm1012 = vmand %vm948, %vm980
      %vm1013 = vmand %vm949, %vm981
      %vm1014 = vmand %vm950, %vm982
      %vm1015 = vmand %vm951, %vm983
      %vm1016 = vmand %vm952, %vm984
      %vm1017 = vmand %vm953, %vm985
      %vm1018 = vmand %vm954, %vm986
      %vm1019 = vmand %vm955, %vm987
      %vm1020 = vmand %vm956, %vm988
      %vm1021 = vmand %vm957, %vm989
      %vm1022 = vmand %vm958, %vm990
      %vm1023 = vmand %vm959, %vm991
      %vm1024 = vmand %vm960, %vm992
      %vm1025 = vmand %vm961, %vm993
      %vm1026 = vmand %vm962, %vm994
      %vm1027 = vmand %vm963, %vm995
      %vm1028 = vmand %vm964, %vm996
      %vm1029 = vmand %vm965, %vm997
      %vm1030 = vmand %vm966, %vm998
      %vm1031 = vmand %vm967, %vm999
      %vm1032 = vmand %vm968, %vm1000
      %vm1033 = vmand %vm969, %vm1001
      %vm1034 = vmand %vm970, %vm1002
      %v1035 = vsel %vm1003, 1, 0
      %v1036 = vsel %vm1004, 1, 0
      %v1037 = vsel %vm1005, 1, 0
      %v1038 = vsel %vm1006, 1, 0
      %v1039 = vsel %vm1007, 1, 0
      %v1040 = vsel %vm1008, 1, 0
      %v1041 = vsel %vm1009, 1, 0
      %v1042 = vsel %vm1010, 1, 0
      %v1043 = vsel %vm1011, 1, 0
      %v1044 = vsel %vm1012, 1, 0
      %v1045 = vsel %vm1013, 1, 0
      %v1046 = vsel %vm1014, 1, 0
      %v1047 = vsel %vm1015, 1, 0
      %v1048 = vsel %vm1016, 1, 0
      %v1049 = vsel %vm1017, 1, 0
      %v1050 = vsel %vm1018, 1, 0
      %v1051 = vsel %vm1019, 1, 0
      %v1052 = vsel %vm1020, 1, 0
      %v1053 = vsel %vm1021, 1, 0
      %v1054 = vsel %vm1022, 1, 0
      %v1055 = vsel %vm1023, 1, 0
      %v1056 = vsel %vm1024, 1, 0
      %v1057 = vsel %vm1025, 1, 0
      %v1058 = vsel %vm1026, 1, 0
      %v1059 = vsel %vm1027, 1, 0
      %v1060 = vsel %vm1028, 1, 0
      %v1061 = vsel %vm1029, 1, 0
      %v1062 = vsel %vm1030, 1, 0
      %v1063 = vsel %vm1031, 1, 0
      %v1064 = vsel %vm1032, 1, 0
      %v1065 = vsel %vm1033, 1, 0
      %v1066 = vsel %vm1034, 1, 0
      %1067 = vrot.lane.b32.xlu0 %v1035, 127
      %v1068 = vpop.permute.xlu0 %1067
      %1069 = vrot.lane.b32.xlu0 %v1036, 127
      %v1070 = vpop.permute.xlu0 %1069
      %1071 = vrot.lane.b32.xlu0 %v1037, 127
      %v1072 = vpop.permute.xlu0 %1071
      %1073 = vrot.lane.b32.xlu0 %v1038, 127
      %v1074 = vpop.permute.xlu0 %1073
      %1075 = vrot.lane.b32.xlu0 %v1039, 127
      %v1076 = vpop.permute.xlu0 %1075
      %1077 = vrot.lane.b32.xlu0 %v1040, 127
      %v1078 = vpop.permute.xlu0 %1077
      %1079 = vrot.lane.b32.xlu0 %v1041, 127
      %v1080 = vpop.permute.xlu0 %1079
      %1081 = vrot.lane.b32.xlu0 %v1042, 127
      %v1082 = vpop.permute.xlu0 %1081
      %1083 = vrot.lane.b32.xlu0 %v1043, 127
      %v1084 = vpop.permute.xlu0 %1083
      %1085 = vrot.lane.b32.xlu0 %v1044, 127
      %v1086 = vpop.permute.xlu0 %1085
      %1087 = vrot.lane.b32.xlu0 %v1045, 127
      %v1088 = vpop.permute.xlu0 %1087
      %1089 = vrot.lane.b32.xlu0 %v1046, 127
      %v1090 = vpop.permute.xlu0 %1089
      %1091 = vrot.lane.b32.xlu0 %v1047, 127
      %v1092 = vpop.permute.xlu0 %1091
      %1093 = vrot.lane.b32.xlu0 %v1048, 127
      %v1094 = vpop.permute.xlu0 %1093
      %1095 = vrot.lane.b32.xlu0 %v1049, 127
      %v1096 = vpop.permute.xlu0 %1095
      %1097 = vrot.lane.b32.xlu0 %v1050, 127
      %v1098 = vpop.permute.xlu0 %1097
      %1099 = vrot.lane.b32.xlu0 %v1051, 127
      %v1100 = vpop.permute.xlu0 %1099
      %1101 = vrot.lane.b32.xlu0 %v1052, 127
      %v1102 = vpop.permute.xlu0 %1101
      %1103 = vrot.lane.b32.xlu0 %v1053, 127
      %v1104 = vpop.permute.xlu0 %1103
      %1105 = vrot.lane.b32.xlu0 %v1054, 127
      %v1106 = vpop.permute.xlu0 %1105
      %1107 = vrot.lane.b32.xlu0 %v1055, 127
      %v1108 = vpop.permute.xlu0 %1107
      %1109 = vrot.lane.b32.xlu0 %v1056, 127
      %v1110 = vpop.permute.xlu0 %1109
      %1111 = vrot.lane.b32.xlu0 %v1057, 127
      %v1112 = vpop.permute.xlu0 %1111
      %1113 = vrot.lane.b32.xlu0 %v1058, 127
      %v1114 = vpop.permute.xlu0 %1113
      %1115 = vrot.lane.b32.xlu0 %v1059, 127
      %v1116 = vpop.permute.xlu0 %1115
      %1117 = vrot.lane.b32.xlu0 %v1060, 127
      %v1118 = vpop.permute.xlu0 %1117
      %1119 = vrot.lane.b32.xlu0 %v1061, 127
      %v1120 = vpop.permute.xlu0 %1119
      %1121 = vrot.lane.b32.xlu0 %v1062, 127
      %v1122 = vpop.permute.xlu0 %1121
      %1123 = vrot.lane.b32.xlu0 %v1063, 127
      %v1124 = vpop.permute.xlu0 %1123
      %1125 = vrot.lane.b32.xlu0 %v1064, 127
      %v1126 = vpop.permute.xlu0 %1125
      %1127 = vrot.lane.b32.xlu0 %v1065, 127
      %v1128 = vpop.permute.xlu0 %1127
      %1129 = vrot.lane.b32.xlu0 %v1066, 127
      %v1130 = vpop.permute.xlu0 %1129
      %vm1131 = vcmp.ne.s32.totalorder %v1068, 0
      %vm1132 = vcmp.ne.s32.totalorder %v1070, 0
      %vm1133 = vcmp.ne.s32.totalorder %v1072, 0
      %vm1134 = vcmp.ne.s32.totalorder %v1074, 0
      %vm1135 = vcmp.ne.s32.totalorder %v1076, 0
      %vm1136 = vcmp.ne.s32.totalorder %v1078, 0
      %vm1137 = vcmp.ne.s32.totalorder %v1080, 0
      %vm1138 = vcmp.ne.s32.totalorder %v1082, 0
      %vm1139 = vcmp.ne.s32.totalorder %v1084, 0
      %vm1140 = vcmp.ne.s32.totalorder %v1086, 0
      %vm1141 = vcmp.ne.s32.totalorder %v1088, 0
      %vm1142 = vcmp.ne.s32.totalorder %v1090, 0
      %vm1143 = vcmp.ne.s32.totalorder %v1092, 0
      %vm1144 = vcmp.ne.s32.totalorder %v1094, 0
      %vm1145 = vcmp.ne.s32.totalorder %v1096, 0
      %vm1146 = vcmp.ne.s32.totalorder %v1098, 0
      %vm1147 = vcmp.ne.s32.totalorder %v1100, 0
      %vm1148 = vcmp.ne.s32.totalorder %v1102, 0
      %vm1149 = vcmp.ne.s32.totalorder %v1104, 0
      %vm1150 = vcmp.ne.s32.totalorder %v1106, 0
      %vm1151 = vcmp.ne.s32.totalorder %v1108, 0
      %vm1152 = vcmp.ne.s32.totalorder %v1110, 0
      %vm1153 = vcmp.ne.s32.totalorder %v1112, 0
      %vm1154 = vcmp.ne.s32.totalorder %v1114, 0
      %vm1155 = vcmp.ne.s32.totalorder %v1116, 0
      %vm1156 = vcmp.ne.s32.totalorder %v1118, 0
      %vm1157 = vcmp.ne.s32.totalorder %v1120, 0
      %vm1158 = vcmp.ne.s32.totalorder %v1122, 0
      %vm1159 = vcmp.ne.s32.totalorder %v1124, 0
      %vm1160 = vcmp.ne.s32.totalorder %v1126, 0
      %vm1161 = vcmp.ne.s32.totalorder %v1128, 0
      %vm1162 = vcmp.ne.s32.totalorder %v1130, 0
      %vm1163 = vmand %vm683, %vm1131
      %vm1164 = vmand %vm684, %vm1132
      %vm1165 = vmand %vm685, %vm1133
      %vm1166 = vmand %vm686, %vm1134
      %vm1167 = vmand %vm687, %vm1135
      %vm1168 = vmand %vm688, %vm1136
      %vm1169 = vmand %vm689, %vm1137
      %vm1170 = vmand %vm690, %vm1138
      %vm1171 = vmand %vm691, %vm1139
      %vm1172 = vmand %vm692, %vm1140
      %vm1173 = vmand %vm693, %vm1141
      %vm1174 = vmand %vm694, %vm1142
      %vm1175 = vmand %vm695, %vm1143
      %vm1176 = vmand %vm696, %vm1144
      %vm1177 = vmand %vm697, %vm1145
      %vm1178 = vmand %vm698, %vm1146
      %vm1179 = vmand %vm699, %vm1147
      %vm1180 = vmand %vm700, %vm1148
      %vm1181 = vmand %vm701, %vm1149
      %vm1182 = vmand %vm702, %vm1150
      %vm1183 = vmand %vm703, %vm1151
      %vm1184 = vmand %vm704, %vm1152
      %vm1185 = vmand %vm705, %vm1153
      %vm1186 = vmand %vm706, %vm1154
      %vm1187 = vmand %vm707, %vm1155
      %vm1188 = vmand %vm708, %vm1156
      %vm1189 = vmand %vm709, %vm1157
      %vm1190 = vmand %vm710, %vm1158
      %vm1191 = vmand %vm711, %vm1159
      %vm1192 = vmand %vm712, %vm1160
      %vm1193 = vmand %vm713, %vm1161
      %vm1194 = vmand %vm714, %vm1162
      %v1195 = vsel %vm1163, 1, 0
      %v1196 = vsel %vm1164, 1, 0
      %v1197 = vsel %vm1165, 1, 0
      %v1198 = vsel %vm1166, 1, 0
      %v1199 = vsel %vm1167, 1, 0
      %v1200 = vsel %vm1168, 1, 0
      %v1201 = vsel %vm1169, 1, 0
      %v1202 = vsel %vm1170, 1, 0
      %v1203 = vsel %vm1171, 1, 0
      %v1204 = vsel %vm1172, 1, 0
      %v1205 = vsel %vm1173, 1, 0
      %v1206 = vsel %vm1174, 1, 0
      %v1207 = vsel %vm1175, 1, 0
      %v1208 = vsel %vm1176, 1, 0
      %v1209 = vsel %vm1177, 1, 0
      %v1210 = vsel %vm1178, 1, 0
      %v1211 = vsel %vm1179, 1, 0
      %v1212 = vsel %vm1180, 1, 0
      %v1213 = vsel %vm1181, 1, 0
      %v1214 = vsel %vm1182, 1, 0
      %v1215 = vsel %vm1183, 1, 0
      %v1216 = vsel %vm1184, 1, 0
      %v1217 = vsel %vm1185, 1, 0
      %v1218 = vsel %vm1186, 1, 0
      %v1219 = vsel %vm1187, 1, 0
      %v1220 = vsel %vm1188, 1, 0
      %v1221 = vsel %vm1189, 1, 0
      %v1222 = vsel %vm1190, 1, 0
      %v1223 = vsel %vm1191, 1, 0
      %v1224 = vsel %vm1192, 1, 0
      %v1225 = vsel %vm1193, 1, 0
      %v1226 = vsel %vm1194, 1, 0
      %v1227 = vcvt.s32.f32 %v1195
      %v1228 = vcvt.s32.f32 %v1196
      %v1229 = vcvt.s32.f32 %v1197
      %v1230 = vcvt.s32.f32 %v1198
      %v1231 = vcvt.s32.f32 %v1199
      %v1232 = vcvt.s32.f32 %v1200
      %v1233 = vcvt.s32.f32 %v1201
      %v1234 = vcvt.s32.f32 %v1202
      %v1235 = vcvt.s32.f32 %v1203
      %v1236 = vcvt.s32.f32 %v1204
      %v1237 = vcvt.s32.f32 %v1205
      %v1238 = vcvt.s32.f32 %v1206
      %v1239 = vcvt.s32.f32 %v1207
      %v1240 = vcvt.s32.f32 %v1208
      %v1241 = vcvt.s32.f32 %v1209
      %v1242 = vcvt.s32.f32 %v1210
      %v1243 = vcvt.s32.f32 %v1211
      %v1244 = vcvt.s32.f32 %v1212
      %v1245 = vcvt.s32.f32 %v1213
      %v1246 = vcvt.s32.f32 %v1214
      %v1247 = vcvt.s32.f32 %v1215
      %v1248 = vcvt.s32.f32 %v1216
      %v1249 = vcvt.s32.f32 %v1217
      %v1250 = vcvt.s32.f32 %v1218
      %v1251 = vcvt.s32.f32 %v1219
      %v1252 = vcvt.s32.f32 %v1220
      %v1253 = vcvt.s32.f32 %v1221
      %v1254 = vcvt.s32.f32 %v1222
      %v1255 = vcvt.s32.f32 %v1223
      %v1256 = vcvt.s32.f32 %v1224
      %v1257 = vcvt.s32.f32 %v1225
      %v1258 = vcvt.s32.f32 %v1226
      %vm1259 = vcmp.ge.s32.totalorder %v587, 4294967295
      %vm1260 = vcmp.ge.s32.totalorder %v588, 4294967295
      %vm1261 = vcmp.ge.s32.totalorder %v589, 4294967295
      %vm1262 = vcmp.ge.s32.totalorder %v590, 4294967295
      %vm1263 = vcmp.ge.s32.totalorder %v591, 4294967295
      %vm1264 = vcmp.ge.s32.totalorder %v592, 4294967295
      %vm1265 = vcmp.ge.s32.totalorder %v593, 4294967295
      %vm1266 = vcmp.ge.s32.totalorder %v594, 4294967295
      %vm1267 = vcmp.ge.s32.totalorder %v595, 4294967295
      %vm1268 = vcmp.ge.s32.totalorder %v596, 4294967295
      %vm1269 = vcmp.ge.s32.totalorder %v597, 4294967295
      %vm1270 = vcmp.ge.s32.totalorder %v598, 4294967295
      %vm1271 = vcmp.ge.s32.totalorder %v599, 4294967295
      %vm1272 = vcmp.ge.s32.totalorder %v600, 4294967295
      %vm1273 = vcmp.ge.s32.totalorder %v601, 4294967295
      %vm1274 = vcmp.ge.s32.totalorder %v602, 4294967295
      %vm1275 = vcmp.ge.s32.totalorder %v603, 4294967295
      %vm1276 = vcmp.ge.s32.totalorder %v604, 4294967295
      %vm1277 = vcmp.ge.s32.totalorder %v605, 4294967295
      %vm1278 = vcmp.ge.s32.totalorder %v606, 4294967295
      %vm1279 = vcmp.ge.s32.totalorder %v607, 4294967295
      %vm1280 = vcmp.ge.s32.totalorder %v608, 4294967295
      %vm1281 = vcmp.ge.s32.totalorder %v609, 4294967295
      %vm1282 = vcmp.ge.s32.totalorder %v610, 4294967295
      %vm1283 = vcmp.ge.s32.totalorder %v611, 4294967295
      %vm1284 = vcmp.ge.s32.totalorder %v612, 4294967295
      %vm1285 = vcmp.ge.s32.totalorder %v613, 4294967295
      %vm1286 = vcmp.ge.s32.totalorder %v614, 4294967295
      %vm1287 = vcmp.ge.s32.totalorder %v615, 4294967295
      %vm1288 = vcmp.ge.s32.totalorder %v616, 4294967295
      %vm1289 = vcmp.ge.s32.totalorder %v617, 4294967295
      %vm1290 = vcmp.ge.s32.totalorder %v618, 4294967295
      %vm1291 = vcmp.lt.s32.totalorder %v587, 15
      %vm1292 = vcmp.lt.s32.totalorder %v588, 15
      %vm1293 = vcmp.lt.s32.totalorder %v589, 15
      %vm1294 = vcmp.lt.s32.totalorder %v590, 15
      %vm1295 = vcmp.lt.s32.totalorder %v591, 15
      %vm1296 = vcmp.lt.s32.totalorder %v592, 15
      %vm1297 = vcmp.lt.s32.totalorder %v593, 15
      %vm1298 = vcmp.lt.s32.totalorder %v594, 15
      %vm1299 = vcmp.lt.s32.totalorder %v595, 15
      %vm1300 = vcmp.lt.s32.totalorder %v596, 15
      %vm1301 = vcmp.lt.s32.totalorder %v597, 15
      %vm1302 = vcmp.lt.s32.totalorder %v598, 15
      %vm1303 = vcmp.lt.s32.totalorder %v599, 15
      %vm1304 = vcmp.lt.s32.totalorder %v600, 15
      %vm1305 = vcmp.lt.s32.totalorder %v601, 15
      %vm1306 = vcmp.lt.s32.totalorder %v602, 15
      %vm1307 = vcmp.lt.s32.totalorder %v603, 15
      %vm1308 = vcmp.lt.s32.totalorder %v604, 15
      %vm1309 = vcmp.lt.s32.totalorder %v605, 15
      %vm1310 = vcmp.lt.s32.totalorder %v606, 15
      %vm1311 = vcmp.lt.s32.totalorder %v607, 15
      %vm1312 = vcmp.lt.s32.totalorder %v608, 15
      %vm1313 = vcmp.lt.s32.totalorder %v609, 15
      %vm1314 = vcmp.lt.s32.totalorder %v610, 15
      %vm1315 = vcmp.lt.s32.totalorder %v611, 15
      %vm1316 = vcmp.lt.s32.totalorder %v612, 15
      %vm1317 = vcmp.lt.s32.totalorder %v613, 15
      %vm1318 = vcmp.lt.s32.totalorder %v614, 15
      %vm1319 = vcmp.lt.s32.totalorder %v615, 15
      %vm1320 = vcmp.lt.s32.totalorder %v616, 15
      %vm1321 = vcmp.lt.s32.totalorder %v617, 15
      %vm1322 = vcmp.lt.s32.totalorder %v618, 15
      %vm1323 = vmand %vm1259, %vm1291
      %vm1324 = vmand %vm1260, %vm1292
      %vm1325 = vmand %vm1261, %vm1293
      %vm1326 = vmand %vm1262, %vm1294
      %vm1327 = vmand %vm1263, %vm1295
      %vm1328 = vmand %vm1264, %vm1296
      %vm1329 = vmand %vm1265, %vm1297
      %vm1330 = vmand %vm1266, %vm1298
      %vm1331 = vmand %vm1267, %vm1299
      %vm1332 = vmand %vm1268, %vm1300
      %vm1333 = vmand %vm1269, %vm1301
      %vm1334 = vmand %vm1270, %vm1302
      %vm1335 = vmand %vm1271, %vm1303
      %vm1336 = vmand %vm1272, %vm1304
      %vm1337 = vmand %vm1273, %vm1305
      %vm1338 = vmand %vm1274, %vm1306
      %vm1339 = vmand %vm1275, %vm1307
      %vm1340 = vmand %vm1276, %vm1308
      %vm1341 = vmand %vm1277, %vm1309
      %vm1342 = vmand %vm1278, %vm1310
      %vm1343 = vmand %vm1279, %vm1311
      %vm1344 = vmand %vm1280, %vm1312
      %vm1345 = vmand %vm1281, %vm1313
      %vm1346 = vmand %vm1282, %vm1314
      %vm1347 = vmand %vm1283, %vm1315
      %vm1348 = vmand %vm1284, %vm1316
      %vm1349 = vmand %vm1285, %vm1317
      %vm1350 = vmand %vm1286, %vm1318
      %vm1351 = vmand %vm1287, %vm1319
      %vm1352 = vmand %vm1288, %vm1320
      %vm1353 = vmand %vm1289, %vm1321
      %vm1354 = vmand %vm1290, %vm1322
      %v1355 = vsel %vm1323, 1, 0
      %v1356 = vsel %vm1324, 1, 0
      %v1357 = vsel %vm1325, 1, 0
      %v1358 = vsel %vm1326, 1, 0
      %v1359 = vsel %vm1327, 1, 0
      %v1360 = vsel %vm1328, 1, 0
      %v1361 = vsel %vm1329, 1, 0
      %v1362 = vsel %vm1330, 1, 0
      %v1363 = vsel %vm1331, 1, 0
      %v1364 = vsel %vm1332, 1, 0
      %v1365 = vsel %vm1333, 1, 0
      %v1366 = vsel %vm1334, 1, 0
      %v1367 = vsel %vm1335, 1, 0
      %v1368 = vsel %vm1336, 1, 0
      %v1369 = vsel %vm1337, 1, 0
      %v1370 = vsel %vm1338, 1, 0
      %v1371 = vsel %vm1339, 1, 0
      %v1372 = vsel %vm1340, 1, 0
      %v1373 = vsel %vm1341, 1, 0
      %v1374 = vsel %vm1342, 1, 0
      %v1375 = vsel %vm1343, 1, 0
      %v1376 = vsel %vm1344, 1, 0
      %v1377 = vsel %vm1345, 1, 0
      %v1378 = vsel %vm1346, 1, 0
      %v1379 = vsel %vm1347, 1, 0
      %v1380 = vsel %vm1348, 1, 0
      %v1381 = vsel %vm1349, 1, 0
      %v1382 = vsel %vm1350, 1, 0
      %v1383 = vsel %vm1351, 1, 0
      %v1384 = vsel %vm1352, 1, 0
      %v1385 = vsel %vm1353, 1, 0
      %v1386 = vsel %vm1354, 1, 0
      %1387 = vrot.lane.b32.xlu0 %v1355, 127
      %v1388 = vpop.permute.xlu0 %1387
      %1389 = vrot.lane.b32.xlu0 %v1356, 127
      %v1390 = vpop.permute.xlu0 %1389
      %1391 = vrot.lane.b32.xlu0 %v1357, 127
      %v1392 = vpop.permute.xlu0 %1391
      %1393 = vrot.lane.b32.xlu0 %v1358, 127
      %v1394 = vpop.permute.xlu0 %1393
      %1395 = vrot.lane.b32.xlu0 %v1359, 127
      %v1396 = vpop.permute.xlu0 %1395
      %1397 = vrot.lane.b32.xlu0 %v1360, 127
      %v1398 = vpop.permute.xlu0 %1397
      %1399 = vrot.lane.b32.xlu0 %v1361, 127
      %v1400 = vpop.permute.xlu0 %1399
      %1401 = vrot.lane.b32.xlu0 %v1362, 127
      %v1402 = vpop.permute.xlu0 %1401
      %1403 = vrot.lane.b32.xlu0 %v1363, 127
      %v1404 = vpop.permute.xlu0 %1403
      %1405 = vrot.lane.b32.xlu0 %v1364, 127
      %v1406 = vpop.permute.xlu0 %1405
      %1407 = vrot.lane.b32.xlu0 %v1365, 127
      %v1408 = vpop.permute.xlu0 %1407
      %1409 = vrot.lane.b32.xlu0 %v1366, 127
      %v1410 = vpop.permute.xlu0 %1409
      %1411 = vrot.lane.b32.xlu0 %v1367, 127
      %v1412 = vpop.permute.xlu0 %1411
      %1413 = vrot.lane.b32.xlu0 %v1368, 127
      %v1414 = vpop.permute.xlu0 %1413
      %1415 = vrot.lane.b32.xlu0 %v1369, 127
      %v1416 = vpop.permute.xlu0 %1415
      %1417 = vrot.lane.b32.xlu0 %v1370, 127
      %v1418 = vpop.permute.xlu0 %1417
      %1419 = vrot.lane.b32.xlu0 %v1371, 127
      %v1420 = vpop.permute.xlu0 %1419
      %1421 = vrot.lane.b32.xlu0 %v1372, 127
      %v1422 = vpop.permute.xlu0 %1421
      %1423 = vrot.lane.b32.xlu0 %v1373, 127
      %v1424 = vpop.permute.xlu0 %1423
      %1425 = vrot.lane.b32.xlu0 %v1374, 127
      %v1426 = vpop.permute.xlu0 %1425
      %1427 = vrot.lane.b32.xlu0 %v1375, 127
      %v1428 = vpop.permute.xlu0 %1427
      %1429 = vrot.lane.b32.xlu0 %v1376, 127
      %v1430 = vpop.permute.xlu0 %1429
      %1431 = vrot.lane.b32.xlu0 %v1377, 127
      %v1432 = vpop.permute.xlu0 %1431
      %1433 = vrot.lane.b32.xlu0 %v1378, 127
      %v1434 = vpop.permute.xlu0 %1433
      %1435 = vrot.lane.b32.xlu0 %v1379, 127
      %v1436 = vpop.permute.xlu0 %1435
      %1437 = vrot.lane.b32.xlu0 %v1380, 127
      %v1438 = vpop.permute.xlu0 %1437
      %1439 = vrot.lane.b32.xlu0 %v1381, 127
      %v1440 = vpop.permute.xlu0 %1439
      %1441 = vrot.lane.b32.xlu0 %v1382, 127
      %v1442 = vpop.permute.xlu0 %1441
      %1443 = vrot.lane.b32.xlu0 %v1383, 127
      %v1444 = vpop.permute.xlu0 %1443
      %1445 = vrot.lane.b32.xlu0 %v1384, 127
      %v1446 = vpop.permute.xlu0 %1445
      %1447 = vrot.lane.b32.xlu0 %v1385, 127
      %v1448 = vpop.permute.xlu0 %1447
      %1449 = vrot.lane.b32.xlu0 %v1386, 127
      %v1450 = vpop.permute.xlu0 %1449
      %vm1451 = vcmp.ne.s32.totalorder %v1388, 0
      %vm1452 = vcmp.ne.s32.totalorder %v1390, 0
      %vm1453 = vcmp.ne.s32.totalorder %v1392, 0
      %vm1454 = vcmp.ne.s32.totalorder %v1394, 0
      %vm1455 = vcmp.ne.s32.totalorder %v1396, 0
      %vm1456 = vcmp.ne.s32.totalorder %v1398, 0
      %vm1457 = vcmp.ne.s32.totalorder %v1400, 0
      %vm1458 = vcmp.ne.s32.totalorder %v1402, 0
      %vm1459 = vcmp.ne.s32.totalorder %v1404, 0
      %vm1460 = vcmp.ne.s32.totalorder %v1406, 0
      %vm1461 = vcmp.ne.s32.totalorder %v1408, 0
      %vm1462 = vcmp.ne.s32.totalorder %v1410, 0
      %vm1463 = vcmp.ne.s32.totalorder %v1412, 0
      %vm1464 = vcmp.ne.s32.totalorder %v1414, 0
      %vm1465 = vcmp.ne.s32.totalorder %v1416, 0
      %vm1466 = vcmp.ne.s32.totalorder %v1418, 0
      %vm1467 = vcmp.ne.s32.totalorder %v1420, 0
      %vm1468 = vcmp.ne.s32.totalorder %v1422, 0
      %vm1469 = vcmp.ne.s32.totalorder %v1424, 0
      %vm1470 = vcmp.ne.s32.totalorder %v1426, 0
      %vm1471 = vcmp.ne.s32.totalorder %v1428, 0
      %vm1472 = vcmp.ne.s32.totalorder %v1430, 0
      %vm1473 = vcmp.ne.s32.totalorder %v1432, 0
      %vm1474 = vcmp.ne.s32.totalorder %v1434, 0
      %vm1475 = vcmp.ne.s32.totalorder %v1436, 0
      %vm1476 = vcmp.ne.s32.totalorder %v1438, 0
      %vm1477 = vcmp.ne.s32.totalorder %v1440, 0
      %vm1478 = vcmp.ne.s32.totalorder %v1442, 0
      %vm1479 = vcmp.ne.s32.totalorder %v1444, 0
      %vm1480 = vcmp.ne.s32.totalorder %v1446, 0
      %vm1481 = vcmp.ne.s32.totalorder %v1448, 0
      %vm1482 = vcmp.ne.s32.totalorder %v1450, 0
      %vm1483 = vmand %vm683, %vm1451
      %vm1484 = vmand %vm684, %vm1452
      %vm1485 = vmand %vm685, %vm1453
      %vm1486 = vmand %vm686, %vm1454
      %vm1487 = vmand %vm687, %vm1455
      %vm1488 = vmand %vm688, %vm1456
      %vm1489 = vmand %vm689, %vm1457
      %vm1490 = vmand %vm690, %vm1458
      %vm1491 = vmand %vm691, %vm1459
      %vm1492 = vmand %vm692, %vm1460
      %vm1493 = vmand %vm693, %vm1461
      %vm1494 = vmand %vm694, %vm1462
      %vm1495 = vmand %vm695, %vm1463
      %vm1496 = vmand %vm696, %vm1464
      %vm1497 = vmand %vm697, %vm1465
      %vm1498 = vmand %vm698, %vm1466
      %vm1499 = vmand %vm699, %vm1467
      %vm1500 = vmand %vm700, %vm1468
      %vm1501 = vmand %vm701, %vm1469
      %vm1502 = vmand %vm702, %vm1470
      %vm1503 = vmand %vm703, %vm1471
      %vm1504 = vmand %vm704, %vm1472
      %vm1505 = vmand %vm705, %vm1473
      %vm1506 = vmand %vm706, %vm1474
      %vm1507 = vmand %vm707, %vm1475
      %vm1508 = vmand %vm708, %vm1476
      %vm1509 = vmand %vm709, %vm1477
      %vm1510 = vmand %vm710, %vm1478
      %vm1511 = vmand %vm711, %vm1479
      %vm1512 = vmand %vm712, %vm1480
      %vm1513 = vmand %vm713, %vm1481
      %vm1514 = vmand %vm714, %vm1482
      %v1515 = vsel %vm1483, 1, 0
      %v1516 = vsel %vm1484, 1, 0
      %v1517 = vsel %vm1485, 1, 0
      %v1518 = vsel %vm1486, 1, 0
      %v1519 = vsel %vm1487, 1, 0
      %v1520 = vsel %vm1488, 1, 0
      %v1521 = vsel %vm1489, 1, 0
      %v1522 = vsel %vm1490, 1, 0
      %v1523 = vsel %vm1491, 1, 0
      %v1524 = vsel %vm1492, 1, 0
      %v1525 = vsel %vm1493, 1, 0
      %v1526 = vsel %vm1494, 1, 0
      %v1527 = vsel %vm1495, 1, 0
      %v1528 = vsel %vm1496, 1, 0
      %v1529 = vsel %vm1497, 1, 0
      %v1530 = vsel %vm1498, 1, 0
      %v1531 = vsel %vm1499, 1, 0
      %v1532 = vsel %vm1500, 1, 0
      %v1533 = vsel %vm1501, 1, 0
      %v1534 = vsel %vm1502, 1, 0
      %v1535 = vsel %vm1503, 1, 0
      %v1536 = vsel %vm1504, 1, 0
      %v1537 = vsel %vm1505, 1, 0
      %v1538 = vsel %vm1506, 1, 0
      %v1539 = vsel %vm1507, 1, 0
      %v1540 = vsel %vm1508, 1, 0
      %v1541 = vsel %vm1509, 1, 0
      %v1542 = vsel %vm1510, 1, 0
      %v1543 = vsel %vm1511, 1, 0
      %v1544 = vsel %vm1512, 1, 0
      %v1545 = vsel %vm1513, 1, 0
      %v1546 = vsel %vm1514, 1, 0
      %v1547 = vcvt.s32.f32 %v1515
      %v1548 = vcvt.s32.f32 %v1516
      %v1549 = vcvt.s32.f32 %v1517
      %v1550 = vcvt.s32.f32 %v1518
      %v1551 = vcvt.s32.f32 %v1519
      %v1552 = vcvt.s32.f32 %v1520
      %v1553 = vcvt.s32.f32 %v1521
      %v1554 = vcvt.s32.f32 %v1522
      %v1555 = vcvt.s32.f32 %v1523
      %v1556 = vcvt.s32.f32 %v1524
      %v1557 = vcvt.s32.f32 %v1525
      %v1558 = vcvt.s32.f32 %v1526
      %v1559 = vcvt.s32.f32 %v1527
      %v1560 = vcvt.s32.f32 %v1528
      %v1561 = vcvt.s32.f32 %v1529
      %v1562 = vcvt.s32.f32 %v1530
      %v1563 = vcvt.s32.f32 %v1531
      %v1564 = vcvt.s32.f32 %v1532
      %v1565 = vcvt.s32.f32 %v1533
      %v1566 = vcvt.s32.f32 %v1534
      %v1567 = vcvt.s32.f32 %v1535
      %v1568 = vcvt.s32.f32 %v1536
      %v1569 = vcvt.s32.f32 %v1537
      %v1570 = vcvt.s32.f32 %v1538
      %v1571 = vcvt.s32.f32 %v1539
      %v1572 = vcvt.s32.f32 %v1540
      %v1573 = vcvt.s32.f32 %v1541
      %v1574 = vcvt.s32.f32 %v1542
      %v1575 = vcvt.s32.f32 %v1543
      %v1576 = vcvt.s32.f32 %v1544
      %v1577 = vcvt.s32.f32 %v1545
      %v1578 = vcvt.s32.f32 %v1546
      %vm1579 = vmand %vm1003, %vm811
      %vm1580 = vmand %vm1004, %vm812
      %vm1581 = vmand %vm1005, %vm813
      %vm1582 = vmand %vm1006, %vm814
      %vm1583 = vmand %vm1007, %vm815
      %vm1584 = vmand %vm1008, %vm816
      %vm1585 = vmand %vm1009, %vm817
      %vm1586 = vmand %vm1010, %vm818
      %vm1587 = vmand %vm1011, %vm819
      %vm1588 = vmand %vm1012, %vm820
      %vm1589 = vmand %vm1013, %vm821
      %vm1590 = vmand %vm1014, %vm822
      %vm1591 = vmand %vm1015, %vm823
      %vm1592 = vmand %vm1016, %vm824
      %vm1593 = vmand %vm1017, %vm825
      %vm1594 = vmand %vm1018, %vm826
      %vm1595 = vmand %vm1019, %vm827
      %vm1596 = vmand %vm1020, %vm828
      %vm1597 = vmand %vm1021, %vm829
      %vm1598 = vmand %vm1022, %vm830
      %vm1599 = vmand %vm1023, %vm831
      %vm1600 = vmand %vm1024, %vm832
      %vm1601 = vmand %vm1025, %vm833
      %vm1602 = vmand %vm1026, %vm834
      %vm1603 = vmand %vm1027, %vm835
      %vm1604 = vmand %vm1028, %vm836
      %vm1605 = vmand %vm1029, %vm837
      %vm1606 = vmand %vm1030, %vm838
      %vm1607 = vmand %vm1031, %vm839
      %vm1608 = vmand %vm1032, %vm840
      %vm1609 = vmand %vm1033, %vm841
      %vm1610 = vmand %vm1034, %vm842
      %v1611 = vsel %vm1579, 1, 0
      %v1612 = vsel %vm1580, 1, 0
      %v1613 = vsel %vm1581, 1, 0
      %v1614 = vsel %vm1582, 1, 0
      %v1615 = vsel %vm1583, 1, 0
      %v1616 = vsel %vm1584, 1, 0
      %v1617 = vsel %vm1585, 1, 0
      %v1618 = vsel %vm1586, 1, 0
      %v1619 = vsel %vm1587, 1, 0
      %v1620 = vsel %vm1588, 1, 0
      %v1621 = vsel %vm1589, 1, 0
      %v1622 = vsel %vm1590, 1, 0
      %v1623 = vsel %vm1591, 1, 0
      %v1624 = vsel %vm1592, 1, 0
      %v1625 = vsel %vm1593, 1, 0
      %v1626 = vsel %vm1594, 1, 0
      %v1627 = vsel %vm1595, 1, 0
      %v1628 = vsel %vm1596, 1, 0
      %v1629 = vsel %vm1597, 1, 0
      %v1630 = vsel %vm1598, 1, 0
      %v1631 = vsel %vm1599, 1, 0
      %v1632 = vsel %vm1600, 1, 0
      %v1633 = vsel %vm1601, 1, 0
      %v1634 = vsel %vm1602, 1, 0
      %v1635 = vsel %vm1603, 1, 0
      %v1636 = vsel %vm1604, 1, 0
      %v1637 = vsel %vm1605, 1, 0
      %v1638 = vsel %vm1606, 1, 0
      %v1639 = vsel %vm1607, 1, 0
      %v1640 = vsel %vm1608, 1, 0
      %v1641 = vsel %vm1609, 1, 0
      %v1642 = vsel %vm1610, 1, 0
      %v1643 = vcvt.s32.f32 %v1611
      %v1644 = vcvt.s32.f32 %v1612
      %v1645 = vcvt.s32.f32 %v1613
      %v1646 = vcvt.s32.f32 %v1614
      %v1647 = vcvt.s32.f32 %v1615
      %v1648 = vcvt.s32.f32 %v1616
      %v1649 = vcvt.s32.f32 %v1617
      %v1650 = vcvt.s32.f32 %v1618
      %v1651 = vcvt.s32.f32 %v1619
      %v1652 = vcvt.s32.f32 %v1620
      %v1653 = vcvt.s32.f32 %v1621
      %v1654 = vcvt.s32.f32 %v1622
      %v1655 = vcvt.s32.f32 %v1623
      %v1656 = vcvt.s32.f32 %v1624
      %v1657 = vcvt.s32.f32 %v1625
      %v1658 = vcvt.s32.f32 %v1626
      %v1659 = vcvt.s32.f32 %v1627
      %v1660 = vcvt.s32.f32 %v1628
      %v1661 = vcvt.s32.f32 %v1629
      %v1662 = vcvt.s32.f32 %v1630
      %v1663 = vcvt.s32.f32 %v1631
      %v1664 = vcvt.s32.f32 %v1632
      %v1665 = vcvt.s32.f32 %v1633
      %v1666 = vcvt.s32.f32 %v1634
      %v1667 = vcvt.s32.f32 %v1635
      %v1668 = vcvt.s32.f32 %v1636
      %v1669 = vcvt.s32.f32 %v1637
      %v1670 = vcvt.s32.f32 %v1638
      %v1671 = vcvt.s32.f32 %v1639
      %v1672 = vcvt.s32.f32 %v1640
      %v1673 = vcvt.s32.f32 %v1641
      %v1674 = vcvt.s32.f32 %v1642
      %vm1675 = vmand %vm1003, %vm1451
      %vm1676 = vmand %vm1004, %vm1452
      %vm1677 = vmand %vm1005, %vm1453
      %vm1678 = vmand %vm1006, %vm1454
      %vm1679 = vmand %vm1007, %vm1455
      %vm1680 = vmand %vm1008, %vm1456
      %vm1681 = vmand %vm1009, %vm1457
      %vm1682 = vmand %vm1010, %vm1458
      %vm1683 = vmand %vm1011, %vm1459
      %vm1684 = vmand %vm1012, %vm1460
      %vm1685 = vmand %vm1013, %vm1461
      %vm1686 = vmand %vm1014, %vm1462
      %vm1687 = vmand %vm1015, %vm1463
      %vm1688 = vmand %vm1016, %vm1464
      %vm1689 = vmand %vm1017, %vm1465
      %vm1690 = vmand %vm1018, %vm1466
      %vm1691 = vmand %vm1019, %vm1467
      %vm1692 = vmand %vm1020, %vm1468
      %vm1693 = vmand %vm1021, %vm1469
      %vm1694 = vmand %vm1022, %vm1470
      %vm1695 = vmand %vm1023, %vm1471
      %vm1696 = vmand %vm1024, %vm1472
      %vm1697 = vmand %vm1025, %vm1473
      %vm1698 = vmand %vm1026, %vm1474
      %vm1699 = vmand %vm1027, %vm1475
      %vm1700 = vmand %vm1028, %vm1476
      %vm1701 = vmand %vm1029, %vm1477
      %vm1702 = vmand %vm1030, %vm1478
      %vm1703 = vmand %vm1031, %vm1479
      %vm1704 = vmand %vm1032, %vm1480
      %vm1705 = vmand %vm1033, %vm1481
      %vm1706 = vmand %vm1034, %vm1482
      %v1707 = vsel %vm1675, 1, 0
      %v1708 = vsel %vm1676, 1, 0
      %v1709 = vsel %vm1677, 1, 0
      %v1710 = vsel %vm1678, 1, 0
      %v1711 = vsel %vm1679, 1, 0
      %v1712 = vsel %vm1680, 1, 0
      %v1713 = vsel %vm1681, 1, 0
      %v1714 = vsel %vm1682, 1, 0
      %v1715 = vsel %vm1683, 1, 0
      %v1716 = vsel %vm1684, 1, 0
      %v1717 = vsel %vm1685, 1, 0
      %v1718 = vsel %vm1686, 1, 0
      %v1719 = vsel %vm1687, 1, 0
      %v1720 = vsel %vm1688, 1, 0
      %v1721 = vsel %vm1689, 1, 0
      %v1722 = vsel %vm1690, 1, 0
      %v1723 = vsel %vm1691, 1, 0
      %v1724 = vsel %vm1692, 1, 0
      %v1725 = vsel %vm1693, 1, 0
      %v1726 = vsel %vm1694, 1, 0
      %v1727 = vsel %vm1695, 1, 0
      %v1728 = vsel %vm1696, 1, 0
      %v1729 = vsel %vm1697, 1, 0
      %v1730 = vsel %vm1698, 1, 0
      %v1731 = vsel %vm1699, 1, 0
      %v1732 = vsel %vm1700, 1, 0
      %v1733 = vsel %vm1701, 1, 0
      %v1734 = vsel %vm1702, 1, 0
      %v1735 = vsel %vm1703, 1, 0
      %v1736 = vsel %vm1704, 1, 0
      %v1737 = vsel %vm1705, 1, 0
      %v1738 = vsel %vm1706, 1, 0
      %v1739 = vcvt.s32.f32 %v1707
      %v1740 = vcvt.s32.f32 %v1708
      %v1741 = vcvt.s32.f32 %v1709
      %v1742 = vcvt.s32.f32 %v1710
      %v1743 = vcvt.s32.f32 %v1711
      %v1744 = vcvt.s32.f32 %v1712
      %v1745 = vcvt.s32.f32 %v1713
      %v1746 = vcvt.s32.f32 %v1714
      %v1747 = vcvt.s32.f32 %v1715
      %v1748 = vcvt.s32.f32 %v1716
      %v1749 = vcvt.s32.f32 %v1717
      %v1750 = vcvt.s32.f32 %v1718
      %v1751 = vcvt.s32.f32 %v1719
      %v1752 = vcvt.s32.f32 %v1720
      %v1753 = vcvt.s32.f32 %v1721
      %v1754 = vcvt.s32.f32 %v1722
      %v1755 = vcvt.s32.f32 %v1723
      %v1756 = vcvt.s32.f32 %v1724
      %v1757 = vcvt.s32.f32 %v1725
      %v1758 = vcvt.s32.f32 %v1726
      %v1759 = vcvt.s32.f32 %v1727
      %v1760 = vcvt.s32.f32 %v1728
      %v1761 = vcvt.s32.f32 %v1729
      %v1762 = vcvt.s32.f32 %v1730
      %v1763 = vcvt.s32.f32 %v1731
      %v1764 = vcvt.s32.f32 %v1732
      %v1765 = vcvt.s32.f32 %v1733
      %v1766 = vcvt.s32.f32 %v1734
      %v1767 = vcvt.s32.f32 %v1735
      %v1768 = vcvt.s32.f32 %v1736
      %v1769 = vcvt.s32.f32 %v1737
      %v1770 = vcvt.s32.f32 %v1738
      %vm1771 = vmand %vm1323, %vm811
      %vm1772 = vmand %vm1324, %vm812
      %vm1773 = vmand %vm1325, %vm813
      %vm1774 = vmand %vm1326, %vm814
      %vm1775 = vmand %vm1327, %vm815
      %vm1776 = vmand %vm1328, %vm816
      %vm1777 = vmand %vm1329, %vm817
      %vm1778 = vmand %vm1330, %vm818
      %vm1779 = vmand %vm1331, %vm819
      %vm1780 = vmand %vm1332, %vm820
      %vm1781 = vmand %vm1333, %vm821
      %vm1782 = vmand %vm1334, %vm822
      %vm1783 = vmand %vm1335, %vm823
      %vm1784 = vmand %vm1336, %vm824
      %vm1785 = vmand %vm1337, %vm825
      %vm1786 = vmand %vm1338, %vm826
      %vm1787 = vmand %vm1339, %vm827
      %vm1788 = vmand %vm1340, %vm828
      %vm1789 = vmand %vm1341, %vm829
      %vm1790 = vmand %vm1342, %vm830
      %vm1791 = vmand %vm1343, %vm831
      %vm1792 = vmand %vm1344, %vm832
      %vm1793 = vmand %vm1345, %vm833
      %vm1794 = vmand %vm1346, %vm834
      %vm1795 = vmand %vm1347, %vm835
      %vm1796 = vmand %vm1348, %vm836
      %vm1797 = vmand %vm1349, %vm837
      %vm1798 = vmand %vm1350, %vm838
      %vm1799 = vmand %vm1351, %vm839
      %vm1800 = vmand %vm1352, %vm840
      %vm1801 = vmand %vm1353, %vm841
      %vm1802 = vmand %vm1354, %vm842
      %v1803 = vsel %vm1771, 1, 0
      %v1804 = vsel %vm1772, 1, 0
      %v1805 = vsel %vm1773, 1, 0
      %v1806 = vsel %vm1774, 1, 0
      %v1807 = vsel %vm1775, 1, 0
      %v1808 = vsel %vm1776, 1, 0
      %v1809 = vsel %vm1777, 1, 0
      %v1810 = vsel %vm1778, 1, 0
      %v1811 = vsel %vm1779, 1, 0
      %v1812 = vsel %vm1780, 1, 0
      %v1813 = vsel %vm1781, 1, 0
      %v1814 = vsel %vm1782, 1, 0
      %v1815 = vsel %vm1783, 1, 0
      %v1816 = vsel %vm1784, 1, 0
      %v1817 = vsel %vm1785, 1, 0
      %v1818 = vsel %vm1786, 1, 0
      %v1819 = vsel %vm1787, 1, 0
      %v1820 = vsel %vm1788, 1, 0
      %v1821 = vsel %vm1789, 1, 0
      %v1822 = vsel %vm1790, 1, 0
      %v1823 = vsel %vm1791, 1, 0
      %v1824 = vsel %vm1792, 1, 0
      %v1825 = vsel %vm1793, 1, 0
      %v1826 = vsel %vm1794, 1, 0
      %v1827 = vsel %vm1795, 1, 0
      %v1828 = vsel %vm1796, 1, 0
      %v1829 = vsel %vm1797, 1, 0
      %v1830 = vsel %vm1798, 1, 0
      %v1831 = vsel %vm1799, 1, 0
      %v1832 = vsel %vm1800, 1, 0
      %v1833 = vsel %vm1801, 1, 0
      %v1834 = vsel %vm1802, 1, 0
      %v1835 = vcvt.s32.f32 %v1803
      %v1836 = vcvt.s32.f32 %v1804
      %v1837 = vcvt.s32.f32 %v1805
      %v1838 = vcvt.s32.f32 %v1806
      %v1839 = vcvt.s32.f32 %v1807
      %v1840 = vcvt.s32.f32 %v1808
      %v1841 = vcvt.s32.f32 %v1809
      %v1842 = vcvt.s32.f32 %v1810
      %v1843 = vcvt.s32.f32 %v1811
      %v1844 = vcvt.s32.f32 %v1812
      %v1845 = vcvt.s32.f32 %v1813
      %v1846 = vcvt.s32.f32 %v1814
      %v1847 = vcvt.s32.f32 %v1815
      %v1848 = vcvt.s32.f32 %v1816
      %v1849 = vcvt.s32.f32 %v1817
      %v1850 = vcvt.s32.f32 %v1818
      %v1851 = vcvt.s32.f32 %v1819
      %v1852 = vcvt.s32.f32 %v1820
      %v1853 = vcvt.s32.f32 %v1821
      %v1854 = vcvt.s32.f32 %v1822
      %v1855 = vcvt.s32.f32 %v1823
      %v1856 = vcvt.s32.f32 %v1824
      %v1857 = vcvt.s32.f32 %v1825
      %v1858 = vcvt.s32.f32 %v1826
      %v1859 = vcvt.s32.f32 %v1827
      %v1860 = vcvt.s32.f32 %v1828
      %v1861 = vcvt.s32.f32 %v1829
      %v1862 = vcvt.s32.f32 %v1830
      %v1863 = vcvt.s32.f32 %v1831
      %v1864 = vcvt.s32.f32 %v1832
      %v1865 = vcvt.s32.f32 %v1833
      %v1866 = vcvt.s32.f32 %v1834
      %vm1867 = vmand %vm1323, %vm1131
      %vm1868 = vmand %vm1324, %vm1132
      %vm1869 = vmand %vm1325, %vm1133
      %vm1870 = vmand %vm1326, %vm1134
      %vm1871 = vmand %vm1327, %vm1135
      %vm1872 = vmand %vm1328, %vm1136
      %vm1873 = vmand %vm1329, %vm1137
      %vm1874 = vmand %vm1330, %vm1138
      %vm1875 = vmand %vm1331, %vm1139
      %vm1876 = vmand %vm1332, %vm1140
      %vm1877 = vmand %vm1333, %vm1141
      %vm1878 = vmand %vm1334, %vm1142
      %vm1879 = vmand %vm1335, %vm1143
      %vm1880 = vmand %vm1336, %vm1144
      %vm1881 = vmand %vm1337, %vm1145
      %vm1882 = vmand %vm1338, %vm1146
      %vm1883 = vmand %vm1339, %vm1147
      %vm1884 = vmand %vm1340, %vm1148
      %vm1885 = vmand %vm1341, %vm1149
      %vm1886 = vmand %vm1342, %vm1150
      %vm1887 = vmand %vm1343, %vm1151
      %vm1888 = vmand %vm1344, %vm1152
      %vm1889 = vmand %vm1345, %vm1153
      %vm1890 = vmand %vm1346, %vm1154
      %vm1891 = vmand %vm1347, %vm1155
      %vm1892 = vmand %vm1348, %vm1156
      %vm1893 = vmand %vm1349, %vm1157
      %vm1894 = vmand %vm1350, %vm1158
      %vm1895 = vmand %vm1351, %vm1159
      %vm1896 = vmand %vm1352, %vm1160
      %vm1897 = vmand %vm1353, %vm1161
      %vm1898 = vmand %vm1354, %vm1162
      %v1899 = vsel %vm1867, 1, 0
      %v1900 = vsel %vm1868, 1, 0
      %v1901 = vsel %vm1869, 1, 0
      %v1902 = vsel %vm1870, 1, 0
      %v1903 = vsel %vm1871, 1, 0
      %v1904 = vsel %vm1872, 1, 0
      %v1905 = vsel %vm1873, 1, 0
      %v1906 = vsel %vm1874, 1, 0
      %v1907 = vsel %vm1875, 1, 0
      %v1908 = vsel %vm1876, 1, 0
      %v1909 = vsel %vm1877, 1, 0
      %v1910 = vsel %vm1878, 1, 0
      %v1911 = vsel %vm1879, 1, 0
      %v1912 = vsel %vm1880, 1, 0
      %v1913 = vsel %vm1881, 1, 0
      %v1914 = vsel %vm1882, 1, 0
      %v1915 = vsel %vm1883, 1, 0
      %v1916 = vsel %vm1884, 1, 0
      %v1917 = vsel %vm1885, 1, 0
      %v1918 = vsel %vm1886, 1, 0
      %v1919 = vsel %vm1887, 1, 0
      %v1920 = vsel %vm1888, 1, 0
      %v1921 = vsel %vm1889, 1, 0
      %v1922 = vsel %vm1890, 1, 0
      %v1923 = vsel %vm1891, 1, 0
      %v1924 = vsel %vm1892, 1, 0
      %v1925 = vsel %vm1893, 1, 0
      %v1926 = vsel %vm1894, 1, 0
      %v1927 = vsel %vm1895, 1, 0
      %v1928 = vsel %vm1896, 1, 0
      %v1929 = vsel %vm1897, 1, 0
      %v1930 = vsel %vm1898, 1, 0
      %v1931 = vcvt.s32.f32 %v1899
      %v1932 = vcvt.s32.f32 %v1900
      %v1933 = vcvt.s32.f32 %v1901
      %v1934 = vcvt.s32.f32 %v1902
      %v1935 = vcvt.s32.f32 %v1903
      %v1936 = vcvt.s32.f32 %v1904
      %v1937 = vcvt.s32.f32 %v1905
      %v1938 = vcvt.s32.f32 %v1906
      %v1939 = vcvt.s32.f32 %v1907
      %v1940 = vcvt.s32.f32 %v1908
      %v1941 = vcvt.s32.f32 %v1909
      %v1942 = vcvt.s32.f32 %v1910
      %v1943 = vcvt.s32.f32 %v1911
      %v1944 = vcvt.s32.f32 %v1912
      %v1945 = vcvt.s32.f32 %v1913
      %v1946 = vcvt.s32.f32 %v1914
      %v1947 = vcvt.s32.f32 %v1915
      %v1948 = vcvt.s32.f32 %v1916
      %v1949 = vcvt.s32.f32 %v1917
      %v1950 = vcvt.s32.f32 %v1918
      %v1951 = vcvt.s32.f32 %v1919
      %v1952 = vcvt.s32.f32 %v1920
      %v1953 = vcvt.s32.f32 %v1921
      %v1954 = vcvt.s32.f32 %v1922
      %v1955 = vcvt.s32.f32 %v1923
      %v1956 = vcvt.s32.f32 %v1924
      %v1957 = vcvt.s32.f32 %v1925
      %v1958 = vcvt.s32.f32 %v1926
      %v1959 = vcvt.s32.f32 %v1927
      %v1960 = vcvt.s32.f32 %v1928
      %v1961 = vcvt.s32.f32 %v1929
      %v1962 = vcvt.s32.f32 %v1930
      %vm1963 = vmand %vm1323, %vm1451
      %vm1964 = vmand %vm1324, %vm1452
      %vm1965 = vmand %vm1325, %vm1453
      %vm1966 = vmand %vm1326, %vm1454
      %vm1967 = vmand %vm1327, %vm1455
      %vm1968 = vmand %vm1328, %vm1456
      %vm1969 = vmand %vm1329, %vm1457
      %vm1970 = vmand %vm1330, %vm1458
      %vm1971 = vmand %vm1331, %vm1459
      %vm1972 = vmand %vm1332, %vm1460
      %vm1973 = vmand %vm1333, %vm1461
      %vm1974 = vmand %vm1334, %vm1462
      %vm1975 = vmand %vm1335, %vm1463
      %vm1976 = vmand %vm1336, %vm1464
      %vm1977 = vmand %vm1337, %vm1465
      %vm1978 = vmand %vm1338, %vm1466
      %vm1979 = vmand %vm1339, %vm1467
      %vm1980 = vmand %vm1340, %vm1468
      %vm1981 = vmand %vm1341, %vm1469
      %vm1982 = vmand %vm1342, %vm1470
      %vm1983 = vmand %vm1343, %vm1471
      %vm1984 = vmand %vm1344, %vm1472
      %vm1985 = vmand %vm1345, %vm1473
      %vm1986 = vmand %vm1346, %vm1474
      %vm1987 = vmand %vm1347, %vm1475
      %vm1988 = vmand %vm1348, %vm1476
      %vm1989 = vmand %vm1349, %vm1477
      %vm1990 = vmand %vm1350, %vm1478
      %vm1991 = vmand %vm1351, %vm1479
      %vm1992 = vmand %vm1352, %vm1480
      %vm1993 = vmand %vm1353, %vm1481
      %vm1994 = vmand %vm1354, %vm1482
      %v1995 = vsel %vm1963, 1, 0
      %v1996 = vsel %vm1964, 1, 0
      %v1997 = vsel %vm1965, 1, 0
      %v1998 = vsel %vm1966, 1, 0
      %v1999 = vsel %vm1967, 1, 0
      %v2000 = vsel %vm1968, 1, 0
      %v2001 = vsel %vm1969, 1, 0
      %v2002 = vsel %vm1970, 1, 0
      %v2003 = vsel %vm1971, 1, 0
      %v2004 = vsel %vm1972, 1, 0
      %v2005 = vsel %vm1973, 1, 0
      %v2006 = vsel %vm1974, 1, 0
      %v2007 = vsel %vm1975, 1, 0
      %v2008 = vsel %vm1976, 1, 0
      %v2009 = vsel %vm1977, 1, 0
      %v2010 = vsel %vm1978, 1, 0
      %v2011 = vsel %vm1979, 1, 0
      %v2012 = vsel %vm1980, 1, 0
      %v2013 = vsel %vm1981, 1, 0
      %v2014 = vsel %vm1982, 1, 0
      %v2015 = vsel %vm1983, 1, 0
      %v2016 = vsel %vm1984, 1, 0
      %v2017 = vsel %vm1985, 1, 0
      %v2018 = vsel %vm1986, 1, 0
      %v2019 = vsel %vm1987, 1, 0
      %v2020 = vsel %vm1988, 1, 0
      %v2021 = vsel %vm1989, 1, 0
      %v2022 = vsel %vm1990, 1, 0
      %v2023 = vsel %vm1991, 1, 0
      %v2024 = vsel %vm1992, 1, 0
      %v2025 = vsel %vm1993, 1, 0
      %v2026 = vsel %vm1994, 1, 0
      %v2027 = vcvt.s32.f32 %v1995
      %v2028 = vcvt.s32.f32 %v1996
      %v2029 = vcvt.s32.f32 %v1997
      %v2030 = vcvt.s32.f32 %v1998
      %v2031 = vcvt.s32.f32 %v1999
      %v2032 = vcvt.s32.f32 %v2000
      %v2033 = vcvt.s32.f32 %v2001
      %v2034 = vcvt.s32.f32 %v2002
      %v2035 = vcvt.s32.f32 %v2003
      %v2036 = vcvt.s32.f32 %v2004
      %v2037 = vcvt.s32.f32 %v2005
      %v2038 = vcvt.s32.f32 %v2006
      %v2039 = vcvt.s32.f32 %v2007
      %v2040 = vcvt.s32.f32 %v2008
      %v2041 = vcvt.s32.f32 %v2009
      %v2042 = vcvt.s32.f32 %v2010
      %v2043 = vcvt.s32.f32 %v2011
      %v2044 = vcvt.s32.f32 %v2012
      %v2045 = vcvt.s32.f32 %v2013
      %v2046 = vcvt.s32.f32 %v2014
      %v2047 = vcvt.s32.f32 %v2015
      %v2048 = vcvt.s32.f32 %v2016
      %v2049 = vcvt.s32.f32 %v2017
      %v2050 = vcvt.s32.f32 %v2018
      %v2051 = vcvt.s32.f32 %v2019
      %v2052 = vcvt.s32.f32 %v2020
      %v2053 = vcvt.s32.f32 %v2021
      %v2054 = vcvt.s32.f32 %v2022
      %v2055 = vcvt.s32.f32 %v2023
      %v2056 = vcvt.s32.f32 %v2024
      %v2057 = vcvt.s32.f32 %v2025
      %v2058 = vcvt.s32.f32 %v2026
      %v2059 = vld [vmem:[%s521] sm:$0xff]
      %v2060 = vld [vmem:[%s521 + $0x8] sm:$0xff]
      %v2061 = vld [vmem:[%s521 + $0x10] sm:$0xff]
      %v2062 = vld [vmem:[%s521 + $0x18] sm:$0xff]
      %v2063 = vld [vmem:[%s521 + $0x20] sm:$0xff]
      %v2064 = vld [vmem:[%s521 + $0x28] sm:$0xff]
      %v2065 = vld [vmem:[%s521 + $0x30] sm:$0xff]
      %v2066 = vld [vmem:[%s521 + $0x38] sm:$0xff]
      %v2067 = vld [vmem:[%s521 + $0x40] sm:$0xff]
      %v2068 = vld [vmem:[%s521 + $0x48] sm:$0xff]
      %v2069 = vld [vmem:[%s521 + $0x50] sm:$0xff]
      %v2070 = vld [vmem:[%s521 + $0x58] sm:$0xff]
      %v2071 = vld [vmem:[%s521 + $0x60] sm:$0xff]
      %v2072 = vld [vmem:[%s521 + $0x68] sm:$0xff]
      %v2073 = vld [vmem:[%s521 + $0x70] sm:$0xff]
      %v2074 = vld [vmem:[%s521 + $0x78] sm:$0xff]
      %v2075 = vld [vmem:[%s521 + $0x80] sm:$0xff]
      %v2076 = vld [vmem:[%s521 + $0x88] sm:$0xff]
      %v2077 = vld [vmem:[%s521 + $0x90] sm:$0xff]
      %v2078 = vld [vmem:[%s521 + $0x98] sm:$0xff]
      %v2079 = vld [vmem:[%s521 + $0xa0] sm:$0xff]
      %v2080 = vld [vmem:[%s521 + $0xa8] sm:$0xff]
      %v2081 = vld [vmem:[%s521 + $0xb0] sm:$0xff]
      %v2082 = vld [vmem:[%s521 + $0xb8] sm:$0xff]
      %v2083 = vld [vmem:[%s521 + $0xc0] sm:$0xff]
      %v2084 = vld [vmem:[%s521 + $0xc8] sm:$0xff]
      %v2085 = vld [vmem:[%s521 + $0xd0] sm:$0xff]
      %v2086 = vld [vmem:[%s521 + $0xd8] sm:$0xff]
      %v2087 = vld [vmem:[%s521 + $0xe0] sm:$0xff]
      %v2088 = vld [vmem:[%s521 + $0xe8] sm:$0xff]
      %v2089 = vld [vmem:[%s521 + $0xf0] sm:$0xff]
      %v2090 = vld [vmem:[%s521 + $0xf8] sm:$0xff]
      %v2091 = vld [vmem:[%s2] sm:$0x1]
      %v2093 = vlaneseq
      %v2094 = vshrl.u32 %v2093, 7
      %v2095 = vsub.s32 0, %v2094
      %v2096 = vrot.slane %v2091, %v2095
      %v2098 = vmul.f32 %v2059, %v2096
      %v2099 = vmul.f32 %v2060, %v2096
      %v2100 = vmul.f32 %v2061, %v2096
      %v2101 = vmul.f32 %v2062, %v2096
      %v2102 = vmul.f32 %v2063, %v2096
      %v2103 = vmul.f32 %v2064, %v2096
      %v2104 = vmul.f32 %v2065, %v2096
      %v2105 = vmul.f32 %v2066, %v2096
      %v2106 = vmul.f32 %v2067, %v2096
      %v2107 = vmul.f32 %v2068, %v2096
      %v2108 = vmul.f32 %v2069, %v2096
      %v2109 = vmul.f32 %v2070, %v2096
      %v2110 = vmul.f32 %v2071, %v2096
      %v2111 = vmul.f32 %v2072, %v2096
      %v2112 = vmul.f32 %v2073, %v2096
      %v2113 = vmul.f32 %v2074, %v2096
      %v2114 = vmul.f32 %v2075, %v2096
      %v2115 = vmul.f32 %v2076, %v2096
      %v2116 = vmul.f32 %v2077, %v2096
      %v2117 = vmul.f32 %v2078, %v2096
      %v2118 = vmul.f32 %v2079, %v2096
      %v2119 = vmul.f32 %v2080, %v2096
      %v2120 = vmul.f32 %v2081, %v2096
      %v2121 = vmul.f32 %v2082, %v2096
      %v2122 = vmul.f32 %v2083, %v2096
      %v2123 = vmul.f32 %v2084, %v2096
      %v2124 = vmul.f32 %v2085, %v2096
      %v2125 = vmul.f32 %v2086, %v2096
      %v2126 = vmul.f32 %v2087, %v2096
      %v2127 = vmul.f32 %v2088, %v2096
      %v2128 = vmul.f32 %v2089, %v2096
      %v2129 = vmul.f32 %v2090, %v2096
      %v2130 = vld [vmem:[%s3] sm:$0x1]
      %v2132 = vlaneseq
      %v2133 = vshrl.u32 %v2132, 7
      %v2134 = vsub.s32 0, %v2133
      %v2135 = vrot.slane %v2130, %v2134
      %v2137 = vadd.f32 %v2098, %v2135
      %v2138 = vadd.f32 %v2099, %v2135
      %v2139 = vadd.f32 %v2100, %v2135
      %v2140 = vadd.f32 %v2101, %v2135
      %v2141 = vadd.f32 %v2102, %v2135
      %v2142 = vadd.f32 %v2103, %v2135
      %v2143 = vadd.f32 %v2104, %v2135
      %v2144 = vadd.f32 %v2105, %v2135
      %v2145 = vadd.f32 %v2106, %v2135
      %v2146 = vadd.f32 %v2107, %v2135
      %v2147 = vadd.f32 %v2108, %v2135
      %v2148 = vadd.f32 %v2109, %v2135
      %v2149 = vadd.f32 %v2110, %v2135
      %v2150 = vadd.f32 %v2111, %v2135
      %v2151 = vadd.f32 %v2112, %v2135
      %v2152 = vadd.f32 %v2113, %v2135
      %v2153 = vadd.f32 %v2114, %v2135
      %v2154 = vadd.f32 %v2115, %v2135
      %v2155 = vadd.f32 %v2116, %v2135
      %v2156 = vadd.f32 %v2117, %v2135
      %v2157 = vadd.f32 %v2118, %v2135
      %v2158 = vadd.f32 %v2119, %v2135
      %v2159 = vadd.f32 %v2120, %v2135
      %v2160 = vadd.f32 %v2121, %v2135
      %v2161 = vadd.f32 %v2122, %v2135
      %v2162 = vadd.f32 %v2123, %v2135
      %v2163 = vadd.f32 %v2124, %v2135
      %v2164 = vadd.f32 %v2125, %v2135
      %v2165 = vadd.f32 %v2126, %v2135
      %v2166 = vadd.f32 %v2127, %v2135
      %v2167 = vadd.f32 %v2128, %v2135
      %v2168 = vadd.f32 %v2129, %v2135
      %v2169 = vmax.f32 %v2137, 0.0
      %v2170 = vmax.f32 %v2138, 0.0
      %v2171 = vmax.f32 %v2139, 0.0
      %v2172 = vmax.f32 %v2140, 0.0
      %v2173 = vmax.f32 %v2141, 0.0
      %v2174 = vmax.f32 %v2142, 0.0
      %v2175 = vmax.f32 %v2143, 0.0
      %v2176 = vmax.f32 %v2144, 0.0
      %v2177 = vmax.f32 %v2145, 0.0
      %v2178 = vmax.f32 %v2146, 0.0
      %v2179 = vmax.f32 %v2147, 0.0
      %v2180 = vmax.f32 %v2148, 0.0
      %v2181 = vmax.f32 %v2149, 0.0
      %v2182 = vmax.f32 %v2150, 0.0
      %v2183 = vmax.f32 %v2151, 0.0
      %v2184 = vmax.f32 %v2152, 0.0
      %v2185 = vmax.f32 %v2153, 0.0
      %v2186 = vmax.f32 %v2154, 0.0
      %v2187 = vmax.f32 %v2155, 0.0
      %v2188 = vmax.f32 %v2156, 0.0
      %v2189 = vmax.f32 %v2157, 0.0
      %v2190 = vmax.f32 %v2158, 0.0
      %v2191 = vmax.f32 %v2159, 0.0
      %v2192 = vmax.f32 %v2160, 0.0
      %v2193 = vmax.f32 %v2161, 0.0
      %v2194 = vmax.f32 %v2162, 0.0
      %v2195 = vmax.f32 %v2163, 0.0
      %v2196 = vmax.f32 %v2164, 0.0
      %v2197 = vmax.f32 %v2165, 0.0
      %v2198 = vmax.f32 %v2166, 0.0
      %v2199 = vmax.f32 %v2167, 0.0
      %v2200 = vmax.f32 %v2168, 0.0
      %v2201 = vld [vmem:[%s4] sm:$0xf]
      %v2203 = vsel %vm554, %v2169, 0
      %v2206 = vsel %vm554, %v2170, 0
      %v2209 = vsel %vm554, %v2171, 0
      %v2212 = vsel %vm554, %v2172, 0
      %v2215 = vsel %vm554, %v2173, 0
      %v2218 = vsel %vm554, %v2174, 0
      %v2221 = vsel %vm554, %v2175, 0
      %v2224 = vsel %vm554, %v2176, 0
      %v2227 = vsel %vm554, %v2177, 0
      %v2230 = vsel %vm554, %v2178, 0
      %v2233 = vsel %vm554, %v2179, 0
      %v2236 = vsel %vm554, %v2180, 0
      %v2239 = vsel %vm554, %v2181, 0
      %v2242 = vsel %vm554, %v2182, 0
      %v2245 = vsel %vm554, %v2183, 0
      %v2248 = vsel %vm554, %v2184, 0
      %v2251 = vsel %vm554, %v2185, 0
      %v2254 = vsel %vm554, %v2186, 0
      %v2257 = vsel %vm554, %v2187, 0
      %v2260 = vsel %vm554, %v2188, 0
      %v2263 = vsel %vm554, %v2189, 0
      %v2266 = vsel %vm554, %v2190, 0
      %v2269 = vsel %vm554, %v2191, 0
      %v2272 = vsel %vm554, %v2192, 0
      %v2275 = vsel %vm554, %v2193, 0
      %v2278 = vsel %vm554, %v2194, 0
      %v2281 = vsel %vm554, %v2195, 0
      %v2284 = vsel %vm554, %v2196, 0
      %v2287 = vsel %vm554, %v2197, 0
      %v2290 = vsel %vm554, %v2198, 0
      %v2293 = vsel %vm554, %v2199, 0
      %v2296 = vsel %vm554, %v2200, 0
      %vm2298 = vcmask 1043456
      %v2300 = vsel %vm2298, %v2201, 0
      %2302 = vmatprep.subr.mxu0 0.0
      %2303 = vmatpush1.msra.mxu0 %v2300
      %2304 = vmatprep.subr.mxu0 0.0
      %2305 = vmatpush1.msra.mxu0 0.0
      %2306 = vmatprep.subr.mxu0 0.0
      %2307 = vmatpush1.msra.mxu0 0.0
      %2308 = vmatprep.subr.mxu0 0.0
      %2309 = vmatpush1.msra.mxu0 0.0
      %2310 = vmatprep.subr.mxu0 0.0
      %2311 = vmatpush1.msra.mxu0 0.0
      %2312 = vmatprep.subr.mxu0 0.0
      %2313 = vmatpush1.msra.mxu0 0.0
      %2314 = vmatprep.subr.mxu0 0.0
      %2315 = vmatpush1.msra.mxu0 0.0
      %2316 = vmatprep.subr.mxu0 0.0
      %2317 = vmatpush1.msra.mxu0 0.0
      %2318 = vmatprep.subr.mxu0 0.0
      %2319 = vmatpush1.msra.mxu0 0.0
      %2320 = vmatprep.subr.mxu0 0.0
      %2321 = vmatpush1.msra.mxu0 0.0
      %2322 = vmatprep.subr.mxu0 0.0
      %2323 = vmatpush1.msra.mxu0 0.0
      %2324 = vmatprep.subr.mxu0 0.0
      %2325 = vmatpush1.msra.mxu0 0.0
      %2326 = vmatprep.subr.mxu0 0.0
      %2327 = vmatpush1.msra.mxu0 0.0
      %2328 = vmatprep.subr.mxu0 0.0
      %2329 = vmatpush1.msra.mxu0 0.0
      %2330 = vmatprep.subr.mxu0 0.0
      %2331 = vmatpush1.msra.mxu0 0.0
      %2332 = vmatprep.subr.mxu0 0.0
      %2333 = vmatpush1.msra.mxu0 0.0
      %2334 = vmatprep.subr.mxu0 0.0
      %2335 = vmatpush1.msra.mxu0 0.0
      %2336 = vmatprep.subr.mxu0 0.0
      %2337 = vmatpush1.msra.mxu0 0.0
      %2338 = vmatprep.subr.mxu0 0.0
      %2339 = vmatpush1.msra.mxu0 0.0
      %2340 = vmatprep.subr.mxu0 0.0
      %2341 = vmatpush1.msra.mxu0 0.0
      %2342 = vmatprep.subr.mxu0 0.0
      %2343 = vmatpush1.msra.mxu0 0.0
      %2344 = vmatprep.subr.mxu0 0.0
      %2345 = vmatpush1.msra.mxu0 0.0
      %2346 = vmatprep.subr.mxu0 0.0
      %2347 = vmatpush1.msra.mxu0 0.0
      %2348 = vmatprep.subr.mxu0 0.0
      %2349 = vmatpush1.msra.mxu0 0.0
      %2350 = vmatprep.subr.mxu0 0.0
      %2351 = vmatpush1.msra.mxu0 0.0
      %2352 = vmatprep.subr.mxu0 0.0
      %2353 = vmatpush1.msra.mxu0 0.0
      %2354 = vmatprep.subr.mxu0 0.0
      %2355 = vmatpush1.msra.mxu0 0.0
      %2356 = vmatprep.subr.mxu0 0.0
      %2357 = vmatpush1.msra.mxu0 0.0
      %2358 = vmatprep.subr.mxu0 0.0
      %2359 = vmatpush1.msra.mxu0 0.0
      %2360 = vmatprep.subr.mxu0 0.0
      %2361 = vmatpush1.msra.mxu0 0.0
      %2362 = vmatprep.subr.mxu0 0.0
      %2363 = vmatpush1.msra.mxu0 0.0
      %2364 = vmatprep.subr.mxu0 0.0
      %2365 = vmatpush1.msra.mxu0 0.0
      %2366 = vmatprep.mubr.f32.mxu0 0.0
      %2367 = vmatmul.mubr.f32.gmra.mrb[0].mxu0 %v2203
      %v2368 = vpop.f32.mrb[0].mxu0
      %v2369 = vadd.f32 0.0, %v2368
      %v2370 = vpop.f32.mrb[0].mxu0
      %2371 = vmatprep.mubr.f32.mxu0 0.0
      %2372 = vmatmul.mubr.f32.gmra.mrb[0].mxu0 %v2206
      %v2373 = vpop.f32.mrb[0].mxu0
      %v2374 = vadd.f32 0.0, %v2373
      %v2375 = vpop.f32.mrb[0].mxu0
      %2376 = vmatprep.mubr.f32.mxu0 0.0
      %2377 = vmatmul.mubr.f32.gmra.mrb[0].mxu0 %v2209
      %v2378 = vpop.f32.mrb[0].mxu0
      %v2379 = vadd.f32 0.0, %v2378
      %v2380 = vpop.f32.mrb[0].mxu0
      %2381 = vmatprep.mubr.f32.mxu0 0.0
      %2382 = vmatmul.mubr.f32.gmra.mrb[0].mxu0 %v2212
      %v2383 = vpop.f32.mrb[0].mxu0
      %v2384 = vadd.f32 0.0, %v2383
      %v2385 = vpop.f32.mrb[0].mxu0
      %2386 = vmatprep.mubr.f32.mxu0 0.0
      %2387 = vmatmul.mubr.f32.gmra.mrb[0].mxu0 %v2215
      %v2388 = vpop.f32.mrb[0].mxu0
      %v2389 = vadd.f32 0.0, %v2388
      %v2390 = vpop.f32.mrb[0].mxu0
      %2391 = vmatprep.mubr.f32.mxu0 0.0
      %2392 = vmatmul.mubr.f32.gmra.mrb[0].mxu0 %v2218
      %v2393 = vpop.f32.mrb[0].mxu0
      %v2394 = vadd.f32 0.0, %v2393
      %v2395 = vpop.f32.mrb[0].mxu0
      %2396 = vmatprep.mubr.f32.mxu0 0.0
      %2397 = vmatmul.mubr.f32.gmra.mrb[0].mxu0 %v2221
      %v2398 = vpop.f32.mrb[0].mxu0
      %v2399 = vadd.f32 0.0, %v2398
      %v2400 = vpop.f32.mrb[0].mxu0
      %2401 = vmatprep.mubr.f32.mxu0 0.0
      %2402 = vmatmul.mubr.f32.gmra.mrb[0].mxu0 %v2224
      %v2403 = vpop.f32.mrb[0].mxu0
      %v2404 = vadd.f32 0.0, %v2403
      %v2405 = vpop.f32.mrb[0].mxu0
      %2406 = vmatprep.mubr.f32.mxu0 0.0
      %2407 = vmatmul.mubr.f32.gmra.mrb[0].mxu0 %v2227
      %v2408 = vpop.f32.mrb[0].mxu0
      %v2409 = vadd.f32 0.0, %v2408
      %v2410 = vpop.f32.mrb[0].mxu0
      %2411 = vmatprep.mubr.f32.mxu0 0.0
      %2412 = vmatmul.mubr.f32.gmra.mrb[0].mxu0 %v2230
      %v2413 = vpop.f32.mrb[0].mxu0
      %v2414 = vadd.f32 0.0, %v2413
      %v2415 = vpop.f32.mrb[0].mxu0
      %2416 = vmatprep.mubr.f32.mxu0 0.0
      %2417 = vmatmul.mubr.f32.gmra.mrb[0].mxu0 %v2233
      %v2418 = vpop.f32.mrb[0].mxu0
      %v2419 = vadd.f32 0.0, %v2418
      %v2420 = vpop.f32.mrb[0].mxu0
      %2421 = vmatprep.mubr.f32.mxu0 0.0
      %2422 = vmatmul.mubr.f32.gmra.mrb[0].mxu0 %v2236
      %v2423 = vpop.f32.mrb[0].mxu0
      %v2424 = vadd.f32 0.0, %v2423
      %v2425 = vpop.f32.mrb[0].mxu0
      %2426 = vmatprep.mubr.f32.mxu0 0.0
      %2427 = vmatmul.mubr.f32.gmra.mrb[0].mxu0 %v2239
      %v2428 = vpop.f32.mrb[0].mxu0
      %v2429 = vadd.f32 0.0, %v2428
      %v2430 = vpop.f32.mrb[0].mxu0
      %2431 = vmatprep.mubr.f32.mxu0 0.0
      %2432 = vmatmul.mubr.f32.gmra.mrb[0].mxu0 %v2242
      %v2433 = vpop.f32.mrb[0].mxu0
      %v2434 = vadd.f32 0.0, %v2433
      %v2435 = vpop.f32.mrb[0].mxu0
      %2436 = vmatprep.mubr.f32.mxu0 0.0
      %2437 = vmatmul.mubr.f32.gmra.mrb[0].mxu0 %v2245
      %v2438 = vpop.f32.mrb[0].mxu0
      %v2439 = vadd.f32 0.0, %v2438
      %v2440 = vpop.f32.mrb[0].mxu0
      %2441 = vmatprep.mubr.f32.mxu0 0.0
      %2442 = vmatmul.mubr.f32.gmra.mrb[0].mxu0 %v2248
      %v2443 = vpop.f32.mrb[0].mxu0
      %v2444 = vadd.f32 0.0, %v2443
      %v2445 = vpop.f32.mrb[0].mxu0
      %2446 = vmatprep.mubr.f32.mxu0 0.0
      %2447 = vmatmul.mubr.f32.gmra.mrb[0].mxu0 %v2251
      %v2448 = vpop.f32.mrb[0].mxu0
      %v2449 = vadd.f32 0.0, %v2448
      %v2450 = vpop.f32.mrb[0].mxu0
      %2451 = vmatprep.mubr.f32.mxu0 0.0
      %2452 = vmatmul.mubr.f32.gmra.mrb[0].mxu0 %v2254
      %v2453 = vpop.f32.mrb[0].mxu0
      %v2454 = vadd.f32 0.0, %v2453
      %v2455 = vpop.f32.mrb[0].mxu0
      %2456 = vmatprep.mubr.f32.mxu0 0.0
      %2457 = vmatmul.mubr.f32.gmra.mrb[0].mxu0 %v2257
      %v2458 = vpop.f32.mrb[0].mxu0
      %v2459 = vadd.f32 0.0, %v2458
      %v2460 = vpop.f32.mrb[0].mxu0
      %2461 = vmatprep.mubr.f32.mxu0 0.0
      %2462 = vmatmul.mubr.f32.gmra.mrb[0].mxu0 %v2260
      %v2463 = vpop.f32.mrb[0].mxu0
      %v2464 = vadd.f32 0.0, %v2463
      %v2465 = vpop.f32.mrb[0].mxu0
      %2466 = vmatprep.mubr.f32.mxu0 0.0
      %2467 = vmatmul.mubr.f32.gmra.mrb[0].mxu0 %v2263
      %v2468 = vpop.f32.mrb[0].mxu0
      %v2469 = vadd.f32 0.0, %v2468
      %v2470 = vpop.f32.mrb[0].mxu0
      %2471 = vmatprep.mubr.f32.mxu0 0.0
      %2472 = vmatmul.mubr.f32.gmra.mrb[0].mxu0 %v2266
      %v2473 = vpop.f32.mrb[0].mxu0
      %v2474 = vadd.f32 0.0, %v2473
      %v2475 = vpop.f32.mrb[0].mxu0
      %2476 = vmatprep.mubr.f32.mxu0 0.0
      %2477 = vmatmul.mubr.f32.gmra.mrb[0].mxu0 %v2269
      %v2478 = vpop.f32.mrb[0].mxu0
      %v2479 = vadd.f32 0.0, %v2478
      %v2480 = vpop.f32.mrb[0].mxu0
      %2481 = vmatprep.mubr.f32.mxu0 0.0
      %2482 = vmatmul.mubr.f32.gmra.mrb[0].mxu0 %v2272
      %v2483 = vpop.f32.mrb[0].mxu0
      %v2484 = vadd.f32 0.0, %v2483
      %v2485 = vpop.f32.mrb[0].mxu0
      %2486 = vmatprep.mubr.f32.mxu0 0.0
      %2487 = vmatmul.mubr.f32.gmra.mrb[0].mxu0 %v2275
      %v2488 = vpop.f32.mrb[0].mxu0
      %v2489 = vadd.f32 0.0, %v2488
      %v2490 = vpop.f32.mrb[0].mxu0
      %2491 = vmatprep.mubr.f32.mxu0 0.0
      %2492 = vmatmul.mubr.f32.gmra.mrb[0].mxu0 %v2278
      %v2493 = vpop.f32.mrb[0].mxu0
      %v2494 = vadd.f32 0.0, %v2493
      %v2495 = vpop.f32.mrb[0].mxu0
      %2496 = vmatprep.mubr.f32.mxu0 0.0
      %2497 = vmatmul.mubr.f32.gmra.mrb[0].mxu0 %v2281
      %v2498 = vpop.f32.mrb[0].mxu0
      %v2499 = vadd.f32 0.0, %v2498
      %v2500 = vpop.f32.mrb[0].mxu0
      %2501 = vmatprep.mubr.f32.mxu0 0.0
      %2502 = vmatmul.mubr.f32.gmra.mrb[0].mxu0 %v2284
      %v2503 = vpop.f32.mrb[0].mxu0
      %v2504 = vadd.f32 0.0, %v2503
      %v2505 = vpop.f32.mrb[0].mxu0
      %2506 = vmatprep.mubr.f32.mxu0 0.0
      %2507 = vmatmul.mubr.f32.gmra.mrb[0].mxu0 %v2287
      %v2508 = vpop.f32.mrb[0].mxu0
      %v2509 = vadd.f32 0.0, %v2508
      %v2510 = vpop.f32.mrb[0].mxu0
      %2511 = vmatprep.mubr.f32.mxu0 0.0
      %2512 = vmatmul.mubr.f32.gmra.mrb[0].mxu0 %v2290
      %v2513 = vpop.f32.mrb[0].mxu0
      %v2514 = vadd.f32 0.0, %v2513
      %v2515 = vpop.f32.mrb[0].mxu0
      %2516 = vmatprep.mubr.f32.mxu0 0.0
      %2517 = vmatmul.mubr.f32.gmra.mrb[0].mxu0 %v2293
      %v2518 = vpop.f32.mrb[0].mxu0
      %v2519 = vadd.f32 0.0, %v2518
      %v2520 = vpop.f32.mrb[0].mxu0
      %2521 = vmatprep.mubr.f32.mxu0 0.0
      %2522 = vmatmul.mubr.f32.gmra.mrb[0].mxu0 %v2296
      %v2523 = vpop.f32.mrb[0].mxu0
      %v2524 = vadd.f32 0.0, %v2523
      %v2525 = vpop.f32.mrb[0].mxu0
      %2526 = vdwg.mxu0
      %v2527 = vld [vmem:[%s5] sm:$0x1]
      %v2529 = vlaneseq
      %v2530 = vshrl.u32 %v2529, 7
      %v2531 = vsub.s32 0, %v2530
      %v2532 = vrot.slane %v2527, %v2531
      %v2534 = vmul.f32 %v2369, %v2532
      %v2535 = vmul.f32 %v2374, %v2532
      %v2536 = vmul.f32 %v2379, %v2532
      %v2537 = vmul.f32 %v2384, %v2532
      %v2538 = vmul.f32 %v2389, %v2532
      %v2539 = vmul.f32 %v2394, %v2532
      %v2540 = vmul.f32 %v2399, %v2532
      %v2541 = vmul.f32 %v2404, %v2532
      %v2542 = vmul.f32 %v2409, %v2532
      %v2543 = vmul.f32 %v2414, %v2532
      %v2544 = vmul.f32 %v2419, %v2532
      %v2545 = vmul.f32 %v2424, %v2532
      %v2546 = vmul.f32 %v2429, %v2532
      %v2547 = vmul.f32 %v2434, %v2532
      %v2548 = vmul.f32 %v2439, %v2532
      %v2549 = vmul.f32 %v2444, %v2532
      %v2550 = vmul.f32 %v2449, %v2532
      %v2551 = vmul.f32 %v2454, %v2532
      %v2552 = vmul.f32 %v2459, %v2532
      %v2553 = vmul.f32 %v2464, %v2532
      %v2554 = vmul.f32 %v2469, %v2532
      %v2555 = vmul.f32 %v2474, %v2532
      %v2556 = vmul.f32 %v2479, %v2532
      %v2557 = vmul.f32 %v2484, %v2532
      %v2558 = vmul.f32 %v2489, %v2532
      %v2559 = vmul.f32 %v2494, %v2532
      %v2560 = vmul.f32 %v2499, %v2532
      %v2561 = vmul.f32 %v2504, %v2532
      %v2562 = vmul.f32 %v2509, %v2532
      %v2563 = vmul.f32 %v2514, %v2532
      %v2564 = vmul.f32 %v2519, %v2532
      %v2565 = vmul.f32 %v2524, %v2532
      %v2566 = vld [vmem:[%s6] sm:$0x1]
      %v2568 = vlaneseq
      %v2569 = vshrl.u32 %v2568, 7
      %v2570 = vsub.s32 0, %v2569
      %v2571 = vrot.slane %v2566, %v2570
      %v2573 = vadd.f32 %v2534, %v2571
      %v2574 = vadd.f32 %v2535, %v2571
      %v2575 = vadd.f32 %v2536, %v2571
      %v2576 = vadd.f32 %v2537, %v2571
      %v2577 = vadd.f32 %v2538, %v2571
      %v2578 = vadd.f32 %v2539, %v2571
      %v2579 = vadd.f32 %v2540, %v2571
      %v2580 = vadd.f32 %v2541, %v2571
      %v2581 = vadd.f32 %v2542, %v2571
      %v2582 = vadd.f32 %v2543, %v2571
      %v2583 = vadd.f32 %v2544, %v2571
      %v2584 = vadd.f32 %v2545, %v2571
      %v2585 = vadd.f32 %v2546, %v2571
      %v2586 = vadd.f32 %v2547, %v2571
      %v2587 = vadd.f32 %v2548, %v2571
      %v2588 = vadd.f32 %v2549, %v2571
      %v2589 = vadd.f32 %v2550, %v2571
      %v2590 = vadd.f32 %v2551, %v2571
      %v2591 = vadd.f32 %v2552, %v2571
      %v2592 = vadd.f32 %v2553, %v2571
      %v2593 = vadd.f32 %v2554, %v2571
      %v2594 = vadd.f32 %v2555, %v2571
      %v2595 = vadd.f32 %v2556, %v2571
      %v2596 = vadd.f32 %v2557, %v2571
      %v2597 = vadd.f32 %v2558, %v2571
      %v2598 = vadd.f32 %v2559, %v2571
      %v2599 = vadd.f32 %v2560, %v2571
      %v2600 = vadd.f32 %v2561, %v2571
      %v2601 = vadd.f32 %v2562, %v2571
      %v2602 = vadd.f32 %v2563, %v2571
      %v2603 = vadd.f32 %v2564, %v2571
      %v2604 = vadd.f32 %v2565, %v2571
      %v2605 = vmax.f32 %v2573, 0.0
      %v2606 = vmax.f32 %v2574, 0.0
      %v2607 = vmax.f32 %v2575, 0.0
      %v2608 = vmax.f32 %v2576, 0.0
      %v2609 = vmax.f32 %v2577, 0.0
      %v2610 = vmax.f32 %v2578, 0.0
      %v2611 = vmax.f32 %v2579, 0.0
      %v2612 = vmax.f32 %v2580, 0.0
      %v2613 = vmax.f32 %v2581, 0.0
      %v2614 = vmax.f32 %v2582, 0.0
      %v2615 = vmax.f32 %v2583, 0.0
      %v2616 = vmax.f32 %v2584, 0.0
      %v2617 = vmax.f32 %v2585, 0.0
      %v2618 = vmax.f32 %v2586, 0.0
      %v2619 = vmax.f32 %v2587, 0.0
      %v2620 = vmax.f32 %v2588, 0.0
      %v2621 = vmax.f32 %v2589, 0.0
      %v2622 = vmax.f32 %v2590, 0.0
      %v2623 = vmax.f32 %v2591, 0.0
      %v2624 = vmax.f32 %v2592, 0.0
      %v2625 = vmax.f32 %v2593, 0.0
      %v2626 = vmax.f32 %v2594, 0.0
      %v2627 = vmax.f32 %v2595, 0.0
      %v2628 = vmax.f32 %v2596, 0.0
      %v2629 = vmax.f32 %v2597, 0.0
      %v2630 = vmax.f32 %v2598, 0.0
      %v2631 = vmax.f32 %v2599, 0.0
      %v2632 = vmax.f32 %v2600, 0.0
      %v2633 = vmax.f32 %v2601, 0.0
      %v2634 = vmax.f32 %v2602, 0.0
      %v2635 = vmax.f32 %v2603, 0.0
      %v2636 = vmax.f32 %v2604, 0.0
      %v2637 = vrot.slane %v2605, 7
      %v2638 = vrot.slane %v2606, 7
      %v2639 = vrot.slane %v2607, 7
      %v2640 = vrot.slane %v2608, 7
      %v2641 = vrot.slane %v2609, 7
      %v2642 = vrot.slane %v2610, 7
      %v2643 = vrot.slane %v2611, 7
      %v2644 = vrot.slane %v2612, 7
      %v2645 = vrot.slane %v2613, 7
      %v2646 = vrot.slane %v2614, 7
      %v2647 = vrot.slane %v2615, 7
      %v2648 = vrot.slane %v2616, 7
      %v2649 = vrot.slane %v2617, 7
      %v2650 = vrot.slane %v2618, 7
      %v2651 = vrot.slane %v2619, 7
      %v2652 = vrot.slane %v2620, 7
      %v2653 = vrot.slane %v2621, 7
      %v2654 = vrot.slane %v2622, 7
      %v2655 = vrot.slane %v2623, 7
      %v2656 = vrot.slane %v2624, 7
      %v2657 = vrot.slane %v2625, 7
      %v2658 = vrot.slane %v2626, 7
      %v2659 = vrot.slane %v2627, 7
      %v2660 = vrot.slane %v2628, 7
      %v2661 = vrot.slane %v2629, 7
      %v2662 = vrot.slane %v2630, 7
      %v2663 = vrot.slane %v2631, 7
      %v2664 = vrot.slane %v2632, 7
      %v2665 = vrot.slane %v2633, 7
      %v2666 = vrot.slane %v2634, 7
      %v2667 = vrot.slane %v2635, 7
      %v2668 = vrot.slane %v2636, 7
      %v2669 = vlaneseq
      %v2670 = vshrl.u32 %v2669, 7
      %vm2671 = vcmp.lt.s32.totalorder %v2670, 1
      %v2672 = vsel %vm2671, %v2667, %v2668
      %v2673 = vsel %vm2671, %v2666, %v2667
      %v2674 = vsel %vm2671, %v2665, %v2666
      %v2675 = vsel %vm2671, %v2664, %v2665
      %v2676 = vsel %vm2671, %v2663, %v2664
      %v2677 = vsel %vm2671, %v2662, %v2663
      %v2678 = vsel %vm2671, %v2661, %v2662
      %v2679 = vsel %vm2671, %v2660, %v2661
      %v2680 = vsel %vm2671, %v2659, %v2660
      %v2681 = vsel %vm2671, %v2658, %v2659
      %v2682 = vsel %vm2671, %v2657, %v2658
      %v2683 = vsel %vm2671, %v2656, %v2657
      %v2684 = vsel %vm2671, %v2655, %v2656
      %v2685 = vsel %vm2671, %v2654, %v2655
      %v2686 = vsel %vm2671, %v2653, %v2654
      %v2687 = vsel %vm2671, %v2652, %v2653
      %v2688 = vsel %vm2671, %v2651, %v2652
      %v2689 = vsel %vm2671, %v2650, %v2651
      %v2690 = vsel %vm2671, %v2649, %v2650
      %v2691 = vsel %vm2671, %v2648, %v2649
      %v2692 = vsel %vm2671, %v2647, %v2648
      %v2693 = vsel %vm2671, %v2646, %v2647
      %v2694 = vsel %vm2671, %v2645, %v2646
      %v2695 = vsel %vm2671, %v2644, %v2645
      %v2696 = vsel %vm2671, %v2643, %v2644
      %v2697 = vsel %vm2671, %v2642, %v2643
      %v2698 = vsel %vm2671, %v2641, %v2642
      %v2699 = vsel %vm2671, %v2640, %v2641
      %v2700 = vsel %vm2671, %v2639, %v2640
      %v2701 = vsel %vm2671, %v2638, %v2639
      %v2702 = vsel %vm2671, %v2637, %v2638
      %v2703 = vsel %vm2671, %v2668, %v2637
      %2705 = vset.pattern.permute.xlu0 0
      %2706 = vperm.xlu0 %2705, %v907
      %v2707 = vpop.permute.xlu0 %2706
      %2710 = vset.pattern.permute.xlu0 0
      %2711 = vperm.xlu0 %2710, %v908
      %v2712 = vpop.permute.xlu0 %2711
      %2715 = vset.pattern.permute.xlu0 0
      %2716 = vperm.xlu0 %2715, %v909
      %v2717 = vpop.permute.xlu0 %2716
      %2720 = vset.pattern.permute.xlu0 0
      %2721 = vperm.xlu0 %2720, %v910
      %v2722 = vpop.permute.xlu0 %2721
      %2725 = vset.pattern.permute.xlu0 0
      %2726 = vperm.xlu0 %2725, %v911
      %v2727 = vpop.permute.xlu0 %2726
      %2730 = vset.pattern.permute.xlu0 0
      %2731 = vperm.xlu0 %2730, %v912
      %v2732 = vpop.permute.xlu0 %2731
      %2735 = vset.pattern.permute.xlu0 0
      %2736 = vperm.xlu0 %2735, %v913
      %v2737 = vpop.permute.xlu0 %2736
      %2740 = vset.pattern.permute.xlu0 0
      %2741 = vperm.xlu0 %2740, %v914
      %v2742 = vpop.permute.xlu0 %2741
      %2745 = vset.pattern.permute.xlu0 0
      %2746 = vperm.xlu0 %2745, %v915
      %v2747 = vpop.permute.xlu0 %2746
      %2750 = vset.pattern.permute.xlu0 0
      %2751 = vperm.xlu0 %2750, %v916
      %v2752 = vpop.permute.xlu0 %2751
      %2755 = vset.pattern.permute.xlu0 0
      %2756 = vperm.xlu0 %2755, %v917
      %v2757 = vpop.permute.xlu0 %2756
      %2760 = vset.pattern.permute.xlu0 0
      %2761 = vperm.xlu0 %2760, %v918
      %v2762 = vpop.permute.xlu0 %2761
      %2765 = vset.pattern.permute.xlu0 0
      %2766 = vperm.xlu0 %2765, %v919
      %v2767 = vpop.permute.xlu0 %2766
      %2770 = vset.pattern.permute.xlu0 0
      %2771 = vperm.xlu0 %2770, %v920
      %v2772 = vpop.permute.xlu0 %2771
      %2775 = vset.pattern.permute.xlu0 0
      %2776 = vperm.xlu0 %2775, %v921
      %v2777 = vpop.permute.xlu0 %2776
      %2780 = vset.pattern.permute.xlu0 0
      %2781 = vperm.xlu0 %2780, %v922
      %v2782 = vpop.permute.xlu0 %2781
      %2785 = vset.pattern.permute.xlu0 0
      %2786 = vperm.xlu0 %2785, %v923
      %v2787 = vpop.permute.xlu0 %2786
      %2790 = vset.pattern.permute.xlu0 0
      %2791 = vperm.xlu0 %2790, %v924
      %v2792 = vpop.permute.xlu0 %2791
      %2795 = vset.pattern.permute.xlu0 0
      %2796 = vperm.xlu0 %2795, %v925
      %v2797 = vpop.permute.xlu0 %2796
      %2800 = vset.pattern.permute.xlu0 0
      %2801 = vperm.xlu0 %2800, %v926
      %v2802 = vpop.permute.xlu0 %2801
      %2805 = vset.pattern.permute.xlu0 0
      %2806 = vperm.xlu0 %2805, %v927
      %v2807 = vpop.permute.xlu0 %2806
      %2810 = vset.pattern.permute.xlu0 0
      %2811 = vperm.xlu0 %2810, %v928
      %v2812 = vpop.permute.xlu0 %2811
      %2815 = vset.pattern.permute.xlu0 0
      %2816 = vperm.xlu0 %2815, %v929
      %v2817 = vpop.permute.xlu0 %2816
      %2820 = vset.pattern.permute.xlu0 0
      %2821 = vperm.xlu0 %2820, %v930
      %v2822 = vpop.permute.xlu0 %2821
      %2825 = vset.pattern.permute.xlu0 0
      %2826 = vperm.xlu0 %2825, %v931
      %v2827 = vpop.permute.xlu0 %2826
      %2830 = vset.pattern.permute.xlu0 0
      %2831 = vperm.xlu0 %2830, %v932
      %v2832 = vpop.permute.xlu0 %2831
      %2835 = vset.pattern.permute.xlu0 0
      %2836 = vperm.xlu0 %2835, %v933
      %v2837 = vpop.permute.xlu0 %2836
      %2840 = vset.pattern.permute.xlu0 0
      %2841 = vperm.xlu0 %2840, %v934
      %v2842 = vpop.permute.xlu0 %2841
      %2845 = vset.pattern.permute.xlu0 0
      %2846 = vperm.xlu0 %2845, %v935
      %v2847 = vpop.permute.xlu0 %2846
      %2850 = vset.pattern.permute.xlu0 0
      %2851 = vperm.xlu0 %2850, %v936
      %v2852 = vpop.permute.xlu0 %2851
      %2855 = vset.pattern.permute.xlu0 0
      %2856 = vperm.xlu0 %2855, %v937
      %v2857 = vpop.permute.xlu0 %2856
      %2860 = vset.pattern.permute.xlu0 0
      %2861 = vperm.xlu0 %2860, %v938
      %v2862 = vpop.permute.xlu0 %2861
      %v2864 = vmul.f32 %v2673, %v2707
      %v2865 = vmul.f32 %v2672, %v2712
      %v2866 = vmul.f32 %v2703, %v2717
      %v2867 = vmul.f32 %v2702, %v2722
      %v2868 = vmul.f32 %v2701, %v2727
      %v2869 = vmul.f32 %v2700, %v2732
      %v2870 = vmul.f32 %v2699, %v2737
      %v2871 = vmul.f32 %v2698, %v2742
      %v2872 = vmul.f32 %v2697, %v2747
      %v2873 = vmul.f32 %v2696, %v2752
      %v2874 = vmul.f32 %v2695, %v2757
      %v2875 = vmul.f32 %v2694, %v2762
      %v2876 = vmul.f32 %v2693, %v2767
      %v2877 = vmul.f32 %v2692, %v2772
      %v2878 = vmul.f32 %v2691, %v2777
      %v2879 = vmul.f32 %v2690, %v2782
      %v2880 = vmul.f32 %v2689, %v2787
      %v2881 = vmul.f32 %v2688, %v2792
      %v2882 = vmul.f32 %v2687, %v2797
      %v2883 = vmul.f32 %v2686, %v2802
      %v2884 = vmul.f32 %v2685, %v2807
      %v2885 = vmul.f32 %v2684, %v2812
      %v2886 = vmul.f32 %v2683, %v2817
      %v2887 = vmul.f32 %v2682, %v2822
      %v2888 = vmul.f32 %v2681, %v2827
      %v2889 = vmul.f32 %v2680, %v2832
      %v2890 = vmul.f32 %v2679, %v2837
      %v2891 = vmul.f32 %v2678, %v2842
      %v2892 = vmul.f32 %v2677, %v2847
      %v2893 = vmul.f32 %v2676, %v2852
      %v2894 = vmul.f32 %v2675, %v2857
      %v2895 = vmul.f32 %v2674, %v2862
      %v2896 = vld [vmem:[%s7] sm:$0xff]
      %2898 = vset.pattern.permute.xlu0 0
      %2899 = vperm.xlu0 %2898, %v1227
      %v2900 = vpop.permute.xlu0 %2899
      %2903 = vset.pattern.permute.xlu0 0
      %2904 = vperm.xlu0 %2903, %v1228
      %v2905 = vpop.permute.xlu0 %2904
      %2908 = vset.pattern.permute.xlu0 0
      %2909 = vperm.xlu0 %2908, %v1229
      %v2910 = vpop.permute.xlu0 %2909
      %2913 = vset.pattern.permute.xlu0 0
      %2914 = vperm.xlu0 %2913, %v1230
      %v2915 = vpop.permute.xlu0 %2914
      %2918 = vset.pattern.permute.xlu0 0
      %2919 = vperm.xlu0 %2918, %v1231
      %v2920 = vpop.permute.xlu0 %2919
      %2923 = vset.pattern.permute.xlu0 0
      %2924 = vperm.xlu0 %2923, %v1232
      %v2925 = vpop.permute.xlu0 %2924
      %2928 = vset.pattern.permute.xlu0 0
      %2929 = vperm.xlu0 %2928, %v1233
      %v2930 = vpop.permute.xlu0 %2929
      %2933 = vset.pattern.permute.xlu0 0
      %2934 = vperm.xlu0 %2933, %v1234
      %v2935 = vpop.permute.xlu0 %2934
      %2938 = vset.pattern.permute.xlu0 0
      %2939 = vperm.xlu0 %2938, %v1235
      %v2940 = vpop.permute.xlu0 %2939
      %2943 = vset.pattern.permute.xlu0 0
      %2944 = vperm.xlu0 %2943, %v1236
      %v2945 = vpop.permute.xlu0 %2944
      %2948 = vset.pattern.permute.xlu0 0
      %2949 = vperm.xlu0 %2948, %v1237
      %v2950 = vpop.permute.xlu0 %2949
      %2953 = vset.pattern.permute.xlu0 0
      %2954 = vperm.xlu0 %2953, %v1238
      %v2955 = vpop.permute.xlu0 %2954
      %2958 = vset.pattern.permute.xlu0 0
      %2959 = vperm.xlu0 %2958, %v1239
      %v2960 = vpop.permute.xlu0 %2959
      %2963 = vset.pattern.permute.xlu0 0
      %2964 = vperm.xlu0 %2963, %v1240
      %v2965 = vpop.permute.xlu0 %2964
      %2968 = vset.pattern.permute.xlu0 0
      %2969 = vperm.xlu0 %2968, %v1241
      %v2970 = vpop.permute.xlu0 %2969
      %2973 = vset.pattern.permute.xlu0 0
      %2974 = vperm.xlu0 %2973, %v1242
      %v2975 = vpop.permute.xlu0 %2974
      %2978 = vset.pattern.permute.xlu0 0
      %2979 = vperm.xlu0 %2978, %v1243
      %v2980 = vpop.permute.xlu0 %2979
      %2983 = vset.pattern.permute.xlu0 0
      %2984 = vperm.xlu0 %2983, %v1244
      %v2985 = vpop.permute.xlu0 %2984
      %2988 = vset.pattern.permute.xlu0 0
      %2989 = vperm.xlu0 %2988, %v1245
      %v2990 = vpop.permute.xlu0 %2989
      %2993 = vset.pattern.permute.xlu0 0
      %2994 = vperm.xlu0 %2993, %v1246
      %v2995 = vpop.permute.xlu0 %2994
      %2998 = vset.pattern.permute.xlu0 0
      %2999 = vperm.xlu0 %2998, %v1247
      %v3000 = vpop.permute.xlu0 %2999
      %3003 = vset.pattern.permute.xlu0 0
      %3004 = vperm.xlu0 %3003, %v1248
      %v3005 = vpop.permute.xlu0 %3004
      %3008 = vset.pattern.permute.xlu0 0
      %3009 = vperm.xlu0 %3008, %v1249
      %v3010 = vpop.permute.xlu0 %3009
      %3013 = vset.pattern.permute.xlu0 0
      %3014 = vperm.xlu0 %3013, %v1250
      %v3015 = vpop.permute.xlu0 %3014
      %3018 = vset.pattern.permute.xlu0 0
      %3019 = vperm.xlu0 %3018, %v1251
      %v3020 = vpop.permute.xlu0 %3019
      %3023 = vset.pattern.permute.xlu0 0
      %3024 = vperm.xlu0 %3023, %v1252
      %v3025 = vpop.permute.xlu0 %3024
      %3028 = vset.pattern.permute.xlu0 0
      %3029 = vperm.xlu0 %3028, %v1253
      %v3030 = vpop.permute.xlu0 %3029
      %3033 = vset.pattern.permute.xlu0 0
      %3034 = vperm.xlu0 %3033, %v1254
      %v3035 = vpop.permute.xlu0 %3034
      %3038 = vset.pattern.permute.xlu0 0
      %3039 = vperm.xlu0 %3038, %v1255
      %v3040 = vpop.permute.xlu0 %3039
      %3043 = vset.pattern.permute.xlu0 0
      %3044 = vperm.xlu0 %3043, %v1256
      %v3045 = vpop.permute.xlu0 %3044
      %3048 = vset.pattern.permute.xlu0 0
      %3049 = vperm.xlu0 %3048, %v1257
      %v3050 = vpop.permute.xlu0 %3049
      %3053 = vset.pattern.permute.xlu0 0
      %3054 = vperm.xlu0 %3053, %v1258
      %v3055 = vpop.permute.xlu0 %3054
      %v3057 = vmul.f32 %v2635, %v2900
      %v3058 = vmul.f32 %v2636, %v2905
      %v3059 = vmul.f32 %v2605, %v2910
      %v3060 = vmul.f32 %v2606, %v2915
      %v3061 = vmul.f32 %v2607, %v2920
      %v3062 = vmul.f32 %v2608, %v2925
      %v3063 = vmul.f32 %v2609, %v2930
      %v3064 = vmul.f32 %v2610, %v2935
      %v3065 = vmul.f32 %v2611, %v2940
      %v3066 = vmul.f32 %v2612, %v2945
      %v3067 = vmul.f32 %v2613, %v2950
      %v3068 = vmul.f32 %v2614, %v2955
      %v3069 = vmul.f32 %v2615, %v2960
      %v3070 = vmul.f32 %v2616, %v2965
      %v3071 = vmul.f32 %v2617, %v2970
      %v3072 = vmul.f32 %v2618, %v2975
      %v3073 = vmul.f32 %v2619, %v2980
      %v3074 = vmul.f32 %v2620, %v2985
      %v3075 = vmul.f32 %v2621, %v2990
      %v3076 = vmul.f32 %v2622, %v2995
      %v3077 = vmul.f32 %v2623, %v3000
      %v3078 = vmul.f32 %v2624, %v3005
      %v3079 = vmul.f32 %v2625, %v3010
      %v3080 = vmul.f32 %v2626, %v3015
      %v3081 = vmul.f32 %v2627, %v3020
      %v3082 = vmul.f32 %v2628, %v3025
      %v3083 = vmul.f32 %v2629, %v3030
      %v3084 = vmul.f32 %v2630, %v3035
      %v3085 = vmul.f32 %v2631, %v3040
      %v3086 = vmul.f32 %v2632, %v3045
      %v3087 = vmul.f32 %v2633, %v3050
      %v3088 = vmul.f32 %v2634, %v3055
      %s3089 = scalar_lea.vmem %s7, 8
      %v3090 = vld [vmem:[%s3089] sm:$0xff]
      %vm3091 = vcmask 64512
      %v3093 = vsel %vm3091, %v3057, 0
      %v3096 = vsel %vm3091, %v3058, 0
      %v3099 = vsel %vm3091, %v3059, 0
      %v3102 = vsel %vm3091, %v3060, 0
      %v3105 = vsel %vm3091, %v3061, 0
      %v3108 = vsel %vm3091, %v3062, 0
      %v3111 = vsel %vm3091, %v3063, 0
      %v3114 = vsel %vm3091, %v3064, 0
      %v3117 = vsel %vm3091, %v3065, 0
      %v3120 = vsel %vm3091, %v3066, 0
      %v3123 = vsel %vm3091, %v3067, 0
      %v3126 = vsel %vm3091, %v3068, 0
      %v3129 = vsel %vm3091, %v3069, 0
      %v3132 = vsel %vm3091, %v3070, 0
      %v3135 = vsel %vm3091, %v3071, 0
      %v3138 = vsel %vm3091, %v3072, 0
      %v3141 = vsel %vm3091, %v3073, 0
      %v3144 = vsel %vm3091, %v3074, 0
      %v3147 = vsel %vm3091, %v3075, 0
      %v3150 = vsel %vm3091, %v3076, 0
      %v3153 = vsel %vm3091, %v3077, 0
      %v3156 = vsel %vm3091, %v3078, 0
      %v3159 = vsel %vm3091, %v3079, 0
      %v3162 = vsel %vm3091, %v3080, 0
      %v3165 = vsel %vm3091, %v3081, 0
      %v3168 = vsel %vm3091, %v3082, 0
      %v3171 = vsel %vm3091, %v3083, 0
      %v3174 = vsel %vm3091, %v3084, 0
      %v3177 = vsel %vm3091, %v3085, 0
      %v3180 = vsel %vm3091, %v3086, 0
      %v3183 = vsel %vm3091, %v3087, 0
      %v3186 = vsel %vm3091, %v3088, 0
      %3188 = vmatprep.subr.mxu0 0.0
      %3189 = vmatpush1.msra.mxu0 %v3090
      %3190 = vmatprep.subr.mxu0 0.0
      %3191 = vmatpush1.msra.mxu0 0.0
      %3192 = vmatprep.subr.mxu0 0.0
      %3193 = vmatpush1.msra.mxu0 0.0
      %3194 = vmatprep.subr.mxu0 0.0
      %3195 = vmatpush1.msra.mxu0 0.0
      %3196 = vmatprep.subr.mxu0 0.0
      %3197 = vmatpush1.msra.mxu0 0.0
      %3198 = vmatprep.subr.mxu0 0.0
      %3199 = vmatpush1.msra.mxu0 0.0
      %3200 = vmatprep.subr.mxu0 0.0
      %3201 = vmatpush1.msra.mxu0 0.0
      %3202 = vmatprep.subr.mxu0 0.0
      %3203 = vmatpush1.msra.mxu0 0.0
      %3204 = vmatprep.subr.mxu0 0.0
      %3205 = vmatpush1.msra.mxu0 0.0
      %3206 = vmatprep.subr.mxu0 0.0
      %3207 = vmatpush1.msra.mxu0 0.0
      %3208 = vmatprep.subr.mxu0 0.0
      %3209 = vmatpush1.msra.mxu0 0.0
      %3210 = vmatprep.subr.mxu0 0.0
      %3211 = vmatpush1.msra.mxu0 0.0
      %3212 = vmatprep.subr.mxu0 0.0
      %3213 = vmatpush1.msra.mxu0 0.0
      %3214 = vmatprep.subr.mxu0 0.0
      %3215 = vmatpush1.msra.mxu0 0.0
      %3216 = vmatprep.subr.mxu0 0.0
      %3217 = vmatpush1.msra.mxu0 0.0
      %3218 = vmatprep.subr.mxu0 0.0
      %3219 = vmatpush1.msra.mxu0 0.0
      %3220 = vmatprep.subr.mxu0 0.0
      %3221 = vmatpush1.msra.mxu0 0.0
      %3222 = vmatprep.subr.mxu0 0.0
      %3223 = vmatpush1.msra.mxu0 0.0
      %3224 = vmatprep.subr.mxu0 0.0
      %3225 = vmatpush1.msra.mxu0 0.0
      %3226 = vmatprep.subr.mxu0 0.0
      %3227 = vmatpush1.msra.mxu0 0.0
      %3228 = vmatprep.subr.mxu0 0.0
      %3229 = vmatpush1.msra.mxu0 0.0
      %3230 = vmatprep.subr.mxu0 0.0
      %3231 = vmatpush1.msra.mxu0 0.0
      %3232 = vmatprep.subr.mxu0 0.0
      %3233 = vmatpush1.msra.mxu0 0.0
      %3234 = vmatprep.subr.mxu0 0.0
      %3235 = vmatpush1.msra.mxu0 0.0
      %3236 = vmatprep.subr.mxu0 0.0
      %3237 = vmatpush1.msra.mxu0 0.0
      %3238 = vmatprep.subr.mxu0 0.0
      %3239 = vmatpush1.msra.mxu0 0.0
      %3240 = vmatprep.subr.mxu0 0.0
      %3241 = vmatpush1.msra.mxu0 0.0
      %3242 = vmatprep.subr.mxu0 0.0
      %3243 = vmatpush1.msra.mxu0 0.0
      %3244 = vmatprep.subr.mxu0 0.0
      %3245 = vmatpush1.msra.mxu0 0.0
      %3246 = vmatprep.subr.mxu0 0.0
      %3247 = vmatpush1.msra.mxu0 0.0
      %3248 = vmatprep.subr.mxu0 0.0
      %3249 = vmatpush1.msra.mxu0 0.0
      %3250 = vmatprep.subr.mxu0 0.0
      %3251 = vmatpush1.msra.mxu0 0.0
      %3252 = vmatprep.mubr.f32.mxu0 0.0
      %3253 = vmatmul.mubr.f32.gmra.mrb[0].mxu0 %v3093
      %v3254 = vpop.f32.mrb[0].mxu0
      %v3255 = vadd.f32 0.0, %v3254
      %v3256 = vpop.f32.mrb[0].mxu0
      %3257 = vmatprep.mubr.f32.mxu0 0.0
      %3258 = vmatmul.mubr.f32.gmra.mrb[0].mxu0 %v3096
      %v3259 = vpop.f32.mrb[0].mxu0
      %v3260 = vadd.f32 0.0, %v3259
      %v3261 = vpop.f32.mrb[0].mxu0
      %3262 = vmatprep.mubr.f32.mxu0 0.0
      %3263 = vmatmul.mubr.f32.gmra.mrb[0].mxu0 %v3099
      %v3264 = vpop.f32.mrb[0].mxu0
      %v3265 = vadd.f32 0.0, %v3264
      %v3266 = vpop.f32.mrb[0].mxu0
      %3267 = vmatprep.mubr.f32.mxu0 0.0
      %3268 = vmatmul.mubr.f32.gmra.mrb[0].mxu0 %v3102
      %v3269 = vpop.f32.mrb[0].mxu0
      %v3270 = vadd.f32 0.0, %v3269
      %v3271 = vpop.f32.mrb[0].mxu0
      %3272 = vmatprep.mubr.f32.mxu0 0.0
      %3273 = vmatmul.mubr.f32.gmra.mrb[0].mxu0 %v3105
      %v3274 = vpop.f32.mrb[0].mxu0
      %v3275 = vadd.f32 0.0, %v3274
      %v3276 = vpop.f32.mrb[0].mxu0
      %3277 = vmatprep.mubr.f32.mxu0 0.0
      %3278 = vmatmul.mubr.f32.gmra.mrb[0].mxu0 %v3108
      %v3279 = vpop.f32.mrb[0].mxu0
      %v3280 = vadd.f32 0.0, %v3279
      %v3281 = vpop.f32.mrb[0].mxu0
      %3282 = vmatprep.mubr.f32.mxu0 0.0
      %3283 = vmatmul.mubr.f32.gmra.mrb[0].mxu0 %v3111
      %v3284 = vpop.f32.mrb[0].mxu0
      %v3285 = vadd.f32 0.0, %v3284
      %v3286 = vpop.f32.mrb[0].mxu0
      %3287 = vmatprep.mubr.f32.mxu0 0.0
      %3288 = vmatmul.mubr.f32.gmra.mrb[0].mxu0 %v3114
      %v3289 = vpop.f32.mrb[0].mxu0
      %v3290 = vadd.f32 0.0, %v3289
      %v3291 = vpop.f32.mrb[0].mxu0
      %3292 = vmatprep.mubr.f32.mxu0 0.0
      %3293 = vmatmul.mubr.f32.gmra.mrb[0].mxu0 %v3117
      %v3294 = vpop.f32.mrb[0].mxu0
      %v3295 = vadd.f32 0.0, %v3294
      %v3296 = vpop.f32.mrb[0].mxu0
      %3297 = vmatprep.mubr.f32.mxu0 0.0
      %3298 = vmatmul.mubr.f32.gmra.mrb[0].mxu0 %v3120
      %v3299 = vpop.f32.mrb[0].mxu0
      %v3300 = vadd.f32 0.0, %v3299
      %v3301 = vpop.f32.mrb[0].mxu0
      %3302 = vmatprep.mubr.f32.mxu0 0.0
      %3303 = vmatmul.mubr.f32.gmra.mrb[0].mxu0 %v3123
      %v3304 = vpop.f32.mrb[0].mxu0
      %v3305 = vadd.f32 0.0, %v3304
      %v3306 = vpop.f32.mrb[0].mxu0
      %3307 = vmatprep.mubr.f32.mxu0 0.0
      %3308 = vmatmul.mubr.f32.gmra.mrb[0].mxu0 %v3126
      %v3309 = vpop.f32.mrb[0].mxu0
      %v3310 = vadd.f32 0.0, %v3309
      %v3311 = vpop.f32.mrb[0].mxu0
      %3312 = vmatprep.mubr.f32.mxu0 0.0
      %3313 = vmatmul.mubr.f32.gmra.mrb[0].mxu0 %v3129
      %v3314 = vpop.f32.mrb[0].mxu0
      %v3315 = vadd.f32 0.0, %v3314
      %v3316 = vpop.f32.mrb[0].mxu0
      %3317 = vmatprep.mubr.f32.mxu0 0.0
      %3318 = vmatmul.mubr.f32.gmra.mrb[0].mxu0 %v3132
      %v3319 = vpop.f32.mrb[0].mxu0
      %v3320 = vadd.f32 0.0, %v3319
      %v3321 = vpop.f32.mrb[0].mxu0
      %3322 = vmatprep.mubr.f32.mxu0 0.0
      %3323 = vmatmul.mubr.f32.gmra.mrb[0].mxu0 %v3135
      %v3324 = vpop.f32.mrb[0].mxu0
      %v3325 = vadd.f32 0.0, %v3324
      %v3326 = vpop.f32.mrb[0].mxu0
      %3327 = vmatprep.mubr.f32.mxu0 0.0
      %3328 = vmatmul.mubr.f32.gmra.mrb[0].mxu0 %v3138
      %v3329 = vpop.f32.mrb[0].mxu0
      %v3330 = vadd.f32 0.0, %v3329
      %v3331 = vpop.f32.mrb[0].mxu0
      %3332 = vmatprep.mubr.f32.mxu0 0.0
      %3333 = vmatmul.mubr.f32.gmra.mrb[0].mxu0 %v3141
      %v3334 = vpop.f32.mrb[0].mxu0
      %v3335 = vadd.f32 0.0, %v3334
      %v3336 = vpop.f32.mrb[0].mxu0
      %3337 = vmatprep.mubr.f32.mxu0 0.0
      %3338 = vmatmul.mubr.f32.gmra.mrb[0].mxu0 %v3144
      %v3339 = vpop.f32.mrb[0].mxu0
      %v3340 = vadd.f32 0.0, %v3339
      %v3341 = vpop.f32.mrb[0].mxu0
      %3342 = vmatprep.mubr.f32.mxu0 0.0
      %3343 = vmatmul.mubr.f32.gmra.mrb[0].mxu0 %v3147
      %v3344 = vpop.f32.mrb[0].mxu0
      %v3345 = vadd.f32 0.0, %v3344
      %v3346 = vpop.f32.mrb[0].mxu0
      %3347 = vmatprep.mubr.f32.mxu0 0.0
      %3348 = vmatmul.mubr.f32.gmra.mrb[0].mxu0 %v3150
      %v3349 = vpop.f32.mrb[0].mxu0
      %v3350 = vadd.f32 0.0, %v3349
      %v3351 = vpop.f32.mrb[0].mxu0
      %3352 = vmatprep.mubr.f32.mxu0 0.0
      %3353 = vmatmul.mubr.f32.gmra.mrb[0].mxu0 %v3153
      %v3354 = vpop.f32.mrb[0].mxu0
      %v3355 = vadd.f32 0.0, %v3354
      %v3356 = vpop.f32.mrb[0].mxu0
      %3357 = vmatprep.mubr.f32.mxu0 0.0
      %3358 = vmatmul.mubr.f32.gmra.mrb[0].mxu0 %v3156
      %v3359 = vpop.f32.mrb[0].mxu0
      %v3360 = vadd.f32 0.0, %v3359
      %v3361 = vpop.f32.mrb[0].mxu0
      %3362 = vmatprep.mubr.f32.mxu0 0.0
      %3363 = vmatmul.mubr.f32.gmra.mrb[0].mxu0 %v3159
      %v3364 = vpop.f32.mrb[0].mxu0
      %v3365 = vadd.f32 0.0, %v3364
      %v3366 = vpop.f32.mrb[0].mxu0
      %3367 = vmatprep.mubr.f32.mxu0 0.0
      %3368 = vmatmul.mubr.f32.gmra.mrb[0].mxu0 %v3162
      %v3369 = vpop.f32.mrb[0].mxu0
      %v3370 = vadd.f32 0.0, %v3369
      %v3371 = vpop.f32.mrb[0].mxu0
      %3372 = vmatprep.mubr.f32.mxu0 0.0
      %3373 = vmatmul.mubr.f32.gmra.mrb[0].mxu0 %v3165
      %v3374 = vpop.f32.mrb[0].mxu0
      %v3375 = vadd.f32 0.0, %v3374
      %v3376 = vpop.f32.mrb[0].mxu0
      %3377 = vmatprep.mubr.f32.mxu0 0.0
      %3378 = vmatmul.mubr.f32.gmra.mrb[0].mxu0 %v3168
      %v3379 = vpop.f32.mrb[0].mxu0
      %v3380 = vadd.f32 0.0, %v3379
      %v3381 = vpop.f32.mrb[0].mxu0
      %3382 = vmatprep.mubr.f32.mxu0 0.0
      %3383 = vmatmul.mubr.f32.gmra.mrb[0].mxu0 %v3171
      %v3384 = vpop.f32.mrb[0].mxu0
      %v3385 = vadd.f32 0.0, %v3384
      %v3386 = vpop.f32.mrb[0].mxu0
      %3387 = vmatprep.mubr.f32.mxu0 0.0
      %3388 = vmatmul.mubr.f32.gmra.mrb[0].mxu0 %v3174
      %v3389 = vpop.f32.mrb[0].mxu0
      %v3390 = vadd.f32 0.0, %v3389
      %v3391 = vpop.f32.mrb[0].mxu0
      %3392 = vmatprep.mubr.f32.mxu0 0.0
      %3393 = vmatmul.mubr.f32.gmra.mrb[0].mxu0 %v3177
      %v3394 = vpop.f32.mrb[0].mxu0
      %v3395 = vadd.f32 0.0, %v3394
      %v3396 = vpop.f32.mrb[0].mxu0
      %3397 = vmatprep.mubr.f32.mxu0 0.0
      %3398 = vmatmul.mubr.f32.gmra.mrb[0].mxu0 %v3180
      %v3399 = vpop.f32.mrb[0].mxu0
      %v3400 = vadd.f32 0.0, %v3399
      %v3401 = vpop.f32.mrb[0].mxu0
      %3402 = vmatprep.mubr.f32.mxu0 0.0
      %3403 = vmatmul.mubr.f32.gmra.mrb[0].mxu0 %v3183
      %v3404 = vpop.f32.mrb[0].mxu0
      %v3405 = vadd.f32 0.0, %v3404
      %v3406 = vpop.f32.mrb[0].mxu0
      %3407 = vmatprep.mubr.f32.mxu0 0.0
      %3408 = vmatmul.mubr.f32.gmra.mrb[0].mxu0 %v3186
      %v3409 = vpop.f32.mrb[0].mxu0
      %v3410 = vadd.f32 0.0, %v3409
      %v3411 = vpop.f32.mrb[0].mxu0
      %3412 = vdwg.mxu0
      %v3414 = vsel %vm3091, %v2864, 0
      %v3417 = vsel %vm3091, %v2865, 0
      %v3420 = vsel %vm3091, %v2866, 0
      %v3423 = vsel %vm3091, %v2867, 0
      %v3426 = vsel %vm3091, %v2868, 0
      %v3429 = vsel %vm3091, %v2869, 0
      %v3432 = vsel %vm3091, %v2870, 0
      %v3435 = vsel %vm3091, %v2871, 0
      %v3438 = vsel %vm3091, %v2872, 0
      %v3441 = vsel %vm3091, %v2873, 0
      %v3444 = vsel %vm3091, %v2874, 0
      %v3447 = vsel %vm3091, %v2875, 0
      %v3450 = vsel %vm3091, %v2876, 0
      %v3453 = vsel %vm3091, %v2877, 0
      %v3456 = vsel %vm3091, %v2878, 0
      %v3459 = vsel %vm3091, %v2879, 0
      %v3462 = vsel %vm3091, %v2880, 0
      %v3465 = vsel %vm3091, %v2881, 0
      %v3468 = vsel %vm3091, %v2882, 0
      %v3471 = vsel %vm3091, %v2883, 0
      %v3474 = vsel %vm3091, %v2884, 0
      %v3477 = vsel %vm3091, %v2885, 0
      %v3480 = vsel %vm3091, %v2886, 0
      %v3483 = vsel %vm3091, %v2887, 0
      %v3486 = vsel %vm3091, %v2888, 0
      %v3489 = vsel %vm3091, %v2889, 0
      %v3492 = vsel %vm3091, %v2890, 0
      %v3495 = vsel %vm3091, %v2891, 0
      %v3498 = vsel %vm3091, %v2892, 0
      %v3501 = vsel %vm3091, %v2893, 0
      %v3504 = vsel %vm3091, %v2894, 0
      %v3507 = vsel %vm3091, %v2895, 0
      %3509 = vmatprep.subr.mxu0 0.0
      %3510 = vmatpush1.msra.mxu0 %v2896
      %3511 = vmatprep.subr.mxu0 0.0
      %3512 = vmatpush1.msra.mxu0 0.0
      %3513 = vmatprep.subr.mxu0 0.0
      %3514 = vmatpush1.msra.mxu0 0.0
      %3515 = vmatprep.subr.mxu0 0.0
      %3516 = vmatpush1.msra.mxu0 0.0
      %3517 = vmatprep.subr.mxu0 0.0
      %3518 = vmatpush1.msra.mxu0 0.0
      %3519 = vmatprep.subr.mxu0 0.0
      %3520 = vmatpush1.msra.mxu0 0.0
      %3521 = vmatprep.subr.mxu0 0.0
      %3522 = vmatpush1.msra.mxu0 0.0
      %3523 = vmatprep.subr.mxu0 0.0
      %3524 = vmatpush1.msra.mxu0 0.0
      %3525 = vmatprep.subr.mxu0 0.0
      %3526 = vmatpush1.msra.mxu0 0.0
      %3527 = vmatprep.subr.mxu0 0.0
      %3528 = vmatpush1.msra.mxu0 0.0
      %3529 = vmatprep.subr.mxu0 0.0
      %3530 = vmatpush1.msra.mxu0 0.0
      %3531 = vmatprep.subr.mxu0 0.0
      %3532 = vmatpush1.msra.mxu0 0.0
      %3533 = vmatprep.subr.mxu0 0.0
      %3534 = vmatpush1.msra.mxu0 0.0
      %3535 = vmatprep.subr.mxu0 0.0
      %3536 = vmatpush1.msra.mxu0 0.0
      %3537 = vmatprep.subr.mxu0 0.0
      %3538 = vmatpush1.msra.mxu0 0.0
      %3539 = vmatprep.subr.mxu0 0.0
      %3540 = vmatpush1.msra.mxu0 0.0
      %3541 = vmatprep.subr.mxu0 0.0
      %3542 = vmatpush1.msra.mxu0 0.0
      %3543 = vmatprep.subr.mxu0 0.0
      %3544 = vmatpush1.msra.mxu0 0.0
      %3545 = vmatprep.subr.mxu0 0.0
      %3546 = vmatpush1.msra.mxu0 0.0
      %3547 = vmatprep.subr.mxu0 0.0
      %3548 = vmatpush1.msra.mxu0 0.0
      %3549 = vmatprep.subr.mxu0 0.0
      %3550 = vmatpush1.msra.mxu0 0.0
      %3551 = vmatprep.subr.mxu0 0.0
      %3552 = vmatpush1.msra.mxu0 0.0
      %3553 = vmatprep.subr.mxu0 0.0
      %3554 = vmatpush1.msra.mxu0 0.0
      %3555 = vmatprep.subr.mxu0 0.0
      %3556 = vmatpush1.msra.mxu0 0.0
      %3557 = vmatprep.subr.mxu0 0.0
      %3558 = vmatpush1.msra.mxu0 0.0
      %3559 = vmatprep.subr.mxu0 0.0
      %3560 = vmatpush1.msra.mxu0 0.0
      %3561 = vmatprep.subr.mxu0 0.0
      %3562 = vmatpush1.msra.mxu0 0.0
      %3563 = vmatprep.subr.mxu0 0.0
      %3564 = vmatpush1.msra.mxu0 0.0
      %3565 = vmatprep.subr.mxu0 0.0
      %3566 = vmatpush1.msra.mxu0 0.0
      %3567 = vmatprep.subr.mxu0 0.0
      %3568 = vmatpush1.msra.mxu0 0.0
      %3569 = vmatprep.subr.mxu0 0.0
      %3570 = vmatpush1.msra.mxu0 0.0
      %3571 = vmatprep.subr.mxu0 0.0
      %3572 = vmatpush1.msra.mxu0 0.0
      %3573 = vmatprep.mubr.f32.mxu0 0.0
      %3574 = vmatmul.mubr.f32.gmra.mrb[0].mxu0 %v3414
      %v3575 = vpop.f32.mrb[0].mxu0
      %v3576 = vadd.f32 %v3255, %v3575
      %v3577 = vpop.f32.mrb[0].mxu0
      %3578 = vmatprep.mubr.f32.mxu0 0.0
      %3579 = vmatmul.mubr.f32.gmra.mrb[0].mxu0 %v3417
      %v3580 = vpop.f32.mrb[0].mxu0
      %v3581 = vadd.f32 %v3260, %v3580
      %v3582 = vpop.f32.mrb[0].mxu0
      %3583 = vmatprep.mubr.f32.mxu0 0.0
      %3584 = vmatmul.mubr.f32.gmra.mrb[0].mxu0 %v3420
      %v3585 = vpop.f32.mrb[0].mxu0
      %v3586 = vadd.f32 %v3265, %v3585
      %v3587 = vpop.f32.mrb[0].mxu0
      %3588 = vmatprep.mubr.f32.mxu0 0.0
      %3589 = vmatmul.mubr.f32.gmra.mrb[0].mxu0 %v3423
      %v3590 = vpop.f32.mrb[0].mxu0
      %v3591 = vadd.f32 %v3270, %v3590
      %v3592 = vpop.f32.mrb[0].mxu0
      %3593 = vmatprep.mubr.f32.mxu0 0.0
      %3594 = vmatmul.mubr.f32.gmra.mrb[0].mxu0 %v3426
      %v3595 = vpop.f32.mrb[0].mxu0
      %v3596 = vadd.f32 %v3275, %v3595
      %v3597 = vpop.f32.mrb[0].mxu0
      %3598 = vmatprep.mubr.f32.mxu0 0.0
      %3599 = vmatmul.mubr.f32.gmra.mrb[0].mxu0 %v3429
      %v3600 = vpop.f32.mrb[0].mxu0
      %v3601 = vadd.f32 %v3280, %v3600
      %v3602 = vpop.f32.mrb[0].mxu0
      %3603 = vmatprep.mubr.f32.mxu0 0.0
      %3604 = vmatmul.mubr.f32.gmra.mrb[0].mxu0 %v3432
      %v3605 = vpop.f32.mrb[0].mxu0
      %v3606 = vadd.f32 %v3285, %v3605
      %v3607 = vpop.f32.mrb[0].mxu0
      %3608 = vmatprep.mubr.f32.mxu0 0.0
      %3609 = vmatmul.mubr.f32.gmra.mrb[0].mxu0 %v3435
      %v3610 = vpop.f32.mrb[0].mxu0
      %v3611 = vadd.f32 %v3290, %v3610
      %v3612 = vpop.f32.mrb[0].mxu0
      %3613 = vmatprep.mubr.f32.mxu0 0.0
      %3614 = vmatmul.mubr.f32.gmra.mrb[0].mxu0 %v3438
      %v3615 = vpop.f32.mrb[0].mxu0
      %v3616 = vadd.f32 %v3295, %v3615
      %v3617 = vpop.f32.mrb[0].mxu0
      %3618 = vmatprep.mubr.f32.mxu0 0.0
      %3619 = vmatmul.mubr.f32.gmra.mrb[0].mxu0 %v3441
      %v3620 = vpop.f32.mrb[0].mxu0
      %v3621 = vadd.f32 %v3300, %v3620
      %v3622 = vpop.f32.mrb[0].mxu0
      %3623 = vmatprep.mubr.f32.mxu0 0.0
      %3624 = vmatmul.mubr.f32.gmra.mrb[0].mxu0 %v3444
      %v3625 = vpop.f32.mrb[0].mxu0
      %v3626 = vadd.f32 %v3305, %v3625
      %v3627 = vpop.f32.mrb[0].mxu0
      %3628 = vmatprep.mubr.f32.mxu0 0.0
      %3629 = vmatmul.mubr.f32.gmra.mrb[0].mxu0 %v3447
      %v3630 = vpop.f32.mrb[0].mxu0
      %v3631 = vadd.f32 %v3310, %v3630
      %v3632 = vpop.f32.mrb[0].mxu0
      %3633 = vmatprep.mubr.f32.mxu0 0.0
      %3634 = vmatmul.mubr.f32.gmra.mrb[0].mxu0 %v3450
      %v3635 = vpop.f32.mrb[0].mxu0
      %v3636 = vadd.f32 %v3315, %v3635
      %v3637 = vpop.f32.mrb[0].mxu0
      %3638 = vmatprep.mubr.f32.mxu0 0.0
      %3639 = vmatmul.mubr.f32.gmra.mrb[0].mxu0 %v3453
      %v3640 = vpop.f32.mrb[0].mxu0
      %v3641 = vadd.f32 %v3320, %v3640
      %v3642 = vpop.f32.mrb[0].mxu0
      %3643 = vmatprep.mubr.f32.mxu0 0.0
      %3644 = vmatmul.mubr.f32.gmra.mrb[0].mxu0 %v3456
      %v3645 = vpop.f32.mrb[0].mxu0
      %v3646 = vadd.f32 %v3325, %v3645
      %v3647 = vpop.f32.mrb[0].mxu0
      %3648 = vmatprep.mubr.f32.mxu0 0.0
      %3649 = vmatmul.mubr.f32.gmra.mrb[0].mxu0 %v3459
      %v3650 = vpop.f32.mrb[0].mxu0
      %v3651 = vadd.f32 %v3330, %v3650
      %v3652 = vpop.f32.mrb[0].mxu0
      %3653 = vmatprep.mubr.f32.mxu0 0.0
      %3654 = vmatmul.mubr.f32.gmra.mrb[0].mxu0 %v3462
      %v3655 = vpop.f32.mrb[0].mxu0
      %v3656 = vadd.f32 %v3335, %v3655
      %v3657 = vpop.f32.mrb[0].mxu0
      %3658 = vmatprep.mubr.f32.mxu0 0.0
      %3659 = vmatmul.mubr.f32.gmra.mrb[0].mxu0 %v3465
      %v3660 = vpop.f32.mrb[0].mxu0
      %v3661 = vadd.f32 %v3340, %v3660
      %v3662 = vpop.f32.mrb[0].mxu0
      %3663 = vmatprep.mubr.f32.mxu0 0.0
      %3664 = vmatmul.mubr.f32.gmra.mrb[0].mxu0 %v3468
      %v3665 = vpop.f32.mrb[0].mxu0
      %v3666 = vadd.f32 %v3345, %v3665
      %v3667 = vpop.f32.mrb[0].mxu0
      %3668 = vmatprep.mubr.f32.mxu0 0.0
      %3669 = vmatmul.mubr.f32.gmra.mrb[0].mxu0 %v3471
      %v3670 = vpop.f32.mrb[0].mxu0
      %v3671 = vadd.f32 %v3350, %v3670
      %v3672 = vpop.f32.mrb[0].mxu0
      %3673 = vmatprep.mubr.f32.mxu0 0.0
      %3674 = vmatmul.mubr.f32.gmra.mrb[0].mxu0 %v3474
      %v3675 = vpop.f32.mrb[0].mxu0
      %v3676 = vadd.f32 %v3355, %v3675
      %v3677 = vpop.f32.mrb[0].mxu0
      %3678 = vmatprep.mubr.f32.mxu0 0.0
      %3679 = vmatmul.mubr.f32.gmra.mrb[0].mxu0 %v3477
      %v3680 = vpop.f32.mrb[0].mxu0
      %v3681 = vadd.f32 %v3360, %v3680
      %v3682 = vpop.f32.mrb[0].mxu0
      %3683 = vmatprep.mubr.f32.mxu0 0.0
      %3684 = vmatmul.mubr.f32.gmra.mrb[0].mxu0 %v3480
      %v3685 = vpop.f32.mrb[0].mxu0
      %v3686 = vadd.f32 %v3365, %v3685
      %v3687 = vpop.f32.mrb[0].mxu0
      %3688 = vmatprep.mubr.f32.mxu0 0.0
      %3689 = vmatmul.mubr.f32.gmra.mrb[0].mxu0 %v3483
      %v3690 = vpop.f32.mrb[0].mxu0
      %v3691 = vadd.f32 %v3370, %v3690
      %v3692 = vpop.f32.mrb[0].mxu0
      %3693 = vmatprep.mubr.f32.mxu0 0.0
      %3694 = vmatmul.mubr.f32.gmra.mrb[0].mxu0 %v3486
      %v3695 = vpop.f32.mrb[0].mxu0
      %v3696 = vadd.f32 %v3375, %v3695
      %v3697 = vpop.f32.mrb[0].mxu0
      %3698 = vmatprep.mubr.f32.mxu0 0.0
      %3699 = vmatmul.mubr.f32.gmra.mrb[0].mxu0 %v3489
      %v3700 = vpop.f32.mrb[0].mxu0
      %v3701 = vadd.f32 %v3380, %v3700
      %v3702 = vpop.f32.mrb[0].mxu0
      %3703 = vmatprep.mubr.f32.mxu0 0.0
      %3704 = vmatmul.mubr.f32.gmra.mrb[0].mxu0 %v3492
      %v3705 = vpop.f32.mrb[0].mxu0
      %v3706 = vadd.f32 %v3385, %v3705
      %v3707 = vpop.f32.mrb[0].mxu0
      %3708 = vmatprep.mubr.f32.mxu0 0.0
      %3709 = vmatmul.mubr.f32.gmra.mrb[0].mxu0 %v3495
      %v3710 = vpop.f32.mrb[0].mxu0
      %v3711 = vadd.f32 %v3390, %v3710
      %v3712 = vpop.f32.mrb[0].mxu0
      %3713 = vmatprep.mubr.f32.mxu0 0.0
      %3714 = vmatmul.mubr.f32.gmra.mrb[0].mxu0 %v3498
      %v3715 = vpop.f32.mrb[0].mxu0
      %v3716 = vadd.f32 %v3395, %v3715
      %v3717 = vpop.f32.mrb[0].mxu0
      %3718 = vmatprep.mubr.f32.mxu0 0.0
      %3719 = vmatmul.mubr.f32.gmra.mrb[0].mxu0 %v3501
      %v3720 = vpop.f32.mrb[0].mxu0
      %v3721 = vadd.f32 %v3400, %v3720
      %v3722 = vpop.f32.mrb[0].mxu0
      %3723 = vmatprep.mubr.f32.mxu0 0.0
      %3724 = vmatmul.mubr.f32.gmra.mrb[0].mxu0 %v3504
      %v3725 = vpop.f32.mrb[0].mxu0
      %v3726 = vadd.f32 %v3405, %v3725
      %v3727 = vpop.f32.mrb[0].mxu0
      %3728 = vmatprep.mubr.f32.mxu0 0.0
      %3729 = vmatmul.mubr.f32.gmra.mrb[0].mxu0 %v3507
      %v3730 = vpop.f32.mrb[0].mxu0
      %v3731 = vadd.f32 %v3410, %v3730
      %v3732 = vpop.f32.mrb[0].mxu0
      %3733 = vdwg.mxu0
      %v3734 = vrot.slane %v2605, 1
      %v3735 = vrot.slane %v2606, 1
      %v3736 = vrot.slane %v2607, 1
      %v3737 = vrot.slane %v2608, 1
      %v3738 = vrot.slane %v2609, 1
      %v3739 = vrot.slane %v2610, 1
      %v3740 = vrot.slane %v2611, 1
      %v3741 = vrot.slane %v2612, 1
      %v3742 = vrot.slane %v2613, 1
      %v3743 = vrot.slane %v2614, 1
      %v3744 = vrot.slane %v2615, 1
      %v3745 = vrot.slane %v2616, 1
      %v3746 = vrot.slane %v2617, 1
      %v3747 = vrot.slane %v2618, 1
      %v3748 = vrot.slane %v2619, 1
      %v3749 = vrot.slane %v2620, 1
      %v3750 = vrot.slane %v2621, 1
      %v3751 = vrot.slane %v2622, 1
      %v3752 = vrot.slane %v2623, 1
      %v3753 = vrot.slane %v2624, 1
      %v3754 = vrot.slane %v2625, 1
      %v3755 = vrot.slane %v2626, 1
      %v3756 = vrot.slane %v2627, 1
      %v3757 = vrot.slane %v2628, 1
      %v3758 = vrot.slane %v2629, 1
      %v3759 = vrot.slane %v2630, 1
      %v3760 = vrot.slane %v2631, 1
      %v3761 = vrot.slane %v2632, 1
      %v3762 = vrot.slane %v2633, 1
      %v3763 = vrot.slane %v2634, 1
      %v3764 = vrot.slane %v2635, 1
      %v3765 = vrot.slane %v2636, 1
      %vm3766 = vcmp.lt.s32.totalorder %v2670, 7
      %v3767 = vsel %vm3766, %v3764, %v3765
      %v3768 = vsel %vm3766, %v3763, %v3764
      %v3769 = vsel %vm3766, %v3762, %v3763
      %v3770 = vsel %vm3766, %v3761, %v3762
      %v3771 = vsel %vm3766, %v3760, %v3761
      %v3772 = vsel %vm3766, %v3759, %v3760
      %v3773 = vsel %vm3766, %v3758, %v3759
      %v3774 = vsel %vm3766, %v3757, %v3758
      %v3775 = vsel %vm3766, %v3756, %v3757
      %v3776 = vsel %vm3766, %v3755, %v3756
      %v3777 = vsel %vm3766, %v3754, %v3755
      %v3778 = vsel %vm3766, %v3753, %v3754
      %v3779 = vsel %vm3766, %v3752, %v3753
      %v3780 = vsel %vm3766, %v3751, %v3752
      %v3781 = vsel %vm3766, %v3750, %v3751
      %v3782 = vsel %vm3766, %v3749, %v3750
      %v3783 = vsel %vm3766, %v3748, %v3749
      %v3784 = vsel %vm3766, %v3747, %v3748
      %v3785 = vsel %vm3766, %v3746, %v3747
      %v3786 = vsel %vm3766, %v3745, %v3746
      %v3787 = vsel %vm3766, %v3744, %v3745
      %v3788 = vsel %vm3766, %v3743, %v3744
      %v3789 = vsel %vm3766, %v3742, %v3743
      %v3790 = vsel %vm3766, %v3741, %v3742
      %v3791 = vsel %vm3766, %v3740, %v3741
      %v3792 = vsel %vm3766, %v3739, %v3740
      %v3793 = vsel %vm3766, %v3738, %v3739
      %v3794 = vsel %vm3766, %v3737, %v3738
      %v3795 = vsel %vm3766, %v3736, %v3737
      %v3796 = vsel %vm3766, %v3735, %v3736
      %v3797 = vsel %vm3766, %v3734, %v3735
      %v3798 = vsel %vm3766, %v3765, %v3734
      %3800 = vset.pattern.permute.xlu0 0
      %3801 = vperm.xlu0 %3800, %v1547
      %v3802 = vpop.permute.xlu0 %3801
      %3805 = vset.pattern.permute.xlu0 0
      %3806 = vperm.xlu0 %3805, %v1548
      %v3807 = vpop.permute.xlu0 %3806
      %3810 = vset.pattern.permute.xlu0 0
      %3811 = vperm.xlu0 %3810, %v1549
      %v3812 = vpop.permute.xlu0 %3811
      %3815 = vset.pattern.permute.xlu0 0
      %3816 = vperm.xlu0 %3815, %v1550
      %v3817 = vpop.permute.xlu0 %3816
      %3820 = vset.pattern.permute.xlu0 0
      %3821 = vperm.xlu0 %3820, %v1551
      %v3822 = vpop.permute.xlu0 %3821
      %3825 = vset.pattern.permute.xlu0 0
      %3826 = vperm.xlu0 %3825, %v1552
      %v3827 = vpop.permute.xlu0 %3826
      %3830 = vset.pattern.permute.xlu0 0
      %3831 = vperm.xlu0 %3830, %v1553
      %v3832 = vpop.permute.xlu0 %3831
      %3835 = vset.pattern.permute.xlu0 0
      %3836 = vperm.xlu0 %3835, %v1554
      %v3837 = vpop.permute.xlu0 %3836
      %3840 = vset.pattern.permute.xlu0 0
      %3841 = vperm.xlu0 %3840, %v1555
      %v3842 = vpop.permute.xlu0 %3841
      %3845 = vset.pattern.permute.xlu0 0
      %3846 = vperm.xlu0 %3845, %v1556
      %v3847 = vpop.permute.xlu0 %3846
      %3850 = vset.pattern.permute.xlu0 0
      %3851 = vperm.xlu0 %3850, %v1557
      %v3852 = vpop.permute.xlu0 %3851
      %3855 = vset.pattern.permute.xlu0 0
      %3856 = vperm.xlu0 %3855, %v1558
      %v3857 = vpop.permute.xlu0 %3856
      %3860 = vset.pattern.permute.xlu0 0
      %3861 = vperm.xlu0 %3860, %v1559
      %v3862 = vpop.permute.xlu0 %3861
      %3865 = vset.pattern.permute.xlu0 0
      %3866 = vperm.xlu0 %3865, %v1560
      %v3867 = vpop.permute.xlu0 %3866
      %3870 = vset.pattern.permute.xlu0 0
      %3871 = vperm.xlu0 %3870, %v1561
      %v3872 = vpop.permute.xlu0 %3871
      %3875 = vset.pattern.permute.xlu0 0
      %3876 = vperm.xlu0 %3875, %v1562
      %v3877 = vpop.permute.xlu0 %3876
      %3880 = vset.pattern.permute.xlu0 0
      %3881 = vperm.xlu0 %3880, %v1563
      %v3882 = vpop.permute.xlu0 %3881
      %3885 = vset.pattern.permute.xlu0 0
      %3886 = vperm.xlu0 %3885, %v1564
      %v3887 = vpop.permute.xlu0 %3886
      %3890 = vset.pattern.permute.xlu0 0
      %3891 = vperm.xlu0 %3890, %v1565
      %v3892 = vpop.permute.xlu0 %3891
      %3895 = vset.pattern.permute.xlu0 0
      %3896 = vperm.xlu0 %3895, %v1566
      %v3897 = vpop.permute.xlu0 %3896
      %3900 = vset.pattern.permute.xlu0 0
      %3901 = vperm.xlu0 %3900, %v1567
      %v3902 = vpop.permute.xlu0 %3901
      %3905 = vset.pattern.permute.xlu0 0
      %3906 = vperm.xlu0 %3905, %v1568
      %v3907 = vpop.permute.xlu0 %3906
      %3910 = vset.pattern.permute.xlu0 0
      %3911 = vperm.xlu0 %3910, %v1569
      %v3912 = vpop.permute.xlu0 %3911
      %3915 = vset.pattern.permute.xlu0 0
      %3916 = vperm.xlu0 %3915, %v1570
      %v3917 = vpop.permute.xlu0 %3916
      %3920 = vset.pattern.permute.xlu0 0
      %3921 = vperm.xlu0 %3920, %v1571
      %v3922 = vpop.permute.xlu0 %3921
      %3925 = vset.pattern.permute.xlu0 0
      %3926 = vperm.xlu0 %3925, %v1572
      %v3927 = vpop.permute.xlu0 %3926
      %3930 = vset.pattern.permute.xlu0 0
      %3931 = vperm.xlu0 %3930, %v1573
      %v3932 = vpop.permute.xlu0 %3931
      %3935 = vset.pattern.permute.xlu0 0
      %3936 = vperm.xlu0 %3935, %v1574
      %v3937 = vpop.permute.xlu0 %3936
      %3940 = vset.pattern.permute.xlu0 0
      %3941 = vperm.xlu0 %3940, %v1575
      %v3942 = vpop.permute.xlu0 %3941
      %3945 = vset.pattern.permute.xlu0 0
      %3946 = vperm.xlu0 %3945, %v1576
      %v3947 = vpop.permute.xlu0 %3946
      %3950 = vset.pattern.permute.xlu0 0
      %3951 = vperm.xlu0 %3950, %v1577
      %v3952 = vpop.permute.xlu0 %3951
      %3955 = vset.pattern.permute.xlu0 0
      %3956 = vperm.xlu0 %3955, %v1578
      %v3957 = vpop.permute.xlu0 %3956
      %v3959 = vmul.f32 %v3767, %v3802
      %v3960 = vmul.f32 %v3798, %v3807
      %v3961 = vmul.f32 %v3797, %v3812
      %v3962 = vmul.f32 %v3796, %v3817
      %v3963 = vmul.f32 %v3795, %v3822
      %v3964 = vmul.f32 %v3794, %v3827
      %v3965 = vmul.f32 %v3793, %v3832
      %v3966 = vmul.f32 %v3792, %v3837
      %v3967 = vmul.f32 %v3791, %v3842
      %v3968 = vmul.f32 %v3790, %v3847
      %v3969 = vmul.f32 %v3789, %v3852
      %v3970 = vmul.f32 %v3788, %v3857
      %v3971 = vmul.f32 %v3787, %v3862
      %v3972 = vmul.f32 %v3786, %v3867
      %v3973 = vmul.f32 %v3785, %v3872
      %v3974 = vmul.f32 %v3784, %v3877
      %v3975 = vmul.f32 %v3783, %v3882
      %v3976 = vmul.f32 %v3782, %v3887
      %v3977 = vmul.f32 %v3781, %v3892
      %v3978 = vmul.f32 %v3780, %v3897
      %v3979 = vmul.f32 %v3779, %v3902
      %v3980 = vmul.f32 %v3778, %v3907
      %v3981 = vmul.f32 %v3777, %v3912
      %v3982 = vmul.f32 %v3776, %v3917
      %v3983 = vmul.f32 %v3775, %v3922
      %v3984 = vmul.f32 %v3774, %v3927
      %v3985 = vmul.f32 %v3773, %v3932
      %v3986 = vmul.f32 %v3772, %v3937
      %v3987 = vmul.f32 %v3771, %v3942
      %v3988 = vmul.f32 %v3770, %v3947
      %v3989 = vmul.f32 %v3769, %v3952
      %v3990 = vmul.f32 %v3768, %v3957
      %s3991 = scalar_lea.vmem %s7, 16
      %v3992 = vld [vmem:[%s3991] sm:$0xff]
      %v3994 = vsel %vm3091, %v3959, 0
      %v3997 = vsel %vm3091, %v3960, 0
      %v4000 = vsel %vm3091, %v3961, 0
      %v4003 = vsel %vm3091, %v3962, 0
      %v4006 = vsel %vm3091, %v3963, 0
      %v4009 = vsel %vm3091, %v3964, 0
      %v4012 = vsel %vm3091, %v3965, 0
      %v4015 = vsel %vm3091, %v3966, 0
      %v4018 = vsel %vm3091, %v3967, 0
      %v4021 = vsel %vm3091, %v3968, 0
      %v4024 = vsel %vm3091, %v3969, 0
      %v4027 = vsel %vm3091, %v3970, 0
      %v4030 = vsel %vm3091, %v3971, 0
      %v4033 = vsel %vm3091, %v3972, 0
      %v4036 = vsel %vm3091, %v3973, 0
      %v4039 = vsel %vm3091, %v3974, 0
      %v4042 = vsel %vm3091, %v3975, 0
      %v4045 = vsel %vm3091, %v3976, 0
      %v4048 = vsel %vm3091, %v3977, 0
      %v4051 = vsel %vm3091, %v3978, 0
      %v4054 = vsel %vm3091, %v3979, 0
      %v4057 = vsel %vm3091, %v3980, 0
      %v4060 = vsel %vm3091, %v3981, 0
      %v4063 = vsel %vm3091, %v3982, 0
      %v4066 = vsel %vm3091, %v3983, 0
      %v4069 = vsel %vm3091, %v3984, 0
      %v4072 = vsel %vm3091, %v3985, 0
      %v4075 = vsel %vm3091, %v3986, 0
      %v4078 = vsel %vm3091, %v3987, 0
      %v4081 = vsel %vm3091, %v3988, 0
      %v4084 = vsel %vm3091, %v3989, 0
      %v4087 = vsel %vm3091, %v3990, 0
      %4089 = vmatprep.subr.mxu0 0.0
      %4090 = vmatpush1.msra.mxu0 %v3992
      %4091 = vmatprep.subr.mxu0 0.0
      %4092 = vmatpush1.msra.mxu0 0.0
      %4093 = vmatprep.subr.mxu0 0.0
      %4094 = vmatpush1.msra.mxu0 0.0
      %4095 = vmatprep.subr.mxu0 0.0
      %4096 = vmatpush1.msra.mxu0 0.0
      %4097 = vmatprep.subr.mxu0 0.0
      %4098 = vmatpush1.msra.mxu0 0.0
      %4099 = vmatprep.subr.mxu0 0.0
      %4100 = vmatpush1.msra.mxu0 0.0
      %4101 = vmatprep.subr.mxu0 0.0
      %4102 = vmatpush1.msra.mxu0 0.0
      %4103 = vmatprep.subr.mxu0 0.0
      %4104 = vmatpush1.msra.mxu0 0.0
      %4105 = vmatprep.subr.mxu0 0.0
      %4106 = vmatpush1.msra.mxu0 0.0
      %4107 = vmatprep.subr.mxu0 0.0
      %4108 = vmatpush1.msra.mxu0 0.0
      %4109 = vmatprep.subr.mxu0 0.0
      %4110 = vmatpush1.msra.mxu0 0.0
      %4111 = vmatprep.subr.mxu0 0.0
      %4112 = vmatpush1.msra.mxu0 0.0
      %4113 = vmatprep.subr.mxu0 0.0
      %4114 = vmatpush1.msra.mxu0 0.0
      %4115 = vmatprep.subr.mxu0 0.0
      %4116 = vmatpush1.msra.mxu0 0.0
      %4117 = vmatprep.subr.mxu0 0.0
      %4118 = vmatpush1.msra.mxu0 0.0
      %4119 = vmatprep.subr.mxu0 0.0
      %4120 = vmatpush1.msra.mxu0 0.0
      %4121 = vmatprep.subr.mxu0 0.0
      %4122 = vmatpush1.msra.mxu0 0.0
      %4123 = vmatprep.subr.mxu0 0.0
      %4124 = vmatpush1.msra.mxu0 0.0
      %4125 = vmatprep.subr.mxu0 0.0
      %4126 = vmatpush1.msra.mxu0 0.0
      %4127 = vmatprep.subr.mxu0 0.0
      %4128 = vmatpush1.msra.mxu0 0.0
      %4129 = vmatprep.subr.mxu0 0.0
      %4130 = vmatpush1.msra.mxu0 0.0
      %4131 = vmatprep.subr.mxu0 0.0
      %4132 = vmatpush1.msra.mxu0 0.0
      %4133 = vmatprep.subr.mxu0 0.0
      %4134 = vmatpush1.msra.mxu0 0.0
      %4135 = vmatprep.subr.mxu0 0.0
      %4136 = vmatpush1.msra.mxu0 0.0
      %4137 = vmatprep.subr.mxu0 0.0
      %4138 = vmatpush1.msra.mxu0 0.0
      %4139 = vmatprep.subr.mxu0 0.0
      %4140 = vmatpush1.msra.mxu0 0.0
      %4141 = vmatprep.subr.mxu0 0.0
      %4142 = vmatpush1.msra.mxu0 0.0
      %4143 = vmatprep.subr.mxu0 0.0
      %4144 = vmatpush1.msra.mxu0 0.0
      %4145 = vmatprep.subr.mxu0 0.0
      %4146 = vmatpush1.msra.mxu0 0.0
      %4147 = vmatprep.subr.mxu0 0.0
      %4148 = vmatpush1.msra.mxu0 0.0
      %4149 = vmatprep.subr.mxu0 0.0
      %4150 = vmatpush1.msra.mxu0 0.0
      %4151 = vmatprep.subr.mxu0 0.0
      %4152 = vmatpush1.msra.mxu0 0.0
      %4153 = vmatprep.mubr.f32.mxu0 0.0
      %4154 = vmatmul.mubr.f32.gmra.mrb[0].mxu0 %v3994
      %v4155 = vpop.f32.mrb[0].mxu0
      %v4156 = vadd.f32 0.0, %v4155
      %v4157 = vpop.f32.mrb[0].mxu0
      %4158 = vmatprep.mubr.f32.mxu0 0.0
      %4159 = vmatmul.mubr.f32.gmra.mrb[0].mxu0 %v3997
      %v4160 = vpop.f32.mrb[0].mxu0
      %v4161 = vadd.f32 0.0, %v4160
      %v4162 = vpop.f32.mrb[0].mxu0
      %4163 = vmatprep.mubr.f32.mxu0 0.0
      %4164 = vmatmul.mubr.f32.gmra.mrb[0].mxu0 %v4000
      %v4165 = vpop.f32.mrb[0].mxu0
      %v4166 = vadd.f32 0.0, %v4165
      %v4167 = vpop.f32.mrb[0].mxu0
      %4168 = vmatprep.mubr.f32.mxu0 0.0
      %4169 = vmatmul.mubr.f32.gmra.mrb[0].mxu0 %v4003
      %v4170 = vpop.f32.mrb[0].mxu0
      %v4171 = vadd.f32 0.0, %v4170
      %v4172 = vpop.f32.mrb[0].mxu0
      %4173 = vmatprep.mubr.f32.mxu0 0.0
      %4174 = vmatmul.mubr.f32.gmra.mrb[0].mxu0 %v4006
      %v4175 = vpop.f32.mrb[0].mxu0
      %v4176 = vadd.f32 0.0, %v4175
      %v4177 = vpop.f32.mrb[0].mxu0
      %4178 = vmatprep.mubr.f32.mxu0 0.0
      %4179 = vmatmul.mubr.f32.gmra.mrb[0].mxu0 %v4009
      %v4180 = vpop.f32.mrb[0].mxu0
      %v4181 = vadd.f32 0.0, %v4180
      %v4182 = vpop.f32.mrb[0].mxu0
      %4183 = vmatprep.mubr.f32.mxu0 0.0
      %4184 = vmatmul.mubr.f32.gmra.mrb[0].mxu0 %v4012
      %v4185 = vpop.f32.mrb[0].mxu0
      %v4186 = vadd.f32 0.0, %v4185
      %v4187 = vpop.f32.mrb[0].mxu0
      %4188 = vmatprep.mubr.f32.mxu0 0.0
      %4189 = vmatmul.mubr.f32.gmra.mrb[0].mxu0 %v4015
      %v4190 = vpop.f32.mrb[0].mxu0
      %v4191 = vadd.f32 0.0, %v4190
      %v4192 = vpop.f32.mrb[0].mxu0
      %4193 = vmatprep.mubr.f32.mxu0 0.0
      %4194 = vmatmul.mubr.f32.gmra.mrb[0].mxu0 %v4018
      %v4195 = vpop.f32.mrb[0].mxu0
      %v4196 = vadd.f32 0.0, %v4195
      %v4197 = vpop.f32.mrb[0].mxu0
      %4198 = vmatprep.mubr.f32.mxu0 0.0
      %4199 = vmatmul.mubr.f32.gmra.mrb[0].mxu0 %v4021
      %v4200 = vpop.f32.mrb[0].mxu0
      %v4201 = vadd.f32 0.0, %v4200
      %v4202 = vpop.f32.mrb[0].mxu0
      %4203 = vmatprep.mubr.f32.mxu0 0.0
      %4204 = vmatmul.mubr.f32.gmra.mrb[0].mxu0 %v4024
      %v4205 = vpop.f32.mrb[0].mxu0
      %v4206 = vadd.f32 0.0, %v4205
      %v4207 = vpop.f32.mrb[0].mxu0
      %4208 = vmatprep.mubr.f32.mxu0 0.0
      %4209 = vmatmul.mubr.f32.gmra.mrb[0].mxu0 %v4027
      %v4210 = vpop.f32.mrb[0].mxu0
      %v4211 = vadd.f32 0.0, %v4210
      %v4212 = vpop.f32.mrb[0].mxu0
      %4213 = vmatprep.mubr.f32.mxu0 0.0
      %4214 = vmatmul.mubr.f32.gmra.mrb[0].mxu0 %v4030
      %v4215 = vpop.f32.mrb[0].mxu0
      %v4216 = vadd.f32 0.0, %v4215
      %v4217 = vpop.f32.mrb[0].mxu0
      %4218 = vmatprep.mubr.f32.mxu0 0.0
      %4219 = vmatmul.mubr.f32.gmra.mrb[0].mxu0 %v4033
      %v4220 = vpop.f32.mrb[0].mxu0
      %v4221 = vadd.f32 0.0, %v4220
      %v4222 = vpop.f32.mrb[0].mxu0
      %4223 = vmatprep.mubr.f32.mxu0 0.0
      %4224 = vmatmul.mubr.f32.gmra.mrb[0].mxu0 %v4036
      %v4225 = vpop.f32.mrb[0].mxu0
      %v4226 = vadd.f32 0.0, %v4225
      %v4227 = vpop.f32.mrb[0].mxu0
      %4228 = vmatprep.mubr.f32.mxu0 0.0
      %4229 = vmatmul.mubr.f32.gmra.mrb[0].mxu0 %v4039
      %v4230 = vpop.f32.mrb[0].mxu0
      %v4231 = vadd.f32 0.0, %v4230
      %v4232 = vpop.f32.mrb[0].mxu0
      %4233 = vmatprep.mubr.f32.mxu0 0.0
      %4234 = vmatmul.mubr.f32.gmra.mrb[0].mxu0 %v4042
      %v4235 = vpop.f32.mrb[0].mxu0
      %v4236 = vadd.f32 0.0, %v4235
      %v4237 = vpop.f32.mrb[0].mxu0
      %4238 = vmatprep.mubr.f32.mxu0 0.0
      %4239 = vmatmul.mubr.f32.gmra.mrb[0].mxu0 %v4045
      %v4240 = vpop.f32.mrb[0].mxu0
      %v4241 = vadd.f32 0.0, %v4240
      %v4242 = vpop.f32.mrb[0].mxu0
      %4243 = vmatprep.mubr.f32.mxu0 0.0
      %4244 = vmatmul.mubr.f32.gmra.mrb[0].mxu0 %v4048
      %v4245 = vpop.f32.mrb[0].mxu0
      %v4246 = vadd.f32 0.0, %v4245
      %v4247 = vpop.f32.mrb[0].mxu0
      %4248 = vmatprep.mubr.f32.mxu0 0.0
      %4249 = vmatmul.mubr.f32.gmra.mrb[0].mxu0 %v4051
      %v4250 = vpop.f32.mrb[0].mxu0
      %v4251 = vadd.f32 0.0, %v4250
      %v4252 = vpop.f32.mrb[0].mxu0
      %4253 = vmatprep.mubr.f32.mxu0 0.0
      %4254 = vmatmul.mubr.f32.gmra.mrb[0].mxu0 %v4054
      %v4255 = vpop.f32.mrb[0].mxu0
      %v4256 = vadd.f32 0.0, %v4255
      %v4257 = vpop.f32.mrb[0].mxu0
      %4258 = vmatprep.mubr.f32.mxu0 0.0
      %4259 = vmatmul.mubr.f32.gmra.mrb[0].mxu0 %v4057
      %v4260 = vpop.f32.mrb[0].mxu0
      %v4261 = vadd.f32 0.0, %v4260
      %v4262 = vpop.f32.mrb[0].mxu0
      %4263 = vmatprep.mubr.f32.mxu0 0.0
      %4264 = vmatmul.mubr.f32.gmra.mrb[0].mxu0 %v4060
      %v4265 = vpop.f32.mrb[0].mxu0
      %v4266 = vadd.f32 0.0, %v4265
      %v4267 = vpop.f32.mrb[0].mxu0
      %4268 = vmatprep.mubr.f32.mxu0 0.0
      %4269 = vmatmul.mubr.f32.gmra.mrb[0].mxu0 %v4063
      %v4270 = vpop.f32.mrb[0].mxu0
      %v4271 = vadd.f32 0.0, %v4270
      %v4272 = vpop.f32.mrb[0].mxu0
      %4273 = vmatprep.mubr.f32.mxu0 0.0
      %4274 = vmatmul.mubr.f32.gmra.mrb[0].mxu0 %v4066
      %v4275 = vpop.f32.mrb[0].mxu0
      %v4276 = vadd.f32 0.0, %v4275
      %v4277 = vpop.f32.mrb[0].mxu0
      %4278 = vmatprep.mubr.f32.mxu0 0.0
      %4279 = vmatmul.mubr.f32.gmra.mrb[0].mxu0 %v4069
      %v4280 = vpop.f32.mrb[0].mxu0
      %v4281 = vadd.f32 0.0, %v4280
      %v4282 = vpop.f32.mrb[0].mxu0
      %4283 = vmatprep.mubr.f32.mxu0 0.0
      %4284 = vmatmul.mubr.f32.gmra.mrb[0].mxu0 %v4072
      %v4285 = vpop.f32.mrb[0].mxu0
      %v4286 = vadd.f32 0.0, %v4285
      %v4287 = vpop.f32.mrb[0].mxu0
      %4288 = vmatprep.mubr.f32.mxu0 0.0
      %4289 = vmatmul.mubr.f32.gmra.mrb[0].mxu0 %v4075
      %v4290 = vpop.f32.mrb[0].mxu0
      %v4291 = vadd.f32 0.0, %v4290
      %v4292 = vpop.f32.mrb[0].mxu0
      %4293 = vmatprep.mubr.f32.mxu0 0.0
      %4294 = vmatmul.mubr.f32.gmra.mrb[0].mxu0 %v4078
      %v4295 = vpop.f32.mrb[0].mxu0
      %v4296 = vadd.f32 0.0, %v4295
      %v4297 = vpop.f32.mrb[0].mxu0
      %4298 = vmatprep.mubr.f32.mxu0 0.0
      %4299 = vmatmul.mubr.f32.gmra.mrb[0].mxu0 %v4081
      %v4300 = vpop.f32.mrb[0].mxu0
      %v4301 = vadd.f32 0.0, %v4300
      %v4302 = vpop.f32.mrb[0].mxu0
      %4303 = vmatprep.mubr.f32.mxu0 0.0
      %4304 = vmatmul.mubr.f32.gmra.mrb[0].mxu0 %v4084
      %v4305 = vpop.f32.mrb[0].mxu0
      %v4306 = vadd.f32 0.0, %v4305
      %v4307 = vpop.f32.mrb[0].mxu0
      %4308 = vmatprep.mubr.f32.mxu0 0.0
      %4309 = vmatmul.mubr.f32.gmra.mrb[0].mxu0 %v4087
      %v4310 = vpop.f32.mrb[0].mxu0
      %v4311 = vadd.f32 0.0, %v4310
      %v4312 = vpop.f32.mrb[0].mxu0
      %4313 = vdwg.mxu0
      %v4314 = vadd.f32 %v3576, %v4156
      %v4315 = vadd.f32 %v3581, %v4161
      %v4316 = vadd.f32 %v3586, %v4166
      %v4317 = vadd.f32 %v3591, %v4171
      %v4318 = vadd.f32 %v3596, %v4176
      %v4319 = vadd.f32 %v3601, %v4181
      %v4320 = vadd.f32 %v3606, %v4186
      %v4321 = vadd.f32 %v3611, %v4191
      %v4322 = vadd.f32 %v3616, %v4196
      %v4323 = vadd.f32 %v3621, %v4201
      %v4324 = vadd.f32 %v3626, %v4206
      %v4325 = vadd.f32 %v3631, %v4211
      %v4326 = vadd.f32 %v3636, %v4216
      %v4327 = vadd.f32 %v3641, %v4221
      %v4328 = vadd.f32 %v3646, %v4226
      %v4329 = vadd.f32 %v3651, %v4231
      %v4330 = vadd.f32 %v3656, %v4236
      %v4331 = vadd.f32 %v3661, %v4241
      %v4332 = vadd.f32 %v3666, %v4246
      %v4333 = vadd.f32 %v3671, %v4251
      %v4334 = vadd.f32 %v3676, %v4256
      %v4335 = vadd.f32 %v3681, %v4261
      %v4336 = vadd.f32 %v3686, %v4266
      %v4337 = vadd.f32 %v3691, %v4271
      %v4338 = vadd.f32 %v3696, %v4276
      %v4339 = vadd.f32 %v3701, %v4281
      %v4340 = vadd.f32 %v3706, %v4286
      %v4341 = vadd.f32 %v3711, %v4291
      %v4342 = vadd.f32 %v3716, %v4296
      %v4343 = vadd.f32 %v3721, %v4301
      %v4344 = vadd.f32 %v3726, %v4306
      %v4345 = vadd.f32 %v3731, %v4311
      %4347 = vset.pattern.permute.xlu0 0
      %4348 = vperm.xlu0 %4347, %v1643
      %v4349 = vpop.permute.xlu0 %4348
      %4352 = vset.pattern.permute.xlu0 0
      %4353 = vperm.xlu0 %4352, %v1644
      %v4354 = vpop.permute.xlu0 %4353
      %4357 = vset.pattern.permute.xlu0 0
      %4358 = vperm.xlu0 %4357, %v1645
      %v4359 = vpop.permute.xlu0 %4358
      %4362 = vset.pattern.permute.xlu0 0
      %4363 = vperm.xlu0 %4362, %v1646
      %v4364 = vpop.permute.xlu0 %4363
      %4367 = vset.pattern.permute.xlu0 0
      %4368 = vperm.xlu0 %4367, %v1647
      %v4369 = vpop.permute.xlu0 %4368
      %4372 = vset.pattern.permute.xlu0 0
      %4373 = vperm.xlu0 %4372, %v1648
      %v4374 = vpop.permute.xlu0 %4373
      %4377 = vset.pattern.permute.xlu0 0
      %4378 = vperm.xlu0 %4377, %v1649
      %v4379 = vpop.permute.xlu0 %4378
      %4382 = vset.pattern.permute.xlu0 0
      %4383 = vperm.xlu0 %4382, %v1650
      %v4384 = vpop.permute.xlu0 %4383
      %4387 = vset.pattern.permute.xlu0 0
      %4388 = vperm.xlu0 %4387, %v1651
      %v4389 = vpop.permute.xlu0 %4388
      %4392 = vset.pattern.permute.xlu0 0
      %4393 = vperm.xlu0 %4392, %v1652
      %v4394 = vpop.permute.xlu0 %4393
      %4397 = vset.pattern.permute.xlu0 0
      %4398 = vperm.xlu0 %4397, %v1653
      %v4399 = vpop.permute.xlu0 %4398
      %4402 = vset.pattern.permute.xlu0 0
      %4403 = vperm.xlu0 %4402, %v1654
      %v4404 = vpop.permute.xlu0 %4403
      %4407 = vset.pattern.permute.xlu0 0
      %4408 = vperm.xlu0 %4407, %v1655
      %v4409 = vpop.permute.xlu0 %4408
      %4412 = vset.pattern.permute.xlu0 0
      %4413 = vperm.xlu0 %4412, %v1656
      %v4414 = vpop.permute.xlu0 %4413
      %4417 = vset.pattern.permute.xlu0 0
      %4418 = vperm.xlu0 %4417, %v1657
      %v4419 = vpop.permute.xlu0 %4418
      %4422 = vset.pattern.permute.xlu0 0
      %4423 = vperm.xlu0 %4422, %v1658
      %v4424 = vpop.permute.xlu0 %4423
      %4427 = vset.pattern.permute.xlu0 0
      %4428 = vperm.xlu0 %4427, %v1659
      %v4429 = vpop.permute.xlu0 %4428
      %4432 = vset.pattern.permute.xlu0 0
      %4433 = vperm.xlu0 %4432, %v1660
      %v4434 = vpop.permute.xlu0 %4433
      %4437 = vset.pattern.permute.xlu0 0
      %4438 = vperm.xlu0 %4437, %v1661
      %v4439 = vpop.permute.xlu0 %4438
      %4442 = vset.pattern.permute.xlu0 0
      %4443 = vperm.xlu0 %4442, %v1662
      %v4444 = vpop.permute.xlu0 %4443
      %4447 = vset.pattern.permute.xlu0 0
      %4448 = vperm.xlu0 %4447, %v1663
      %v4449 = vpop.permute.xlu0 %4448
      %4452 = vset.pattern.permute.xlu0 0
      %4453 = vperm.xlu0 %4452, %v1664
      %v4454 = vpop.permute.xlu0 %4453
      %4457 = vset.pattern.permute.xlu0 0
      %4458 = vperm.xlu0 %4457, %v1665
      %v4459 = vpop.permute.xlu0 %4458
      %4462 = vset.pattern.permute.xlu0 0
      %4463 = vperm.xlu0 %4462, %v1666
      %v4464 = vpop.permute.xlu0 %4463
      %4467 = vset.pattern.permute.xlu0 0
      %4468 = vperm.xlu0 %4467, %v1667
      %v4469 = vpop.permute.xlu0 %4468
      %4472 = vset.pattern.permute.xlu0 0
      %4473 = vperm.xlu0 %4472, %v1668
      %v4474 = vpop.permute.xlu0 %4473
      %4477 = vset.pattern.permute.xlu0 0
      %4478 = vperm.xlu0 %4477, %v1669
      %v4479 = vpop.permute.xlu0 %4478
      %4482 = vset.pattern.permute.xlu0 0
      %4483 = vperm.xlu0 %4482, %v1670
      %v4484 = vpop.permute.xlu0 %4483
      %4487 = vset.pattern.permute.xlu0 0
      %4488 = vperm.xlu0 %4487, %v1671
      %v4489 = vpop.permute.xlu0 %4488
      %4492 = vset.pattern.permute.xlu0 0
      %4493 = vperm.xlu0 %4492, %v1672
      %v4494 = vpop.permute.xlu0 %4493
      %4497 = vset.pattern.permute.xlu0 0
      %4498 = vperm.xlu0 %4497, %v1673
      %v4499 = vpop.permute.xlu0 %4498
      %4502 = vset.pattern.permute.xlu0 0
      %4503 = vperm.xlu0 %4502, %v1674
      %v4504 = vpop.permute.xlu0 %4503
      %v4506 = vmul.f32 %v2703, %v4349
      %v4507 = vmul.f32 %v2702, %v4354
      %v4508 = vmul.f32 %v2701, %v4359
      %v4509 = vmul.f32 %v2700, %v4364
      %v4510 = vmul.f32 %v2699, %v4369
      %v4511 = vmul.f32 %v2698, %v4374
      %v4512 = vmul.f32 %v2697, %v4379
      %v4513 = vmul.f32 %v2696, %v4384
      %v4514 = vmul.f32 %v2695, %v4389
      %v4515 = vmul.f32 %v2694, %v4394
      %v4516 = vmul.f32 %v2693, %v4399
      %v4517 = vmul.f32 %v2692, %v4404
      %v4518 = vmul.f32 %v2691, %v4409
      %v4519 = vmul.f32 %v2690, %v4414
      %v4520 = vmul.f32 %v2689, %v4419
      %v4521 = vmul.f32 %v2688, %v4424
      %v4522 = vmul.f32 %v2687, %v4429
      %v4523 = vmul.f32 %v2686, %v4434
      %v4524 = vmul.f32 %v2685, %v4439
      %v4525 = vmul.f32 %v2684, %v4444
      %v4526 = vmul.f32 %v2683, %v4449
      %v4527 = vmul.f32 %v2682, %v4454
      %v4528 = vmul.f32 %v2681, %v4459
      %v4529 = vmul.f32 %v2680, %v4464
      %v4530 = vmul.f32 %v2679, %v4469
      %v4531 = vmul.f32 %v2678, %v4474
      %v4532 = vmul.f32 %v2677, %v4479
      %v4533 = vmul.f32 %v2676, %v4484
      %v4534 = vmul.f32 %v2675, %v4489
      %v4535 = vmul.f32 %v2674, %v4494
      %v4536 = vmul.f32 %v2673, %v4499
      %v4537 = vmul.f32 %v2672, %v4504
      %s4538 = scalar_lea.vmem %s7, 24
      %v4539 = vld [vmem:[%s4538] sm:$0xff]
      %v4541 = vsel %vm3091, %v4506, 0
      %v4544 = vsel %vm3091, %v4507, 0
      %v4547 = vsel %vm3091, %v4508, 0
      %v4550 = vsel %vm3091, %v4509, 0
      %v4553 = vsel %vm3091, %v4510, 0
      %v4556 = vsel %vm3091, %v4511, 0
      %v4559 = vsel %vm3091, %v4512, 0
      %v4562 = vsel %vm3091, %v4513, 0
      %v4565 = vsel %vm3091, %v4514, 0
      %v4568 = vsel %vm3091, %v4515, 0
      %v4571 = vsel %vm3091, %v4516, 0
      %v4574 = vsel %vm3091, %v4517, 0
      %v4577 = vsel %vm3091, %v4518, 0
      %v4580 = vsel %vm3091, %v4519, 0
      %v4583 = vsel %vm3091, %v4520, 0
      %v4586 = vsel %vm3091, %v4521, 0
      %v4589 = vsel %vm3091, %v4522, 0
      %v4592 = vsel %vm3091, %v4523, 0
      %v4595 = vsel %vm3091, %v4524, 0
      %v4598 = vsel %vm3091, %v4525, 0
      %v4601 = vsel %vm3091, %v4526, 0
      %v4604 = vsel %vm3091, %v4527, 0
      %v4607 = vsel %vm3091, %v4528, 0
      %v4610 = vsel %vm3091, %v4529, 0
      %v4613 = vsel %vm3091, %v4530, 0
      %v4616 = vsel %vm3091, %v4531, 0
      %v4619 = vsel %vm3091, %v4532, 0
      %v4622 = vsel %vm3091, %v4533, 0
      %v4625 = vsel %vm3091, %v4534, 0
      %v4628 = vsel %vm3091, %v4535, 0
      %v4631 = vsel %vm3091, %v4536, 0
      %v4634 = vsel %vm3091, %v4537, 0
      %4636 = vmatprep.subr.mxu0 0.0
      %4637 = vmatpush1.msra.mxu0 %v4539
      %4638 = vmatprep.subr.mxu0 0.0
      %4639 = vmatpush1.msra.mxu0 0.0
      %4640 = vmatprep.subr.mxu0 0.0
      %4641 = vmatpush1.msra.mxu0 0.0
      %4642 = vmatprep.subr.mxu0 0.0
      %4643 = vmatpush1.msra.mxu0 0.0
      %4644 = vmatprep.subr.mxu0 0.0
      %4645 = vmatpush1.msra.mxu0 0.0
      %4646 = vmatprep.subr.mxu0 0.0
      %4647 = vmatpush1.msra.mxu0 0.0
      %4648 = vmatprep.subr.mxu0 0.0
      %4649 = vmatpush1.msra.mxu0 0.0
      %4650 = vmatprep.subr.mxu0 0.0
      %4651 = vmatpush1.msra.mxu0 0.0
      %4652 = vmatprep.subr.mxu0 0.0
      %4653 = vmatpush1.msra.mxu0 0.0
      %4654 = vmatprep.subr.mxu0 0.0
      %4655 = vmatpush1.msra.mxu0 0.0
      %4656 = vmatprep.subr.mxu0 0.0
      %4657 = vmatpush1.msra.mxu0 0.0
      %4658 = vmatprep.subr.mxu0 0.0
      %4659 = vmatpush1.msra.mxu0 0.0
      %4660 = vmatprep.subr.mxu0 0.0
      %4661 = vmatpush1.msra.mxu0 0.0
      %4662 = vmatprep.subr.mxu0 0.0
      %4663 = vmatpush1.msra.mxu0 0.0
      %4664 = vmatprep.subr.mxu0 0.0
      %4665 = vmatpush1.msra.mxu0 0.0
      %4666 = vmatprep.subr.mxu0 0.0
      %4667 = vmatpush1.msra.mxu0 0.0
      %4668 = vmatprep.subr.mxu0 0.0
      %4669 = vmatpush1.msra.mxu0 0.0
      %4670 = vmatprep.subr.mxu0 0.0
      %4671 = vmatpush1.msra.mxu0 0.0
      %4672 = vmatprep.subr.mxu0 0.0
      %4673 = vmatpush1.msra.mxu0 0.0
      %4674 = vmatprep.subr.mxu0 0.0
      %4675 = vmatpush1.msra.mxu0 0.0
      %4676 = vmatprep.subr.mxu0 0.0
      %4677 = vmatpush1.msra.mxu0 0.0
      %4678 = vmatprep.subr.mxu0 0.0
      %4679 = vmatpush1.msra.mxu0 0.0
      %4680 = vmatprep.subr.mxu0 0.0
      %4681 = vmatpush1.msra.mxu0 0.0
      %4682 = vmatprep.subr.mxu0 0.0
      %4683 = vmatpush1.msra.mxu0 0.0
      %4684 = vmatprep.subr.mxu0 0.0
      %4685 = vmatpush1.msra.mxu0 0.0
      %4686 = vmatprep.subr.mxu0 0.0
      %4687 = vmatpush1.msra.mxu0 0.0
      %4688 = vmatprep.subr.mxu0 0.0
      %4689 = vmatpush1.msra.mxu0 0.0
      %4690 = vmatprep.subr.mxu0 0.0
      %4691 = vmatpush1.msra.mxu0 0.0
      %4692 = vmatprep.subr.mxu0 0.0
      %4693 = vmatpush1.msra.mxu0 0.0
      %4694 = vmatprep.subr.mxu0 0.0
      %4695 = vmatpush1.msra.mxu0 0.0
      %4696 = vmatprep.subr.mxu0 0.0
      %4697 = vmatpush1.msra.mxu0 0.0
      %4698 = vmatprep.subr.mxu0 0.0
      %4699 = vmatpush1.msra.mxu0 0.0
      %4700 = vmatprep.mubr.f32.mxu0 0.0
      %4701 = vmatmul.mubr.f32.gmra.mrb[0].mxu0 %v4541
      %v4702 = vpop.f32.mrb[0].mxu0
      %v4703 = vadd.f32 0.0, %v4702
      %v4704 = vpop.f32.mrb[0].mxu0
      %4705 = vmatprep.mubr.f32.mxu0 0.0
      %4706 = vmatmul.mubr.f32.gmra.mrb[0].mxu0 %v4544
      %v4707 = vpop.f32.mrb[0].mxu0
      %v4708 = vadd.f32 0.0, %v4707
      %v4709 = vpop.f32.mrb[0].mxu0
      %4710 = vmatprep.mubr.f32.mxu0 0.0
      %4711 = vmatmul.mubr.f32.gmra.mrb[0].mxu0 %v4547
      %v4712 = vpop.f32.mrb[0].mxu0
      %v4713 = vadd.f32 0.0, %v4712
      %v4714 = vpop.f32.mrb[0].mxu0
      %4715 = vmatprep.mubr.f32.mxu0 0.0
      %4716 = vmatmul.mubr.f32.gmra.mrb[0].mxu0 %v4550
      %v4717 = vpop.f32.mrb[0].mxu0
      %v4718 = vadd.f32 0.0, %v4717
      %v4719 = vpop.f32.mrb[0].mxu0
      %4720 = vmatprep.mubr.f32.mxu0 0.0
      %4721 = vmatmul.mubr.f32.gmra.mrb[0].mxu0 %v4553
      %v4722 = vpop.f32.mrb[0].mxu0
      %v4723 = vadd.f32 0.0, %v4722
      %v4724 = vpop.f32.mrb[0].mxu0
      %4725 = vmatprep.mubr.f32.mxu0 0.0
      %4726 = vmatmul.mubr.f32.gmra.mrb[0].mxu0 %v4556
      %v4727 = vpop.f32.mrb[0].mxu0
      %v4728 = vadd.f32 0.0, %v4727
      %v4729 = vpop.f32.mrb[0].mxu0
      %4730 = vmatprep.mubr.f32.mxu0 0.0
      %4731 = vmatmul.mubr.f32.gmra.mrb[0].mxu0 %v4559
      %v4732 = vpop.f32.mrb[0].mxu0
      %v4733 = vadd.f32 0.0, %v4732
      %v4734 = vpop.f32.mrb[0].mxu0
      %4735 = vmatprep.mubr.f32.mxu0 0.0
      %4736 = vmatmul.mubr.f32.gmra.mrb[0].mxu0 %v4562
      %v4737 = vpop.f32.mrb[0].mxu0
      %v4738 = vadd.f32 0.0, %v4737
      %v4739 = vpop.f32.mrb[0].mxu0
      %4740 = vmatprep.mubr.f32.mxu0 0.0
      %4741 = vmatmul.mubr.f32.gmra.mrb[0].mxu0 %v4565
      %v4742 = vpop.f32.mrb[0].mxu0
      %v4743 = vadd.f32 0.0, %v4742
      %v4744 = vpop.f32.mrb[0].mxu0
      %4745 = vmatprep.mubr.f32.mxu0 0.0
      %4746 = vmatmul.mubr.f32.gmra.mrb[0].mxu0 %v4568
      %v4747 = vpop.f32.mrb[0].mxu0
      %v4748 = vadd.f32 0.0, %v4747
      %v4749 = vpop.f32.mrb[0].mxu0
      %4750 = vmatprep.mubr.f32.mxu0 0.0
      %4751 = vmatmul.mubr.f32.gmra.mrb[0].mxu0 %v4571
      %v4752 = vpop.f32.mrb[0].mxu0
      %v4753 = vadd.f32 0.0, %v4752
      %v4754 = vpop.f32.mrb[0].mxu0
      %4755 = vmatprep.mubr.f32.mxu0 0.0
      %4756 = vmatmul.mubr.f32.gmra.mrb[0].mxu0 %v4574
      %v4757 = vpop.f32.mrb[0].mxu0
      %v4758 = vadd.f32 0.0, %v4757
      %v4759 = vpop.f32.mrb[0].mxu0
      %4760 = vmatprep.mubr.f32.mxu0 0.0
      %4761 = vmatmul.mubr.f32.gmra.mrb[0].mxu0 %v4577
      %v4762 = vpop.f32.mrb[0].mxu0
      %v4763 = vadd.f32 0.0, %v4762
      %v4764 = vpop.f32.mrb[0].mxu0
      %4765 = vmatprep.mubr.f32.mxu0 0.0
      %4766 = vmatmul.mubr.f32.gmra.mrb[0].mxu0 %v4580
      %v4767 = vpop.f32.mrb[0].mxu0
      %v4768 = vadd.f32 0.0, %v4767
      %v4769 = vpop.f32.mrb[0].mxu0
      %4770 = vmatprep.mubr.f32.mxu0 0.0
      %4771 = vmatmul.mubr.f32.gmra.mrb[0].mxu0 %v4583
      %v4772 = vpop.f32.mrb[0].mxu0
      %v4773 = vadd.f32 0.0, %v4772
      %v4774 = vpop.f32.mrb[0].mxu0
      %4775 = vmatprep.mubr.f32.mxu0 0.0
      %4776 = vmatmul.mubr.f32.gmra.mrb[0].mxu0 %v4586
      %v4777 = vpop.f32.mrb[0].mxu0
      %v4778 = vadd.f32 0.0, %v4777
      %v4779 = vpop.f32.mrb[0].mxu0
      %4780 = vmatprep.mubr.f32.mxu0 0.0
      %4781 = vmatmul.mubr.f32.gmra.mrb[0].mxu0 %v4589
      %v4782 = vpop.f32.mrb[0].mxu0
      %v4783 = vadd.f32 0.0, %v4782
      %v4784 = vpop.f32.mrb[0].mxu0
      %4785 = vmatprep.mubr.f32.mxu0 0.0
      %4786 = vmatmul.mubr.f32.gmra.mrb[0].mxu0 %v4592
      %v4787 = vpop.f32.mrb[0].mxu0
      %v4788 = vadd.f32 0.0, %v4787
      %v4789 = vpop.f32.mrb[0].mxu0
      %4790 = vmatprep.mubr.f32.mxu0 0.0
      %4791 = vmatmul.mubr.f32.gmra.mrb[0].mxu0 %v4595
      %v4792 = vpop.f32.mrb[0].mxu0
      %v4793 = vadd.f32 0.0, %v4792
      %v4794 = vpop.f32.mrb[0].mxu0
      %4795 = vmatprep.mubr.f32.mxu0 0.0
      %4796 = vmatmul.mubr.f32.gmra.mrb[0].mxu0 %v4598
      %v4797 = vpop.f32.mrb[0].mxu0
      %v4798 = vadd.f32 0.0, %v4797
      %v4799 = vpop.f32.mrb[0].mxu0
      %4800 = vmatprep.mubr.f32.mxu0 0.0
      %4801 = vmatmul.mubr.f32.gmra.mrb[0].mxu0 %v4601
      %v4802 = vpop.f32.mrb[0].mxu0
      %v4803 = vadd.f32 0.0, %v4802
      %v4804 = vpop.f32.mrb[0].mxu0
      %4805 = vmatprep.mubr.f32.mxu0 0.0
      %4806 = vmatmul.mubr.f32.gmra.mrb[0].mxu0 %v4604
      %v4807 = vpop.f32.mrb[0].mxu0
      %v4808 = vadd.f32 0.0, %v4807
      %v4809 = vpop.f32.mrb[0].mxu0
      %4810 = vmatprep.mubr.f32.mxu0 0.0
      %4811 = vmatmul.mubr.f32.gmra.mrb[0].mxu0 %v4607
      %v4812 = vpop.f32.mrb[0].mxu0
      %v4813 = vadd.f32 0.0, %v4812
      %v4814 = vpop.f32.mrb[0].mxu0
      %4815 = vmatprep.mubr.f32.mxu0 0.0
      %4816 = vmatmul.mubr.f32.gmra.mrb[0].mxu0 %v4610
      %v4817 = vpop.f32.mrb[0].mxu0
      %v4818 = vadd.f32 0.0, %v4817
      %v4819 = vpop.f32.mrb[0].mxu0
      %4820 = vmatprep.mubr.f32.mxu0 0.0
      %4821 = vmatmul.mubr.f32.gmra.mrb[0].mxu0 %v4613
      %v4822 = vpop.f32.mrb[0].mxu0
      %v4823 = vadd.f32 0.0, %v4822
      %v4824 = vpop.f32.mrb[0].mxu0
      %4825 = vmatprep.mubr.f32.mxu0 0.0
      %4826 = vmatmul.mubr.f32.gmra.mrb[0].mxu0 %v4616
      %v4827 = vpop.f32.mrb[0].mxu0
      %v4828 = vadd.f32 0.0, %v4827
      %v4829 = vpop.f32.mrb[0].mxu0
      %4830 = vmatprep.mubr.f32.mxu0 0.0
      %4831 = vmatmul.mubr.f32.gmra.mrb[0].mxu0 %v4619
      %v4832 = vpop.f32.mrb[0].mxu0
      %v4833 = vadd.f32 0.0, %v4832
      %v4834 = vpop.f32.mrb[0].mxu0
      %4835 = vmatprep.mubr.f32.mxu0 0.0
      %4836 = vmatmul.mubr.f32.gmra.mrb[0].mxu0 %v4622
      %v4837 = vpop.f32.mrb[0].mxu0
      %v4838 = vadd.f32 0.0, %v4837
      %v4839 = vpop.f32.mrb[0].mxu0
      %4840 = vmatprep.mubr.f32.mxu0 0.0
      %4841 = vmatmul.mubr.f32.gmra.mrb[0].mxu0 %v4625
      %v4842 = vpop.f32.mrb[0].mxu0
      %v4843 = vadd.f32 0.0, %v4842
      %v4844 = vpop.f32.mrb[0].mxu0
      %4845 = vmatprep.mubr.f32.mxu0 0.0
      %4846 = vmatmul.mubr.f32.gmra.mrb[0].mxu0 %v4628
      %v4847 = vpop.f32.mrb[0].mxu0
      %v4848 = vadd.f32 0.0, %v4847
      %v4849 = vpop.f32.mrb[0].mxu0
      %4850 = vmatprep.mubr.f32.mxu0 0.0
      %4851 = vmatmul.mubr.f32.gmra.mrb[0].mxu0 %v4631
      %v4852 = vpop.f32.mrb[0].mxu0
      %v4853 = vadd.f32 0.0, %v4852
      %v4854 = vpop.f32.mrb[0].mxu0
      %4855 = vmatprep.mubr.f32.mxu0 0.0
      %4856 = vmatmul.mubr.f32.gmra.mrb[0].mxu0 %v4634
      %v4857 = vpop.f32.mrb[0].mxu0
      %v4858 = vadd.f32 0.0, %v4857
      %v4859 = vpop.f32.mrb[0].mxu0
      %4860 = vdwg.mxu0
      %v4861 = vadd.f32 %v4314, %v4703
      %v4862 = vadd.f32 %v4315, %v4708
      %v4863 = vadd.f32 %v4316, %v4713
      %v4864 = vadd.f32 %v4317, %v4718
      %v4865 = vadd.f32 %v4318, %v4723
      %v4866 = vadd.f32 %v4319, %v4728
      %v4867 = vadd.f32 %v4320, %v4733
      %v4868 = vadd.f32 %v4321, %v4738
      %v4869 = vadd.f32 %v4322, %v4743
      %v4870 = vadd.f32 %v4323, %v4748
      %v4871 = vadd.f32 %v4324, %v4753
      %v4872 = vadd.f32 %v4325, %v4758
      %v4873 = vadd.f32 %v4326, %v4763
      %v4874 = vadd.f32 %v4327, %v4768
      %v4875 = vadd.f32 %v4328, %v4773
      %v4876 = vadd.f32 %v4329, %v4778
      %v4877 = vadd.f32 %v4330, %v4783
      %v4878 = vadd.f32 %v4331, %v4788
      %v4879 = vadd.f32 %v4332, %v4793
      %v4880 = vadd.f32 %v4333, %v4798
      %v4881 = vadd.f32 %v4334, %v4803
      %v4882 = vadd.f32 %v4335, %v4808
      %v4883 = vadd.f32 %v4336, %v4813
      %v4884 = vadd.f32 %v4337, %v4818
      %v4885 = vadd.f32 %v4338, %v4823
      %v4886 = vadd.f32 %v4339, %v4828
      %v4887 = vadd.f32 %v4340, %v4833
      %v4888 = vadd.f32 %v4341, %v4838
      %v4889 = vadd.f32 %v4342, %v4843
      %v4890 = vadd.f32 %v4343, %v4848
      %v4891 = vadd.f32 %v4344, %v4853
      %v4892 = vadd.f32 %v4345, %v4858
      %s4893 = scalar_lea.vmem %s7, 32
      %v4894 = vld [vmem:[%s4893] sm:$0xff]
      %v4896 = vsel %vm3091, %v2605, 0
      %v4899 = vsel %vm3091, %v2606, 0
      %v4902 = vsel %vm3091, %v2607, 0
      %v4905 = vsel %vm3091, %v2608, 0
      %v4908 = vsel %vm3091, %v2609, 0
      %v4911 = vsel %vm3091, %v2610, 0
      %v4914 = vsel %vm3091, %v2611, 0
      %v4917 = vsel %vm3091, %v2612, 0
      %v4920 = vsel %vm3091, %v2613, 0
      %v4923 = vsel %vm3091, %v2614, 0
      %v4926 = vsel %vm3091, %v2615, 0
      %v4929 = vsel %vm3091, %v2616, 0
      %v4932 = vsel %vm3091, %v2617, 0
      %v4935 = vsel %vm3091, %v2618, 0
      %v4938 = vsel %vm3091, %v2619, 0
      %v4941 = vsel %vm3091, %v2620, 0
      %v4944 = vsel %vm3091, %v2621, 0
      %v4947 = vsel %vm3091, %v2622, 0
      %v4950 = vsel %vm3091, %v2623, 0
      %v4953 = vsel %vm3091, %v2624, 0
      %v4956 = vsel %vm3091, %v2625, 0
      %v4959 = vsel %vm3091, %v2626, 0
      %v4962 = vsel %vm3091, %v2627, 0
      %v4965 = vsel %vm3091, %v2628, 0
      %v4968 = vsel %vm3091, %v2629, 0
      %v4971 = vsel %vm3091, %v2630, 0
      %v4974 = vsel %vm3091, %v2631, 0
      %v4977 = vsel %vm3091, %v2632, 0
      %v4980 = vsel %vm3091, %v2633, 0
      %v4983 = vsel %vm3091, %v2634, 0
      %v4986 = vsel %vm3091, %v2635, 0
      %v4989 = vsel %vm3091, %v2636, 0
      %4991 = vmatprep.subr.mxu0 0.0
      %4992 = vmatpush1.msra.mxu0 %v4894
      %4993 = vmatprep.subr.mxu0 0.0
      %4994 = vmatpush1.msra.mxu0 0.0
      %4995 = vmatprep.subr.mxu0 0.0
      %4996 = vmatpush1.msra.mxu0 0.0
      %4997 = vmatprep.subr.mxu0 0.0
      %4998 = vmatpush1.msra.mxu0 0.0
      %4999 = vmatprep.subr.mxu0 0.0
      %5000 = vmatpush1.msra.mxu0 0.0
      %5001 = vmatprep.subr.mxu0 0.0
      %5002 = vmatpush1.msra.mxu0 0.0
      %5003 = vmatprep.subr.mxu0 0.0
      %5004 = vmatpush1.msra.mxu0 0.0
      %5005 = vmatprep.subr.mxu0 0.0
      %5006 = vmatpush1.msra.mxu0 0.0
      %5007 = vmatprep.subr.mxu0 0.0
      %5008 = vmatpush1.msra.mxu0 0.0
      %5009 = vmatprep.subr.mxu0 0.0
      %5010 = vmatpush1.msra.mxu0 0.0
      %5011 = vmatprep.subr.mxu0 0.0
      %5012 = vmatpush1.msra.mxu0 0.0
      %5013 = vmatprep.subr.mxu0 0.0
      %5014 = vmatpush1.msra.mxu0 0.0
      %5015 = vmatprep.subr.mxu0 0.0
      %5016 = vmatpush1.msra.mxu0 0.0
      %5017 = vmatprep.subr.mxu0 0.0
      %5018 = vmatpush1.msra.mxu0 0.0
      %5019 = vmatprep.subr.mxu0 0.0
      %5020 = vmatpush1.msra.mxu0 0.0
      %5021 = vmatprep.subr.mxu0 0.0
      %5022 = vmatpush1.msra.mxu0 0.0
      %5023 = vmatprep.subr.mxu0 0.0
      %5024 = vmatpush1.msra.mxu0 0.0
      %5025 = vmatprep.subr.mxu0 0.0
      %5026 = vmatpush1.msra.mxu0 0.0
      %5027 = vmatprep.subr.mxu0 0.0
      %5028 = vmatpush1.msra.mxu0 0.0
      %5029 = vmatprep.subr.mxu0 0.0
      %5030 = vmatpush1.msra.mxu0 0.0
      %5031 = vmatprep.subr.mxu0 0.0
      %5032 = vmatpush1.msra.mxu0 0.0
      %5033 = vmatprep.subr.mxu0 0.0
      %5034 = vmatpush1.msra.mxu0 0.0
      %5035 = vmatprep.subr.mxu0 0.0
      %5036 = vmatpush1.msra.mxu0 0.0
      %5037 = vmatprep.subr.mxu0 0.0
      %5038 = vmatpush1.msra.mxu0 0.0
      %5039 = vmatprep.subr.mxu0 0.0
      %5040 = vmatpush1.msra.mxu0 0.0
      %5041 = vmatprep.subr.mxu0 0.0
      %5042 = vmatpush1.msra.mxu0 0.0
      %5043 = vmatprep.subr.mxu0 0.0
      %5044 = vmatpush1.msra.mxu0 0.0
      %5045 = vmatprep.subr.mxu0 0.0
      %5046 = vmatpush1.msra.mxu0 0.0
      %5047 = vmatprep.subr.mxu0 0.0
      %5048 = vmatpush1.msra.mxu0 0.0
      %5049 = vmatprep.subr.mxu0 0.0
      %5050 = vmatpush1.msra.mxu0 0.0
      %5051 = vmatprep.subr.mxu0 0.0
      %5052 = vmatpush1.msra.mxu0 0.0
      %5053 = vmatprep.subr.mxu0 0.0
      %5054 = vmatpush1.msra.mxu0 0.0
      %5055 = vmatprep.mubr.f32.mxu0 0.0
      %5056 = vmatmul.mubr.f32.gmra.mrb[0].mxu0 %v4896
      %v5057 = vpop.f32.mrb[0].mxu0
      %v5058 = vadd.f32 0.0, %v5057
      %v5059 = vpop.f32.mrb[0].mxu0
      %5060 = vmatprep.mubr.f32.mxu0 0.0
      %5061 = vmatmul.mubr.f32.gmra.mrb[0].mxu0 %v4899
      %v5062 = vpop.f32.mrb[0].mxu0
      %v5063 = vadd.f32 0.0, %v5062
      %v5064 = vpop.f32.mrb[0].mxu0
      %5065 = vmatprep.mubr.f32.mxu0 0.0
      %5066 = vmatmul.mubr.f32.gmra.mrb[0].mxu0 %v4902
      %v5067 = vpop.f32.mrb[0].mxu0
      %v5068 = vadd.f32 0.0, %v5067
      %v5069 = vpop.f32.mrb[0].mxu0
      %5070 = vmatprep.mubr.f32.mxu0 0.0
      %5071 = vmatmul.mubr.f32.gmra.mrb[0].mxu0 %v4905
      %v5072 = vpop.f32.mrb[0].mxu0
      %v5073 = vadd.f32 0.0, %v5072
      %v5074 = vpop.f32.mrb[0].mxu0
      %5075 = vmatprep.mubr.f32.mxu0 0.0
      %5076 = vmatmul.mubr.f32.gmra.mrb[0].mxu0 %v4908
      %v5077 = vpop.f32.mrb[0].mxu0
      %v5078 = vadd.f32 0.0, %v5077
      %v5079 = vpop.f32.mrb[0].mxu0
      %5080 = vmatprep.mubr.f32.mxu0 0.0
      %5081 = vmatmul.mubr.f32.gmra.mrb[0].mxu0 %v4911
      %v5082 = vpop.f32.mrb[0].mxu0
      %v5083 = vadd.f32 0.0, %v5082
      %v5084 = vpop.f32.mrb[0].mxu0
      %5085 = vmatprep.mubr.f32.mxu0 0.0
      %5086 = vmatmul.mubr.f32.gmra.mrb[0].mxu0 %v4914
      %v5087 = vpop.f32.mrb[0].mxu0
      %v5088 = vadd.f32 0.0, %v5087
      %v5089 = vpop.f32.mrb[0].mxu0
      %5090 = vmatprep.mubr.f32.mxu0 0.0
      %5091 = vmatmul.mubr.f32.gmra.mrb[0].mxu0 %v4917
      %v5092 = vpop.f32.mrb[0].mxu0
      %v5093 = vadd.f32 0.0, %v5092
      %v5094 = vpop.f32.mrb[0].mxu0
      %5095 = vmatprep.mubr.f32.mxu0 0.0
      %5096 = vmatmul.mubr.f32.gmra.mrb[0].mxu0 %v4920
      %v5097 = vpop.f32.mrb[0].mxu0
      %v5098 = vadd.f32 0.0, %v5097
      %v5099 = vpop.f32.mrb[0].mxu0
      %5100 = vmatprep.mubr.f32.mxu0 0.0
      %5101 = vmatmul.mubr.f32.gmra.mrb[0].mxu0 %v4923
      %v5102 = vpop.f32.mrb[0].mxu0
      %v5103 = vadd.f32 0.0, %v5102
      %v5104 = vpop.f32.mrb[0].mxu0
      %5105 = vmatprep.mubr.f32.mxu0 0.0
      %5106 = vmatmul.mubr.f32.gmra.mrb[0].mxu0 %v4926
      %v5107 = vpop.f32.mrb[0].mxu0
      %v5108 = vadd.f32 0.0, %v5107
      %v5109 = vpop.f32.mrb[0].mxu0
      %5110 = vmatprep.mubr.f32.mxu0 0.0
      %5111 = vmatmul.mubr.f32.gmra.mrb[0].mxu0 %v4929
      %v5112 = vpop.f32.mrb[0].mxu0
      %v5113 = vadd.f32 0.0, %v5112
      %v5114 = vpop.f32.mrb[0].mxu0
      %5115 = vmatprep.mubr.f32.mxu0 0.0
      %5116 = vmatmul.mubr.f32.gmra.mrb[0].mxu0 %v4932
      %v5117 = vpop.f32.mrb[0].mxu0
      %v5118 = vadd.f32 0.0, %v5117
      %v5119 = vpop.f32.mrb[0].mxu0
      %5120 = vmatprep.mubr.f32.mxu0 0.0
      %5121 = vmatmul.mubr.f32.gmra.mrb[0].mxu0 %v4935
      %v5122 = vpop.f32.mrb[0].mxu0
      %v5123 = vadd.f32 0.0, %v5122
      %v5124 = vpop.f32.mrb[0].mxu0
      %5125 = vmatprep.mubr.f32.mxu0 0.0
      %5126 = vmatmul.mubr.f32.gmra.mrb[0].mxu0 %v4938
      %v5127 = vpop.f32.mrb[0].mxu0
      %v5128 = vadd.f32 0.0, %v5127
      %v5129 = vpop.f32.mrb[0].mxu0
      %5130 = vmatprep.mubr.f32.mxu0 0.0
      %5131 = vmatmul.mubr.f32.gmra.mrb[0].mxu0 %v4941
      %v5132 = vpop.f32.mrb[0].mxu0
      %v5133 = vadd.f32 0.0, %v5132
      %v5134 = vpop.f32.mrb[0].mxu0
      %5135 = vmatprep.mubr.f32.mxu0 0.0
      %5136 = vmatmul.mubr.f32.gmra.mrb[0].mxu0 %v4944
      %v5137 = vpop.f32.mrb[0].mxu0
      %v5138 = vadd.f32 0.0, %v5137
      %v5139 = vpop.f32.mrb[0].mxu0
      %5140 = vmatprep.mubr.f32.mxu0 0.0
      %5141 = vmatmul.mubr.f32.gmra.mrb[0].mxu0 %v4947
      %v5142 = vpop.f32.mrb[0].mxu0
      %v5143 = vadd.f32 0.0, %v5142
      %v5144 = vpop.f32.mrb[0].mxu0
      %5145 = vmatprep.mubr.f32.mxu0 0.0
      %5146 = vmatmul.mubr.f32.gmra.mrb[0].mxu0 %v4950
      %v5147 = vpop.f32.mrb[0].mxu0
      %v5148 = vadd.f32 0.0, %v5147
      %v5149 = vpop.f32.mrb[0].mxu0
      %5150 = vmatprep.mubr.f32.mxu0 0.0
      %5151 = vmatmul.mubr.f32.gmra.mrb[0].mxu0 %v4953
      %v5152 = vpop.f32.mrb[0].mxu0
      %v5153 = vadd.f32 0.0, %v5152
      %v5154 = vpop.f32.mrb[0].mxu0
      %5155 = vmatprep.mubr.f32.mxu0 0.0
      %5156 = vmatmul.mubr.f32.gmra.mrb[0].mxu0 %v4956
      %v5157 = vpop.f32.mrb[0].mxu0
      %v5158 = vadd.f32 0.0, %v5157
      %v5159 = vpop.f32.mrb[0].mxu0
      %5160 = vmatprep.mubr.f32.mxu0 0.0
      %5161 = vmatmul.mubr.f32.gmra.mrb[0].mxu0 %v4959
      %v5162 = vpop.f32.mrb[0].mxu0
      %v5163 = vadd.f32 0.0, %v5162
      %v5164 = vpop.f32.mrb[0].mxu0
      %5165 = vmatprep.mubr.f32.mxu0 0.0
      %5166 = vmatmul.mubr.f32.gmra.mrb[0].mxu0 %v4962
      %v5167 = vpop.f32.mrb[0].mxu0
      %v5168 = vadd.f32 0.0, %v5167
      %v5169 = vpop.f32.mrb[0].mxu0
      %5170 = vmatprep.mubr.f32.mxu0 0.0
      %5171 = vmatmul.mubr.f32.gmra.mrb[0].mxu0 %v4965
      %v5172 = vpop.f32.mrb[0].mxu0
      %v5173 = vadd.f32 0.0, %v5172
      %v5174 = vpop.f32.mrb[0].mxu0
      %5175 = vmatprep.mubr.f32.mxu0 0.0
      %5176 = vmatmul.mubr.f32.gmra.mrb[0].mxu0 %v4968
      %v5177 = vpop.f32.mrb[0].mxu0
      %v5178 = vadd.f32 0.0, %v5177
      %v5179 = vpop.f32.mrb[0].mxu0
      %5180 = vmatprep.mubr.f32.mxu0 0.0
      %5181 = vmatmul.mubr.f32.gmra.mrb[0].mxu0 %v4971
      %v5182 = vpop.f32.mrb[0].mxu0
      %v5183 = vadd.f32 0.0, %v5182
      %v5184 = vpop.f32.mrb[0].mxu0
      %5185 = vmatprep.mubr.f32.mxu0 0.0
      %5186 = vmatmul.mubr.f32.gmra.mrb[0].mxu0 %v4974
      %v5187 = vpop.f32.mrb[0].mxu0
      %v5188 = vadd.f32 0.0, %v5187
      %v5189 = vpop.f32.mrb[0].mxu0
      %5190 = vmatprep.mubr.f32.mxu0 0.0
      %5191 = vmatmul.mubr.f32.gmra.mrb[0].mxu0 %v4977
      %v5192 = vpop.f32.mrb[0].mxu0
      %v5193 = vadd.f32 0.0, %v5192
      %v5194 = vpop.f32.mrb[0].mxu0
      %5195 = vmatprep.mubr.f32.mxu0 0.0
      %5196 = vmatmul.mubr.f32.gmra.mrb[0].mxu0 %v4980
      %v5197 = vpop.f32.mrb[0].mxu0
      %v5198 = vadd.f32 0.0, %v5197
      %v5199 = vpop.f32.mrb[0].mxu0
      %5200 = vmatprep.mubr.f32.mxu0 0.0
      %5201 = vmatmul.mubr.f32.gmra.mrb[0].mxu0 %v4983
      %v5202 = vpop.f32.mrb[0].mxu0
      %v5203 = vadd.f32 0.0, %v5202
      %v5204 = vpop.f32.mrb[0].mxu0
      %5205 = vmatprep.mubr.f32.mxu0 0.0
      %5206 = vmatmul.mubr.f32.gmra.mrb[0].mxu0 %v4986
      %v5207 = vpop.f32.mrb[0].mxu0
      %v5208 = vadd.f32 0.0, %v5207
      %v5209 = vpop.f32.mrb[0].mxu0
      %5210 = vmatprep.mubr.f32.mxu0 0.0
      %5211 = vmatmul.mubr.f32.gmra.mrb[0].mxu0 %v4989
      %v5212 = vpop.f32.mrb[0].mxu0
      %v5213 = vadd.f32 0.0, %v5212
      %v5214 = vpop.f32.mrb[0].mxu0
      %5215 = vdwg.mxu0
      %v5216 = vadd.f32 %v4861, %v5058
      %v5217 = vadd.f32 %v4862, %v5063
      %v5218 = vadd.f32 %v4863, %v5068
      %v5219 = vadd.f32 %v4864, %v5073
      %v5220 = vadd.f32 %v4865, %v5078
      %v5221 = vadd.f32 %v4866, %v5083
      %v5222 = vadd.f32 %v4867, %v5088
      %v5223 = vadd.f32 %v4868, %v5093
      %v5224 = vadd.f32 %v4869, %v5098
      %v5225 = vadd.f32 %v4870, %v5103
      %v5226 = vadd.f32 %v4871, %v5108
      %v5227 = vadd.f32 %v4872, %v5113
      %v5228 = vadd.f32 %v4873, %v5118
      %v5229 = vadd.f32 %v4874, %v5123
      %v5230 = vadd.f32 %v4875, %v5128
      %v5231 = vadd.f32 %v4876, %v5133
      %v5232 = vadd.f32 %v4877, %v5138
      %v5233 = vadd.f32 %v4878, %v5143
      %v5234 = vadd.f32 %v4879, %v5148
      %v5235 = vadd.f32 %v4880, %v5153
      %v5236 = vadd.f32 %v4881, %v5158
      %v5237 = vadd.f32 %v4882, %v5163
      %v5238 = vadd.f32 %v4883, %v5168
      %v5239 = vadd.f32 %v4884, %v5173
      %v5240 = vadd.f32 %v4885, %v5178
      %v5241 = vadd.f32 %v4886, %v5183
      %v5242 = vadd.f32 %v4887, %v5188
      %v5243 = vadd.f32 %v4888, %v5193
      %v5244 = vadd.f32 %v4889, %v5198
      %v5245 = vadd.f32 %v4890, %v5203
      %v5246 = vadd.f32 %v4891, %v5208
      %v5247 = vadd.f32 %v4892, %v5213
      %5249 = vset.pattern.permute.xlu0 0
      %5250 = vperm.xlu0 %5249, %v1739
      %v5251 = vpop.permute.xlu0 %5250
      %5254 = vset.pattern.permute.xlu0 0
      %5255 = vperm.xlu0 %5254, %v1740
      %v5256 = vpop.permute.xlu0 %5255
      %5259 = vset.pattern.permute.xlu0 0
      %5260 = vperm.xlu0 %5259, %v1741
      %v5261 = vpop.permute.xlu0 %5260
      %5264 = vset.pattern.permute.xlu0 0
      %5265 = vperm.xlu0 %5264, %v1742
      %v5266 = vpop.permute.xlu0 %5265
      %5269 = vset.pattern.permute.xlu0 0
      %5270 = vperm.xlu0 %5269, %v1743
      %v5271 = vpop.permute.xlu0 %5270
      %5274 = vset.pattern.permute.xlu0 0
      %5275 = vperm.xlu0 %5274, %v1744
      %v5276 = vpop.permute.xlu0 %5275
      %5279 = vset.pattern.permute.xlu0 0
      %5280 = vperm.xlu0 %5279, %v1745
      %v5281 = vpop.permute.xlu0 %5280
      %5284 = vset.pattern.permute.xlu0 0
      %5285 = vperm.xlu0 %5284, %v1746
      %v5286 = vpop.permute.xlu0 %5285
      %5289 = vset.pattern.permute.xlu0 0
      %5290 = vperm.xlu0 %5289, %v1747
      %v5291 = vpop.permute.xlu0 %5290
      %5294 = vset.pattern.permute.xlu0 0
      %5295 = vperm.xlu0 %5294, %v1748
      %v5296 = vpop.permute.xlu0 %5295
      %5299 = vset.pattern.permute.xlu0 0
      %5300 = vperm.xlu0 %5299, %v1749
      %v5301 = vpop.permute.xlu0 %5300
      %5304 = vset.pattern.permute.xlu0 0
      %5305 = vperm.xlu0 %5304, %v1750
      %v5306 = vpop.permute.xlu0 %5305
      %5309 = vset.pattern.permute.xlu0 0
      %5310 = vperm.xlu0 %5309, %v1751
      %v5311 = vpop.permute.xlu0 %5310
      %5314 = vset.pattern.permute.xlu0 0
      %5315 = vperm.xlu0 %5314, %v1752
      %v5316 = vpop.permute.xlu0 %5315
      %5319 = vset.pattern.permute.xlu0 0
      %5320 = vperm.xlu0 %5319, %v1753
      %v5321 = vpop.permute.xlu0 %5320
      %5324 = vset.pattern.permute.xlu0 0
      %5325 = vperm.xlu0 %5324, %v1754
      %v5326 = vpop.permute.xlu0 %5325
      %5329 = vset.pattern.permute.xlu0 0
      %5330 = vperm.xlu0 %5329, %v1755
      %v5331 = vpop.permute.xlu0 %5330
      %5334 = vset.pattern.permute.xlu0 0
      %5335 = vperm.xlu0 %5334, %v1756
      %v5336 = vpop.permute.xlu0 %5335
      %5339 = vset.pattern.permute.xlu0 0
      %5340 = vperm.xlu0 %5339, %v1757
      %v5341 = vpop.permute.xlu0 %5340
      %5344 = vset.pattern.permute.xlu0 0
      %5345 = vperm.xlu0 %5344, %v1758
      %v5346 = vpop.permute.xlu0 %5345
      %5349 = vset.pattern.permute.xlu0 0
      %5350 = vperm.xlu0 %5349, %v1759
      %v5351 = vpop.permute.xlu0 %5350
      %5354 = vset.pattern.permute.xlu0 0
      %5355 = vperm.xlu0 %5354, %v1760
      %v5356 = vpop.permute.xlu0 %5355
      %5359 = vset.pattern.permute.xlu0 0
      %5360 = vperm.xlu0 %5359, %v1761
      %v5361 = vpop.permute.xlu0 %5360
      %5364 = vset.pattern.permute.xlu0 0
      %5365 = vperm.xlu0 %5364, %v1762
      %v5366 = vpop.permute.xlu0 %5365
      %5369 = vset.pattern.permute.xlu0 0
      %5370 = vperm.xlu0 %5369, %v1763
      %v5371 = vpop.permute.xlu0 %5370
      %5374 = vset.pattern.permute.xlu0 0
      %5375 = vperm.xlu0 %5374, %v1764
      %v5376 = vpop.permute.xlu0 %5375
      %5379 = vset.pattern.permute.xlu0 0
      %5380 = vperm.xlu0 %5379, %v1765
      %v5381 = vpop.permute.xlu0 %5380
      %5384 = vset.pattern.permute.xlu0 0
      %5385 = vperm.xlu0 %5384, %v1766
      %v5386 = vpop.permute.xlu0 %5385
      %5389 = vset.pattern.permute.xlu0 0
      %5390 = vperm.xlu0 %5389, %v1767
      %v5391 = vpop.permute.xlu0 %5390
      %5394 = vset.pattern.permute.xlu0 0
      %5395 = vperm.xlu0 %5394, %v1768
      %v5396 = vpop.permute.xlu0 %5395
      %5399 = vset.pattern.permute.xlu0 0
      %5400 = vperm.xlu0 %5399, %v1769
      %v5401 = vpop.permute.xlu0 %5400
      %5404 = vset.pattern.permute.xlu0 0
      %5405 = vperm.xlu0 %5404, %v1770
      %v5406 = vpop.permute.xlu0 %5405
      %v5408 = vmul.f32 %v3797, %v5251
      %v5409 = vmul.f32 %v3796, %v5256
      %v5410 = vmul.f32 %v3795, %v5261
      %v5411 = vmul.f32 %v3794, %v5266
      %v5412 = vmul.f32 %v3793, %v5271
      %v5413 = vmul.f32 %v3792, %v5276
      %v5414 = vmul.f32 %v3791, %v5281
      %v5415 = vmul.f32 %v3790, %v5286
      %v5416 = vmul.f32 %v3789, %v5291
      %v5417 = vmul.f32 %v3788, %v5296
      %v5418 = vmul.f32 %v3787, %v5301
      %v5419 = vmul.f32 %v3786, %v5306
      %v5420 = vmul.f32 %v3785, %v5311
      %v5421 = vmul.f32 %v3784, %v5316
      %v5422 = vmul.f32 %v3783, %v5321
      %v5423 = vmul.f32 %v3782, %v5326
      %v5424 = vmul.f32 %v3781, %v5331
      %v5425 = vmul.f32 %v3780, %v5336
      %v5426 = vmul.f32 %v3779, %v5341
      %v5427 = vmul.f32 %v3778, %v5346
      %v5428 = vmul.f32 %v3777, %v5351
      %v5429 = vmul.f32 %v3776, %v5356
      %v5430 = vmul.f32 %v3775, %v5361
      %v5431 = vmul.f32 %v3774, %v5366
      %v5432 = vmul.f32 %v3773, %v5371
      %v5433 = vmul.f32 %v3772, %v5376
      %v5434 = vmul.f32 %v3771, %v5381
      %v5435 = vmul.f32 %v3770, %v5386
      %v5436 = vmul.f32 %v3769, %v5391
      %v5437 = vmul.f32 %v3768, %v5396
      %v5438 = vmul.f32 %v3767, %v5401
      %v5439 = vmul.f32 %v3798, %v5406
      %s5440 = scalar_lea.vmem %s7, 40
      %v5441 = vld [vmem:[%s5440] sm:$0xff]
      %v5443 = vsel %vm3091, %v5408, 0
      %v5446 = vsel %vm3091, %v5409, 0
      %v5449 = vsel %vm3091, %v5410, 0
      %v5452 = vsel %vm3091, %v5411, 0
      %v5455 = vsel %vm3091, %v5412, 0
      %v5458 = vsel %vm3091, %v5413, 0
      %v5461 = vsel %vm3091, %v5414, 0
      %v5464 = vsel %vm3091, %v5415, 0
      %v5467 = vsel %vm3091, %v5416, 0
      %v5470 = vsel %vm3091, %v5417, 0
      %v5473 = vsel %vm3091, %v5418, 0
      %v5476 = vsel %vm3091, %v5419, 0
      %v5479 = vsel %vm3091, %v5420, 0
      %v5482 = vsel %vm3091, %v5421, 0
      %v5485 = vsel %vm3091, %v5422, 0
      %v5488 = vsel %vm3091, %v5423, 0
      %v5491 = vsel %vm3091, %v5424, 0
      %v5494 = vsel %vm3091, %v5425, 0
      %v5497 = vsel %vm3091, %v5426, 0
      %v5500 = vsel %vm3091, %v5427, 0
      %v5503 = vsel %vm3091, %v5428, 0
      %v5506 = vsel %vm3091, %v5429, 0
      %v5509 = vsel %vm3091, %v5430, 0
      %v5512 = vsel %vm3091, %v5431, 0
      %v5515 = vsel %vm3091, %v5432, 0
      %v5518 = vsel %vm3091, %v5433, 0
      %v5521 = vsel %vm3091, %v5434, 0
      %v5524 = vsel %vm3091, %v5435, 0
      %v5527 = vsel %vm3091, %v5436, 0
      %v5530 = vsel %vm3091, %v5437, 0
      %v5533 = vsel %vm3091, %v5438, 0
      %v5536 = vsel %vm3091, %v5439, 0
      %5538 = vmatprep.subr.mxu0 0.0
      %5539 = vmatpush1.msra.mxu0 %v5441
      %5540 = vmatprep.subr.mxu0 0.0
      %5541 = vmatpush1.msra.mxu0 0.0
      %5542 = vmatprep.subr.mxu0 0.0
      %5543 = vmatpush1.msra.mxu0 0.0
      %5544 = vmatprep.subr.mxu0 0.0
      %5545 = vmatpush1.msra.mxu0 0.0
      %5546 = vmatprep.subr.mxu0 0.0
      %5547 = vmatpush1.msra.mxu0 0.0
      %5548 = vmatprep.subr.mxu0 0.0
      %5549 = vmatpush1.msra.mxu0 0.0
      %5550 = vmatprep.subr.mxu0 0.0
      %5551 = vmatpush1.msra.mxu0 0.0
      %5552 = vmatprep.subr.mxu0 0.0
      %5553 = vmatpush1.msra.mxu0 0.0
      %5554 = vmatprep.subr.mxu0 0.0
      %5555 = vmatpush1.msra.mxu0 0.0
      %5556 = vmatprep.subr.mxu0 0.0
      %5557 = vmatpush1.msra.mxu0 0.0
      %5558 = vmatprep.subr.mxu0 0.0
      %5559 = vmatpush1.msra.mxu0 0.0
      %5560 = vmatprep.subr.mxu0 0.0
      %5561 = vmatpush1.msra.mxu0 0.0
      %5562 = vmatprep.subr.mxu0 0.0
      %5563 = vmatpush1.msra.mxu0 0.0
      %5564 = vmatprep.subr.mxu0 0.0
      %5565 = vmatpush1.msra.mxu0 0.0
      %5566 = vmatprep.subr.mxu0 0.0
      %5567 = vmatpush1.msra.mxu0 0.0
      %5568 = vmatprep.subr.mxu0 0.0
      %5569 = vmatpush1.msra.mxu0 0.0
      %5570 = vmatprep.subr.mxu0 0.0
      %5571 = vmatpush1.msra.mxu0 0.0
      %5572 = vmatprep.subr.mxu0 0.0
      %5573 = vmatpush1.msra.mxu0 0.0
      %5574 = vmatprep.subr.mxu0 0.0
      %5575 = vmatpush1.msra.mxu0 0.0
      %5576 = vmatprep.subr.mxu0 0.0
      %5577 = vmatpush1.msra.mxu0 0.0
      %5578 = vmatprep.subr.mxu0 0.0
      %5579 = vmatpush1.msra.mxu0 0.0
      %5580 = vmatprep.subr.mxu0 0.0
      %5581 = vmatpush1.msra.mxu0 0.0
      %5582 = vmatprep.subr.mxu0 0.0
      %5583 = vmatpush1.msra.mxu0 0.0
      %5584 = vmatprep.subr.mxu0 0.0
      %5585 = vmatpush1.msra.mxu0 0.0
      %5586 = vmatprep.subr.mxu0 0.0
      %5587 = vmatpush1.msra.mxu0 0.0
      %5588 = vmatprep.subr.mxu0 0.0
      %5589 = vmatpush1.msra.mxu0 0.0
      %5590 = vmatprep.subr.mxu0 0.0
      %5591 = vmatpush1.msra.mxu0 0.0
      %5592 = vmatprep.subr.mxu0 0.0
      %5593 = vmatpush1.msra.mxu0 0.0
      %5594 = vmatprep.subr.mxu0 0.0
      %5595 = vmatpush1.msra.mxu0 0.0
      %5596 = vmatprep.subr.mxu0 0.0
      %5597 = vmatpush1.msra.mxu0 0.0
      %5598 = vmatprep.subr.mxu0 0.0
      %5599 = vmatpush1.msra.mxu0 0.0
      %5600 = vmatprep.subr.mxu0 0.0
      %5601 = vmatpush1.msra.mxu0 0.0
      %5602 = vmatprep.mubr.f32.mxu0 0.0
      %5603 = vmatmul.mubr.f32.gmra.mrb[0].mxu0 %v5443
      %v5604 = vpop.f32.mrb[0].mxu0
      %v5605 = vadd.f32 0.0, %v5604
      %v5606 = vpop.f32.mrb[0].mxu0
      %5607 = vmatprep.mubr.f32.mxu0 0.0
      %5608 = vmatmul.mubr.f32.gmra.mrb[0].mxu0 %v5446
      %v5609 = vpop.f32.mrb[0].mxu0
      %v5610 = vadd.f32 0.0, %v5609
      %v5611 = vpop.f32.mrb[0].mxu0
      %5612 = vmatprep.mubr.f32.mxu0 0.0
      %5613 = vmatmul.mubr.f32.gmra.mrb[0].mxu0 %v5449
      %v5614 = vpop.f32.mrb[0].mxu0
      %v5615 = vadd.f32 0.0, %v5614
      %v5616 = vpop.f32.mrb[0].mxu0
      %5617 = vmatprep.mubr.f32.mxu0 0.0
      %5618 = vmatmul.mubr.f32.gmra.mrb[0].mxu0 %v5452
      %v5619 = vpop.f32.mrb[0].mxu0
      %v5620 = vadd.f32 0.0, %v5619
      %v5621 = vpop.f32.mrb[0].mxu0
      %5622 = vmatprep.mubr.f32.mxu0 0.0
      %5623 = vmatmul.mubr.f32.gmra.mrb[0].mxu0 %v5455
      %v5624 = vpop.f32.mrb[0].mxu0
      %v5625 = vadd.f32 0.0, %v5624
      %v5626 = vpop.f32.mrb[0].mxu0
      %5627 = vmatprep.mubr.f32.mxu0 0.0
      %5628 = vmatmul.mubr.f32.gmra.mrb[0].mxu0 %v5458
      %v5629 = vpop.f32.mrb[0].mxu0
      %v5630 = vadd.f32 0.0, %v5629
      %v5631 = vpop.f32.mrb[0].mxu0
      %5632 = vmatprep.mubr.f32.mxu0 0.0
      %5633 = vmatmul.mubr.f32.gmra.mrb[0].mxu0 %v5461
      %v5634 = vpop.f32.mrb[0].mxu0
      %v5635 = vadd.f32 0.0, %v5634
      %v5636 = vpop.f32.mrb[0].mxu0
      %5637 = vmatprep.mubr.f32.mxu0 0.0
      %5638 = vmatmul.mubr.f32.gmra.mrb[0].mxu0 %v5464
      %v5639 = vpop.f32.mrb[0].mxu0
      %v5640 = vadd.f32 0.0, %v5639
      %v5641 = vpop.f32.mrb[0].mxu0
      %5642 = vmatprep.mubr.f32.mxu0 0.0
      %5643 = vmatmul.mubr.f32.gmra.mrb[0].mxu0 %v5467
      %v5644 = vpop.f32.mrb[0].mxu0
      %v5645 = vadd.f32 0.0, %v5644
      %v5646 = vpop.f32.mrb[0].mxu0
      %5647 = vmatprep.mubr.f32.mxu0 0.0
      %5648 = vmatmul.mubr.f32.gmra.mrb[0].mxu0 %v5470
      %v5649 = vpop.f32.mrb[0].mxu0
      %v5650 = vadd.f32 0.0, %v5649
      %v5651 = vpop.f32.mrb[0].mxu0
      %5652 = vmatprep.mubr.f32.mxu0 0.0
      %5653 = vmatmul.mubr.f32.gmra.mrb[0].mxu0 %v5473
      %v5654 = vpop.f32.mrb[0].mxu0
      %v5655 = vadd.f32 0.0, %v5654
      %v5656 = vpop.f32.mrb[0].mxu0
      %5657 = vmatprep.mubr.f32.mxu0 0.0
      %5658 = vmatmul.mubr.f32.gmra.mrb[0].mxu0 %v5476
      %v5659 = vpop.f32.mrb[0].mxu0
      %v5660 = vadd.f32 0.0, %v5659
      %v5661 = vpop.f32.mrb[0].mxu0
      %5662 = vmatprep.mubr.f32.mxu0 0.0
      %5663 = vmatmul.mubr.f32.gmra.mrb[0].mxu0 %v5479
      %v5664 = vpop.f32.mrb[0].mxu0
      %v5665 = vadd.f32 0.0, %v5664
      %v5666 = vpop.f32.mrb[0].mxu0
      %5667 = vmatprep.mubr.f32.mxu0 0.0
      %5668 = vmatmul.mubr.f32.gmra.mrb[0].mxu0 %v5482
      %v5669 = vpop.f32.mrb[0].mxu0
      %v5670 = vadd.f32 0.0, %v5669
      %v5671 = vpop.f32.mrb[0].mxu0
      %5672 = vmatprep.mubr.f32.mxu0 0.0
      %5673 = vmatmul.mubr.f32.gmra.mrb[0].mxu0 %v5485
      %v5674 = vpop.f32.mrb[0].mxu0
      %v5675 = vadd.f32 0.0, %v5674
      %v5676 = vpop.f32.mrb[0].mxu0
      %5677 = vmatprep.mubr.f32.mxu0 0.0
      %5678 = vmatmul.mubr.f32.gmra.mrb[0].mxu0 %v5488
      %v5679 = vpop.f32.mrb[0].mxu0
      %v5680 = vadd.f32 0.0, %v5679
      %v5681 = vpop.f32.mrb[0].mxu0
      %5682 = vmatprep.mubr.f32.mxu0 0.0
      %5683 = vmatmul.mubr.f32.gmra.mrb[0].mxu0 %v5491
      %v5684 = vpop.f32.mrb[0].mxu0
      %v5685 = vadd.f32 0.0, %v5684
      %v5686 = vpop.f32.mrb[0].mxu0
      %5687 = vmatprep.mubr.f32.mxu0 0.0
      %5688 = vmatmul.mubr.f32.gmra.mrb[0].mxu0 %v5494
      %v5689 = vpop.f32.mrb[0].mxu0
      %v5690 = vadd.f32 0.0, %v5689
      %v5691 = vpop.f32.mrb[0].mxu0
      %5692 = vmatprep.mubr.f32.mxu0 0.0
      %5693 = vmatmul.mubr.f32.gmra.mrb[0].mxu0 %v5497
      %v5694 = vpop.f32.mrb[0].mxu0
      %v5695 = vadd.f32 0.0, %v5694
      %v5696 = vpop.f32.mrb[0].mxu0
      %5697 = vmatprep.mubr.f32.mxu0 0.0
      %5698 = vmatmul.mubr.f32.gmra.mrb[0].mxu0 %v5500
      %v5699 = vpop.f32.mrb[0].mxu0
      %v5700 = vadd.f32 0.0, %v5699
      %v5701 = vpop.f32.mrb[0].mxu0
      %5702 = vmatprep.mubr.f32.mxu0 0.0
      %5703 = vmatmul.mubr.f32.gmra.mrb[0].mxu0 %v5503
      %v5704 = vpop.f32.mrb[0].mxu0
      %v5705 = vadd.f32 0.0, %v5704
      %v5706 = vpop.f32.mrb[0].mxu0
      %5707 = vmatprep.mubr.f32.mxu0 0.0
      %5708 = vmatmul.mubr.f32.gmra.mrb[0].mxu0 %v5506
      %v5709 = vpop.f32.mrb[0].mxu0
      %v5710 = vadd.f32 0.0, %v5709
      %v5711 = vpop.f32.mrb[0].mxu0
      %5712 = vmatprep.mubr.f32.mxu0 0.0
      %5713 = vmatmul.mubr.f32.gmra.mrb[0].mxu0 %v5509
      %v5714 = vpop.f32.mrb[0].mxu0
      %v5715 = vadd.f32 0.0, %v5714
      %v5716 = vpop.f32.mrb[0].mxu0
      %5717 = vmatprep.mubr.f32.mxu0 0.0
      %5718 = vmatmul.mubr.f32.gmra.mrb[0].mxu0 %v5512
      %v5719 = vpop.f32.mrb[0].mxu0
      %v5720 = vadd.f32 0.0, %v5719
      %v5721 = vpop.f32.mrb[0].mxu0
      %5722 = vmatprep.mubr.f32.mxu0 0.0
      %5723 = vmatmul.mubr.f32.gmra.mrb[0].mxu0 %v5515
      %v5724 = vpop.f32.mrb[0].mxu0
      %v5725 = vadd.f32 0.0, %v5724
      %v5726 = vpop.f32.mrb[0].mxu0
      %5727 = vmatprep.mubr.f32.mxu0 0.0
      %5728 = vmatmul.mubr.f32.gmra.mrb[0].mxu0 %v5518
      %v5729 = vpop.f32.mrb[0].mxu0
      %v5730 = vadd.f32 0.0, %v5729
      %v5731 = vpop.f32.mrb[0].mxu0
      %5732 = vmatprep.mubr.f32.mxu0 0.0
      %5733 = vmatmul.mubr.f32.gmra.mrb[0].mxu0 %v5521
      %v5734 = vpop.f32.mrb[0].mxu0
      %v5735 = vadd.f32 0.0, %v5734
      %v5736 = vpop.f32.mrb[0].mxu0
      %5737 = vmatprep.mubr.f32.mxu0 0.0
      %5738 = vmatmul.mubr.f32.gmra.mrb[0].mxu0 %v5524
      %v5739 = vpop.f32.mrb[0].mxu0
      %v5740 = vadd.f32 0.0, %v5739
      %v5741 = vpop.f32.mrb[0].mxu0
      %5742 = vmatprep.mubr.f32.mxu0 0.0
      %5743 = vmatmul.mubr.f32.gmra.mrb[0].mxu0 %v5527
      %v5744 = vpop.f32.mrb[0].mxu0
      %v5745 = vadd.f32 0.0, %v5744
      %v5746 = vpop.f32.mrb[0].mxu0
      %5747 = vmatprep.mubr.f32.mxu0 0.0
      %5748 = vmatmul.mubr.f32.gmra.mrb[0].mxu0 %v5530
      %v5749 = vpop.f32.mrb[0].mxu0
      %v5750 = vadd.f32 0.0, %v5749
      %v5751 = vpop.f32.mrb[0].mxu0
      %5752 = vmatprep.mubr.f32.mxu0 0.0
      %5753 = vmatmul.mubr.f32.gmra.mrb[0].mxu0 %v5533
      %v5754 = vpop.f32.mrb[0].mxu0
      %v5755 = vadd.f32 0.0, %v5754
      %v5756 = vpop.f32.mrb[0].mxu0
      %5757 = vmatprep.mubr.f32.mxu0 0.0
      %5758 = vmatmul.mubr.f32.gmra.mrb[0].mxu0 %v5536
      %v5759 = vpop.f32.mrb[0].mxu0
      %v5760 = vadd.f32 0.0, %v5759
      %v5761 = vpop.f32.mrb[0].mxu0
      %5762 = vdwg.mxu0
      %v5763 = vadd.f32 %v5216, %v5605
      %v5764 = vadd.f32 %v5217, %v5610
      %v5765 = vadd.f32 %v5218, %v5615
      %v5766 = vadd.f32 %v5219, %v5620
      %v5767 = vadd.f32 %v5220, %v5625
      %v5768 = vadd.f32 %v5221, %v5630
      %v5769 = vadd.f32 %v5222, %v5635
      %v5770 = vadd.f32 %v5223, %v5640
      %v5771 = vadd.f32 %v5224, %v5645
      %v5772 = vadd.f32 %v5225, %v5650
      %v5773 = vadd.f32 %v5226, %v5655
      %v5774 = vadd.f32 %v5227, %v5660
      %v5775 = vadd.f32 %v5228, %v5665
      %v5776 = vadd.f32 %v5229, %v5670
      %v5777 = vadd.f32 %v5230, %v5675
      %v5778 = vadd.f32 %v5231, %v5680
      %v5779 = vadd.f32 %v5232, %v5685
      %v5780 = vadd.f32 %v5233, %v5690
      %v5781 = vadd.f32 %v5234, %v5695
      %v5782 = vadd.f32 %v5235, %v5700
      %v5783 = vadd.f32 %v5236, %v5705
      %v5784 = vadd.f32 %v5237, %v5710
      %v5785 = vadd.f32 %v5238, %v5715
      %v5786 = vadd.f32 %v5239, %v5720
      %v5787 = vadd.f32 %v5240, %v5725
      %v5788 = vadd.f32 %v5241, %v5730
      %v5789 = vadd.f32 %v5242, %v5735
      %v5790 = vadd.f32 %v5243, %v5740
      %v5791 = vadd.f32 %v5244, %v5745
      %v5792 = vadd.f32 %v5245, %v5750
      %v5793 = vadd.f32 %v5246, %v5755
      %v5794 = vadd.f32 %v5247, %v5760
      %5796 = vset.pattern.permute.xlu0 0
      %5797 = vperm.xlu0 %5796, %v1835
      %v5798 = vpop.permute.xlu0 %5797
      %5801 = vset.pattern.permute.xlu0 0
      %5802 = vperm.xlu0 %5801, %v1836
      %v5803 = vpop.permute.xlu0 %5802
      %5806 = vset.pattern.permute.xlu0 0
      %5807 = vperm.xlu0 %5806, %v1837
      %v5808 = vpop.permute.xlu0 %5807
      %5811 = vset.pattern.permute.xlu0 0
      %5812 = vperm.xlu0 %5811, %v1838
      %v5813 = vpop.permute.xlu0 %5812
      %5816 = vset.pattern.permute.xlu0 0
      %5817 = vperm.xlu0 %5816, %v1839
      %v5818 = vpop.permute.xlu0 %5817
      %5821 = vset.pattern.permute.xlu0 0
      %5822 = vperm.xlu0 %5821, %v1840
      %v5823 = vpop.permute.xlu0 %5822
      %5826 = vset.pattern.permute.xlu0 0
      %5827 = vperm.xlu0 %5826, %v1841
      %v5828 = vpop.permute.xlu0 %5827
      %5831 = vset.pattern.permute.xlu0 0
      %5832 = vperm.xlu0 %5831, %v1842
      %v5833 = vpop.permute.xlu0 %5832
      %5836 = vset.pattern.permute.xlu0 0
      %5837 = vperm.xlu0 %5836, %v1843
      %v5838 = vpop.permute.xlu0 %5837
      %5841 = vset.pattern.permute.xlu0 0
      %5842 = vperm.xlu0 %5841, %v1844
      %v5843 = vpop.permute.xlu0 %5842
      %5846 = vset.pattern.permute.xlu0 0
      %5847 = vperm.xlu0 %5846, %v1845
      %v5848 = vpop.permute.xlu0 %5847
      %5851 = vset.pattern.permute.xlu0 0
      %5852 = vperm.xlu0 %5851, %v1846
      %v5853 = vpop.permute.xlu0 %5852
      %5856 = vset.pattern.permute.xlu0 0
      %5857 = vperm.xlu0 %5856, %v1847
      %v5858 = vpop.permute.xlu0 %5857
      %5861 = vset.pattern.permute.xlu0 0
      %5862 = vperm.xlu0 %5861, %v1848
      %v5863 = vpop.permute.xlu0 %5862
      %5866 = vset.pattern.permute.xlu0 0
      %5867 = vperm.xlu0 %5866, %v1849
      %v5868 = vpop.permute.xlu0 %5867
      %5871 = vset.pattern.permute.xlu0 0
      %5872 = vperm.xlu0 %5871, %v1850
      %v5873 = vpop.permute.xlu0 %5872
      %5876 = vset.pattern.permute.xlu0 0
      %5877 = vperm.xlu0 %5876, %v1851
      %v5878 = vpop.permute.xlu0 %5877
      %5881 = vset.pattern.permute.xlu0 0
      %5882 = vperm.xlu0 %5881, %v1852
      %v5883 = vpop.permute.xlu0 %5882
      %5886 = vset.pattern.permute.xlu0 0
      %5887 = vperm.xlu0 %5886, %v1853
      %v5888 = vpop.permute.xlu0 %5887
      %5891 = vset.pattern.permute.xlu0 0
      %5892 = vperm.xlu0 %5891, %v1854
      %v5893 = vpop.permute.xlu0 %5892
      %5896 = vset.pattern.permute.xlu0 0
      %5897 = vperm.xlu0 %5896, %v1855
      %v5898 = vpop.permute.xlu0 %5897
      %5901 = vset.pattern.permute.xlu0 0
      %5902 = vperm.xlu0 %5901, %v1856
      %v5903 = vpop.permute.xlu0 %5902
      %5906 = vset.pattern.permute.xlu0 0
      %5907 = vperm.xlu0 %5906, %v1857
      %v5908 = vpop.permute.xlu0 %5907
      %5911 = vset.pattern.permute.xlu0 0
      %5912 = vperm.xlu0 %5911, %v1858
      %v5913 = vpop.permute.xlu0 %5912
      %5916 = vset.pattern.permute.xlu0 0
      %5917 = vperm.xlu0 %5916, %v1859
      %v5918 = vpop.permute.xlu0 %5917
      %5921 = vset.pattern.permute.xlu0 0
      %5922 = vperm.xlu0 %5921, %v1860
      %v5923 = vpop.permute.xlu0 %5922
      %5926 = vset.pattern.permute.xlu0 0
      %5927 = vperm.xlu0 %5926, %v1861
      %v5928 = vpop.permute.xlu0 %5927
      %5931 = vset.pattern.permute.xlu0 0
      %5932 = vperm.xlu0 %5931, %v1862
      %v5933 = vpop.permute.xlu0 %5932
      %5936 = vset.pattern.permute.xlu0 0
      %5937 = vperm.xlu0 %5936, %v1863
      %v5938 = vpop.permute.xlu0 %5937
      %5941 = vset.pattern.permute.xlu0 0
      %5942 = vperm.xlu0 %5941, %v1864
      %v5943 = vpop.permute.xlu0 %5942
      %5946 = vset.pattern.permute.xlu0 0
      %5947 = vperm.xlu0 %5946, %v1865
      %v5948 = vpop.permute.xlu0 %5947
      %5951 = vset.pattern.permute.xlu0 0
      %5952 = vperm.xlu0 %5951, %v1866
      %v5953 = vpop.permute.xlu0 %5952
      %v5955 = vmul.f32 %v2701, %v5798
      %v5956 = vmul.f32 %v2700, %v5803
      %v5957 = vmul.f32 %v2699, %v5808
      %v5958 = vmul.f32 %v2698, %v5813
      %v5959 = vmul.f32 %v2697, %v5818
      %v5960 = vmul.f32 %v2696, %v5823
      %v5961 = vmul.f32 %v2695, %v5828
      %v5962 = vmul.f32 %v2694, %v5833
      %v5963 = vmul.f32 %v2693, %v5838
      %v5964 = vmul.f32 %v2692, %v5843
      %v5965 = vmul.f32 %v2691, %v5848
      %v5966 = vmul.f32 %v2690, %v5853
      %v5967 = vmul.f32 %v2689, %v5858
      %v5968 = vmul.f32 %v2688, %v5863
      %v5969 = vmul.f32 %v2687, %v5868
      %v5970 = vmul.f32 %v2686, %v5873
      %v5971 = vmul.f32 %v2685, %v5878
      %v5972 = vmul.f32 %v2684, %v5883
      %v5973 = vmul.f32 %v2683, %v5888
      %v5974 = vmul.f32 %v2682, %v5893
      %v5975 = vmul.f32 %v2681, %v5898
      %v5976 = vmul.f32 %v2680, %v5903
      %v5977 = vmul.f32 %v2679, %v5908
      %v5978 = vmul.f32 %v2678, %v5913
      %v5979 = vmul.f32 %v2677, %v5918
      %v5980 = vmul.f32 %v2676, %v5923
      %v5981 = vmul.f32 %v2675, %v5928
      %v5982 = vmul.f32 %v2674, %v5933
      %v5983 = vmul.f32 %v2673, %v5938
      %v5984 = vmul.f32 %v2672, %v5943
      %v5985 = vmul.f32 %v2703, %v5948
      %v5986 = vmul.f32 %v2702, %v5953
      %s5987 = scalar_lea.vmem %s7, 48
      %v5988 = vld [vmem:[%s5987] sm:$0xff]
      %v5990 = vsel %vm3091, %v5955, 0
      %v5993 = vsel %vm3091, %v5956, 0
      %v5996 = vsel %vm3091, %v5957, 0
      %v5999 = vsel %vm3091, %v5958, 0
      %v6002 = vsel %vm3091, %v5959, 0
      %v6005 = vsel %vm3091, %v5960, 0
      %v6008 = vsel %vm3091, %v5961, 0
      %v6011 = vsel %vm3091, %v5962, 0
      %v6014 = vsel %vm3091, %v5963, 0
      %v6017 = vsel %vm3091, %v5964, 0
      %v6020 = vsel %vm3091, %v5965, 0
      %v6023 = vsel %vm3091, %v5966, 0
      %v6026 = vsel %vm3091, %v5967, 0
      %v6029 = vsel %vm3091, %v5968, 0
      %v6032 = vsel %vm3091, %v5969, 0
      %v6035 = vsel %vm3091, %v5970, 0
      %v6038 = vsel %vm3091, %v5971, 0
      %v6041 = vsel %vm3091, %v5972, 0
      %v6044 = vsel %vm3091, %v5973, 0
      %v6047 = vsel %vm3091, %v5974, 0
      %v6050 = vsel %vm3091, %v5975, 0
      %v6053 = vsel %vm3091, %v5976, 0
      %v6056 = vsel %vm3091, %v5977, 0
      %v6059 = vsel %vm3091, %v5978, 0
      %v6062 = vsel %vm3091, %v5979, 0
      %v6065 = vsel %vm3091, %v5980, 0
      %v6068 = vsel %vm3091, %v5981, 0
      %v6071 = vsel %vm3091, %v5982, 0
      %v6074 = vsel %vm3091, %v5983, 0
      %v6077 = vsel %vm3091, %v5984, 0
      %v6080 = vsel %vm3091, %v5985, 0
      %v6083 = vsel %vm3091, %v5986, 0
      %6085 = vmatprep.subr.mxu0 0.0
      %6086 = vmatpush1.msra.mxu0 %v5988
      %6087 = vmatprep.subr.mxu0 0.0
      %6088 = vmatpush1.msra.mxu0 0.0
      %6089 = vmatprep.subr.mxu0 0.0
      %6090 = vmatpush1.msra.mxu0 0.0
      %6091 = vmatprep.subr.mxu0 0.0
      %6092 = vmatpush1.msra.mxu0 0.0
      %6093 = vmatprep.subr.mxu0 0.0
      %6094 = vmatpush1.msra.mxu0 0.0
      %6095 = vmatprep.subr.mxu0 0.0
      %6096 = vmatpush1.msra.mxu0 0.0
      %6097 = vmatprep.subr.mxu0 0.0
      %6098 = vmatpush1.msra.mxu0 0.0
      %6099 = vmatprep.subr.mxu0 0.0
      %6100 = vmatpush1.msra.mxu0 0.0
      %6101 = vmatprep.subr.mxu0 0.0
      %6102 = vmatpush1.msra.mxu0 0.0
      %6103 = vmatprep.subr.mxu0 0.0
      %6104 = vmatpush1.msra.mxu0 0.0
      %6105 = vmatprep.subr.mxu0 0.0
      %6106 = vmatpush1.msra.mxu0 0.0
      %6107 = vmatprep.subr.mxu0 0.0
      %6108 = vmatpush1.msra.mxu0 0.0
      %6109 = vmatprep.subr.mxu0 0.0
      %6110 = vmatpush1.msra.mxu0 0.0
      %6111 = vmatprep.subr.mxu0 0.0
      %6112 = vmatpush1.msra.mxu0 0.0
      %6113 = vmatprep.subr.mxu0 0.0
      %6114 = vmatpush1.msra.mxu0 0.0
      %6115 = vmatprep.subr.mxu0 0.0
      %6116 = vmatpush1.msra.mxu0 0.0
      %6117 = vmatprep.subr.mxu0 0.0
      %6118 = vmatpush1.msra.mxu0 0.0
      %6119 = vmatprep.subr.mxu0 0.0
      %6120 = vmatpush1.msra.mxu0 0.0
      %6121 = vmatprep.subr.mxu0 0.0
      %6122 = vmatpush1.msra.mxu0 0.0
      %6123 = vmatprep.subr.mxu0 0.0
      %6124 = vmatpush1.msra.mxu0 0.0
      %6125 = vmatprep.subr.mxu0 0.0
      %6126 = vmatpush1.msra.mxu0 0.0
      %6127 = vmatprep.subr.mxu0 0.0
      %6128 = vmatpush1.msra.mxu0 0.0
      %6129 = vmatprep.subr.mxu0 0.0
      %6130 = vmatpush1.msra.mxu0 0.0
      %6131 = vmatprep.subr.mxu0 0.0
      %6132 = vmatpush1.msra.mxu0 0.0
      %6133 = vmatprep.subr.mxu0 0.0
      %6134 = vmatpush1.msra.mxu0 0.0
      %6135 = vmatprep.subr.mxu0 0.0
      %6136 = vmatpush1.msra.mxu0 0.0
      %6137 = vmatprep.subr.mxu0 0.0
      %6138 = vmatpush1.msra.mxu0 0.0
      %6139 = vmatprep.subr.mxu0 0.0
      %6140 = vmatpush1.msra.mxu0 0.0
      %6141 = vmatprep.subr.mxu0 0.0
      %6142 = vmatpush1.msra.mxu0 0.0
      %6143 = vmatprep.subr.mxu0 0.0
      %6144 = vmatpush1.msra.mxu0 0.0
      %6145 = vmatprep.subr.mxu0 0.0
      %6146 = vmatpush1.msra.mxu0 0.0
      %6147 = vmatprep.subr.mxu0 0.0
      %6148 = vmatpush1.msra.mxu0 0.0
      %6149 = vmatprep.mubr.f32.mxu0 0.0
      %6150 = vmatmul.mubr.f32.gmra.mrb[0].mxu0 %v5990
      %v6151 = vpop.f32.mrb[0].mxu0
      %v6152 = vadd.f32 0.0, %v6151
      %v6153 = vpop.f32.mrb[0].mxu0
      %6154 = vmatprep.mubr.f32.mxu0 0.0
      %6155 = vmatmul.mubr.f32.gmra.mrb[0].mxu0 %v5993
      %v6156 = vpop.f32.mrb[0].mxu0
      %v6157 = vadd.f32 0.0, %v6156
      %v6158 = vpop.f32.mrb[0].mxu0
      %6159 = vmatprep.mubr.f32.mxu0 0.0
      %6160 = vmatmul.mubr.f32.gmra.mrb[0].mxu0 %v5996
      %v6161 = vpop.f32.mrb[0].mxu0
      %v6162 = vadd.f32 0.0, %v6161
      %v6163 = vpop.f32.mrb[0].mxu0
      %6164 = vmatprep.mubr.f32.mxu0 0.0
      %6165 = vmatmul.mubr.f32.gmra.mrb[0].mxu0 %v5999
      %v6166 = vpop.f32.mrb[0].mxu0
      %v6167 = vadd.f32 0.0, %v6166
      %v6168 = vpop.f32.mrb[0].mxu0
      %6169 = vmatprep.mubr.f32.mxu0 0.0
      %6170 = vmatmul.mubr.f32.gmra.mrb[0].mxu0 %v6002
      %v6171 = vpop.f32.mrb[0].mxu0
      %v6172 = vadd.f32 0.0, %v6171
      %v6173 = vpop.f32.mrb[0].mxu0
      %6174 = vmatprep.mubr.f32.mxu0 0.0
      %6175 = vmatmul.mubr.f32.gmra.mrb[0].mxu0 %v6005
      %v6176 = vpop.f32.mrb[0].mxu0
      %v6177 = vadd.f32 0.0, %v6176
      %v6178 = vpop.f32.mrb[0].mxu0
      %6179 = vmatprep.mubr.f32.mxu0 0.0
      %6180 = vmatmul.mubr.f32.gmra.mrb[0].mxu0 %v6008
      %v6181 = vpop.f32.mrb[0].mxu0
      %v6182 = vadd.f32 0.0, %v6181
      %v6183 = vpop.f32.mrb[0].mxu0
      %6184 = vmatprep.mubr.f32.mxu0 0.0
      %6185 = vmatmul.mubr.f32.gmra.mrb[0].mxu0 %v6011
      %v6186 = vpop.f32.mrb[0].mxu0
      %v6187 = vadd.f32 0.0, %v6186
      %v6188 = vpop.f32.mrb[0].mxu0
      %6189 = vmatprep.mubr.f32.mxu0 0.0
      %6190 = vmatmul.mubr.f32.gmra.mrb[0].mxu0 %v6014
      %v6191 = vpop.f32.mrb[0].mxu0
      %v6192 = vadd.f32 0.0, %v6191
      %v6193 = vpop.f32.mrb[0].mxu0
      %6194 = vmatprep.mubr.f32.mxu0 0.0
      %6195 = vmatmul.mubr.f32.gmra.mrb[0].mxu0 %v6017
      %v6196 = vpop.f32.mrb[0].mxu0
      %v6197 = vadd.f32 0.0, %v6196
      %v6198 = vpop.f32.mrb[0].mxu0
      %6199 = vmatprep.mubr.f32.mxu0 0.0
      %6200 = vmatmul.mubr.f32.gmra.mrb[0].mxu0 %v6020
      %v6201 = vpop.f32.mrb[0].mxu0
      %v6202 = vadd.f32 0.0, %v6201
      %v6203 = vpop.f32.mrb[0].mxu0
      %6204 = vmatprep.mubr.f32.mxu0 0.0
      %6205 = vmatmul.mubr.f32.gmra.mrb[0].mxu0 %v6023
      %v6206 = vpop.f32.mrb[0].mxu0
      %v6207 = vadd.f32 0.0, %v6206
      %v6208 = vpop.f32.mrb[0].mxu0
      %6209 = vmatprep.mubr.f32.mxu0 0.0
      %6210 = vmatmul.mubr.f32.gmra.mrb[0].mxu0 %v6026
      %v6211 = vpop.f32.mrb[0].mxu0
      %v6212 = vadd.f32 0.0, %v6211
      %v6213 = vpop.f32.mrb[0].mxu0
      %6214 = vmatprep.mubr.f32.mxu0 0.0
      %6215 = vmatmul.mubr.f32.gmra.mrb[0].mxu0 %v6029
      %v6216 = vpop.f32.mrb[0].mxu0
      %v6217 = vadd.f32 0.0, %v6216
      %v6218 = vpop.f32.mrb[0].mxu0
      %6219 = vmatprep.mubr.f32.mxu0 0.0
      %6220 = vmatmul.mubr.f32.gmra.mrb[0].mxu0 %v6032
      %v6221 = vpop.f32.mrb[0].mxu0
      %v6222 = vadd.f32 0.0, %v6221
      %v6223 = vpop.f32.mrb[0].mxu0
      %6224 = vmatprep.mubr.f32.mxu0 0.0
      %6225 = vmatmul.mubr.f32.gmra.mrb[0].mxu0 %v6035
      %v6226 = vpop.f32.mrb[0].mxu0
      %v6227 = vadd.f32 0.0, %v6226
      %v6228 = vpop.f32.mrb[0].mxu0
      %6229 = vmatprep.mubr.f32.mxu0 0.0
      %6230 = vmatmul.mubr.f32.gmra.mrb[0].mxu0 %v6038
      %v6231 = vpop.f32.mrb[0].mxu0
      %v6232 = vadd.f32 0.0, %v6231
      %v6233 = vpop.f32.mrb[0].mxu0
      %6234 = vmatprep.mubr.f32.mxu0 0.0
      %6235 = vmatmul.mubr.f32.gmra.mrb[0].mxu0 %v6041
      %v6236 = vpop.f32.mrb[0].mxu0
      %v6237 = vadd.f32 0.0, %v6236
      %v6238 = vpop.f32.mrb[0].mxu0
      %6239 = vmatprep.mubr.f32.mxu0 0.0
      %6240 = vmatmul.mubr.f32.gmra.mrb[0].mxu0 %v6044
      %v6241 = vpop.f32.mrb[0].mxu0
      %v6242 = vadd.f32 0.0, %v6241
      %v6243 = vpop.f32.mrb[0].mxu0
      %6244 = vmatprep.mubr.f32.mxu0 0.0
      %6245 = vmatmul.mubr.f32.gmra.mrb[0].mxu0 %v6047
      %v6246 = vpop.f32.mrb[0].mxu0
      %v6247 = vadd.f32 0.0, %v6246
      %v6248 = vpop.f32.mrb[0].mxu0
      %6249 = vmatprep.mubr.f32.mxu0 0.0
      %6250 = vmatmul.mubr.f32.gmra.mrb[0].mxu0 %v6050
      %v6251 = vpop.f32.mrb[0].mxu0
      %v6252 = vadd.f32 0.0, %v6251
      %v6253 = vpop.f32.mrb[0].mxu0
      %6254 = vmatprep.mubr.f32.mxu0 0.0
      %6255 = vmatmul.mubr.f32.gmra.mrb[0].mxu0 %v6053
      %v6256 = vpop.f32.mrb[0].mxu0
      %v6257 = vadd.f32 0.0, %v6256
      %v6258 = vpop.f32.mrb[0].mxu0
      %6259 = vmatprep.mubr.f32.mxu0 0.0
      %6260 = vmatmul.mubr.f32.gmra.mrb[0].mxu0 %v6056
      %v6261 = vpop.f32.mrb[0].mxu0
      %v6262 = vadd.f32 0.0, %v6261
      %v6263 = vpop.f32.mrb[0].mxu0
      %6264 = vmatprep.mubr.f32.mxu0 0.0
      %6265 = vmatmul.mubr.f32.gmra.mrb[0].mxu0 %v6059
      %v6266 = vpop.f32.mrb[0].mxu0
      %v6267 = vadd.f32 0.0, %v6266
      %v6268 = vpop.f32.mrb[0].mxu0
      %6269 = vmatprep.mubr.f32.mxu0 0.0
      %6270 = vmatmul.mubr.f32.gmra.mrb[0].mxu0 %v6062
      %v6271 = vpop.f32.mrb[0].mxu0
      %v6272 = vadd.f32 0.0, %v6271
      %v6273 = vpop.f32.mrb[0].mxu0
      %6274 = vmatprep.mubr.f32.mxu0 0.0
      %6275 = vmatmul.mubr.f32.gmra.mrb[0].mxu0 %v6065
      %v6276 = vpop.f32.mrb[0].mxu0
      %v6277 = vadd.f32 0.0, %v6276
      %v6278 = vpop.f32.mrb[0].mxu0
      %6279 = vmatprep.mubr.f32.mxu0 0.0
      %6280 = vmatmul.mubr.f32.gmra.mrb[0].mxu0 %v6068
      %v6281 = vpop.f32.mrb[0].mxu0
      %v6282 = vadd.f32 0.0, %v6281
      %v6283 = vpop.f32.mrb[0].mxu0
      %6284 = vmatprep.mubr.f32.mxu0 0.0
      %6285 = vmatmul.mubr.f32.gmra.mrb[0].mxu0 %v6071
      %v6286 = vpop.f32.mrb[0].mxu0
      %v6287 = vadd.f32 0.0, %v6286
      %v6288 = vpop.f32.mrb[0].mxu0
      %6289 = vmatprep.mubr.f32.mxu0 0.0
      %6290 = vmatmul.mubr.f32.gmra.mrb[0].mxu0 %v6074
      %v6291 = vpop.f32.mrb[0].mxu0
      %v6292 = vadd.f32 0.0, %v6291
      %v6293 = vpop.f32.mrb[0].mxu0
      %6294 = vmatprep.mubr.f32.mxu0 0.0
      %6295 = vmatmul.mubr.f32.gmra.mrb[0].mxu0 %v6077
      %v6296 = vpop.f32.mrb[0].mxu0
      %v6297 = vadd.f32 0.0, %v6296
      %v6298 = vpop.f32.mrb[0].mxu0
      %6299 = vmatprep.mubr.f32.mxu0 0.0
      %6300 = vmatmul.mubr.f32.gmra.mrb[0].mxu0 %v6080
      %v6301 = vpop.f32.mrb[0].mxu0
      %v6302 = vadd.f32 0.0, %v6301
      %v6303 = vpop.f32.mrb[0].mxu0
      %6304 = vmatprep.mubr.f32.mxu0 0.0
      %6305 = vmatmul.mubr.f32.gmra.mrb[0].mxu0 %v6083
      %v6306 = vpop.f32.mrb[0].mxu0
      %v6307 = vadd.f32 0.0, %v6306
      %v6308 = vpop.f32.mrb[0].mxu0
      %6309 = vdwg.mxu0
      %v6310 = vadd.f32 %v5763, %v6152
      %v6311 = vadd.f32 %v5764, %v6157
      %v6312 = vadd.f32 %v5765, %v6162
      %v6313 = vadd.f32 %v5766, %v6167
      %v6314 = vadd.f32 %v5767, %v6172
      %v6315 = vadd.f32 %v5768, %v6177
      %v6316 = vadd.f32 %v5769, %v6182
      %v6317 = vadd.f32 %v5770, %v6187
      %v6318 = vadd.f32 %v5771, %v6192
      %v6319 = vadd.f32 %v5772, %v6197
      %v6320 = vadd.f32 %v5773, %v6202
      %v6321 = vadd.f32 %v5774, %v6207
      %v6322 = vadd.f32 %v5775, %v6212
      %v6323 = vadd.f32 %v5776, %v6217
      %v6324 = vadd.f32 %v5777, %v6222
      %v6325 = vadd.f32 %v5778, %v6227
      %v6326 = vadd.f32 %v5779, %v6232
      %v6327 = vadd.f32 %v5780, %v6237
      %v6328 = vadd.f32 %v5781, %v6242
      %v6329 = vadd.f32 %v5782, %v6247
      %v6330 = vadd.f32 %v5783, %v6252
      %v6331 = vadd.f32 %v5784, %v6257
      %v6332 = vadd.f32 %v5785, %v6262
      %v6333 = vadd.f32 %v5786, %v6267
      %v6334 = vadd.f32 %v5787, %v6272
      %v6335 = vadd.f32 %v5788, %v6277
      %v6336 = vadd.f32 %v5789, %v6282
      %v6337 = vadd.f32 %v5790, %v6287
      %v6338 = vadd.f32 %v5791, %v6292
      %v6339 = vadd.f32 %v5792, %v6297
      %v6340 = vadd.f32 %v5793, %v6302
      %v6341 = vadd.f32 %v5794, %v6307
      %6343 = vset.pattern.permute.xlu0 0
      %6344 = vperm.xlu0 %6343, %v1931
      %v6345 = vpop.permute.xlu0 %6344
      %6348 = vset.pattern.permute.xlu0 0
      %6349 = vperm.xlu0 %6348, %v1932
      %v6350 = vpop.permute.xlu0 %6349
      %6353 = vset.pattern.permute.xlu0 0
      %6354 = vperm.xlu0 %6353, %v1933
      %v6355 = vpop.permute.xlu0 %6354
      %6358 = vset.pattern.permute.xlu0 0
      %6359 = vperm.xlu0 %6358, %v1934
      %v6360 = vpop.permute.xlu0 %6359
      %6363 = vset.pattern.permute.xlu0 0
      %6364 = vperm.xlu0 %6363, %v1935
      %v6365 = vpop.permute.xlu0 %6364
      %6368 = vset.pattern.permute.xlu0 0
      %6369 = vperm.xlu0 %6368, %v1936
      %v6370 = vpop.permute.xlu0 %6369
      %6373 = vset.pattern.permute.xlu0 0
      %6374 = vperm.xlu0 %6373, %v1937
      %v6375 = vpop.permute.xlu0 %6374
      %6378 = vset.pattern.permute.xlu0 0
      %6379 = vperm.xlu0 %6378, %v1938
      %v6380 = vpop.permute.xlu0 %6379
      %6383 = vset.pattern.permute.xlu0 0
      %6384 = vperm.xlu0 %6383, %v1939
      %v6385 = vpop.permute.xlu0 %6384
      %6388 = vset.pattern.permute.xlu0 0
      %6389 = vperm.xlu0 %6388, %v1940
      %v6390 = vpop.permute.xlu0 %6389
      %6393 = vset.pattern.permute.xlu0 0
      %6394 = vperm.xlu0 %6393, %v1941
      %v6395 = vpop.permute.xlu0 %6394
      %6398 = vset.pattern.permute.xlu0 0
      %6399 = vperm.xlu0 %6398, %v1942
      %v6400 = vpop.permute.xlu0 %6399
      %6403 = vset.pattern.permute.xlu0 0
      %6404 = vperm.xlu0 %6403, %v1943
      %v6405 = vpop.permute.xlu0 %6404
      %6408 = vset.pattern.permute.xlu0 0
      %6409 = vperm.xlu0 %6408, %v1944
      %v6410 = vpop.permute.xlu0 %6409
      %6413 = vset.pattern.permute.xlu0 0
      %6414 = vperm.xlu0 %6413, %v1945
      %v6415 = vpop.permute.xlu0 %6414
      %6418 = vset.pattern.permute.xlu0 0
      %6419 = vperm.xlu0 %6418, %v1946
      %v6420 = vpop.permute.xlu0 %6419
      %6423 = vset.pattern.permute.xlu0 0
      %6424 = vperm.xlu0 %6423, %v1947
      %v6425 = vpop.permute.xlu0 %6424
      %6428 = vset.pattern.permute.xlu0 0
      %6429 = vperm.xlu0 %6428, %v1948
      %v6430 = vpop.permute.xlu0 %6429
      %6433 = vset.pattern.permute.xlu0 0
      %6434 = vperm.xlu0 %6433, %v1949
      %v6435 = vpop.permute.xlu0 %6434
      %6438 = vset.pattern.permute.xlu0 0
      %6439 = vperm.xlu0 %6438, %v1950
      %v6440 = vpop.permute.xlu0 %6439
      %6443 = vset.pattern.permute.xlu0 0
      %6444 = vperm.xlu0 %6443, %v1951
      %v6445 = vpop.permute.xlu0 %6444
      %6448 = vset.pattern.permute.xlu0 0
      %6449 = vperm.xlu0 %6448, %v1952
      %v6450 = vpop.permute.xlu0 %6449
      %6453 = vset.pattern.permute.xlu0 0
      %6454 = vperm.xlu0 %6453, %v1953
      %v6455 = vpop.permute.xlu0 %6454
      %6458 = vset.pattern.permute.xlu0 0
      %6459 = vperm.xlu0 %6458, %v1954
      %v6460 = vpop.permute.xlu0 %6459
      %6463 = vset.pattern.permute.xlu0 0
      %6464 = vperm.xlu0 %6463, %v1955
      %v6465 = vpop.permute.xlu0 %6464
      %6468 = vset.pattern.permute.xlu0 0
      %6469 = vperm.xlu0 %6468, %v1956
      %v6470 = vpop.permute.xlu0 %6469
      %6473 = vset.pattern.permute.xlu0 0
      %6474 = vperm.xlu0 %6473, %v1957
      %v6475 = vpop.permute.xlu0 %6474
      %6478 = vset.pattern.permute.xlu0 0
      %6479 = vperm.xlu0 %6478, %v1958
      %v6480 = vpop.permute.xlu0 %6479
      %6483 = vset.pattern.permute.xlu0 0
      %6484 = vperm.xlu0 %6483, %v1959
      %v6485 = vpop.permute.xlu0 %6484
      %6488 = vset.pattern.permute.xlu0 0
      %6489 = vperm.xlu0 %6488, %v1960
      %v6490 = vpop.permute.xlu0 %6489
      %6493 = vset.pattern.permute.xlu0 0
      %6494 = vperm.xlu0 %6493, %v1961
      %v6495 = vpop.permute.xlu0 %6494
      %6498 = vset.pattern.permute.xlu0 0
      %6499 = vperm.xlu0 %6498, %v1962
      %v6500 = vpop.permute.xlu0 %6499
      %v6502 = vmul.f32 %v2607, %v6345
      %v6503 = vmul.f32 %v2608, %v6350
      %v6504 = vmul.f32 %v2609, %v6355
      %v6505 = vmul.f32 %v2610, %v6360
      %v6506 = vmul.f32 %v2611, %v6365
      %v6507 = vmul.f32 %v2612, %v6370
      %v6508 = vmul.f32 %v2613, %v6375
      %v6509 = vmul.f32 %v2614, %v6380
      %v6510 = vmul.f32 %v2615, %v6385
      %v6511 = vmul.f32 %v2616, %v6390
      %v6512 = vmul.f32 %v2617, %v6395
      %v6513 = vmul.f32 %v2618, %v6400
      %v6514 = vmul.f32 %v2619, %v6405
      %v6515 = vmul.f32 %v2620, %v6410
      %v6516 = vmul.f32 %v2621, %v6415
      %v6517 = vmul.f32 %v2622, %v6420
      %v6518 = vmul.f32 %v2623, %v6425
      %v6519 = vmul.f32 %v2624, %v6430
      %v6520 = vmul.f32 %v2625, %v6435
      %v6521 = vmul.f32 %v2626, %v6440
      %v6522 = vmul.f32 %v2627, %v6445
      %v6523 = vmul.f32 %v2628, %v6450
      %v6524 = vmul.f32 %v2629, %v6455
      %v6525 = vmul.f32 %v2630, %v6460
      %v6526 = vmul.f32 %v2631, %v6465
      %v6527 = vmul.f32 %v2632, %v6470
      %v6528 = vmul.f32 %v2633, %v6475
      %v6529 = vmul.f32 %v2634, %v6480
      %v6530 = vmul.f32 %v2635, %v6485
      %v6531 = vmul.f32 %v2636, %v6490
      %v6532 = vmul.f32 %v2605, %v6495
      %v6533 = vmul.f32 %v2606, %v6500
      %s6534 = scalar_lea.vmem %s7, 56
      %v6535 = vld [vmem:[%s6534] sm:$0xff]
      %v6537 = vsel %vm3091, %v6502, 0
      %v6540 = vsel %vm3091, %v6503, 0
      %v6543 = vsel %vm3091, %v6504, 0
      %v6546 = vsel %vm3091, %v6505, 0
      %v6549 = vsel %vm3091, %v6506, 0
      %v6552 = vsel %vm3091, %v6507, 0
      %v6555 = vsel %vm3091, %v6508, 0
      %v6558 = vsel %vm3091, %v6509, 0
      %v6561 = vsel %vm3091, %v6510, 0
      %v6564 = vsel %vm3091, %v6511, 0
      %v6567 = vsel %vm3091, %v6512, 0
      %v6570 = vsel %vm3091, %v6513, 0
      %v6573 = vsel %vm3091, %v6514, 0
      %v6576 = vsel %vm3091, %v6515, 0
      %v6579 = vsel %vm3091, %v6516, 0
      %v6582 = vsel %vm3091, %v6517, 0
      %v6585 = vsel %vm3091, %v6518, 0
      %v6588 = vsel %vm3091, %v6519, 0
      %v6591 = vsel %vm3091, %v6520, 0
      %v6594 = vsel %vm3091, %v6521, 0
      %v6597 = vsel %vm3091, %v6522, 0
      %v6600 = vsel %vm3091, %v6523, 0
      %v6603 = vsel %vm3091, %v6524, 0
      %v6606 = vsel %vm3091, %v6525, 0
      %v6609 = vsel %vm3091, %v6526, 0
      %v6612 = vsel %vm3091, %v6527, 0
      %v6615 = vsel %vm3091, %v6528, 0
      %v6618 = vsel %vm3091, %v6529, 0
      %v6621 = vsel %vm3091, %v6530, 0
      %v6624 = vsel %vm3091, %v6531, 0
      %v6627 = vsel %vm3091, %v6532, 0
      %v6630 = vsel %vm3091, %v6533, 0
      %6632 = vmatprep.subr.mxu0 0.0
      %6633 = vmatpush1.msra.mxu0 %v6535
      %6634 = vmatprep.subr.mxu0 0.0
      %6635 = vmatpush1.msra.mxu0 0.0
      %6636 = vmatprep.subr.mxu0 0.0
      %6637 = vmatpush1.msra.mxu0 0.0
      %6638 = vmatprep.subr.mxu0 0.0
      %6639 = vmatpush1.msra.mxu0 0.0
      %6640 = vmatprep.subr.mxu0 0.0
      %6641 = vmatpush1.msra.mxu0 0.0
      %6642 = vmatprep.subr.mxu0 0.0
      %6643 = vmatpush1.msra.mxu0 0.0
      %6644 = vmatprep.subr.mxu0 0.0
      %6645 = vmatpush1.msra.mxu0 0.0
      %6646 = vmatprep.subr.mxu0 0.0
      %6647 = vmatpush1.msra.mxu0 0.0
      %6648 = vmatprep.subr.mxu0 0.0
      %6649 = vmatpush1.msra.mxu0 0.0
      %6650 = vmatprep.subr.mxu0 0.0
      %6651 = vmatpush1.msra.mxu0 0.0
      %6652 = vmatprep.subr.mxu0 0.0
      %6653 = vmatpush1.msra.mxu0 0.0
      %6654 = vmatprep.subr.mxu0 0.0
      %6655 = vmatpush1.msra.mxu0 0.0
      %6656 = vmatprep.subr.mxu0 0.0
      %6657 = vmatpush1.msra.mxu0 0.0
      %6658 = vmatprep.subr.mxu0 0.0
      %6659 = vmatpush1.msra.mxu0 0.0
      %6660 = vmatprep.subr.mxu0 0.0
      %6661 = vmatpush1.msra.mxu0 0.0
      %6662 = vmatprep.subr.mxu0 0.0
      %6663 = vmatpush1.msra.mxu0 0.0
      %6664 = vmatprep.subr.mxu0 0.0
      %6665 = vmatpush1.msra.mxu0 0.0
      %6666 = vmatprep.subr.mxu0 0.0
      %6667 = vmatpush1.msra.mxu0 0.0
      %6668 = vmatprep.subr.mxu0 0.0
      %6669 = vmatpush1.msra.mxu0 0.0
      %6670 = vmatprep.subr.mxu0 0.0
      %6671 = vmatpush1.msra.mxu0 0.0
      %6672 = vmatprep.subr.mxu0 0.0
      %6673 = vmatpush1.msra.mxu0 0.0
      %6674 = vmatprep.subr.mxu0 0.0
      %6675 = vmatpush1.msra.mxu0 0.0
      %6676 = vmatprep.subr.mxu0 0.0
      %6677 = vmatpush1.msra.mxu0 0.0
      %6678 = vmatprep.subr.mxu0 0.0
      %6679 = vmatpush1.msra.mxu0 0.0
      %6680 = vmatprep.subr.mxu0 0.0
      %6681 = vmatpush1.msra.mxu0 0.0
      %6682 = vmatprep.subr.mxu0 0.0
      %6683 = vmatpush1.msra.mxu0 0.0
      %6684 = vmatprep.subr.mxu0 0.0
      %6685 = vmatpush1.msra.mxu0 0.0
      %6686 = vmatprep.subr.mxu0 0.0
      %6687 = vmatpush1.msra.mxu0 0.0
      %6688 = vmatprep.subr.mxu0 0.0
      %6689 = vmatpush1.msra.mxu0 0.0
      %6690 = vmatprep.subr.mxu0 0.0
      %6691 = vmatpush1.msra.mxu0 0.0
      %6692 = vmatprep.subr.mxu0 0.0
      %6693 = vmatpush1.msra.mxu0 0.0
      %6694 = vmatprep.subr.mxu0 0.0
      %6695 = vmatpush1.msra.mxu0 0.0
      %6696 = vmatprep.mubr.f32.mxu0 0.0
      %6697 = vmatmul.mubr.f32.gmra.mrb[0].mxu0 %v6537
      %v6698 = vpop.f32.mrb[0].mxu0
      %v6699 = vadd.f32 0.0, %v6698
      %v6700 = vpop.f32.mrb[0].mxu0
      %6701 = vmatprep.mubr.f32.mxu0 0.0
      %6702 = vmatmul.mubr.f32.gmra.mrb[0].mxu0 %v6540
      %v6703 = vpop.f32.mrb[0].mxu0
      %v6704 = vadd.f32 0.0, %v6703
      %v6705 = vpop.f32.mrb[0].mxu0
      %6706 = vmatprep.mubr.f32.mxu0 0.0
      %6707 = vmatmul.mubr.f32.gmra.mrb[0].mxu0 %v6543
      %v6708 = vpop.f32.mrb[0].mxu0
      %v6709 = vadd.f32 0.0, %v6708
      %v6710 = vpop.f32.mrb[0].mxu0
      %6711 = vmatprep.mubr.f32.mxu0 0.0
      %6712 = vmatmul.mubr.f32.gmra.mrb[0].mxu0 %v6546
      %v6713 = vpop.f32.mrb[0].mxu0
      %v6714 = vadd.f32 0.0, %v6713
      %v6715 = vpop.f32.mrb[0].mxu0
      %6716 = vmatprep.mubr.f32.mxu0 0.0
      %6717 = vmatmul.mubr.f32.gmra.mrb[0].mxu0 %v6549
      %v6718 = vpop.f32.mrb[0].mxu0
      %v6719 = vadd.f32 0.0, %v6718
      %v6720 = vpop.f32.mrb[0].mxu0
      %6721 = vmatprep.mubr.f32.mxu0 0.0
      %6722 = vmatmul.mubr.f32.gmra.mrb[0].mxu0 %v6552
      %v6723 = vpop.f32.mrb[0].mxu0
      %v6724 = vadd.f32 0.0, %v6723
      %v6725 = vpop.f32.mrb[0].mxu0
      %6726 = vmatprep.mubr.f32.mxu0 0.0
      %6727 = vmatmul.mubr.f32.gmra.mrb[0].mxu0 %v6555
      %v6728 = vpop.f32.mrb[0].mxu0
      %v6729 = vadd.f32 0.0, %v6728
      %v6730 = vpop.f32.mrb[0].mxu0
      %6731 = vmatprep.mubr.f32.mxu0 0.0
      %6732 = vmatmul.mubr.f32.gmra.mrb[0].mxu0 %v6558
      %v6733 = vpop.f32.mrb[0].mxu0
      %v6734 = vadd.f32 0.0, %v6733
      %v6735 = vpop.f32.mrb[0].mxu0
      %6736 = vmatprep.mubr.f32.mxu0 0.0
      %6737 = vmatmul.mubr.f32.gmra.mrb[0].mxu0 %v6561
      %v6738 = vpop.f32.mrb[0].mxu0
      %v6739 = vadd.f32 0.0, %v6738
      %v6740 = vpop.f32.mrb[0].mxu0
      %6741 = vmatprep.mubr.f32.mxu0 0.0
      %6742 = vmatmul.mubr.f32.gmra.mrb[0].mxu0 %v6564
      %v6743 = vpop.f32.mrb[0].mxu0
      %v6744 = vadd.f32 0.0, %v6743
      %v6745 = vpop.f32.mrb[0].mxu0
      %6746 = vmatprep.mubr.f32.mxu0 0.0
      %6747 = vmatmul.mubr.f32.gmra.mrb[0].mxu0 %v6567
      %v6748 = vpop.f32.mrb[0].mxu0
      %v6749 = vadd.f32 0.0, %v6748
      %v6750 = vpop.f32.mrb[0].mxu0
      %6751 = vmatprep.mubr.f32.mxu0 0.0
      %6752 = vmatmul.mubr.f32.gmra.mrb[0].mxu0 %v6570
      %v6753 = vpop.f32.mrb[0].mxu0
      %v6754 = vadd.f32 0.0, %v6753
      %v6755 = vpop.f32.mrb[0].mxu0
      %6756 = vmatprep.mubr.f32.mxu0 0.0
      %6757 = vmatmul.mubr.f32.gmra.mrb[0].mxu0 %v6573
      %v6758 = vpop.f32.mrb[0].mxu0
      %v6759 = vadd.f32 0.0, %v6758
      %v6760 = vpop.f32.mrb[0].mxu0
      %6761 = vmatprep.mubr.f32.mxu0 0.0
      %6762 = vmatmul.mubr.f32.gmra.mrb[0].mxu0 %v6576
      %v6763 = vpop.f32.mrb[0].mxu0
      %v6764 = vadd.f32 0.0, %v6763
      %v6765 = vpop.f32.mrb[0].mxu0
      %6766 = vmatprep.mubr.f32.mxu0 0.0
      %6767 = vmatmul.mubr.f32.gmra.mrb[0].mxu0 %v6579
      %v6768 = vpop.f32.mrb[0].mxu0
      %v6769 = vadd.f32 0.0, %v6768
      %v6770 = vpop.f32.mrb[0].mxu0
      %6771 = vmatprep.mubr.f32.mxu0 0.0
      %6772 = vmatmul.mubr.f32.gmra.mrb[0].mxu0 %v6582
      %v6773 = vpop.f32.mrb[0].mxu0
      %v6774 = vadd.f32 0.0, %v6773
      %v6775 = vpop.f32.mrb[0].mxu0
      %6776 = vmatprep.mubr.f32.mxu0 0.0
      %6777 = vmatmul.mubr.f32.gmra.mrb[0].mxu0 %v6585
      %v6778 = vpop.f32.mrb[0].mxu0
      %v6779 = vadd.f32 0.0, %v6778
      %v6780 = vpop.f32.mrb[0].mxu0
      %6781 = vmatprep.mubr.f32.mxu0 0.0
      %6782 = vmatmul.mubr.f32.gmra.mrb[0].mxu0 %v6588
      %v6783 = vpop.f32.mrb[0].mxu0
      %v6784 = vadd.f32 0.0, %v6783
      %v6785 = vpop.f32.mrb[0].mxu0
      %6786 = vmatprep.mubr.f32.mxu0 0.0
      %6787 = vmatmul.mubr.f32.gmra.mrb[0].mxu0 %v6591
      %v6788 = vpop.f32.mrb[0].mxu0
      %v6789 = vadd.f32 0.0, %v6788
      %v6790 = vpop.f32.mrb[0].mxu0
      %6791 = vmatprep.mubr.f32.mxu0 0.0
      %6792 = vmatmul.mubr.f32.gmra.mrb[0].mxu0 %v6594
      %v6793 = vpop.f32.mrb[0].mxu0
      %v6794 = vadd.f32 0.0, %v6793
      %v6795 = vpop.f32.mrb[0].mxu0
      %6796 = vmatprep.mubr.f32.mxu0 0.0
      %6797 = vmatmul.mubr.f32.gmra.mrb[0].mxu0 %v6597
      %v6798 = vpop.f32.mrb[0].mxu0
      %v6799 = vadd.f32 0.0, %v6798
      %v6800 = vpop.f32.mrb[0].mxu0
      %6801 = vmatprep.mubr.f32.mxu0 0.0
      %6802 = vmatmul.mubr.f32.gmra.mrb[0].mxu0 %v6600
      %v6803 = vpop.f32.mrb[0].mxu0
      %v6804 = vadd.f32 0.0, %v6803
      %v6805 = vpop.f32.mrb[0].mxu0
      %6806 = vmatprep.mubr.f32.mxu0 0.0
      %6807 = vmatmul.mubr.f32.gmra.mrb[0].mxu0 %v6603
      %v6808 = vpop.f32.mrb[0].mxu0
      %v6809 = vadd.f32 0.0, %v6808
      %v6810 = vpop.f32.mrb[0].mxu0
      %6811 = vmatprep.mubr.f32.mxu0 0.0
      %6812 = vmatmul.mubr.f32.gmra.mrb[0].mxu0 %v6606
      %v6813 = vpop.f32.mrb[0].mxu0
      %v6814 = vadd.f32 0.0, %v6813
      %v6815 = vpop.f32.mrb[0].mxu0
      %6816 = vmatprep.mubr.f32.mxu0 0.0
      %6817 = vmatmul.mubr.f32.gmra.mrb[0].mxu0 %v6609
      %v6818 = vpop.f32.mrb[0].mxu0
      %v6819 = vadd.f32 0.0, %v6818
      %v6820 = vpop.f32.mrb[0].mxu0
      %6821 = vmatprep.mubr.f32.mxu0 0.0
      %6822 = vmatmul.mubr.f32.gmra.mrb[0].mxu0 %v6612
      %v6823 = vpop.f32.mrb[0].mxu0
      %v6824 = vadd.f32 0.0, %v6823
      %v6825 = vpop.f32.mrb[0].mxu0
      %6826 = vmatprep.mubr.f32.mxu0 0.0
      %6827 = vmatmul.mubr.f32.gmra.mrb[0].mxu0 %v6615
      %v6828 = vpop.f32.mrb[0].mxu0
      %v6829 = vadd.f32 0.0, %v6828
      %v6830 = vpop.f32.mrb[0].mxu0
      %6831 = vmatprep.mubr.f32.mxu0 0.0
      %6832 = vmatmul.mubr.f32.gmra.mrb[0].mxu0 %v6618
      %v6833 = vpop.f32.mrb[0].mxu0
      %v6834 = vadd.f32 0.0, %v6833
      %v6835 = vpop.f32.mrb[0].mxu0
      %6836 = vmatprep.mubr.f32.mxu0 0.0
      %6837 = vmatmul.mubr.f32.gmra.mrb[0].mxu0 %v6621
      %v6838 = vpop.f32.mrb[0].mxu0
      %v6839 = vadd.f32 0.0, %v6838
      %v6840 = vpop.f32.mrb[0].mxu0
      %6841 = vmatprep.mubr.f32.mxu0 0.0
      %6842 = vmatmul.mubr.f32.gmra.mrb[0].mxu0 %v6624
      %v6843 = vpop.f32.mrb[0].mxu0
      %v6844 = vadd.f32 0.0, %v6843
      %v6845 = vpop.f32.mrb[0].mxu0
      %6846 = vmatprep.mubr.f32.mxu0 0.0
      %6847 = vmatmul.mubr.f32.gmra.mrb[0].mxu0 %v6627
      %v6848 = vpop.f32.mrb[0].mxu0
      %v6849 = vadd.f32 0.0, %v6848
      %v6850 = vpop.f32.mrb[0].mxu0
      %6851 = vmatprep.mubr.f32.mxu0 0.0
      %6852 = vmatmul.mubr.f32.gmra.mrb[0].mxu0 %v6630
      %v6853 = vpop.f32.mrb[0].mxu0
      %v6854 = vadd.f32 0.0, %v6853
      %v6855 = vpop.f32.mrb[0].mxu0
      %6856 = vdwg.mxu0
      %v6857 = vadd.f32 %v6310, %v6699
      %v6858 = vadd.f32 %v6311, %v6704
      %v6859 = vadd.f32 %v6312, %v6709
      %v6860 = vadd.f32 %v6313, %v6714
      %v6861 = vadd.f32 %v6314, %v6719
      %v6862 = vadd.f32 %v6315, %v6724
      %v6863 = vadd.f32 %v6316, %v6729
      %v6864 = vadd.f32 %v6317, %v6734
      %v6865 = vadd.f32 %v6318, %v6739
      %v6866 = vadd.f32 %v6319, %v6744
      %v6867 = vadd.f32 %v6320, %v6749
      %v6868 = vadd.f32 %v6321, %v6754
      %v6869 = vadd.f32 %v6322, %v6759
      %v6870 = vadd.f32 %v6323, %v6764
      %v6871 = vadd.f32 %v6324, %v6769
      %v6872 = vadd.f32 %v6325, %v6774
      %v6873 = vadd.f32 %v6326, %v6779
      %v6874 = vadd.f32 %v6327, %v6784
      %v6875 = vadd.f32 %v6328, %v6789
      %v6876 = vadd.f32 %v6329, %v6794
      %v6877 = vadd.f32 %v6330, %v6799
      %v6878 = vadd.f32 %v6331, %v6804
      %v6879 = vadd.f32 %v6332, %v6809
      %v6880 = vadd.f32 %v6333, %v6814
      %v6881 = vadd.f32 %v6334, %v6819
      %v6882 = vadd.f32 %v6335, %v6824
      %v6883 = vadd.f32 %v6336, %v6829
      %v6884 = vadd.f32 %v6337, %v6834
      %v6885 = vadd.f32 %v6338, %v6839
      %v6886 = vadd.f32 %v6339, %v6844
      %v6887 = vadd.f32 %v6340, %v6849
      %v6888 = vadd.f32 %v6341, %v6854
      %6890 = vset.pattern.permute.xlu0 0
      %6891 = vperm.xlu0 %6890, %v2027
      %v6892 = vpop.permute.xlu0 %6891
      %6895 = vset.pattern.permute.xlu0 0
      %6896 = vperm.xlu0 %6895, %v2028
      %v6897 = vpop.permute.xlu0 %6896
      %6900 = vset.pattern.permute.xlu0 0
      %6901 = vperm.xlu0 %6900, %v2029
      %v6902 = vpop.permute.xlu0 %6901
      %6905 = vset.pattern.permute.xlu0 0
      %6906 = vperm.xlu0 %6905, %v2030
      %v6907 = vpop.permute.xlu0 %6906
      %6910 = vset.pattern.permute.xlu0 0
      %6911 = vperm.xlu0 %6910, %v2031
      %v6912 = vpop.permute.xlu0 %6911
      %6915 = vset.pattern.permute.xlu0 0
      %6916 = vperm.xlu0 %6915, %v2032
      %v6917 = vpop.permute.xlu0 %6916
      %6920 = vset.pattern.permute.xlu0 0
      %6921 = vperm.xlu0 %6920, %v2033
      %v6922 = vpop.permute.xlu0 %6921
      %6925 = vset.pattern.permute.xlu0 0
      %6926 = vperm.xlu0 %6925, %v2034
      %v6927 = vpop.permute.xlu0 %6926
      %6930 = vset.pattern.permute.xlu0 0
      %6931 = vperm.xlu0 %6930, %v2035
      %v6932 = vpop.permute.xlu0 %6931
      %6935 = vset.pattern.permute.xlu0 0
      %6936 = vperm.xlu0 %6935, %v2036
      %v6937 = vpop.permute.xlu0 %6936
      %6940 = vset.pattern.permute.xlu0 0
      %6941 = vperm.xlu0 %6940, %v2037
      %v6942 = vpop.permute.xlu0 %6941
      %6945 = vset.pattern.permute.xlu0 0
      %6946 = vperm.xlu0 %6945, %v2038
      %v6947 = vpop.permute.xlu0 %6946
      %6950 = vset.pattern.permute.xlu0 0
      %6951 = vperm.xlu0 %6950, %v2039
      %v6952 = vpop.permute.xlu0 %6951
      %6955 = vset.pattern.permute.xlu0 0
      %6956 = vperm.xlu0 %6955, %v2040
      %v6957 = vpop.permute.xlu0 %6956
      %6960 = vset.pattern.permute.xlu0 0
      %6961 = vperm.xlu0 %6960, %v2041
      %v6962 = vpop.permute.xlu0 %6961
      %6965 = vset.pattern.permute.xlu0 0
      %6966 = vperm.xlu0 %6965, %v2042
      %v6967 = vpop.permute.xlu0 %6966
      %6970 = vset.pattern.permute.xlu0 0
      %6971 = vperm.xlu0 %6970, %v2043
      %v6972 = vpop.permute.xlu0 %6971
      %6975 = vset.pattern.permute.xlu0 0
      %6976 = vperm.xlu0 %6975, %v2044
      %v6977 = vpop.permute.xlu0 %6976
      %6980 = vset.pattern.permute.xlu0 0
      %6981 = vperm.xlu0 %6980, %v2045
      %v6982 = vpop.permute.xlu0 %6981
      %6985 = vset.pattern.permute.xlu0 0
      %6986 = vperm.xlu0 %6985, %v2046
      %v6987 = vpop.permute.xlu0 %6986
      %6990 = vset.pattern.permute.xlu0 0
      %6991 = vperm.xlu0 %6990, %v2047
      %v6992 = vpop.permute.xlu0 %6991
      %6995 = vset.pattern.permute.xlu0 0
      %6996 = vperm.xlu0 %6995, %v2048
      %v6997 = vpop.permute.xlu0 %6996
      %7000 = vset.pattern.permute.xlu0 0
      %7001 = vperm.xlu0 %7000, %v2049
      %v7002 = vpop.permute.xlu0 %7001
      %7005 = vset.pattern.permute.xlu0 0
      %7006 = vperm.xlu0 %7005, %v2050
      %v7007 = vpop.permute.xlu0 %7006
      %7010 = vset.pattern.permute.xlu0 0
      %7011 = vperm.xlu0 %7010, %v2051
      %v7012 = vpop.permute.xlu0 %7011
      %7015 = vset.pattern.permute.xlu0 0
      %7016 = vperm.xlu0 %7015, %v2052
      %v7017 = vpop.permute.xlu0 %7016
      %7020 = vset.pattern.permute.xlu0 0
      %7021 = vperm.xlu0 %7020, %v2053
      %v7022 = vpop.permute.xlu0 %7021
      %7025 = vset.pattern.permute.xlu0 0
      %7026 = vperm.xlu0 %7025, %v2054
      %v7027 = vpop.permute.xlu0 %7026
      %7030 = vset.pattern.permute.xlu0 0
      %7031 = vperm.xlu0 %7030, %v2055
      %v7032 = vpop.permute.xlu0 %7031
      %7035 = vset.pattern.permute.xlu0 0
      %7036 = vperm.xlu0 %7035, %v2056
      %v7037 = vpop.permute.xlu0 %7036
      %7040 = vset.pattern.permute.xlu0 0
      %7041 = vperm.xlu0 %7040, %v2057
      %v7042 = vpop.permute.xlu0 %7041
      %7045 = vset.pattern.permute.xlu0 0
      %7046 = vperm.xlu0 %7045, %v2058
      %v7047 = vpop.permute.xlu0 %7046
      %v7049 = vmul.f32 %v3795, %v6892
      %v7050 = vmul.f32 %v3794, %v6897
      %v7051 = vmul.f32 %v3793, %v6902
      %v7052 = vmul.f32 %v3792, %v6907
      %v7053 = vmul.f32 %v3791, %v6912
      %v7054 = vmul.f32 %v3790, %v6917
      %v7055 = vmul.f32 %v3789, %v6922
      %v7056 = vmul.f32 %v3788, %v6927
      %v7057 = vmul.f32 %v3787, %v6932
      %v7058 = vmul.f32 %v3786, %v6937
      %v7059 = vmul.f32 %v3785, %v6942
      %v7060 = vmul.f32 %v3784, %v6947
      %v7061 = vmul.f32 %v3783, %v6952
      %v7062 = vmul.f32 %v3782, %v6957
      %v7063 = vmul.f32 %v3781, %v6962
      %v7064 = vmul.f32 %v3780, %v6967
      %v7065 = vmul.f32 %v3779, %v6972
      %v7066 = vmul.f32 %v3778, %v6977
      %v7067 = vmul.f32 %v3777, %v6982
      %v7068 = vmul.f32 %v3776, %v6987
      %v7069 = vmul.f32 %v3775, %v6992
      %v7070 = vmul.f32 %v3774, %v6997
      %v7071 = vmul.f32 %v3773, %v7002
      %v7072 = vmul.f32 %v3772, %v7007
      %v7073 = vmul.f32 %v3771, %v7012
      %v7074 = vmul.f32 %v3770, %v7017
      %v7075 = vmul.f32 %v3769, %v7022
      %v7076 = vmul.f32 %v3768, %v7027
      %v7077 = vmul.f32 %v3767, %v7032
      %v7078 = vmul.f32 %v3798, %v7037
      %v7079 = vmul.f32 %v3797, %v7042
      %v7080 = vmul.f32 %v3796, %v7047
      %s7081 = scalar_lea.vmem %s7, 64
      %v7082 = vld [vmem:[%s7081] sm:$0xff]
      %v7084 = vsel %vm3091, %v7049, 0
      %v7087 = vsel %vm3091, %v7050, 0
      %v7090 = vsel %vm3091, %v7051, 0
      %v7093 = vsel %vm3091, %v7052, 0
      %v7096 = vsel %vm3091, %v7053, 0
      %v7099 = vsel %vm3091, %v7054, 0
      %v7102 = vsel %vm3091, %v7055, 0
      %v7105 = vsel %vm3091, %v7056, 0
      %v7108 = vsel %vm3091, %v7057, 0
      %v7111 = vsel %vm3091, %v7058, 0
      %v7114 = vsel %vm3091, %v7059, 0
      %v7117 = vsel %vm3091, %v7060, 0
      %v7120 = vsel %vm3091, %v7061, 0
      %v7123 = vsel %vm3091, %v7062, 0
      %v7126 = vsel %vm3091, %v7063, 0
      %v7129 = vsel %vm3091, %v7064, 0
      %v7132 = vsel %vm3091, %v7065, 0
      %v7135 = vsel %vm3091, %v7066, 0
      %v7138 = vsel %vm3091, %v7067, 0
      %v7141 = vsel %vm3091, %v7068, 0
      %v7144 = vsel %vm3091, %v7069, 0
      %v7147 = vsel %vm3091, %v7070, 0
      %v7150 = vsel %vm3091, %v7071, 0
      %v7153 = vsel %vm3091, %v7072, 0
      %v7156 = vsel %vm3091, %v7073, 0
      %v7159 = vsel %vm3091, %v7074, 0
      %v7162 = vsel %vm3091, %v7075, 0
      %v7165 = vsel %vm3091, %v7076, 0
      %v7168 = vsel %vm3091, %v7077, 0
      %v7171 = vsel %vm3091, %v7078, 0
      %v7174 = vsel %vm3091, %v7079, 0
      %v7177 = vsel %vm3091, %v7080, 0
      %7179 = vmatprep.subr.mxu0 0.0
      %7180 = vmatpush1.msra.mxu0 %v7082
      %7181 = vmatprep.subr.mxu0 0.0
      %7182 = vmatpush1.msra.mxu0 0.0
      %7183 = vmatprep.subr.mxu0 0.0
      %7184 = vmatpush1.msra.mxu0 0.0
      %7185 = vmatprep.subr.mxu0 0.0
      %7186 = vmatpush1.msra.mxu0 0.0
      %7187 = vmatprep.subr.mxu0 0.0
      %7188 = vmatpush1.msra.mxu0 0.0
      %7189 = vmatprep.subr.mxu0 0.0
      %7190 = vmatpush1.msra.mxu0 0.0
      %7191 = vmatprep.subr.mxu0 0.0
      %7192 = vmatpush1.msra.mxu0 0.0
      %7193 = vmatprep.subr.mxu0 0.0
      %7194 = vmatpush1.msra.mxu0 0.0
      %7195 = vmatprep.subr.mxu0 0.0
      %7196 = vmatpush1.msra.mxu0 0.0
      %7197 = vmatprep.subr.mxu0 0.0
      %7198 = vmatpush1.msra.mxu0 0.0
      %7199 = vmatprep.subr.mxu0 0.0
      %7200 = vmatpush1.msra.mxu0 0.0
      %7201 = vmatprep.subr.mxu0 0.0
      %7202 = vmatpush1.msra.mxu0 0.0
      %7203 = vmatprep.subr.mxu0 0.0
      %7204 = vmatpush1.msra.mxu0 0.0
      %7205 = vmatprep.subr.mxu0 0.0
      %7206 = vmatpush1.msra.mxu0 0.0
      %7207 = vmatprep.subr.mxu0 0.0
      %7208 = vmatpush1.msra.mxu0 0.0
      %7209 = vmatprep.subr.mxu0 0.0
      %7210 = vmatpush1.msra.mxu0 0.0
      %7211 = vmatprep.subr.mxu0 0.0
      %7212 = vmatpush1.msra.mxu0 0.0
      %7213 = vmatprep.subr.mxu0 0.0
      %7214 = vmatpush1.msra.mxu0 0.0
      %7215 = vmatprep.subr.mxu0 0.0
      %7216 = vmatpush1.msra.mxu0 0.0
      %7217 = vmatprep.subr.mxu0 0.0
      %7218 = vmatpush1.msra.mxu0 0.0
      %7219 = vmatprep.subr.mxu0 0.0
      %7220 = vmatpush1.msra.mxu0 0.0
      %7221 = vmatprep.subr.mxu0 0.0
      %7222 = vmatpush1.msra.mxu0 0.0
      %7223 = vmatprep.subr.mxu0 0.0
      %7224 = vmatpush1.msra.mxu0 0.0
      %7225 = vmatprep.subr.mxu0 0.0
      %7226 = vmatpush1.msra.mxu0 0.0
      %7227 = vmatprep.subr.mxu0 0.0
      %7228 = vmatpush1.msra.mxu0 0.0
      %7229 = vmatprep.subr.mxu0 0.0
      %7230 = vmatpush1.msra.mxu0 0.0
      %7231 = vmatprep.subr.mxu0 0.0
      %7232 = vmatpush1.msra.mxu0 0.0
      %7233 = vmatprep.subr.mxu0 0.0
      %7234 = vmatpush1.msra.mxu0 0.0
      %7235 = vmatprep.subr.mxu0 0.0
      %7236 = vmatpush1.msra.mxu0 0.0
      %7237 = vmatprep.subr.mxu0 0.0
      %7238 = vmatpush1.msra.mxu0 0.0
      %7239 = vmatprep.subr.mxu0 0.0
      %7240 = vmatpush1.msra.mxu0 0.0
      %7241 = vmatprep.subr.mxu0 0.0
      %7242 = vmatpush1.msra.mxu0 0.0
      %7243 = vmatprep.mubr.f32.mxu0 0.0
      %7244 = vmatmul.mubr.f32.gmra.mrb[0].mxu0 %v7084
      %v7245 = vpop.f32.mrb[0].mxu0
      %v7246 = vadd.f32 0.0, %v7245
      %v7247 = vpop.f32.mrb[0].mxu0
      %7248 = vmatprep.mubr.f32.mxu0 0.0
      %7249 = vmatmul.mubr.f32.gmra.mrb[0].mxu0 %v7087
      %v7250 = vpop.f32.mrb[0].mxu0
      %v7251 = vadd.f32 0.0, %v7250
      %v7252 = vpop.f32.mrb[0].mxu0
      %7253 = vmatprep.mubr.f32.mxu0 0.0
      %7254 = vmatmul.mubr.f32.gmra.mrb[0].mxu0 %v7090
      %v7255 = vpop.f32.mrb[0].mxu0
      %v7256 = vadd.f32 0.0, %v7255
      %v7257 = vpop.f32.mrb[0].mxu0
      %7258 = vmatprep.mubr.f32.mxu0 0.0
      %7259 = vmatmul.mubr.f32.gmra.mrb[0].mxu0 %v7093
      %v7260 = vpop.f32.mrb[0].mxu0
      %v7261 = vadd.f32 0.0, %v7260
      %v7262 = vpop.f32.mrb[0].mxu0
      %7263 = vmatprep.mubr.f32.mxu0 0.0
      %7264 = vmatmul.mubr.f32.gmra.mrb[0].mxu0 %v7096
      %v7265 = vpop.f32.mrb[0].mxu0
      %v7266 = vadd.f32 0.0, %v7265
      %v7267 = vpop.f32.mrb[0].mxu0
      %7268 = vmatprep.mubr.f32.mxu0 0.0
      %7269 = vmatmul.mubr.f32.gmra.mrb[0].mxu0 %v7099
      %v7270 = vpop.f32.mrb[0].mxu0
      %v7271 = vadd.f32 0.0, %v7270
      %v7272 = vpop.f32.mrb[0].mxu0
      %7273 = vmatprep.mubr.f32.mxu0 0.0
      %7274 = vmatmul.mubr.f32.gmra.mrb[0].mxu0 %v7102
      %v7275 = vpop.f32.mrb[0].mxu0
      %v7276 = vadd.f32 0.0, %v7275
      %v7277 = vpop.f32.mrb[0].mxu0
      %7278 = vmatprep.mubr.f32.mxu0 0.0
      %7279 = vmatmul.mubr.f32.gmra.mrb[0].mxu0 %v7105
      %v7280 = vpop.f32.mrb[0].mxu0
      %v7281 = vadd.f32 0.0, %v7280
      %v7282 = vpop.f32.mrb[0].mxu0
      %7283 = vmatprep.mubr.f32.mxu0 0.0
      %7284 = vmatmul.mubr.f32.gmra.mrb[0].mxu0 %v7108
      %v7285 = vpop.f32.mrb[0].mxu0
      %v7286 = vadd.f32 0.0, %v7285
      %v7287 = vpop.f32.mrb[0].mxu0
      %7288 = vmatprep.mubr.f32.mxu0 0.0
      %7289 = vmatmul.mubr.f32.gmra.mrb[0].mxu0 %v7111
      %v7290 = vpop.f32.mrb[0].mxu0
      %v7291 = vadd.f32 0.0, %v7290
      %v7292 = vpop.f32.mrb[0].mxu0
      %7293 = vmatprep.mubr.f32.mxu0 0.0
      %7294 = vmatmul.mubr.f32.gmra.mrb[0].mxu0 %v7114
      %v7295 = vpop.f32.mrb[0].mxu0
      %v7296 = vadd.f32 0.0, %v7295
      %v7297 = vpop.f32.mrb[0].mxu0
      %7298 = vmatprep.mubr.f32.mxu0 0.0
      %7299 = vmatmul.mubr.f32.gmra.mrb[0].mxu0 %v7117
      %v7300 = vpop.f32.mrb[0].mxu0
      %v7301 = vadd.f32 0.0, %v7300
      %v7302 = vpop.f32.mrb[0].mxu0
      %7303 = vmatprep.mubr.f32.mxu0 0.0
      %7304 = vmatmul.mubr.f32.gmra.mrb[0].mxu0 %v7120
      %v7305 = vpop.f32.mrb[0].mxu0
      %v7306 = vadd.f32 0.0, %v7305
      %v7307 = vpop.f32.mrb[0].mxu0
      %7308 = vmatprep.mubr.f32.mxu0 0.0
      %7309 = vmatmul.mubr.f32.gmra.mrb[0].mxu0 %v7123
      %v7310 = vpop.f32.mrb[0].mxu0
      %v7311 = vadd.f32 0.0, %v7310
      %v7312 = vpop.f32.mrb[0].mxu0
      %7313 = vmatprep.mubr.f32.mxu0 0.0
      %7314 = vmatmul.mubr.f32.gmra.mrb[0].mxu0 %v7126
      %v7315 = vpop.f32.mrb[0].mxu0
      %v7316 = vadd.f32 0.0, %v7315
      %v7317 = vpop.f32.mrb[0].mxu0
      %7318 = vmatprep.mubr.f32.mxu0 0.0
      %7319 = vmatmul.mubr.f32.gmra.mrb[0].mxu0 %v7129
      %v7320 = vpop.f32.mrb[0].mxu0
      %v7321 = vadd.f32 0.0, %v7320
      %v7322 = vpop.f32.mrb[0].mxu0
      %7323 = vmatprep.mubr.f32.mxu0 0.0
      %7324 = vmatmul.mubr.f32.gmra.mrb[0].mxu0 %v7132
      %v7325 = vpop.f32.mrb[0].mxu0
      %v7326 = vadd.f32 0.0, %v7325
      %v7327 = vpop.f32.mrb[0].mxu0
      %7328 = vmatprep.mubr.f32.mxu0 0.0
      %7329 = vmatmul.mubr.f32.gmra.mrb[0].mxu0 %v7135
      %v7330 = vpop.f32.mrb[0].mxu0
      %v7331 = vadd.f32 0.0, %v7330
      %v7332 = vpop.f32.mrb[0].mxu0
      %7333 = vmatprep.mubr.f32.mxu0 0.0
      %7334 = vmatmul.mubr.f32.gmra.mrb[0].mxu0 %v7138
      %v7335 = vpop.f32.mrb[0].mxu0
      %v7336 = vadd.f32 0.0, %v7335
      %v7337 = vpop.f32.mrb[0].mxu0
      %7338 = vmatprep.mubr.f32.mxu0 0.0
      %7339 = vmatmul.mubr.f32.gmra.mrb[0].mxu0 %v7141
      %v7340 = vpop.f32.mrb[0].mxu0
      %v7341 = vadd.f32 0.0, %v7340
      %v7342 = vpop.f32.mrb[0].mxu0
      %7343 = vmatprep.mubr.f32.mxu0 0.0
      %7344 = vmatmul.mubr.f32.gmra.mrb[0].mxu0 %v7144
      %v7345 = vpop.f32.mrb[0].mxu0
      %v7346 = vadd.f32 0.0, %v7345
      %v7347 = vpop.f32.mrb[0].mxu0
      %7348 = vmatprep.mubr.f32.mxu0 0.0
      %7349 = vmatmul.mubr.f32.gmra.mrb[0].mxu0 %v7147
      %v7350 = vpop.f32.mrb[0].mxu0
      %v7351 = vadd.f32 0.0, %v7350
      %v7352 = vpop.f32.mrb[0].mxu0
      %7353 = vmatprep.mubr.f32.mxu0 0.0
      %7354 = vmatmul.mubr.f32.gmra.mrb[0].mxu0 %v7150
      %v7355 = vpop.f32.mrb[0].mxu0
      %v7356 = vadd.f32 0.0, %v7355
      %v7357 = vpop.f32.mrb[0].mxu0
      %7358 = vmatprep.mubr.f32.mxu0 0.0
      %7359 = vmatmul.mubr.f32.gmra.mrb[0].mxu0 %v7153
      %v7360 = vpop.f32.mrb[0].mxu0
      %v7361 = vadd.f32 0.0, %v7360
      %v7362 = vpop.f32.mrb[0].mxu0
      %7363 = vmatprep.mubr.f32.mxu0 0.0
      %7364 = vmatmul.mubr.f32.gmra.mrb[0].mxu0 %v7156
      %v7365 = vpop.f32.mrb[0].mxu0
      %v7366 = vadd.f32 0.0, %v7365
      %v7367 = vpop.f32.mrb[0].mxu0
      %7368 = vmatprep.mubr.f32.mxu0 0.0
      %7369 = vmatmul.mubr.f32.gmra.mrb[0].mxu0 %v7159
      %v7370 = vpop.f32.mrb[0].mxu0
      %v7371 = vadd.f32 0.0, %v7370
      %v7372 = vpop.f32.mrb[0].mxu0
      %7373 = vmatprep.mubr.f32.mxu0 0.0
      %7374 = vmatmul.mubr.f32.gmra.mrb[0].mxu0 %v7162
      %v7375 = vpop.f32.mrb[0].mxu0
      %v7376 = vadd.f32 0.0, %v7375
      %v7377 = vpop.f32.mrb[0].mxu0
      %7378 = vmatprep.mubr.f32.mxu0 0.0
      %7379 = vmatmul.mubr.f32.gmra.mrb[0].mxu0 %v7165
      %v7380 = vpop.f32.mrb[0].mxu0
      %v7381 = vadd.f32 0.0, %v7380
      %v7382 = vpop.f32.mrb[0].mxu0
      %7383 = vmatprep.mubr.f32.mxu0 0.0
      %7384 = vmatmul.mubr.f32.gmra.mrb[0].mxu0 %v7168
      %v7385 = vpop.f32.mrb[0].mxu0
      %v7386 = vadd.f32 0.0, %v7385
      %v7387 = vpop.f32.mrb[0].mxu0
      %7388 = vmatprep.mubr.f32.mxu0 0.0
      %7389 = vmatmul.mubr.f32.gmra.mrb[0].mxu0 %v7171
      %v7390 = vpop.f32.mrb[0].mxu0
      %v7391 = vadd.f32 0.0, %v7390
      %v7392 = vpop.f32.mrb[0].mxu0
      %7393 = vmatprep.mubr.f32.mxu0 0.0
      %7394 = vmatmul.mubr.f32.gmra.mrb[0].mxu0 %v7174
      %v7395 = vpop.f32.mrb[0].mxu0
      %v7396 = vadd.f32 0.0, %v7395
      %v7397 = vpop.f32.mrb[0].mxu0
      %7398 = vmatprep.mubr.f32.mxu0 0.0
      %7399 = vmatmul.mubr.f32.gmra.mrb[0].mxu0 %v7177
      %v7400 = vpop.f32.mrb[0].mxu0
      %v7401 = vadd.f32 0.0, %v7400
      %v7402 = vpop.f32.mrb[0].mxu0
      %7403 = vdwg.mxu0
      %v7404 = vadd.f32 %v6857, %v7246
      %v7405 = vadd.f32 %v6858, %v7251
      %v7406 = vadd.f32 %v6859, %v7256
      %v7407 = vadd.f32 %v6860, %v7261
      %v7408 = vadd.f32 %v6861, %v7266
      %v7409 = vadd.f32 %v6862, %v7271
      %v7410 = vadd.f32 %v6863, %v7276
      %v7411 = vadd.f32 %v6864, %v7281
      %v7412 = vadd.f32 %v6865, %v7286
      %v7413 = vadd.f32 %v6866, %v7291
      %v7414 = vadd.f32 %v6867, %v7296
      %v7415 = vadd.f32 %v6868, %v7301
      %v7416 = vadd.f32 %v6869, %v7306
      %v7417 = vadd.f32 %v6870, %v7311
      %v7418 = vadd.f32 %v6871, %v7316
      %v7419 = vadd.f32 %v6872, %v7321
      %v7420 = vadd.f32 %v6873, %v7326
      %v7421 = vadd.f32 %v6874, %v7331
      %v7422 = vadd.f32 %v6875, %v7336
      %v7423 = vadd.f32 %v6876, %v7341
      %v7424 = vadd.f32 %v6877, %v7346
      %v7425 = vadd.f32 %v6878, %v7351
      %v7426 = vadd.f32 %v6879, %v7356
      %v7427 = vadd.f32 %v6880, %v7361
      %v7428 = vadd.f32 %v6881, %v7366
      %v7429 = vadd.f32 %v6882, %v7371
      %v7430 = vadd.f32 %v6883, %v7376
      %v7431 = vadd.f32 %v6884, %v7381
      %v7432 = vadd.f32 %v6885, %v7386
      %v7433 = vadd.f32 %v6886, %v7391
      %v7434 = vadd.f32 %v6887, %v7396
      %v7435 = vadd.f32 %v6888, %v7401
      %7468 = vrot.lane.b32.xlu0 %v7404, 4
      %v7469 = vpop.permute.xlu0 %7468
      %7470 = vrot.lane.b32.xlu0 %v7405, 4
      %v7471 = vpop.permute.xlu0 %7470
      %7472 = vrot.lane.b32.xlu0 %v7406, 4
      %v7473 = vpop.permute.xlu0 %7472
      %7474 = vrot.lane.b32.xlu0 %v7407, 4
      %v7475 = vpop.permute.xlu0 %7474
      %7476 = vrot.lane.b32.xlu0 %v7408, 4
      %v7477 = vpop.permute.xlu0 %7476
      %7478 = vrot.lane.b32.xlu0 %v7409, 4
      %v7479 = vpop.permute.xlu0 %7478
      %7480 = vrot.lane.b32.xlu0 %v7410, 4
      %v7481 = vpop.permute.xlu0 %7480
      %7482 = vrot.lane.b32.xlu0 %v7411, 4
      %v7483 = vpop.permute.xlu0 %7482
      %7484 = vrot.lane.b32.xlu0 %v7412, 4
      %v7485 = vpop.permute.xlu0 %7484
      %7486 = vrot.lane.b32.xlu0 %v7413, 4
      %v7487 = vpop.permute.xlu0 %7486
      %7488 = vrot.lane.b32.xlu0 %v7414, 4
      %v7489 = vpop.permute.xlu0 %7488
      %7490 = vrot.lane.b32.xlu0 %v7415, 4
      %v7491 = vpop.permute.xlu0 %7490
      %7492 = vrot.lane.b32.xlu0 %v7416, 4
      %v7493 = vpop.permute.xlu0 %7492
      %7494 = vrot.lane.b32.xlu0 %v7417, 4
      %v7495 = vpop.permute.xlu0 %7494
      %7496 = vrot.lane.b32.xlu0 %v7418, 4
      %v7497 = vpop.permute.xlu0 %7496
      %7498 = vrot.lane.b32.xlu0 %v7419, 4
      %v7499 = vpop.permute.xlu0 %7498
      %7500 = vrot.lane.b32.xlu0 %v7420, 4
      %v7501 = vpop.permute.xlu0 %7500
      %7502 = vrot.lane.b32.xlu0 %v7421, 4
      %v7503 = vpop.permute.xlu0 %7502
      %7504 = vrot.lane.b32.xlu0 %v7422, 4
      %v7505 = vpop.permute.xlu0 %7504
      %7506 = vrot.lane.b32.xlu0 %v7423, 4
      %v7507 = vpop.permute.xlu0 %7506
      %7508 = vrot.lane.b32.xlu0 %v7424, 4
      %v7509 = vpop.permute.xlu0 %7508
      %7510 = vrot.lane.b32.xlu0 %v7425, 4
      %v7511 = vpop.permute.xlu0 %7510
      %7512 = vrot.lane.b32.xlu0 %v7426, 4
      %v7513 = vpop.permute.xlu0 %7512
      %7514 = vrot.lane.b32.xlu0 %v7427, 4
      %v7515 = vpop.permute.xlu0 %7514
      %7516 = vrot.lane.b32.xlu0 %v7428, 4
      %v7517 = vpop.permute.xlu0 %7516
      %7518 = vrot.lane.b32.xlu0 %v7429, 4
      %v7519 = vpop.permute.xlu0 %7518
      %7520 = vrot.lane.b32.xlu0 %v7430, 4
      %v7521 = vpop.permute.xlu0 %7520
      %7522 = vrot.lane.b32.xlu0 %v7431, 4
      %v7523 = vpop.permute.xlu0 %7522
      %7524 = vrot.lane.b32.xlu0 %v7432, 4
      %v7525 = vpop.permute.xlu0 %7524
      %7526 = vrot.lane.b32.xlu0 %v7433, 4
      %v7527 = vpop.permute.xlu0 %7526
      %7528 = vrot.lane.b32.xlu0 %v7434, 4
      %v7529 = vpop.permute.xlu0 %7528
      %7530 = vrot.lane.b32.xlu0 %v7435, 4
      %v7531 = vpop.permute.xlu0 %7530
      %vm7564 = vcmask 64544
      %7565 = vst.msk [vmem:[%s521] sm:$0xff] %vm7564, %v7469
      %7566 = vst.msk [vmem:[%s521 + $0x8] sm:$0xff] %vm7564, %v7471
      %7567 = vst.msk [vmem:[%s521 + $0x10] sm:$0xff] %vm7564, %v7473
      %7568 = vst.msk [vmem:[%s521 + $0x18] sm:$0xff] %vm7564, %v7475
      %7569 = vst.msk [vmem:[%s521 + $0x20] sm:$0xff] %vm7564, %v7477
      %7570 = vst.msk [vmem:[%s521 + $0x28] sm:$0xff] %vm7564, %v7479
      %7571 = vst.msk [vmem:[%s521 + $0x30] sm:$0xff] %vm7564, %v7481
      %7572 = vst.msk [vmem:[%s521 + $0x38] sm:$0xff] %vm7564, %v7483
      %7573 = vst.msk [vmem:[%s521 + $0x40] sm:$0xff] %vm7564, %v7485
      %7574 = vst.msk [vmem:[%s521 + $0x48] sm:$0xff] %vm7564, %v7487
      %7575 = vst.msk [vmem:[%s521 + $0x50] sm:$0xff] %vm7564, %v7489
      %7576 = vst.msk [vmem:[%s521 + $0x58] sm:$0xff] %vm7564, %v7491
      %7577 = vst.msk [vmem:[%s521 + $0x60] sm:$0xff] %vm7564, %v7493
      %7578 = vst.msk [vmem:[%s521 + $0x68] sm:$0xff] %vm7564, %v7495
      %7579 = vst.msk [vmem:[%s521 + $0x70] sm:$0xff] %vm7564, %v7497
      %7580 = vst.msk [vmem:[%s521 + $0x78] sm:$0xff] %vm7564, %v7499
      %7581 = vst.msk [vmem:[%s521 + $0x80] sm:$0xff] %vm7564, %v7501
      %7582 = vst.msk [vmem:[%s521 + $0x88] sm:$0xff] %vm7564, %v7503
      %7583 = vst.msk [vmem:[%s521 + $0x90] sm:$0xff] %vm7564, %v7505
      %7584 = vst.msk [vmem:[%s521 + $0x98] sm:$0xff] %vm7564, %v7507
      %7585 = vst.msk [vmem:[%s521 + $0xa0] sm:$0xff] %vm7564, %v7509
      %7586 = vst.msk [vmem:[%s521 + $0xa8] sm:$0xff] %vm7564, %v7511
      %7587 = vst.msk [vmem:[%s521 + $0xb0] sm:$0xff] %vm7564, %v7513
      %7588 = vst.msk [vmem:[%s521 + $0xb8] sm:$0xff] %vm7564, %v7515
      %7589 = vst.msk [vmem:[%s521 + $0xc0] sm:$0xff] %vm7564, %v7517
      %7590 = vst.msk [vmem:[%s521 + $0xc8] sm:$0xff] %vm7564, %v7519
      %7591 = vst.msk [vmem:[%s521 + $0xd0] sm:$0xff] %vm7564, %v7521
      %7592 = vst.msk [vmem:[%s521 + $0xd8] sm:$0xff] %vm7564, %v7523
      %7593 = vst.msk [vmem:[%s521 + $0xe0] sm:$0xff] %vm7564, %v7525
      %7594 = vst.msk [vmem:[%s521 + $0xe8] sm:$0xff] %vm7564, %v7527
      %7595 = vst.msk [vmem:[%s521 + $0xf0] sm:$0xff] %vm7564, %v7529
      %7596 = vst.msk [vmem:[%s521 + $0xf8] sm:$0xff] %vm7564, %v7531
      %v7597 = vld [vmem:[%s521] sm:$0xff]
      %v7598 = vld [vmem:[%s521 + $0x8] sm:$0xff]
      %v7599 = vld [vmem:[%s521 + $0x10] sm:$0xff]
      %v7600 = vld [vmem:[%s521 + $0x18] sm:$0xff]
      %v7601 = vld [vmem:[%s521 + $0x20] sm:$0xff]
      %v7602 = vld [vmem:[%s521 + $0x28] sm:$0xff]
      %v7603 = vld [vmem:[%s521 + $0x30] sm:$0xff]
      %v7604 = vld [vmem:[%s521 + $0x38] sm:$0xff]
      %v7605 = vld [vmem:[%s521 + $0x40] sm:$0xff]
      %v7606 = vld [vmem:[%s521 + $0x48] sm:$0xff]
      %v7607 = vld [vmem:[%s521 + $0x50] sm:$0xff]
      %v7608 = vld [vmem:[%s521 + $0x58] sm:$0xff]
      %v7609 = vld [vmem:[%s521 + $0x60] sm:$0xff]
      %v7610 = vld [vmem:[%s521 + $0x68] sm:$0xff]
      %v7611 = vld [vmem:[%s521 + $0x70] sm:$0xff]
      %v7612 = vld [vmem:[%s521 + $0x78] sm:$0xff]
      %v7613 = vld [vmem:[%s521 + $0x80] sm:$0xff]
      %v7614 = vld [vmem:[%s521 + $0x88] sm:$0xff]
      %v7615 = vld [vmem:[%s521 + $0x90] sm:$0xff]
      %v7616 = vld [vmem:[%s521 + $0x98] sm:$0xff]
      %v7617 = vld [vmem:[%s521 + $0xa0] sm:$0xff]
      %v7618 = vld [vmem:[%s521 + $0xa8] sm:$0xff]
      %v7619 = vld [vmem:[%s521 + $0xb0] sm:$0xff]
      %v7620 = vld [vmem:[%s521 + $0xb8] sm:$0xff]
      %v7621 = vld [vmem:[%s521 + $0xc0] sm:$0xff]
      %v7622 = vld [vmem:[%s521 + $0xc8] sm:$0xff]
      %v7623 = vld [vmem:[%s521 + $0xd0] sm:$0xff]
      %v7624 = vld [vmem:[%s521 + $0xd8] sm:$0xff]
      %v7625 = vld [vmem:[%s521 + $0xe0] sm:$0xff]
      %v7626 = vld [vmem:[%s521 + $0xe8] sm:$0xff]
      %v7627 = vld [vmem:[%s521 + $0xf0] sm:$0xff]
      %v7628 = vld [vmem:[%s521 + $0xf8] sm:$0xff]
      %v7629 = vld [vmem:[%s8] sm:$0x1]
      %v7631 = vlaneseq
      %v7632 = vshrl.u32 %v7631, 7
      %v7633 = vsub.s32 0, %v7632
      %v7634 = vrot.slane %v7629, %v7633
      %v7636 = vmul.f32 %v7597, %v7634
      %v7637 = vmul.f32 %v7598, %v7634
      %v7638 = vmul.f32 %v7599, %v7634
      %v7639 = vmul.f32 %v7600, %v7634
      %v7640 = vmul.f32 %v7601, %v7634
      %v7641 = vmul.f32 %v7602, %v7634
      %v7642 = vmul.f32 %v7603, %v7634
      %v7643 = vmul.f32 %v7604, %v7634
      %v7644 = vmul.f32 %v7605, %v7634
      %v7645 = vmul.f32 %v7606, %v7634
      %v7646 = vmul.f32 %v7607, %v7634
      %v7647 = vmul.f32 %v7608, %v7634
      %v7648 = vmul.f32 %v7609, %v7634
      %v7649 = vmul.f32 %v7610, %v7634
      %v7650 = vmul.f32 %v7611, %v7634
      %v7651 = vmul.f32 %v7612, %v7634
      %v7652 = vmul.f32 %v7613, %v7634
      %v7653 = vmul.f32 %v7614, %v7634
      %v7654 = vmul.f32 %v7615, %v7634
      %v7655 = vmul.f32 %v7616, %v7634
      %v7656 = vmul.f32 %v7617, %v7634
      %v7657 = vmul.f32 %v7618, %v7634
      %v7658 = vmul.f32 %v7619, %v7634
      %v7659 = vmul.f32 %v7620, %v7634
      %v7660 = vmul.f32 %v7621, %v7634
      %v7661 = vmul.f32 %v7622, %v7634
      %v7662 = vmul.f32 %v7623, %v7634
      %v7663 = vmul.f32 %v7624, %v7634
      %v7664 = vmul.f32 %v7625, %v7634
      %v7665 = vmul.f32 %v7626, %v7634
      %v7666 = vmul.f32 %v7627, %v7634
      %v7667 = vmul.f32 %v7628, %v7634
      %v7668 = vld [vmem:[%s9] sm:$0x1]
      %v7670 = vlaneseq
      %v7671 = vshrl.u32 %v7670, 7
      %v7672 = vsub.s32 0, %v7671
      %v7673 = vrot.slane %v7668, %v7672
      %v7675 = vadd.f32 %v7636, %v7673
      %v7676 = vadd.f32 %v7637, %v7673
      %v7677 = vadd.f32 %v7638, %v7673
      %v7678 = vadd.f32 %v7639, %v7673
      %v7679 = vadd.f32 %v7640, %v7673
      %v7680 = vadd.f32 %v7641, %v7673
      %v7681 = vadd.f32 %v7642, %v7673
      %v7682 = vadd.f32 %v7643, %v7673
      %v7683 = vadd.f32 %v7644, %v7673
      %v7684 = vadd.f32 %v7645, %v7673
      %v7685 = vadd.f32 %v7646, %v7673
      %v7686 = vadd.f32 %v7647, %v7673
      %v7687 = vadd.f32 %v7648, %v7673
      %v7688 = vadd.f32 %v7649, %v7673
      %v7689 = vadd.f32 %v7650, %v7673
      %v7690 = vadd.f32 %v7651, %v7673
      %v7691 = vadd.f32 %v7652, %v7673
      %v7692 = vadd.f32 %v7653, %v7673
      %v7693 = vadd.f32 %v7654, %v7673
      %v7694 = vadd.f32 %v7655, %v7673
      %v7695 = vadd.f32 %v7656, %v7673
      %v7696 = vadd.f32 %v7657, %v7673
      %v7697 = vadd.f32 %v7658, %v7673
      %v7698 = vadd.f32 %v7659, %v7673
      %v7699 = vadd.f32 %v7660, %v7673
      %v7700 = vadd.f32 %v7661, %v7673
      %v7701 = vadd.f32 %v7662, %v7673
      %v7702 = vadd.f32 %v7663, %v7673
      %v7703 = vadd.f32 %v7664, %v7673
      %v7704 = vadd.f32 %v7665, %v7673
      %v7705 = vadd.f32 %v7666, %v7673
      %v7706 = vadd.f32 %v7667, %v7673
      %v7707 = vmax.f32 %v7675, 0.0
      %v7708 = vmax.f32 %v7676, 0.0
      %v7709 = vmax.f32 %v7677, 0.0
      %v7710 = vmax.f32 %v7678, 0.0
      %v7711 = vmax.f32 %v7679, 0.0
      %v7712 = vmax.f32 %v7680, 0.0
      %v7713 = vmax.f32 %v7681, 0.0
      %v7714 = vmax.f32 %v7682, 0.0
      %v7715 = vmax.f32 %v7683, 0.0
      %v7716 = vmax.f32 %v7684, 0.0
      %v7717 = vmax.f32 %v7685, 0.0
      %v7718 = vmax.f32 %v7686, 0.0
      %v7719 = vmax.f32 %v7687, 0.0
      %v7720 = vmax.f32 %v7688, 0.0
      %v7721 = vmax.f32 %v7689, 0.0
      %v7722 = vmax.f32 %v7690, 0.0
      %v7723 = vmax.f32 %v7691, 0.0
      %v7724 = vmax.f32 %v7692, 0.0
      %v7725 = vmax.f32 %v7693, 0.0
      %v7726 = vmax.f32 %v7694, 0.0
      %v7727 = vmax.f32 %v7695, 0.0
      %v7728 = vmax.f32 %v7696, 0.0
      %v7729 = vmax.f32 %v7697, 0.0
      %v7730 = vmax.f32 %v7698, 0.0
      %v7731 = vmax.f32 %v7699, 0.0
      %v7732 = vmax.f32 %v7700, 0.0
      %v7733 = vmax.f32 %v7701, 0.0
      %v7734 = vmax.f32 %v7702, 0.0
      %v7735 = vmax.f32 %v7703, 0.0
      %v7736 = vmax.f32 %v7704, 0.0
      %v7737 = vmax.f32 %v7705, 0.0
      %v7738 = vmax.f32 %v7706, 0.0
      %v7739 = vld [vmem:[%s10] sm:$0xff]
      %v7741 = vsel %vm3091, %v7707, 0
      %v7744 = vsel %vm3091, %v7708, 0
      %v7747 = vsel %vm3091, %v7709, 0
      %v7750 = vsel %vm3091, %v7710, 0
      %v7753 = vsel %vm3091, %v7711, 0
      %v7756 = vsel %vm3091, %v7712, 0
      %v7759 = vsel %vm3091, %v7713, 0
      %v7762 = vsel %vm3091, %v7714, 0
      %v7765 = vsel %vm3091, %v7715, 0
      %v7768 = vsel %vm3091, %v7716, 0
      %v7771 = vsel %vm3091, %v7717, 0
      %v7774 = vsel %vm3091, %v7718, 0
      %v7777 = vsel %vm3091, %v7719, 0
      %v7780 = vsel %vm3091, %v7720, 0
      %v7783 = vsel %vm3091, %v7721, 0
      %v7786 = vsel %vm3091, %v7722, 0
      %v7789 = vsel %vm3091, %v7723, 0
      %v7792 = vsel %vm3091, %v7724, 0
      %v7795 = vsel %vm3091, %v7725, 0
      %v7798 = vsel %vm3091, %v7726, 0
      %v7801 = vsel %vm3091, %v7727, 0
      %v7804 = vsel %vm3091, %v7728, 0
      %v7807 = vsel %vm3091, %v7729, 0
      %v7810 = vsel %vm3091, %v7730, 0
      %v7813 = vsel %vm3091, %v7731, 0
      %v7816 = vsel %vm3091, %v7732, 0
      %v7819 = vsel %vm3091, %v7733, 0
      %v7822 = vsel %vm3091, %v7734, 0
      %v7825 = vsel %vm3091, %v7735, 0
      %v7828 = vsel %vm3091, %v7736, 0
      %v7831 = vsel %vm3091, %v7737, 0
      %v7834 = vsel %vm3091, %v7738, 0
      %7836 = vmatprep.subr.mxu0 0.0
      %7837 = vmatpush1.msra.mxu0 %v7739
      %7838 = vmatprep.subr.mxu0 0.0
      %7839 = vmatpush1.msra.mxu0 0.0
      %7840 = vmatprep.subr.mxu0 0.0
      %7841 = vmatpush1.msra.mxu0 0.0
      %7842 = vmatprep.subr.mxu0 0.0
      %7843 = vmatpush1.msra.mxu0 0.0
      %7844 = vmatprep.subr.mxu0 0.0
      %7845 = vmatpush1.msra.mxu0 0.0
      %7846 = vmatprep.subr.mxu0 0.0
      %7847 = vmatpush1.msra.mxu0 0.0
      %7848 = vmatprep.subr.mxu0 0.0
      %7849 = vmatpush1.msra.mxu0 0.0
      %7850 = vmatprep.subr.mxu0 0.0
      %7851 = vmatpush1.msra.mxu0 0.0
      %7852 = vmatprep.subr.mxu0 0.0
      %7853 = vmatpush1.msra.mxu0 0.0
      %7854 = vmatprep.subr.mxu0 0.0
      %7855 = vmatpush1.msra.mxu0 0.0
      %7856 = vmatprep.subr.mxu0 0.0
      %7857 = vmatpush1.msra.mxu0 0.0
      %7858 = vmatprep.subr.mxu0 0.0
      %7859 = vmatpush1.msra.mxu0 0.0
      %7860 = vmatprep.subr.mxu0 0.0
      %7861 = vmatpush1.msra.mxu0 0.0
      %7862 = vmatprep.subr.mxu0 0.0
      %7863 = vmatpush1.msra.mxu0 0.0
      %7864 = vmatprep.subr.mxu0 0.0
      %7865 = vmatpush1.msra.mxu0 0.0
      %7866 = vmatprep.subr.mxu0 0.0
      %7867 = vmatpush1.msra.mxu0 0.0
      %7868 = vmatprep.subr.mxu0 0.0
      %7869 = vmatpush1.msra.mxu0 0.0
      %7870 = vmatprep.subr.mxu0 0.0
      %7871 = vmatpush1.msra.mxu0 0.0
      %7872 = vmatprep.subr.mxu0 0.0
      %7873 = vmatpush1.msra.mxu0 0.0
      %7874 = vmatprep.subr.mxu0 0.0
      %7875 = vmatpush1.msra.mxu0 0.0
      %7876 = vmatprep.subr.mxu0 0.0
      %7877 = vmatpush1.msra.mxu0 0.0
      %7878 = vmatprep.subr.mxu0 0.0
      %7879 = vmatpush1.msra.mxu0 0.0
      %7880 = vmatprep.subr.mxu0 0.0
      %7881 = vmatpush1.msra.mxu0 0.0
      %7882 = vmatprep.subr.mxu0 0.0
      %7883 = vmatpush1.msra.mxu0 0.0
      %7884 = vmatprep.subr.mxu0 0.0
      %7885 = vmatpush1.msra.mxu0 0.0
      %7886 = vmatprep.subr.mxu0 0.0
      %7887 = vmatpush1.msra.mxu0 0.0
      %7888 = vmatprep.subr.mxu0 0.0
      %7889 = vmatpush1.msra.mxu0 0.0
      %7890 = vmatprep.subr.mxu0 0.0
      %7891 = vmatpush1.msra.mxu0 0.0
      %7892 = vmatprep.subr.mxu0 0.0
      %7893 = vmatpush1.msra.mxu0 0.0
      %7894 = vmatprep.subr.mxu0 0.0
      %7895 = vmatpush1.msra.mxu0 0.0
      %7896 = vmatprep.subr.mxu0 0.0
      %7897 = vmatpush1.msra.mxu0 0.0
      %7898 = vmatprep.subr.mxu0 0.0
      %7899 = vmatpush1.msra.mxu0 0.0
      %7900 = vmatprep.mubr.f32.mxu0 0.0
      %7901 = vmatmul.mubr.f32.gmra.mrb[0].mxu0 %v7741
      %v7902 = vpop.f32.mrb[0].mxu0
      %v7903 = vadd.f32 0.0, %v7902
      %v7904 = vpop.f32.mrb[0].mxu0
      %7905 = vmatprep.mubr.f32.mxu0 0.0
      %7906 = vmatmul.mubr.f32.gmra.mrb[0].mxu0 %v7744
      %v7907 = vpop.f32.mrb[0].mxu0
      %v7908 = vadd.f32 0.0, %v7907
      %v7909 = vpop.f32.mrb[0].mxu0
      %7910 = vmatprep.mubr.f32.mxu0 0.0
      %7911 = vmatmul.mubr.f32.gmra.mrb[0].mxu0 %v7747
      %v7912 = vpop.f32.mrb[0].mxu0
      %v7913 = vadd.f32 0.0, %v7912
      %v7914 = vpop.f32.mrb[0].mxu0
      %7915 = vmatprep.mubr.f32.mxu0 0.0
      %7916 = vmatmul.mubr.f32.gmra.mrb[0].mxu0 %v7750
      %v7917 = vpop.f32.mrb[0].mxu0
      %v7918 = vadd.f32 0.0, %v7917
      %v7919 = vpop.f32.mrb[0].mxu0
      %7920 = vmatprep.mubr.f32.mxu0 0.0
      %7921 = vmatmul.mubr.f32.gmra.mrb[0].mxu0 %v7753
      %v7922 = vpop.f32.mrb[0].mxu0
      %v7923 = vadd.f32 0.0, %v7922
      %v7924 = vpop.f32.mrb[0].mxu0
      %7925 = vmatprep.mubr.f32.mxu0 0.0
      %7926 = vmatmul.mubr.f32.gmra.mrb[0].mxu0 %v7756
      %v7927 = vpop.f32.mrb[0].mxu0
      %v7928 = vadd.f32 0.0, %v7927
      %v7929 = vpop.f32.mrb[0].mxu0
      %7930 = vmatprep.mubr.f32.mxu0 0.0
      %7931 = vmatmul.mubr.f32.gmra.mrb[0].mxu0 %v7759
      %v7932 = vpop.f32.mrb[0].mxu0
      %v7933 = vadd.f32 0.0, %v7932
      %v7934 = vpop.f32.mrb[0].mxu0
      %7935 = vmatprep.mubr.f32.mxu0 0.0
      %7936 = vmatmul.mubr.f32.gmra.mrb[0].mxu0 %v7762
      %v7937 = vpop.f32.mrb[0].mxu0
      %v7938 = vadd.f32 0.0, %v7937
      %v7939 = vpop.f32.mrb[0].mxu0
      %7940 = vmatprep.mubr.f32.mxu0 0.0
      %7941 = vmatmul.mubr.f32.gmra.mrb[0].mxu0 %v7765
      %v7942 = vpop.f32.mrb[0].mxu0
      %v7943 = vadd.f32 0.0, %v7942
      %v7944 = vpop.f32.mrb[0].mxu0
      %7945 = vmatprep.mubr.f32.mxu0 0.0
      %7946 = vmatmul.mubr.f32.gmra.mrb[0].mxu0 %v7768
      %v7947 = vpop.f32.mrb[0].mxu0
      %v7948 = vadd.f32 0.0, %v7947
      %v7949 = vpop.f32.mrb[0].mxu0
      %7950 = vmatprep.mubr.f32.mxu0 0.0
      %7951 = vmatmul.mubr.f32.gmra.mrb[0].mxu0 %v7771
      %v7952 = vpop.f32.mrb[0].mxu0
      %v7953 = vadd.f32 0.0, %v7952
      %v7954 = vpop.f32.mrb[0].mxu0
      %7955 = vmatprep.mubr.f32.mxu0 0.0
      %7956 = vmatmul.mubr.f32.gmra.mrb[0].mxu0 %v7774
      %v7957 = vpop.f32.mrb[0].mxu0
      %v7958 = vadd.f32 0.0, %v7957
      %v7959 = vpop.f32.mrb[0].mxu0
      %7960 = vmatprep.mubr.f32.mxu0 0.0
      %7961 = vmatmul.mubr.f32.gmra.mrb[0].mxu0 %v7777
      %v7962 = vpop.f32.mrb[0].mxu0
      %v7963 = vadd.f32 0.0, %v7962
      %v7964 = vpop.f32.mrb[0].mxu0
      %7965 = vmatprep.mubr.f32.mxu0 0.0
      %7966 = vmatmul.mubr.f32.gmra.mrb[0].mxu0 %v7780
      %v7967 = vpop.f32.mrb[0].mxu0
      %v7968 = vadd.f32 0.0, %v7967
      %v7969 = vpop.f32.mrb[0].mxu0
      %7970 = vmatprep.mubr.f32.mxu0 0.0
      %7971 = vmatmul.mubr.f32.gmra.mrb[0].mxu0 %v7783
      %v7972 = vpop.f32.mrb[0].mxu0
      %v7973 = vadd.f32 0.0, %v7972
      %v7974 = vpop.f32.mrb[0].mxu0
      %7975 = vmatprep.mubr.f32.mxu0 0.0
      %7976 = vmatmul.mubr.f32.gmra.mrb[0].mxu0 %v7786
      %v7977 = vpop.f32.mrb[0].mxu0
      %v7978 = vadd.f32 0.0, %v7977
      %v7979 = vpop.f32.mrb[0].mxu0
      %7980 = vmatprep.mubr.f32.mxu0 0.0
      %7981 = vmatmul.mubr.f32.gmra.mrb[0].mxu0 %v7789
      %v7982 = vpop.f32.mrb[0].mxu0
      %v7983 = vadd.f32 0.0, %v7982
      %v7984 = vpop.f32.mrb[0].mxu0
      %7985 = vmatprep.mubr.f32.mxu0 0.0
      %7986 = vmatmul.mubr.f32.gmra.mrb[0].mxu0 %v7792
      %v7987 = vpop.f32.mrb[0].mxu0
      %v7988 = vadd.f32 0.0, %v7987
      %v7989 = vpop.f32.mrb[0].mxu0
      %7990 = vmatprep.mubr.f32.mxu0 0.0
      %7991 = vmatmul.mubr.f32.gmra.mrb[0].mxu0 %v7795
      %v7992 = vpop.f32.mrb[0].mxu0
      %v7993 = vadd.f32 0.0, %v7992
      %v7994 = vpop.f32.mrb[0].mxu0
      %7995 = vmatprep.mubr.f32.mxu0 0.0
      %7996 = vmatmul.mubr.f32.gmra.mrb[0].mxu0 %v7798
      %v7997 = vpop.f32.mrb[0].mxu0
      %v7998 = vadd.f32 0.0, %v7997
      %v7999 = vpop.f32.mrb[0].mxu0
      %8000 = vmatprep.mubr.f32.mxu0 0.0
      %8001 = vmatmul.mubr.f32.gmra.mrb[0].mxu0 %v7801
      %v8002 = vpop.f32.mrb[0].mxu0
      %v8003 = vadd.f32 0.0, %v8002
      %v8004 = vpop.f32.mrb[0].mxu0
      %8005 = vmatprep.mubr.f32.mxu0 0.0
      %8006 = vmatmul.mubr.f32.gmra.mrb[0].mxu0 %v7804
      %v8007 = vpop.f32.mrb[0].mxu0
      %v8008 = vadd.f32 0.0, %v8007
      %v8009 = vpop.f32.mrb[0].mxu0
      %8010 = vmatprep.mubr.f32.mxu0 0.0
      %8011 = vmatmul.mubr.f32.gmra.mrb[0].mxu0 %v7807
      %v8012 = vpop.f32.mrb[0].mxu0
      %v8013 = vadd.f32 0.0, %v8012
      %v8014 = vpop.f32.mrb[0].mxu0
      %8015 = vmatprep.mubr.f32.mxu0 0.0
      %8016 = vmatmul.mubr.f32.gmra.mrb[0].mxu0 %v7810
      %v8017 = vpop.f32.mrb[0].mxu0
      %v8018 = vadd.f32 0.0, %v8017
      %v8019 = vpop.f32.mrb[0].mxu0
      %8020 = vmatprep.mubr.f32.mxu0 0.0
      %8021 = vmatmul.mubr.f32.gmra.mrb[0].mxu0 %v7813
      %v8022 = vpop.f32.mrb[0].mxu0
      %v8023 = vadd.f32 0.0, %v8022
      %v8024 = vpop.f32.mrb[0].mxu0
      %8025 = vmatprep.mubr.f32.mxu0 0.0
      %8026 = vmatmul.mubr.f32.gmra.mrb[0].mxu0 %v7816
      %v8027 = vpop.f32.mrb[0].mxu0
      %v8028 = vadd.f32 0.0, %v8027
      %v8029 = vpop.f32.mrb[0].mxu0
      %8030 = vmatprep.mubr.f32.mxu0 0.0
      %8031 = vmatmul.mubr.f32.gmra.mrb[0].mxu0 %v7819
      %v8032 = vpop.f32.mrb[0].mxu0
      %v8033 = vadd.f32 0.0, %v8032
      %v8034 = vpop.f32.mrb[0].mxu0
      %8035 = vmatprep.mubr.f32.mxu0 0.0
      %8036 = vmatmul.mubr.f32.gmra.mrb[0].mxu0 %v7822
      %v8037 = vpop.f32.mrb[0].mxu0
      %v8038 = vadd.f32 0.0, %v8037
      %v8039 = vpop.f32.mrb[0].mxu0
      %8040 = vmatprep.mubr.f32.mxu0 0.0
      %8041 = vmatmul.mubr.f32.gmra.mrb[0].mxu0 %v7825
      %v8042 = vpop.f32.mrb[0].mxu0
      %v8043 = vadd.f32 0.0, %v8042
      %v8044 = vpop.f32.mrb[0].mxu0
      %8045 = vmatprep.mubr.f32.mxu0 0.0
      %8046 = vmatmul.mubr.f32.gmra.mrb[0].mxu0 %v7828
      %v8047 = vpop.f32.mrb[0].mxu0
      %v8048 = vadd.f32 0.0, %v8047
      %v8049 = vpop.f32.mrb[0].mxu0
      %8050 = vmatprep.mubr.f32.mxu0 0.0
      %8051 = vmatmul.mubr.f32.gmra.mrb[0].mxu0 %v7831
      %v8052 = vpop.f32.mrb[0].mxu0
      %v8053 = vadd.f32 0.0, %v8052
      %v8054 = vpop.f32.mrb[0].mxu0
      %8055 = vmatprep.mubr.f32.mxu0 0.0
      %8056 = vmatmul.mubr.f32.gmra.mrb[0].mxu0 %v7834
      %v8057 = vpop.f32.mrb[0].mxu0
      %v8058 = vadd.f32 0.0, %v8057
      %v8059 = vpop.f32.mrb[0].mxu0
      %8060 = vdwg.mxu0
      %v8061 = vld [vmem:[%s11] sm:$0x1]
      %v8063 = vlaneseq
      %v8064 = vshrl.u32 %v8063, 7
      %v8065 = vsub.s32 0, %v8064
      %v8066 = vrot.slane %v8061, %v8065
      %v8068 = vmul.f32 %v7903, %v8066
      %v8069 = vmul.f32 %v7908, %v8066
      %v8070 = vmul.f32 %v7913, %v8066
      %v8071 = vmul.f32 %v7918, %v8066
      %v8072 = vmul.f32 %v7923, %v8066
      %v8073 = vmul.f32 %v7928, %v8066
      %v8074 = vmul.f32 %v7933, %v8066
      %v8075 = vmul.f32 %v7938, %v8066
      %v8076 = vmul.f32 %v7943, %v8066
      %v8077 = vmul.f32 %v7948, %v8066
      %v8078 = vmul.f32 %v7953, %v8066
      %v8079 = vmul.f32 %v7958, %v8066
      %v8080 = vmul.f32 %v7963, %v8066
      %v8081 = vmul.f32 %v7968, %v8066
      %v8082 = vmul.f32 %v7973, %v8066
      %v8083 = vmul.f32 %v7978, %v8066
      %v8084 = vmul.f32 %v7983, %v8066
      %v8085 = vmul.f32 %v7988, %v8066
      %v8086 = vmul.f32 %v7993, %v8066
      %v8087 = vmul.f32 %v7998, %v8066
      %v8088 = vmul.f32 %v8003, %v8066
      %v8089 = vmul.f32 %v8008, %v8066
      %v8090 = vmul.f32 %v8013, %v8066
      %v8091 = vmul.f32 %v8018, %v8066
      %v8092 = vmul.f32 %v8023, %v8066
      %v8093 = vmul.f32 %v8028, %v8066
      %v8094 = vmul.f32 %v8033, %v8066
      %v8095 = vmul.f32 %v8038, %v8066
      %v8096 = vmul.f32 %v8043, %v8066
      %v8097 = vmul.f32 %v8048, %v8066
      %v8098 = vmul.f32 %v8053, %v8066
      %v8099 = vmul.f32 %v8058, %v8066
      %v8100 = vld [vmem:[%s12] sm:$0x1]
      %v8102 = vlaneseq
      %v8103 = vshrl.u32 %v8102, 7
      %v8104 = vsub.s32 0, %v8103
      %v8105 = vrot.slane %v8100, %v8104
      %v8107 = vadd.f32 %v8068, %v8105
      %v8108 = vadd.f32 %v8069, %v8105
      %v8109 = vadd.f32 %v8070, %v8105
      %v8110 = vadd.f32 %v8071, %v8105
      %v8111 = vadd.f32 %v8072, %v8105
      %v8112 = vadd.f32 %v8073, %v8105
      %v8113 = vadd.f32 %v8074, %v8105
      %v8114 = vadd.f32 %v8075, %v8105
      %v8115 = vadd.f32 %v8076, %v8105
      %v8116 = vadd.f32 %v8077, %v8105
      %v8117 = vadd.f32 %v8078, %v8105
      %v8118 = vadd.f32 %v8079, %v8105
      %v8119 = vadd.f32 %v8080, %v8105
      %v8120 = vadd.f32 %v8081, %v8105
      %v8121 = vadd.f32 %v8082, %v8105
      %v8122 = vadd.f32 %v8083, %v8105
      %v8123 = vadd.f32 %v8084, %v8105
      %v8124 = vadd.f32 %v8085, %v8105
      %v8125 = vadd.f32 %v8086, %v8105
      %v8126 = vadd.f32 %v8087, %v8105
      %v8127 = vadd.f32 %v8088, %v8105
      %v8128 = vadd.f32 %v8089, %v8105
      %v8129 = vadd.f32 %v8090, %v8105
      %v8130 = vadd.f32 %v8091, %v8105
      %v8131 = vadd.f32 %v8092, %v8105
      %v8132 = vadd.f32 %v8093, %v8105
      %v8133 = vadd.f32 %v8094, %v8105
      %v8134 = vadd.f32 %v8095, %v8105
      %v8135 = vadd.f32 %v8096, %v8105
      %v8136 = vadd.f32 %v8097, %v8105
      %v8137 = vadd.f32 %v8098, %v8105
      %v8138 = vadd.f32 %v8099, %v8105
      %v8139 = vmax.f32 %v8107, 0.0
      %v8140 = vmax.f32 %v8108, 0.0
      %v8141 = vmax.f32 %v8109, 0.0
      %v8142 = vmax.f32 %v8110, 0.0
      %v8143 = vmax.f32 %v8111, 0.0
      %v8144 = vmax.f32 %v8112, 0.0
      %v8145 = vmax.f32 %v8113, 0.0
      %v8146 = vmax.f32 %v8114, 0.0
      %v8147 = vmax.f32 %v8115, 0.0
      %v8148 = vmax.f32 %v8116, 0.0
      %v8149 = vmax.f32 %v8117, 0.0
      %v8150 = vmax.f32 %v8118, 0.0
      %v8151 = vmax.f32 %v8119, 0.0
      %v8152 = vmax.f32 %v8120, 0.0
      %v8153 = vmax.f32 %v8121, 0.0
      %v8154 = vmax.f32 %v8122, 0.0
      %v8155 = vmax.f32 %v8123, 0.0
      %v8156 = vmax.f32 %v8124, 0.0
      %v8157 = vmax.f32 %v8125, 0.0
      %v8158 = vmax.f32 %v8126, 0.0
      %v8159 = vmax.f32 %v8127, 0.0
      %v8160 = vmax.f32 %v8128, 0.0
      %v8161 = vmax.f32 %v8129, 0.0
      %v8162 = vmax.f32 %v8130, 0.0
      %v8163 = vmax.f32 %v8131, 0.0
      %v8164 = vmax.f32 %v8132, 0.0
      %v8165 = vmax.f32 %v8133, 0.0
      %v8166 = vmax.f32 %v8134, 0.0
      %v8167 = vmax.f32 %v8135, 0.0
      %v8168 = vmax.f32 %v8136, 0.0
      %v8169 = vmax.f32 %v8137, 0.0
      %v8170 = vmax.f32 %v8138, 0.0
      %v8171 = vrot.slane %v8139, 7
      %v8172 = vrot.slane %v8140, 7
      %v8173 = vrot.slane %v8141, 7
      %v8174 = vrot.slane %v8142, 7
      %v8175 = vrot.slane %v8143, 7
      %v8176 = vrot.slane %v8144, 7
      %v8177 = vrot.slane %v8145, 7
      %v8178 = vrot.slane %v8146, 7
      %v8179 = vrot.slane %v8147, 7
      %v8180 = vrot.slane %v8148, 7
      %v8181 = vrot.slane %v8149, 7
      %v8182 = vrot.slane %v8150, 7
      %v8183 = vrot.slane %v8151, 7
      %v8184 = vrot.slane %v8152, 7
      %v8185 = vrot.slane %v8153, 7
      %v8186 = vrot.slane %v8154, 7
      %v8187 = vrot.slane %v8155, 7
      %v8188 = vrot.slane %v8156, 7
      %v8189 = vrot.slane %v8157, 7
      %v8190 = vrot.slane %v8158, 7
      %v8191 = vrot.slane %v8159, 7
      %v8192 = vrot.slane %v8160, 7
      %v8193 = vrot.slane %v8161, 7
      %v8194 = vrot.slane %v8162, 7
      %v8195 = vrot.slane %v8163, 7
      %v8196 = vrot.slane %v8164, 7
      %v8197 = vrot.slane %v8165, 7
      %v8198 = vrot.slane %v8166, 7
      %v8199 = vrot.slane %v8167, 7
      %v8200 = vrot.slane %v8168, 7
      %v8201 = vrot.slane %v8169, 7
      %v8202 = vrot.slane %v8170, 7
      %v8203 = vsel %vm2671, %v8201, %v8202
      %v8204 = vsel %vm2671, %v8200, %v8201
      %v8205 = vsel %vm2671, %v8199, %v8200
      %v8206 = vsel %vm2671, %v8198, %v8199
      %v8207 = vsel %vm2671, %v8197, %v8198
      %v8208 = vsel %vm2671, %v8196, %v8197
      %v8209 = vsel %vm2671, %v8195, %v8196
      %v8210 = vsel %vm2671, %v8194, %v8195
      %v8211 = vsel %vm2671, %v8193, %v8194
      %v8212 = vsel %vm2671, %v8192, %v8193
      %v8213 = vsel %vm2671, %v8191, %v8192
      %v8214 = vsel %vm2671, %v8190, %v8191
      %v8215 = vsel %vm2671, %v8189, %v8190
      %v8216 = vsel %vm2671, %v8188, %v8189
      %v8217 = vsel %vm2671, %v8187, %v8188
      %v8218 = vsel %vm2671, %v8186, %v8187
      %v8219 = vsel %vm2671, %v8185, %v8186
      %v8220 = vsel %vm2671, %v8184, %v8185
      %v8221 = vsel %vm2671, %v8183, %v8184
      %v8222 = vsel %vm2671, %v8182, %v8183
      %v8223 = vsel %vm2671, %v8181, %v8182
      %v8224 = vsel %vm2671, %v8180, %v8181
      %v8225 = vsel %vm2671, %v8179, %v8180
      %v8226 = vsel %vm2671, %v8178, %v8179
      %v8227 = vsel %vm2671, %v8177, %v8178
      %v8228 = vsel %vm2671, %v8176, %v8177
      %v8229 = vsel %vm2671, %v8175, %v8176
      %v8230 = vsel %vm2671, %v8174, %v8175
      %v8231 = vsel %vm2671, %v8173, %v8174
      %v8232 = vsel %vm2671, %v8172, %v8173
      %v8233 = vsel %vm2671, %v8171, %v8172
      %v8234 = vsel %vm2671, %v8202, %v8171
      %v8235 = vmul.f32 %v8204, %v2707
      %v8236 = vmul.f32 %v8203, %v2712
      %v8237 = vmul.f32 %v8234, %v2717
      %v8238 = vmul.f32 %v8233, %v2722
      %v8239 = vmul.f32 %v8232, %v2727
      %v8240 = vmul.f32 %v8231, %v2732
      %v8241 = vmul.f32 %v8230, %v2737
      %v8242 = vmul.f32 %v8229, %v2742
      %v8243 = vmul.f32 %v8228, %v2747
      %v8244 = vmul.f32 %v8227, %v2752
      %v8245 = vmul.f32 %v8226, %v2757
      %v8246 = vmul.f32 %v8225, %v2762
      %v8247 = vmul.f32 %v8224, %v2767
      %v8248 = vmul.f32 %v8223, %v2772
      %v8249 = vmul.f32 %v8222, %v2777
      %v8250 = vmul.f32 %v8221, %v2782
      %v8251 = vmul.f32 %v8220, %v2787
      %v8252 = vmul.f32 %v8219, %v2792
      %v8253 = vmul.f32 %v8218, %v2797
      %v8254 = vmul.f32 %v8217, %v2802
      %v8255 = vmul.f32 %v8216, %v2807
      %v8256 = vmul.f32 %v8215, %v2812
      %v8257 = vmul.f32 %v8214, %v2817
      %v8258 = vmul.f32 %v8213, %v2822
      %v8259 = vmul.f32 %v8212, %v2827
      %v8260 = vmul.f32 %v8211, %v2832
      %v8261 = vmul.f32 %v8210, %v2837
      %v8262 = vmul.f32 %v8209, %v2842
      %v8263 = vmul.f32 %v8208, %v2847
      %v8264 = vmul.f32 %v8207, %v2852
      %v8265 = vmul.f32 %v8206, %v2857
      %v8266 = vmul.f32 %v8205, %v2862
      %v8267 = vld [vmem:[%s13] sm:$0xff]
      %v8268 = vmul.f32 %v8169, %v2900
      %v8269 = vmul.f32 %v8170, %v2905
      %v8270 = vmul.f32 %v8139, %v2910
      %v8271 = vmul.f32 %v8140, %v2915
      %v8272 = vmul.f32 %v8141, %v2920
      %v8273 = vmul.f32 %v8142, %v2925
      %v8274 = vmul.f32 %v8143, %v2930
      %v8275 = vmul.f32 %v8144, %v2935
      %v8276 = vmul.f32 %v8145, %v2940
      %v8277 = vmul.f32 %v8146, %v2945
      %v8278 = vmul.f32 %v8147, %v2950
      %v8279 = vmul.f32 %v8148, %v2955
      %v8280 = vmul.f32 %v8149, %v2960
      %v8281 = vmul.f32 %v8150, %v2965
      %v8282 = vmul.f32 %v8151, %v2970
      %v8283 = vmul.f32 %v8152, %v2975
      %v8284 = vmul.f32 %v8153, %v2980
      %v8285 = vmul.f32 %v8154, %v2985
      %v8286 = vmul.f32 %v8155, %v2990
      %v8287 = vmul.f32 %v8156, %v2995
      %v8288 = vmul.f32 %v8157, %v3000
      %v8289 = vmul.f32 %v8158, %v3005
      %v8290 = vmul.f32 %v8159, %v3010
      %v8291 = vmul.f32 %v8160, %v3015
      %v8292 = vmul.f32 %v8161, %v3020
      %v8293 = vmul.f32 %v8162, %v3025
      %v8294 = vmul.f32 %v8163, %v3030
      %v8295 = vmul.f32 %v8164, %v3035
      %v8296 = vmul.f32 %v8165, %v3040
      %v8297 = vmul.f32 %v8166, %v3045
      %v8298 = vmul.f32 %v8167, %v3050
      %v8299 = vmul.f32 %v8168, %v3055
      %s8300 = scalar_lea.vmem %s13, 8
      %v8301 = vld [vmem:[%s8300] sm:$0xff]
      %v8303 = vsel %vm3091, %v8268, 0
      %v8306 = vsel %vm3091, %v8269, 0
      %v8309 = vsel %vm3091, %v8270, 0
      %v8312 = vsel %vm3091, %v8271, 0
      %v8315 = vsel %vm3091, %v8272, 0
      %v8318 = vsel %vm3091, %v8273, 0
      %v8321 = vsel %vm3091, %v8274, 0
      %v8324 = vsel %vm3091, %v8275, 0
      %v8327 = vsel %vm3091, %v8276, 0
      %v8330 = vsel %vm3091, %v8277, 0
      %v8333 = vsel %vm3091, %v8278, 0
      %v8336 = vsel %vm3091, %v8279, 0
      %v8339 = vsel %vm3091, %v8280, 0
      %v8342 = vsel %vm3091, %v8281, 0
      %v8345 = vsel %vm3091, %v8282, 0
      %v8348 = vsel %vm3091, %v8283, 0
      %v8351 = vsel %vm3091, %v8284, 0
      %v8354 = vsel %vm3091, %v8285, 0
      %v8357 = vsel %vm3091, %v8286, 0
      %v8360 = vsel %vm3091, %v8287, 0
      %v8363 = vsel %vm3091, %v8288, 0
      %v8366 = vsel %vm3091, %v8289, 0
      %v8369 = vsel %vm3091, %v8290, 0
      %v8372 = vsel %vm3091, %v8291, 0
      %v8375 = vsel %vm3091, %v8292, 0
      %v8378 = vsel %vm3091, %v8293, 0
      %v8381 = vsel %vm3091, %v8294, 0
      %v8384 = vsel %vm3091, %v8295, 0
      %v8387 = vsel %vm3091, %v8296, 0
      %v8390 = vsel %vm3091, %v8297, 0
      %v8393 = vsel %vm3091, %v8298, 0
      %v8396 = vsel %vm3091, %v8299, 0
      %8398 = vmatprep.subr.mxu0 0.0
      %8399 = vmatpush1.msra.mxu0 %v8301
      %8400 = vmatprep.subr.mxu0 0.0
      %8401 = vmatpush1.msra.mxu0 0.0
      %8402 = vmatprep.subr.mxu0 0.0
      %8403 = vmatpush1.msra.mxu0 0.0
      %8404 = vmatprep.subr.mxu0 0.0
      %8405 = vmatpush1.msra.mxu0 0.0
      %8406 = vmatprep.subr.mxu0 0.0
      %8407 = vmatpush1.msra.mxu0 0.0
      %8408 = vmatprep.subr.mxu0 0.0
      %8409 = vmatpush1.msra.mxu0 0.0
      %8410 = vmatprep.subr.mxu0 0.0
      %8411 = vmatpush1.msra.mxu0 0.0
      %8412 = vmatprep.subr.mxu0 0.0
      %8413 = vmatpush1.msra.mxu0 0.0
      %8414 = vmatprep.subr.mxu0 0.0
      %8415 = vmatpush1.msra.mxu0 0.0
      %8416 = vmatprep.subr.mxu0 0.0
      %8417 = vmatpush1.msra.mxu0 0.0
      %8418 = vmatprep.subr.mxu0 0.0
      %8419 = vmatpush1.msra.mxu0 0.0
      %8420 = vmatprep.subr.mxu0 0.0
      %8421 = vmatpush1.msra.mxu0 0.0
      %8422 = vmatprep.subr.mxu0 0.0
      %8423 = vmatpush1.msra.mxu0 0.0
      %8424 = vmatprep.subr.mxu0 0.0
      %8425 = vmatpush1.msra.mxu0 0.0
      %8426 = vmatprep.subr.mxu0 0.0
      %8427 = vmatpush1.msra.mxu0 0.0
      %8428 = vmatprep.subr.mxu0 0.0
      %8429 = vmatpush1.msra.mxu0 0.0
      %8430 = vmatprep.subr.mxu0 0.0
      %8431 = vmatpush1.msra.mxu0 0.0
      %8432 = vmatprep.subr.mxu0 0.0
      %8433 = vmatpush1.msra.mxu0 0.0
      %8434 = vmatprep.subr.mxu0 0.0
      %8435 = vmatpush1.msra.mxu0 0.0
      %8436 = vmatprep.subr.mxu0 0.0
      %8437 = vmatpush1.msra.mxu0 0.0
      %8438 = vmatprep.subr.mxu0 0.0
      %8439 = vmatpush1.msra.mxu0 0.0
      %8440 = vmatprep.subr.mxu0 0.0
      %8441 = vmatpush1.msra.mxu0 0.0
      %8442 = vmatprep.subr.mxu0 0.0
      %8443 = vmatpush1.msra.mxu0 0.0
      %8444 = vmatprep.subr.mxu0 0.0
      %8445 = vmatpush1.msra.mxu0 0.0
      %8446 = vmatprep.subr.mxu0 0.0
      %8447 = vmatpush1.msra.mxu0 0.0
      %8448 = vmatprep.subr.mxu0 0.0
      %8449 = vmatpush1.msra.mxu0 0.0
      %8450 = vmatprep.subr.mxu0 0.0
      %8451 = vmatpush1.msra.mxu0 0.0
      %8452 = vmatprep.subr.mxu0 0.0
      %8453 = vmatpush1.msra.mxu0 0.0
      %8454 = vmatprep.subr.mxu0 0.0
      %8455 = vmatpush1.msra.mxu0 0.0
      %8456 = vmatprep.subr.mxu0 0.0
      %8457 = vmatpush1.msra.mxu0 0.0
      %8458 = vmatprep.subr.mxu0 0.0
      %8459 = vmatpush1.msra.mxu0 0.0
      %8460 = vmatprep.subr.mxu0 0.0
      %8461 = vmatpush1.msra.mxu0 0.0
      %8462 = vmatprep.mubr.f32.mxu0 0.0
      %8463 = vmatmul.mubr.f32.gmra.mrb[0].mxu0 %v8303
      %v8464 = vpop.f32.mrb[0].mxu0
      %v8465 = vadd.f32 0.0, %v8464
      %v8466 = vpop.f32.mrb[0].mxu0
      %8467 = vmatprep.mubr.f32.mxu0 0.0
      %8468 = vmatmul.mubr.f32.gmra.mrb[0].mxu0 %v8306
      %v8469 = vpop.f32.mrb[0].mxu0
      %v8470 = vadd.f32 0.0, %v8469
      %v8471 = vpop.f32.mrb[0].mxu0
      %8472 = vmatprep.mubr.f32.mxu0 0.0
      %8473 = vmatmul.mubr.f32.gmra.mrb[0].mxu0 %v8309
      %v8474 = vpop.f32.mrb[0].mxu0
      %v8475 = vadd.f32 0.0, %v8474
      %v8476 = vpop.f32.mrb[0].mxu0
      %8477 = vmatprep.mubr.f32.mxu0 0.0
      %8478 = vmatmul.mubr.f32.gmra.mrb[0].mxu0 %v8312
      %v8479 = vpop.f32.mrb[0].mxu0
      %v8480 = vadd.f32 0.0, %v8479
      %v8481 = vpop.f32.mrb[0].mxu0
      %8482 = vmatprep.mubr.f32.mxu0 0.0
      %8483 = vmatmul.mubr.f32.gmra.mrb[0].mxu0 %v8315
      %v8484 = vpop.f32.mrb[0].mxu0
      %v8485 = vadd.f32 0.0, %v8484
      %v8486 = vpop.f32.mrb[0].mxu0
      %8487 = vmatprep.mubr.f32.mxu0 0.0
      %8488 = vmatmul.mubr.f32.gmra.mrb[0].mxu0 %v8318
      %v8489 = vpop.f32.mrb[0].mxu0
      %v8490 = vadd.f32 0.0, %v8489
      %v8491 = vpop.f32.mrb[0].mxu0
      %8492 = vmatprep.mubr.f32.mxu0 0.0
      %8493 = vmatmul.mubr.f32.gmra.mrb[0].mxu0 %v8321
      %v8494 = vpop.f32.mrb[0].mxu0
      %v8495 = vadd.f32 0.0, %v8494
      %v8496 = vpop.f32.mrb[0].mxu0
      %8497 = vmatprep.mubr.f32.mxu0 0.0
      %8498 = vmatmul.mubr.f32.gmra.mrb[0].mxu0 %v8324
      %v8499 = vpop.f32.mrb[0].mxu0
      %v8500 = vadd.f32 0.0, %v8499
      %v8501 = vpop.f32.mrb[0].mxu0
      %8502 = vmatprep.mubr.f32.mxu0 0.0
      %8503 = vmatmul.mubr.f32.gmra.mrb[0].mxu0 %v8327
      %v8504 = vpop.f32.mrb[0].mxu0
      %v8505 = vadd.f32 0.0, %v8504
      %v8506 = vpop.f32.mrb[0].mxu0
      %8507 = vmatprep.mubr.f32.mxu0 0.0
      %8508 = vmatmul.mubr.f32.gmra.mrb[0].mxu0 %v8330
      %v8509 = vpop.f32.mrb[0].mxu0
      %v8510 = vadd.f32 0.0, %v8509
      %v8511 = vpop.f32.mrb[0].mxu0
      %8512 = vmatprep.mubr.f32.mxu0 0.0
      %8513 = vmatmul.mubr.f32.gmra.mrb[0].mxu0 %v8333
      %v8514 = vpop.f32.mrb[0].mxu0
      %v8515 = vadd.f32 0.0, %v8514
      %v8516 = vpop.f32.mrb[0].mxu0
      %8517 = vmatprep.mubr.f32.mxu0 0.0
      %8518 = vmatmul.mubr.f32.gmra.mrb[0].mxu0 %v8336
      %v8519 = vpop.f32.mrb[0].mxu0
      %v8520 = vadd.f32 0.0, %v8519
      %v8521 = vpop.f32.mrb[0].mxu0
      %8522 = vmatprep.mubr.f32.mxu0 0.0
      %8523 = vmatmul.mubr.f32.gmra.mrb[0].mxu0 %v8339
      %v8524 = vpop.f32.mrb[0].mxu0
      %v8525 = vadd.f32 0.0, %v8524
      %v8526 = vpop.f32.mrb[0].mxu0
      %8527 = vmatprep.mubr.f32.mxu0 0.0
      %8528 = vmatmul.mubr.f32.gmra.mrb[0].mxu0 %v8342
      %v8529 = vpop.f32.mrb[0].mxu0
      %v8530 = vadd.f32 0.0, %v8529
      %v8531 = vpop.f32.mrb[0].mxu0
      %8532 = vmatprep.mubr.f32.mxu0 0.0
      %8533 = vmatmul.mubr.f32.gmra.mrb[0].mxu0 %v8345
      %v8534 = vpop.f32.mrb[0].mxu0
      %v8535 = vadd.f32 0.0, %v8534
      %v8536 = vpop.f32.mrb[0].mxu0
      %8537 = vmatprep.mubr.f32.mxu0 0.0
      %8538 = vmatmul.mubr.f32.gmra.mrb[0].mxu0 %v8348
      %v8539 = vpop.f32.mrb[0].mxu0
      %v8540 = vadd.f32 0.0, %v8539
      %v8541 = vpop.f32.mrb[0].mxu0
      %8542 = vmatprep.mubr.f32.mxu0 0.0
      %8543 = vmatmul.mubr.f32.gmra.mrb[0].mxu0 %v8351
      %v8544 = vpop.f32.mrb[0].mxu0
      %v8545 = vadd.f32 0.0, %v8544
      %v8546 = vpop.f32.mrb[0].mxu0
      %8547 = vmatprep.mubr.f32.mxu0 0.0
      %8548 = vmatmul.mubr.f32.gmra.mrb[0].mxu0 %v8354
      %v8549 = vpop.f32.mrb[0].mxu0
      %v8550 = vadd.f32 0.0, %v8549
      %v8551 = vpop.f32.mrb[0].mxu0
      %8552 = vmatprep.mubr.f32.mxu0 0.0
      %8553 = vmatmul.mubr.f32.gmra.mrb[0].mxu0 %v8357
      %v8554 = vpop.f32.mrb[0].mxu0
      %v8555 = vadd.f32 0.0, %v8554
      %v8556 = vpop.f32.mrb[0].mxu0
      %8557 = vmatprep.mubr.f32.mxu0 0.0
      %8558 = vmatmul.mubr.f32.gmra.mrb[0].mxu0 %v8360
      %v8559 = vpop.f32.mrb[0].mxu0
      %v8560 = vadd.f32 0.0, %v8559
      %v8561 = vpop.f32.mrb[0].mxu0
      %8562 = vmatprep.mubr.f32.mxu0 0.0
      %8563 = vmatmul.mubr.f32.gmra.mrb[0].mxu0 %v8363
      %v8564 = vpop.f32.mrb[0].mxu0
      %v8565 = vadd.f32 0.0, %v8564
      %v8566 = vpop.f32.mrb[0].mxu0
      %8567 = vmatprep.mubr.f32.mxu0 0.0
      %8568 = vmatmul.mubr.f32.gmra.mrb[0].mxu0 %v8366
      %v8569 = vpop.f32.mrb[0].mxu0
      %v8570 = vadd.f32 0.0, %v8569
      %v8571 = vpop.f32.mrb[0].mxu0
      %8572 = vmatprep.mubr.f32.mxu0 0.0
      %8573 = vmatmul.mubr.f32.gmra.mrb[0].mxu0 %v8369
      %v8574 = vpop.f32.mrb[0].mxu0
      %v8575 = vadd.f32 0.0, %v8574
      %v8576 = vpop.f32.mrb[0].mxu0
      %8577 = vmatprep.mubr.f32.mxu0 0.0
      %8578 = vmatmul.mubr.f32.gmra.mrb[0].mxu0 %v8372
      %v8579 = vpop.f32.mrb[0].mxu0
      %v8580 = vadd.f32 0.0, %v8579
      %v8581 = vpop.f32.mrb[0].mxu0
      %8582 = vmatprep.mubr.f32.mxu0 0.0
      %8583 = vmatmul.mubr.f32.gmra.mrb[0].mxu0 %v8375
      %v8584 = vpop.f32.mrb[0].mxu0
      %v8585 = vadd.f32 0.0, %v8584
      %v8586 = vpop.f32.mrb[0].mxu0
      %8587 = vmatprep.mubr.f32.mxu0 0.0
      %8588 = vmatmul.mubr.f32.gmra.mrb[0].mxu0 %v8378
      %v8589 = vpop.f32.mrb[0].mxu0
      %v8590 = vadd.f32 0.0, %v8589
      %v8591 = vpop.f32.mrb[0].mxu0
      %8592 = vmatprep.mubr.f32.mxu0 0.0
      %8593 = vmatmul.mubr.f32.gmra.mrb[0].mxu0 %v8381
      %v8594 = vpop.f32.mrb[0].mxu0
      %v8595 = vadd.f32 0.0, %v8594
      %v8596 = vpop.f32.mrb[0].mxu0
      %8597 = vmatprep.mubr.f32.mxu0 0.0
      %8598 = vmatmul.mubr.f32.gmra.mrb[0].mxu0 %v8384
      %v8599 = vpop.f32.mrb[0].mxu0
      %v8600 = vadd.f32 0.0, %v8599
      %v8601 = vpop.f32.mrb[0].mxu0
      %8602 = vmatprep.mubr.f32.mxu0 0.0
      %8603 = vmatmul.mubr.f32.gmra.mrb[0].mxu0 %v8387
      %v8604 = vpop.f32.mrb[0].mxu0
      %v8605 = vadd.f32 0.0, %v8604
      %v8606 = vpop.f32.mrb[0].mxu0
      %8607 = vmatprep.mubr.f32.mxu0 0.0
      %8608 = vmatmul.mubr.f32.gmra.mrb[0].mxu0 %v8390
      %v8609 = vpop.f32.mrb[0].mxu0
      %v8610 = vadd.f32 0.0, %v8609
      %v8611 = vpop.f32.mrb[0].mxu0
      %8612 = vmatprep.mubr.f32.mxu0 0.0
      %8613 = vmatmul.mubr.f32.gmra.mrb[0].mxu0 %v8393
      %v8614 = vpop.f32.mrb[0].mxu0
      %v8615 = vadd.f32 0.0, %v8614
      %v8616 = vpop.f32.mrb[0].mxu0
      %8617 = vmatprep.mubr.f32.mxu0 0.0
      %8618 = vmatmul.mubr.f32.gmra.mrb[0].mxu0 %v8396
      %v8619 = vpop.f32.mrb[0].mxu0
      %v8620 = vadd.f32 0.0, %v8619
      %v8621 = vpop.f32.mrb[0].mxu0
      %8622 = vdwg.mxu0
      %v8624 = vsel %vm3091, %v8235, 0
      %v8627 = vsel %vm3091, %v8236, 0
      %v8630 = vsel %vm3091, %v8237, 0
      %v8633 = vsel %vm3091, %v8238, 0
      %v8636 = vsel %vm3091, %v8239, 0
      %v8639 = vsel %vm3091, %v8240, 0
      %v8642 = vsel %vm3091, %v8241, 0
      %v8645 = vsel %vm3091, %v8242, 0
      %v8648 = vsel %vm3091, %v8243, 0
      %v8651 = vsel %vm3091, %v8244, 0
      %v8654 = vsel %vm3091, %v8245, 0
      %v8657 = vsel %vm3091, %v8246, 0
      %v8660 = vsel %vm3091, %v8247, 0
      %v8663 = vsel %vm3091, %v8248, 0
      %v8666 = vsel %vm3091, %v8249, 0
      %v8669 = vsel %vm3091, %v8250, 0
      %v8672 = vsel %vm3091, %v8251, 0
      %v8675 = vsel %vm3091, %v8252, 0
      %v8678 = vsel %vm3091, %v8253, 0
      %v8681 = vsel %vm3091, %v8254, 0
      %v8684 = vsel %vm3091, %v8255, 0
      %v8687 = vsel %vm3091, %v8256, 0
      %v8690 = vsel %vm3091, %v8257, 0
      %v8693 = vsel %vm3091, %v8258, 0
      %v8696 = vsel %vm3091, %v8259, 0
      %v8699 = vsel %vm3091, %v8260, 0
      %v8702 = vsel %vm3091, %v8261, 0
      %v8705 = vsel %vm3091, %v8262, 0
      %v8708 = vsel %vm3091, %v8263, 0
      %v8711 = vsel %vm3091, %v8264, 0
      %v8714 = vsel %vm3091, %v8265, 0
      %v8717 = vsel %vm3091, %v8266, 0
      %8719 = vmatprep.subr.mxu0 0.0
      %8720 = vmatpush1.msra.mxu0 %v8267
      %8721 = vmatprep.subr.mxu0 0.0
      %8722 = vmatpush1.msra.mxu0 0.0
      %8723 = vmatprep.subr.mxu0 0.0
      %8724 = vmatpush1.msra.mxu0 0.0
      %8725 = vmatprep.subr.mxu0 0.0
      %8726 = vmatpush1.msra.mxu0 0.0
      %8727 = vmatprep.subr.mxu0 0.0
      %8728 = vmatpush1.msra.mxu0 0.0
      %8729 = vmatprep.subr.mxu0 0.0
      %8730 = vmatpush1.msra.mxu0 0.0
      %8731 = vmatprep.subr.mxu0 0.0
      %8732 = vmatpush1.msra.mxu0 0.0
      %8733 = vmatprep.subr.mxu0 0.0
      %8734 = vmatpush1.msra.mxu0 0.0
      %8735 = vmatprep.subr.mxu0 0.0
      %8736 = vmatpush1.msra.mxu0 0.0
      %8737 = vmatprep.subr.mxu0 0.0
      %8738 = vmatpush1.msra.mxu0 0.0
      %8739 = vmatprep.subr.mxu0 0.0
      %8740 = vmatpush1.msra.mxu0 0.0
      %8741 = vmatprep.subr.mxu0 0.0
      %8742 = vmatpush1.msra.mxu0 0.0
      %8743 = vmatprep.subr.mxu0 0.0
      %8744 = vmatpush1.msra.mxu0 0.0
      %8745 = vmatprep.subr.mxu0 0.0
      %8746 = vmatpush1.msra.mxu0 0.0
      %8747 = vmatprep.subr.mxu0 0.0
      %8748 = vmatpush1.msra.mxu0 0.0
      %8749 = vmatprep.subr.mxu0 0.0
      %8750 = vmatpush1.msra.mxu0 0.0
      %8751 = vmatprep.subr.mxu0 0.0
      %8752 = vmatpush1.msra.mxu0 0.0
      %8753 = vmatprep.subr.mxu0 0.0
      %8754 = vmatpush1.msra.mxu0 0.0
      %8755 = vmatprep.subr.mxu0 0.0
      %8756 = vmatpush1.msra.mxu0 0.0
      %8757 = vmatprep.subr.mxu0 0.0
      %8758 = vmatpush1.msra.mxu0 0.0
      %8759 = vmatprep.subr.mxu0 0.0
      %8760 = vmatpush1.msra.mxu0 0.0
      %8761 = vmatprep.subr.mxu0 0.0
      %8762 = vmatpush1.msra.mxu0 0.0
      %8763 = vmatprep.subr.mxu0 0.0
      %8764 = vmatpush1.msra.mxu0 0.0
      %8765 = vmatprep.subr.mxu0 0.0
      %8766 = vmatpush1.msra.mxu0 0.0
      %8767 = vmatprep.subr.mxu0 0.0
      %8768 = vmatpush1.msra.mxu0 0.0
      %8769 = vmatprep.subr.mxu0 0.0
      %8770 = vmatpush1.msra.mxu0 0.0
      %8771 = vmatprep.subr.mxu0 0.0
      %8772 = vmatpush1.msra.mxu0 0.0
      %8773 = vmatprep.subr.mxu0 0.0
      %8774 = vmatpush1.msra.mxu0 0.0
      %8775 = vmatprep.subr.mxu0 0.0
      %8776 = vmatpush1.msra.mxu0 0.0
      %8777 = vmatprep.subr.mxu0 0.0
      %8778 = vmatpush1.msra.mxu0 0.0
      %8779 = vmatprep.subr.mxu0 0.0
      %8780 = vmatpush1.msra.mxu0 0.0
      %8781 = vmatprep.subr.mxu0 0.0
      %8782 = vmatpush1.msra.mxu0 0.0
      %8783 = vmatprep.mubr.f32.mxu0 0.0
      %8784 = vmatmul.mubr.f32.gmra.mrb[0].mxu0 %v8624
      %v8785 = vpop.f32.mrb[0].mxu0
      %v8786 = vadd.f32 %v8465, %v8785
      %v8787 = vpop.f32.mrb[0].mxu0
      %8788 = vmatprep.mubr.f32.mxu0 0.0
      %8789 = vmatmul.mubr.f32.gmra.mrb[0].mxu0 %v8627
      %v8790 = vpop.f32.mrb[0].mxu0
      %v8791 = vadd.f32 %v8470, %v8790
      %v8792 = vpop.f32.mrb[0].mxu0
      %8793 = vmatprep.mubr.f32.mxu0 0.0
      %8794 = vmatmul.mubr.f32.gmra.mrb[0].mxu0 %v8630
      %v8795 = vpop.f32.mrb[0].mxu0
      %v8796 = vadd.f32 %v8475, %v8795
      %v8797 = vpop.f32.mrb[0].mxu0
      %8798 = vmatprep.mubr.f32.mxu0 0.0
      %8799 = vmatmul.mubr.f32.gmra.mrb[0].mxu0 %v8633
      %v8800 = vpop.f32.mrb[0].mxu0
      %v8801 = vadd.f32 %v8480, %v8800
      %v8802 = vpop.f32.mrb[0].mxu0
      %8803 = vmatprep.mubr.f32.mxu0 0.0
      %8804 = vmatmul.mubr.f32.gmra.mrb[0].mxu0 %v8636
      %v8805 = vpop.f32.mrb[0].mxu0
      %v8806 = vadd.f32 %v8485, %v8805
      %v8807 = vpop.f32.mrb[0].mxu0
      %8808 = vmatprep.mubr.f32.mxu0 0.0
      %8809 = vmatmul.mubr.f32.gmra.mrb[0].mxu0 %v8639
      %v8810 = vpop.f32.mrb[0].mxu0
      %v8811 = vadd.f32 %v8490, %v8810
      %v8812 = vpop.f32.mrb[0].mxu0
      %8813 = vmatprep.mubr.f32.mxu0 0.0
      %8814 = vmatmul.mubr.f32.gmra.mrb[0].mxu0 %v8642
      %v8815 = vpop.f32.mrb[0].mxu0
      %v8816 = vadd.f32 %v8495, %v8815
      %v8817 = vpop.f32.mrb[0].mxu0
      %8818 = vmatprep.mubr.f32.mxu0 0.0
      %8819 = vmatmul.mubr.f32.gmra.mrb[0].mxu0 %v8645
      %v8820 = vpop.f32.mrb[0].mxu0
      %v8821 = vadd.f32 %v8500, %v8820
      %v8822 = vpop.f32.mrb[0].mxu0
      %8823 = vmatprep.mubr.f32.mxu0 0.0
      %8824 = vmatmul.mubr.f32.gmra.mrb[0].mxu0 %v8648
      %v8825 = vpop.f32.mrb[0].mxu0
      %v8826 = vadd.f32 %v8505, %v8825
      %v8827 = vpop.f32.mrb[0].mxu0
      %8828 = vmatprep.mubr.f32.mxu0 0.0
      %8829 = vmatmul.mubr.f32.gmra.mrb[0].mxu0 %v8651
      %v8830 = vpop.f32.mrb[0].mxu0
      %v8831 = vadd.f32 %v8510, %v8830
      %v8832 = vpop.f32.mrb[0].mxu0
      %8833 = vmatprep.mubr.f32.mxu0 0.0
      %8834 = vmatmul.mubr.f32.gmra.mrb[0].mxu0 %v8654
      %v8835 = vpop.f32.mrb[0].mxu0
      %v8836 = vadd.f32 %v8515, %v8835
      %v8837 = vpop.f32.mrb[0].mxu0
      %8838 = vmatprep.mubr.f32.mxu0 0.0
      %8839 = vmatmul.mubr.f32.gmra.mrb[0].mxu0 %v8657
      %v8840 = vpop.f32.mrb[0].mxu0
      %v8841 = vadd.f32 %v8520, %v8840
      %v8842 = vpop.f32.mrb[0].mxu0
      %8843 = vmatprep.mubr.f32.mxu0 0.0
      %8844 = vmatmul.mubr.f32.gmra.mrb[0].mxu0 %v8660
      %v8845 = vpop.f32.mrb[0].mxu0
      %v8846 = vadd.f32 %v8525, %v8845
      %v8847 = vpop.f32.mrb[0].mxu0
      %8848 = vmatprep.mubr.f32.mxu0 0.0
      %8849 = vmatmul.mubr.f32.gmra.mrb[0].mxu0 %v8663
      %v8850 = vpop.f32.mrb[0].mxu0
      %v8851 = vadd.f32 %v8530, %v8850
      %v8852 = vpop.f32.mrb[0].mxu0
      %8853 = vmatprep.mubr.f32.mxu0 0.0
      %8854 = vmatmul.mubr.f32.gmra.mrb[0].mxu0 %v8666
      %v8855 = vpop.f32.mrb[0].mxu0
      %v8856 = vadd.f32 %v8535, %v8855
      %v8857 = vpop.f32.mrb[0].mxu0
      %8858 = vmatprep.mubr.f32.mxu0 0.0
      %8859 = vmatmul.mubr.f32.gmra.mrb[0].mxu0 %v8669
      %v8860 = vpop.f32.mrb[0].mxu0
      %v8861 = vadd.f32 %v8540, %v8860
      %v8862 = vpop.f32.mrb[0].mxu0
      %8863 = vmatprep.mubr.f32.mxu0 0.0
      %8864 = vmatmul.mubr.f32.gmra.mrb[0].mxu0 %v8672
      %v8865 = vpop.f32.mrb[0].mxu0
      %v8866 = vadd.f32 %v8545, %v8865
      %v8867 = vpop.f32.mrb[0].mxu0
      %8868 = vmatprep.mubr.f32.mxu0 0.0
      %8869 = vmatmul.mubr.f32.gmra.mrb[0].mxu0 %v8675
      %v8870 = vpop.f32.mrb[0].mxu0
      %v8871 = vadd.f32 %v8550, %v8870
      %v8872 = vpop.f32.mrb[0].mxu0
      %8873 = vmatprep.mubr.f32.mxu0 0.0
      %8874 = vmatmul.mubr.f32.gmra.mrb[0].mxu0 %v8678
      %v8875 = vpop.f32.mrb[0].mxu0
      %v8876 = vadd.f32 %v8555, %v8875
      %v8877 = vpop.f32.mrb[0].mxu0
      %8878 = vmatprep.mubr.f32.mxu0 0.0
      %8879 = vmatmul.mubr.f32.gmra.mrb[0].mxu0 %v8681
      %v8880 = vpop.f32.mrb[0].mxu0
      %v8881 = vadd.f32 %v8560, %v8880
      %v8882 = vpop.f32.mrb[0].mxu0
      %8883 = vmatprep.mubr.f32.mxu0 0.0
      %8884 = vmatmul.mubr.f32.gmra.mrb[0].mxu0 %v8684
      %v8885 = vpop.f32.mrb[0].mxu0
      %v8886 = vadd.f32 %v8565, %v8885
      %v8887 = vpop.f32.mrb[0].mxu0
      %8888 = vmatprep.mubr.f32.mxu0 0.0
      %8889 = vmatmul.mubr.f32.gmra.mrb[0].mxu0 %v8687
      %v8890 = vpop.f32.mrb[0].mxu0
      %v8891 = vadd.f32 %v8570, %v8890
      %v8892 = vpop.f32.mrb[0].mxu0
      %8893 = vmatprep.mubr.f32.mxu0 0.0
      %8894 = vmatmul.mubr.f32.gmra.mrb[0].mxu0 %v8690
      %v8895 = vpop.f32.mrb[0].mxu0
      %v8896 = vadd.f32 %v8575, %v8895
      %v8897 = vpop.f32.mrb[0].mxu0
      %8898 = vmatprep.mubr.f32.mxu0 0.0
      %8899 = vmatmul.mubr.f32.gmra.mrb[0].mxu0 %v8693
      %v8900 = vpop.f32.mrb[0].mxu0
      %v8901 = vadd.f32 %v8580, %v8900
      %v8902 = vpop.f32.mrb[0].mxu0
      %8903 = vmatprep.mubr.f32.mxu0 0.0
      %8904 = vmatmul.mubr.f32.gmra.mrb[0].mxu0 %v8696
      %v8905 = vpop.f32.mrb[0].mxu0
      %v8906 = vadd.f32 %v8585, %v8905
      %v8907 = vpop.f32.mrb[0].mxu0
      %8908 = vmatprep.mubr.f32.mxu0 0.0
      %8909 = vmatmul.mubr.f32.gmra.mrb[0].mxu0 %v8699
      %v8910 = vpop.f32.mrb[0].mxu0
      %v8911 = vadd.f32 %v8590, %v8910
      %v8912 = vpop.f32.mrb[0].mxu0
      %8913 = vmatprep.mubr.f32.mxu0 0.0
      %8914 = vmatmul.mubr.f32.gmra.mrb[0].mxu0 %v8702
      %v8915 = vpop.f32.mrb[0].mxu0
      %v8916 = vadd.f32 %v8595, %v8915
      %v8917 = vpop.f32.mrb[0].mxu0
      %8918 = vmatprep.mubr.f32.mxu0 0.0
      %8919 = vmatmul.mubr.f32.gmra.mrb[0].mxu0 %v8705
      %v8920 = vpop.f32.mrb[0].mxu0
      %v8921 = vadd.f32 %v8600, %v8920
      %v8922 = vpop.f32.mrb[0].mxu0
      %8923 = vmatprep.mubr.f32.mxu0 0.0
      %8924 = vmatmul.mubr.f32.gmra.mrb[0].mxu0 %v8708
      %v8925 = vpop.f32.mrb[0].mxu0
      %v8926 = vadd.f32 %v8605, %v8925
      %v8927 = vpop.f32.mrb[0].mxu0
      %8928 = vmatprep.mubr.f32.mxu0 0.0
      %8929 = vmatmul.mubr.f32.gmra.mrb[0].mxu0 %v8711
      %v8930 = vpop.f32.mrb[0].mxu0
      %v8931 = vadd.f32 %v8610, %v8930
      %v8932 = vpop.f32.mrb[0].mxu0
      %8933 = vmatprep.mubr.f32.mxu0 0.0
      %8934 = vmatmul.mubr.f32.gmra.mrb[0].mxu0 %v8714
      %v8935 = vpop.f32.mrb[0].mxu0
      %v8936 = vadd.f32 %v8615, %v8935
      %v8937 = vpop.f32.mrb[0].mxu0
      %8938 = vmatprep.mubr.f32.mxu0 0.0
      %8939 = vmatmul.mubr.f32.gmra.mrb[0].mxu0 %v8717
      %v8940 = vpop.f32.mrb[0].mxu0
      %v8941 = vadd.f32 %v8620, %v8940
      %v8942 = vpop.f32.mrb[0].mxu0
      %8943 = vdwg.mxu0
      %v8944 = vrot.slane %v8139, 1
      %v8945 = vrot.slane %v8140, 1
      %v8946 = vrot.slane %v8141, 1
      %v8947 = vrot.slane %v8142, 1
      %v8948 = vrot.slane %v8143, 1
      %v8949 = vrot.slane %v8144, 1
      %v8950 = vrot.slane %v8145, 1
      %v8951 = vrot.slane %v8146, 1
      %v8952 = vrot.slane %v8147, 1
      %v8953 = vrot.slane %v8148, 1
      %v8954 = vrot.slane %v8149, 1
      %v8955 = vrot.slane %v8150, 1
      %v8956 = vrot.slane %v8151, 1
      %v8957 = vrot.slane %v8152, 1
      %v8958 = vrot.slane %v8153, 1
      %v8959 = vrot.slane %v8154, 1
      %v8960 = vrot.slane %v8155, 1
      %v8961 = vrot.slane %v8156, 1
      %v8962 = vrot.slane %v8157, 1
      %v8963 = vrot.slane %v8158, 1
      %v8964 = vrot.slane %v8159, 1
      %v8965 = vrot.slane %v8160, 1
      %v8966 = vrot.slane %v8161, 1
      %v8967 = vrot.slane %v8162, 1
      %v8968 = vrot.slane %v8163, 1
      %v8969 = vrot.slane %v8164, 1
      %v8970 = vrot.slane %v8165, 1
      %v8971 = vrot.slane %v8166, 1
      %v8972 = vrot.slane %v8167, 1
      %v8973 = vrot.slane %v8168, 1
      %v8974 = vrot.slane %v8169, 1
      %v8975 = vrot.slane %v8170, 1
      %v8976 = vsel %vm3766, %v8974, %v8975
      %v8977 = vsel %vm3766, %v8973, %v8974
      %v8978 = vsel %vm3766, %v8972, %v8973
      %v8979 = vsel %vm3766, %v8971, %v8972
      %v8980 = vsel %vm3766, %v8970, %v8971
      %v8981 = vsel %vm3766, %v8969, %v8970
      %v8982 = vsel %vm3766, %v8968, %v8969
      %v8983 = vsel %vm3766, %v8967, %v8968
      %v8984 = vsel %vm3766, %v8966, %v8967
      %v8985 = vsel %vm3766, %v8965, %v8966
      %v8986 = vsel %vm3766, %v8964, %v8965
      %v8987 = vsel %vm3766, %v8963, %v8964
      %v8988 = vsel %vm3766, %v8962, %v8963
      %v8989 = vsel %vm3766, %v8961, %v8962
      %v8990 = vsel %vm3766, %v8960, %v8961
      %v8991 = vsel %vm3766, %v8959, %v8960
      %v8992 = vsel %vm3766, %v8958, %v8959
      %v8993 = vsel %vm3766, %v8957, %v8958
      %v8994 = vsel %vm3766, %v8956, %v8957
      %v8995 = vsel %vm3766, %v8955, %v8956
      %v8996 = vsel %vm3766, %v8954, %v8955
      %v8997 = vsel %vm3766, %v8953, %v8954
      %v8998 = vsel %vm3766, %v8952, %v8953
      %v8999 = vsel %vm3766, %v8951, %v8952
      %v9000 = vsel %vm3766, %v8950, %v8951
      %v9001 = vsel %vm3766, %v8949, %v8950
      %v9002 = vsel %vm3766, %v8948, %v8949
      %v9003 = vsel %vm3766, %v8947, %v8948
      %v9004 = vsel %vm3766, %v8946, %v8947
      %v9005 = vsel %vm3766, %v8945, %v8946
      %v9006 = vsel %vm3766, %v8944, %v8945
      %v9007 = vsel %vm3766, %v8975, %v8944
      %v9008 = vmul.f32 %v8976, %v3802
      %v9009 = vmul.f32 %v9007, %v3807
      %v9010 = vmul.f32 %v9006, %v3812
      %v9011 = vmul.f32 %v9005, %v3817
      %v9012 = vmul.f32 %v9004, %v3822
      %v9013 = vmul.f32 %v9003, %v3827
      %v9014 = vmul.f32 %v9002, %v3832
      %v9015 = vmul.f32 %v9001, %v3837
      %v9016 = vmul.f32 %v9000, %v3842
      %v9017 = vmul.f32 %v8999, %v3847
      %v9018 = vmul.f32 %v8998, %v3852
      %v9019 = vmul.f32 %v8997, %v3857
      %v9020 = vmul.f32 %v8996, %v3862
      %v9021 = vmul.f32 %v8995, %v3867
      %v9022 = vmul.f32 %v8994, %v3872
      %v9023 = vmul.f32 %v8993, %v3877
      %v9024 = vmul.f32 %v8992, %v3882
      %v9025 = vmul.f32 %v8991, %v3887
      %v9026 = vmul.f32 %v8990, %v3892
      %v9027 = vmul.f32 %v8989, %v3897
      %v9028 = vmul.f32 %v8988, %v3902
      %v9029 = vmul.f32 %v8987, %v3907
      %v9030 = vmul.f32 %v8986, %v3912
      %v9031 = vmul.f32 %v8985, %v3917
      %v9032 = vmul.f32 %v8984, %v3922
      %v9033 = vmul.f32 %v8983, %v3927
      %v9034 = vmul.f32 %v8982, %v3932
      %v9035 = vmul.f32 %v8981, %v3937
      %v9036 = vmul.f32 %v8980, %v3942
      %v9037 = vmul.f32 %v8979, %v3947
      %v9038 = vmul.f32 %v8978, %v3952
      %v9039 = vmul.f32 %v8977, %v3957
      %s9040 = scalar_lea.vmem %s13, 16
      %v9041 = vld [vmem:[%s9040] sm:$0xff]
      %v9043 = vsel %vm3091, %v9008, 0
      %v9046 = vsel %vm3091, %v9009, 0
      %v9049 = vsel %vm3091, %v9010, 0
      %v9052 = vsel %vm3091, %v9011, 0
      %v9055 = vsel %vm3091, %v9012, 0
      %v9058 = vsel %vm3091, %v9013, 0
      %v9061 = vsel %vm3091, %v9014, 0
      %v9064 = vsel %vm3091, %v9015, 0
      %v9067 = vsel %vm3091, %v9016, 0
      %v9070 = vsel %vm3091, %v9017, 0
      %v9073 = vsel %vm3091, %v9018, 0
      %v9076 = vsel %vm3091, %v9019, 0
      %v9079 = vsel %vm3091, %v9020, 0
      %v9082 = vsel %vm3091, %v9021, 0
      %v9085 = vsel %vm3091, %v9022, 0
      %v9088 = vsel %vm3091, %v9023, 0
      %v9091 = vsel %vm3091, %v9024, 0
      %v9094 = vsel %vm3091, %v9025, 0
      %v9097 = vsel %vm3091, %v9026, 0
      %v9100 = vsel %vm3091, %v9027, 0
      %v9103 = vsel %vm3091, %v9028, 0
      %v9106 = vsel %vm3091, %v9029, 0
      %v9109 = vsel %vm3091, %v9030, 0
      %v9112 = vsel %vm3091, %v9031, 0
      %v9115 = vsel %vm3091, %v9032, 0
      %v9118 = vsel %vm3091, %v9033, 0
      %v9121 = vsel %vm3091, %v9034, 0
      %v9124 = vsel %vm3091, %v9035, 0
      %v9127 = vsel %vm3091, %v9036, 0
      %v9130 = vsel %vm3091, %v9037, 0
      %v9133 = vsel %vm3091, %v9038, 0
      %v9136 = vsel %vm3091, %v9039, 0
      %9138 = vmatprep.subr.mxu0 0.0
      %9139 = vmatpush1.msra.mxu0 %v9041
      %9140 = vmatprep.subr.mxu0 0.0
      %9141 = vmatpush1.msra.mxu0 0.0
      %9142 = vmatprep.subr.mxu0 0.0
      %9143 = vmatpush1.msra.mxu0 0.0
      %9144 = vmatprep.subr.mxu0 0.0
      %9145 = vmatpush1.msra.mxu0 0.0
      %9146 = vmatprep.subr.mxu0 0.0
      %9147 = vmatpush1.msra.mxu0 0.0
      %9148 = vmatprep.subr.mxu0 0.0
      %9149 = vmatpush1.msra.mxu0 0.0
      %9150 = vmatprep.subr.mxu0 0.0
      %9151 = vmatpush1.msra.mxu0 0.0
      %9152 = vmatprep.subr.mxu0 0.0
      %9153 = vmatpush1.msra.mxu0 0.0
      %9154 = vmatprep.subr.mxu0 0.0
      %9155 = vmatpush1.msra.mxu0 0.0
      %9156 = vmatprep.subr.mxu0 0.0
      %9157 = vmatpush1.msra.mxu0 0.0
      %9158 = vmatprep.subr.mxu0 0.0
      %9159 = vmatpush1.msra.mxu0 0.0
      %9160 = vmatprep.subr.mxu0 0.0
      %9161 = vmatpush1.msra.mxu0 0.0
      %9162 = vmatprep.subr.mxu0 0.0
      %9163 = vmatpush1.msra.mxu0 0.0
      %9164 = vmatprep.subr.mxu0 0.0
      %9165 = vmatpush1.msra.mxu0 0.0
      %9166 = vmatprep.subr.mxu0 0.0
      %9167 = vmatpush1.msra.mxu0 0.0
      %9168 = vmatprep.subr.mxu0 0.0
      %9169 = vmatpush1.msra.mxu0 0.0
      %9170 = vmatprep.subr.mxu0 0.0
      %9171 = vmatpush1.msra.mxu0 0.0
      %9172 = vmatprep.subr.mxu0 0.0
      %9173 = vmatpush1.msra.mxu0 0.0
      %9174 = vmatprep.subr.mxu0 0.0
      %9175 = vmatpush1.msra.mxu0 0.0
      %9176 = vmatprep.subr.mxu0 0.0
      %9177 = vmatpush1.msra.mxu0 0.0
      %9178 = vmatprep.subr.mxu0 0.0
      %9179 = vmatpush1.msra.mxu0 0.0
      %9180 = vmatprep.subr.mxu0 0.0
      %9181 = vmatpush1.msra.mxu0 0.0
      %9182 = vmatprep.subr.mxu0 0.0
      %9183 = vmatpush1.msra.mxu0 0.0
      %9184 = vmatprep.subr.mxu0 0.0
      %9185 = vmatpush1.msra.mxu0 0.0
      %9186 = vmatprep.subr.mxu0 0.0
      %9187 = vmatpush1.msra.mxu0 0.0
      %9188 = vmatprep.subr.mxu0 0.0
      %9189 = vmatpush1.msra.mxu0 0.0
      %9190 = vmatprep.subr.mxu0 0.0
      %9191 = vmatpush1.msra.mxu0 0.0
      %9192 = vmatprep.subr.mxu0 0.0
      %9193 = vmatpush1.msra.mxu0 0.0
      %9194 = vmatprep.subr.mxu0 0.0
      %9195 = vmatpush1.msra.mxu0 0.0
      %9196 = vmatprep.subr.mxu0 0.0
      %9197 = vmatpush1.msra.mxu0 0.0
      %9198 = vmatprep.subr.mxu0 0.0
      %9199 = vmatpush1.msra.mxu0 0.0
      %9200 = vmatprep.subr.mxu0 0.0
      %9201 = vmatpush1.msra.mxu0 0.0
      %9202 = vmatprep.mubr.f32.mxu0 0.0
      %9203 = vmatmul.mubr.f32.gmra.mrb[0].mxu0 %v9043
      %v9204 = vpop.f32.mrb[0].mxu0
      %v9205 = vadd.f32 0.0, %v9204
      %v9206 = vpop.f32.mrb[0].mxu0
      %9207 = vmatprep.mubr.f32.mxu0 0.0
      %9208 = vmatmul.mubr.f32.gmra.mrb[0].mxu0 %v9046
      %v9209 = vpop.f32.mrb[0].mxu0
      %v9210 = vadd.f32 0.0, %v9209
      %v9211 = vpop.f32.mrb[0].mxu0
      %9212 = vmatprep.mubr.f32.mxu0 0.0
      %9213 = vmatmul.mubr.f32.gmra.mrb[0].mxu0 %v9049
      %v9214 = vpop.f32.mrb[0].mxu0
      %v9215 = vadd.f32 0.0, %v9214
      %v9216 = vpop.f32.mrb[0].mxu0
      %9217 = vmatprep.mubr.f32.mxu0 0.0
      %9218 = vmatmul.mubr.f32.gmra.mrb[0].mxu0 %v9052
      %v9219 = vpop.f32.mrb[0].mxu0
      %v9220 = vadd.f32 0.0, %v9219
      %v9221 = vpop.f32.mrb[0].mxu0
      %9222 = vmatprep.mubr.f32.mxu0 0.0
      %9223 = vmatmul.mubr.f32.gmra.mrb[0].mxu0 %v9055
      %v9224 = vpop.f32.mrb[0].mxu0
      %v9225 = vadd.f32 0.0, %v9224
      %v9226 = vpop.f32.mrb[0].mxu0
      %9227 = vmatprep.mubr.f32.mxu0 0.0
      %9228 = vmatmul.mubr.f32.gmra.mrb[0].mxu0 %v9058
      %v9229 = vpop.f32.mrb[0].mxu0
      %v9230 = vadd.f32 0.0, %v9229
      %v9231 = vpop.f32.mrb[0].mxu0
      %9232 = vmatprep.mubr.f32.mxu0 0.0
      %9233 = vmatmul.mubr.f32.gmra.mrb[0].mxu0 %v9061
      %v9234 = vpop.f32.mrb[0].mxu0
      %v9235 = vadd.f32 0.0, %v9234
      %v9236 = vpop.f32.mrb[0].mxu0
      %9237 = vmatprep.mubr.f32.mxu0 0.0
      %9238 = vmatmul.mubr.f32.gmra.mrb[0].mxu0 %v9064
      %v9239 = vpop.f32.mrb[0].mxu0
      %v9240 = vadd.f32 0.0, %v9239
      %v9241 = vpop.f32.mrb[0].mxu0
      %9242 = vmatprep.mubr.f32.mxu0 0.0
      %9243 = vmatmul.mubr.f32.gmra.mrb[0].mxu0 %v9067
      %v9244 = vpop.f32.mrb[0].mxu0
      %v9245 = vadd.f32 0.0, %v9244
      %v9246 = vpop.f32.mrb[0].mxu0
      %9247 = vmatprep.mubr.f32.mxu0 0.0
      %9248 = vmatmul.mubr.f32.gmra.mrb[0].mxu0 %v9070
      %v9249 = vpop.f32.mrb[0].mxu0
      %v9250 = vadd.f32 0.0, %v9249
      %v9251 = vpop.f32.mrb[0].mxu0
      %9252 = vmatprep.mubr.f32.mxu0 0.0
      %9253 = vmatmul.mubr.f32.gmra.mrb[0].mxu0 %v9073
      %v9254 = vpop.f32.mrb[0].mxu0
      %v9255 = vadd.f32 0.0, %v9254
      %v9256 = vpop.f32.mrb[0].mxu0
      %9257 = vmatprep.mubr.f32.mxu0 0.0
      %9258 = vmatmul.mubr.f32.gmra.mrb[0].mxu0 %v9076
      %v9259 = vpop.f32.mrb[0].mxu0
      %v9260 = vadd.f32 0.0, %v9259
      %v9261 = vpop.f32.mrb[0].mxu0
      %9262 = vmatprep.mubr.f32.mxu0 0.0
      %9263 = vmatmul.mubr.f32.gmra.mrb[0].mxu0 %v9079
      %v9264 = vpop.f32.mrb[0].mxu0
      %v9265 = vadd.f32 0.0, %v9264
      %v9266 = vpop.f32.mrb[0].mxu0
      %9267 = vmatprep.mubr.f32.mxu0 0.0
      %9268 = vmatmul.mubr.f32.gmra.mrb[0].mxu0 %v9082
      %v9269 = vpop.f32.mrb[0].mxu0
      %v9270 = vadd.f32 0.0, %v9269
      %v9271 = vpop.f32.mrb[0].mxu0
      %9272 = vmatprep.mubr.f32.mxu0 0.0
      %9273 = vmatmul.mubr.f32.gmra.mrb[0].mxu0 %v9085
      %v9274 = vpop.f32.mrb[0].mxu0
      %v9275 = vadd.f32 0.0, %v9274
      %v9276 = vpop.f32.mrb[0].mxu0
      %9277 = vmatprep.mubr.f32.mxu0 0.0
      %9278 = vmatmul.mubr.f32.gmra.mrb[0].mxu0 %v9088
      %v9279 = vpop.f32.mrb[0].mxu0
      %v9280 = vadd.f32 0.0, %v9279
      %v9281 = vpop.f32.mrb[0].mxu0
      %9282 = vmatprep.mubr.f32.mxu0 0.0
      %9283 = vmatmul.mubr.f32.gmra.mrb[0].mxu0 %v9091
      %v9284 = vpop.f32.mrb[0].mxu0
      %v9285 = vadd.f32 0.0, %v9284
      %v9286 = vpop.f32.mrb[0].mxu0
      %9287 = vmatprep.mubr.f32.mxu0 0.0
      %9288 = vmatmul.mubr.f32.gmra.mrb[0].mxu0 %v9094
      %v9289 = vpop.f32.mrb[0].mxu0
      %v9290 = vadd.f32 0.0, %v9289
      %v9291 = vpop.f32.mrb[0].mxu0
      %9292 = vmatprep.mubr.f32.mxu0 0.0
      %9293 = vmatmul.mubr.f32.gmra.mrb[0].mxu0 %v9097
      %v9294 = vpop.f32.mrb[0].mxu0
      %v9295 = vadd.f32 0.0, %v9294
      %v9296 = vpop.f32.mrb[0].mxu0
      %9297 = vmatprep.mubr.f32.mxu0 0.0
      %9298 = vmatmul.mubr.f32.gmra.mrb[0].mxu0 %v9100
      %v9299 = vpop.f32.mrb[0].mxu0
      %v9300 = vadd.f32 0.0, %v9299
      %v9301 = vpop.f32.mrb[0].mxu0
      %9302 = vmatprep.mubr.f32.mxu0 0.0
      %9303 = vmatmul.mubr.f32.gmra.mrb[0].mxu0 %v9103
      %v9304 = vpop.f32.mrb[0].mxu0
      %v9305 = vadd.f32 0.0, %v9304
      %v9306 = vpop.f32.mrb[0].mxu0
      %9307 = vmatprep.mubr.f32.mxu0 0.0
      %9308 = vmatmul.mubr.f32.gmra.mrb[0].mxu0 %v9106
      %v9309 = vpop.f32.mrb[0].mxu0
      %v9310 = vadd.f32 0.0, %v9309
      %v9311 = vpop.f32.mrb[0].mxu0
      %9312 = vmatprep.mubr.f32.mxu0 0.0
      %9313 = vmatmul.mubr.f32.gmra.mrb[0].mxu0 %v9109
      %v9314 = vpop.f32.mrb[0].mxu0
      %v9315 = vadd.f32 0.0, %v9314
      %v9316 = vpop.f32.mrb[0].mxu0
      %9317 = vmatprep.mubr.f32.mxu0 0.0
      %9318 = vmatmul.mubr.f32.gmra.mrb[0].mxu0 %v9112
      %v9319 = vpop.f32.mrb[0].mxu0
      %v9320 = vadd.f32 0.0, %v9319
      %v9321 = vpop.f32.mrb[0].mxu0
      %9322 = vmatprep.mubr.f32.mxu0 0.0
      %9323 = vmatmul.mubr.f32.gmra.mrb[0].mxu0 %v9115
      %v9324 = vpop.f32.mrb[0].mxu0
      %v9325 = vadd.f32 0.0, %v9324
      %v9326 = vpop.f32.mrb[0].mxu0
      %9327 = vmatprep.mubr.f32.mxu0 0.0
      %9328 = vmatmul.mubr.f32.gmra.mrb[0].mxu0 %v9118
      %v9329 = vpop.f32.mrb[0].mxu0
      %v9330 = vadd.f32 0.0, %v9329
      %v9331 = vpop.f32.mrb[0].mxu0
      %9332 = vmatprep.mubr.f32.mxu0 0.0
      %9333 = vmatmul.mubr.f32.gmra.mrb[0].mxu0 %v9121
      %v9334 = vpop.f32.mrb[0].mxu0
      %v9335 = vadd.f32 0.0, %v9334
      %v9336 = vpop.f32.mrb[0].mxu0
      %9337 = vmatprep.mubr.f32.mxu0 0.0
      %9338 = vmatmul.mubr.f32.gmra.mrb[0].mxu0 %v9124
      %v9339 = vpop.f32.mrb[0].mxu0
      %v9340 = vadd.f32 0.0, %v9339
      %v9341 = vpop.f32.mrb[0].mxu0
      %9342 = vmatprep.mubr.f32.mxu0 0.0
      %9343 = vmatmul.mubr.f32.gmra.mrb[0].mxu0 %v9127
      %v9344 = vpop.f32.mrb[0].mxu0
      %v9345 = vadd.f32 0.0, %v9344
      %v9346 = vpop.f32.mrb[0].mxu0
      %9347 = vmatprep.mubr.f32.mxu0 0.0
      %9348 = vmatmul.mubr.f32.gmra.mrb[0].mxu0 %v9130
      %v9349 = vpop.f32.mrb[0].mxu0
      %v9350 = vadd.f32 0.0, %v9349
      %v9351 = vpop.f32.mrb[0].mxu0
      %9352 = vmatprep.mubr.f32.mxu0 0.0
      %9353 = vmatmul.mubr.f32.gmra.mrb[0].mxu0 %v9133
      %v9354 = vpop.f32.mrb[0].mxu0
      %v9355 = vadd.f32 0.0, %v9354
      %v9356 = vpop.f32.mrb[0].mxu0
      %9357 = vmatprep.mubr.f32.mxu0 0.0
      %9358 = vmatmul.mubr.f32.gmra.mrb[0].mxu0 %v9136
      %v9359 = vpop.f32.mrb[0].mxu0
      %v9360 = vadd.f32 0.0, %v9359
      %v9361 = vpop.f32.mrb[0].mxu0
      %9362 = vdwg.mxu0
      %v9363 = vadd.f32 %v8786, %v9205
      %v9364 = vadd.f32 %v8791, %v9210
      %v9365 = vadd.f32 %v8796, %v9215
      %v9366 = vadd.f32 %v8801, %v9220
      %v9367 = vadd.f32 %v8806, %v9225
      %v9368 = vadd.f32 %v8811, %v9230
      %v9369 = vadd.f32 %v8816, %v9235
      %v9370 = vadd.f32 %v8821, %v9240
      %v9371 = vadd.f32 %v8826, %v9245
      %v9372 = vadd.f32 %v8831, %v9250
      %v9373 = vadd.f32 %v8836, %v9255
      %v9374 = vadd.f32 %v8841, %v9260
      %v9375 = vadd.f32 %v8846, %v9265
      %v9376 = vadd.f32 %v8851, %v9270
      %v9377 = vadd.f32 %v8856, %v9275
      %v9378 = vadd.f32 %v8861, %v9280
      %v9379 = vadd.f32 %v8866, %v9285
      %v9380 = vadd.f32 %v8871, %v9290
      %v9381 = vadd.f32 %v8876, %v9295
      %v9382 = vadd.f32 %v8881, %v9300
      %v9383 = vadd.f32 %v8886, %v9305
      %v9384 = vadd.f32 %v8891, %v9310
      %v9385 = vadd.f32 %v8896, %v9315
      %v9386 = vadd.f32 %v8901, %v9320
      %v9387 = vadd.f32 %v8906, %v9325
      %v9388 = vadd.f32 %v8911, %v9330
      %v9389 = vadd.f32 %v8916, %v9335
      %v9390 = vadd.f32 %v8921, %v9340
      %v9391 = vadd.f32 %v8926, %v9345
      %v9392 = vadd.f32 %v8931, %v9350
      %v9393 = vadd.f32 %v8936, %v9355
      %v9394 = vadd.f32 %v8941, %v9360
      %v9395 = vmul.f32 %v8234, %v4349
      %v9396 = vmul.f32 %v8233, %v4354
      %v9397 = vmul.f32 %v8232, %v4359
      %v9398 = vmul.f32 %v8231, %v4364
      %v9399 = vmul.f32 %v8230, %v4369
      %v9400 = vmul.f32 %v8229, %v4374
      %v9401 = vmul.f32 %v8228, %v4379
      %v9402 = vmul.f32 %v8227, %v4384
      %v9403 = vmul.f32 %v8226, %v4389
      %v9404 = vmul.f32 %v8225, %v4394
      %v9405 = vmul.f32 %v8224, %v4399
      %v9406 = vmul.f32 %v8223, %v4404
      %v9407 = vmul.f32 %v8222, %v4409
      %v9408 = vmul.f32 %v8221, %v4414
      %v9409 = vmul.f32 %v8220, %v4419
      %v9410 = vmul.f32 %v8219, %v4424
      %v9411 = vmul.f32 %v8218, %v4429
      %v9412 = vmul.f32 %v8217, %v4434
      %v9413 = vmul.f32 %v8216, %v4439
      %v9414 = vmul.f32 %v8215, %v4444
      %v9415 = vmul.f32 %v8214, %v4449
      %v9416 = vmul.f32 %v8213, %v4454
      %v9417 = vmul.f32 %v8212, %v4459
      %v9418 = vmul.f32 %v8211, %v4464
      %v9419 = vmul.f32 %v8210, %v4469
      %v9420 = vmul.f32 %v8209, %v4474
      %v9421 = vmul.f32 %v8208, %v4479
      %v9422 = vmul.f32 %v8207, %v4484
      %v9423 = vmul.f32 %v8206, %v4489
      %v9424 = vmul.f32 %v8205, %v4494
      %v9425 = vmul.f32 %v8204, %v4499
      %v9426 = vmul.f32 %v8203, %v4504
      %s9427 = scalar_lea.vmem %s13, 24
      %v9428 = vld [vmem:[%s9427] sm:$0xff]
      %v9430 = vsel %vm3091, %v9395, 0
      %v9433 = vsel %vm3091, %v9396, 0
      %v9436 = vsel %vm3091, %v9397, 0
      %v9439 = vsel %vm3091, %v9398, 0
      %v9442 = vsel %vm3091, %v9399, 0
      %v9445 = vsel %vm3091, %v9400, 0
      %v9448 = vsel %vm3091, %v9401, 0
      %v9451 = vsel %vm3091, %v9402, 0
      %v9454 = vsel %vm3091, %v9403, 0
      %v9457 = vsel %vm3091, %v9404, 0
      %v9460 = vsel %vm3091, %v9405, 0
      %v9463 = vsel %vm3091, %v9406, 0
      %v9466 = vsel %vm3091, %v9407, 0
      %v9469 = vsel %vm3091, %v9408, 0
      %v9472 = vsel %vm3091, %v9409, 0
      %v9475 = vsel %vm3091, %v9410, 0
      %v9478 = vsel %vm3091, %v9411, 0
      %v9481 = vsel %vm3091, %v9412, 0
      %v9484 = vsel %vm3091, %v9413, 0
      %v9487 = vsel %vm3091, %v9414, 0
      %v9490 = vsel %vm3091, %v9415, 0
      %v9493 = vsel %vm3091, %v9416, 0
      %v9496 = vsel %vm3091, %v9417, 0
      %v9499 = vsel %vm3091, %v9418, 0
      %v9502 = vsel %vm3091, %v9419, 0
      %v9505 = vsel %vm3091, %v9420, 0
      %v9508 = vsel %vm3091, %v9421, 0
      %v9511 = vsel %vm3091, %v9422, 0
      %v9514 = vsel %vm3091, %v9423, 0
      %v9517 = vsel %vm3091, %v9424, 0
      %v9520 = vsel %vm3091, %v9425, 0
      %v9523 = vsel %vm3091, %v9426, 0
      %9525 = vmatprep.subr.mxu0 0.0
      %9526 = vmatpush1.msra.mxu0 %v9428
      %9527 = vmatprep.subr.mxu0 0.0
      %9528 = vmatpush1.msra.mxu0 0.0
      %9529 = vmatprep.subr.mxu0 0.0
      %9530 = vmatpush1.msra.mxu0 0.0
      %9531 = vmatprep.subr.mxu0 0.0
      %9532 = vmatpush1.msra.mxu0 0.0
      %9533 = vmatprep.subr.mxu0 0.0
      %9534 = vmatpush1.msra.mxu0 0.0
      %9535 = vmatprep.subr.mxu0 0.0
      %9536 = vmatpush1.msra.mxu0 0.0
      %9537 = vmatprep.subr.mxu0 0.0
      %9538 = vmatpush1.msra.mxu0 0.0
      %9539 = vmatprep.subr.mxu0 0.0
      %9540 = vmatpush1.msra.mxu0 0.0
      %9541 = vmatprep.subr.mxu0 0.0
      %9542 = vmatpush1.msra.mxu0 0.0
      %9543 = vmatprep.subr.mxu0 0.0
      %9544 = vmatpush1.msra.mxu0 0.0
      %9545 = vmatprep.subr.mxu0 0.0
      %9546 = vmatpush1.msra.mxu0 0.0
      %9547 = vmatprep.subr.mxu0 0.0
      %9548 = vmatpush1.msra.mxu0 0.0
      %9549 = vmatprep.subr.mxu0 0.0
      %9550 = vmatpush1.msra.mxu0 0.0
      %9551 = vmatprep.subr.mxu0 0.0
      %9552 = vmatpush1.msra.mxu0 0.0
      %9553 = vmatprep.subr.mxu0 0.0
      %9554 = vmatpush1.msra.mxu0 0.0
      %9555 = vmatprep.subr.mxu0 0.0
      %9556 = vmatpush1.msra.mxu0 0.0
      %9557 = vmatprep.subr.mxu0 0.0
      %9558 = vmatpush1.msra.mxu0 0.0
      %9559 = vmatprep.subr.mxu0 0.0
      %9560 = vmatpush1.msra.mxu0 0.0
      %9561 = vmatprep.subr.mxu0 0.0
      %9562 = vmatpush1.msra.mxu0 0.0
      %9563 = vmatprep.subr.mxu0 0.0
      %9564 = vmatpush1.msra.mxu0 0.0
      %9565 = vmatprep.subr.mxu0 0.0
      %9566 = vmatpush1.msra.mxu0 0.0
      %9567 = vmatprep.subr.mxu0 0.0
      %9568 = vmatpush1.msra.mxu0 0.0
      %9569 = vmatprep.subr.mxu0 0.0
      %9570 = vmatpush1.msra.mxu0 0.0
      %9571 = vmatprep.subr.mxu0 0.0
      %9572 = vmatpush1.msra.mxu0 0.0
      %9573 = vmatprep.subr.mxu0 0.0
      %9574 = vmatpush1.msra.mxu0 0.0
      %9575 = vmatprep.subr.mxu0 0.0
      %9576 = vmatpush1.msra.mxu0 0.0
      %9577 = vmatprep.subr.mxu0 0.0
      %9578 = vmatpush1.msra.mxu0 0.0
      %9579 = vmatprep.subr.mxu0 0.0
      %9580 = vmatpush1.msra.mxu0 0.0
      %9581 = vmatprep.subr.mxu0 0.0
      %9582 = vmatpush1.msra.mxu0 0.0
      %9583 = vmatprep.subr.mxu0 0.0
      %9584 = vmatpush1.msra.mxu0 0.0
      %9585 = vmatprep.subr.mxu0 0.0
      %9586 = vmatpush1.msra.mxu0 0.0
      %9587 = vmatprep.subr.mxu0 0.0
      %9588 = vmatpush1.msra.mxu0 0.0
      %9589 = vmatprep.mubr.f32.mxu0 0.0
      %9590 = vmatmul.mubr.f32.gmra.mrb[0].mxu0 %v9430
      %v9591 = vpop.f32.mrb[0].mxu0
      %v9592 = vadd.f32 0.0, %v9591
      %v9593 = vpop.f32.mrb[0].mxu0
      %9594 = vmatprep.mubr.f32.mxu0 0.0
      %9595 = vmatmul.mubr.f32.gmra.mrb[0].mxu0 %v9433
      %v9596 = vpop.f32.mrb[0].mxu0
      %v9597 = vadd.f32 0.0, %v9596
      %v9598 = vpop.f32.mrb[0].mxu0
      %9599 = vmatprep.mubr.f32.mxu0 0.0
      %9600 = vmatmul.mubr.f32.gmra.mrb[0].mxu0 %v9436
      %v9601 = vpop.f32.mrb[0].mxu0
      %v9602 = vadd.f32 0.0, %v9601
      %v9603 = vpop.f32.mrb[0].mxu0
      %9604 = vmatprep.mubr.f32.mxu0 0.0
      %9605 = vmatmul.mubr.f32.gmra.mrb[0].mxu0 %v9439
      %v9606 = vpop.f32.mrb[0].mxu0
      %v9607 = vadd.f32 0.0, %v9606
      %v9608 = vpop.f32.mrb[0].mxu0
      %9609 = vmatprep.mubr.f32.mxu0 0.0
      %9610 = vmatmul.mubr.f32.gmra.mrb[0].mxu0 %v9442
      %v9611 = vpop.f32.mrb[0].mxu0
      %v9612 = vadd.f32 0.0, %v9611
      %v9613 = vpop.f32.mrb[0].mxu0
      %9614 = vmatprep.mubr.f32.mxu0 0.0
      %9615 = vmatmul.mubr.f32.gmra.mrb[0].mxu0 %v9445
      %v9616 = vpop.f32.mrb[0].mxu0
      %v9617 = vadd.f32 0.0, %v9616
      %v9618 = vpop.f32.mrb[0].mxu0
      %9619 = vmatprep.mubr.f32.mxu0 0.0
      %9620 = vmatmul.mubr.f32.gmra.mrb[0].mxu0 %v9448
      %v9621 = vpop.f32.mrb[0].mxu0
      %v9622 = vadd.f32 0.0, %v9621
      %v9623 = vpop.f32.mrb[0].mxu0
      %9624 = vmatprep.mubr.f32.mxu0 0.0
      %9625 = vmatmul.mubr.f32.gmra.mrb[0].mxu0 %v9451
      %v9626 = vpop.f32.mrb[0].mxu0
      %v9627 = vadd.f32 0.0, %v9626
      %v9628 = vpop.f32.mrb[0].mxu0
      %9629 = vmatprep.mubr.f32.mxu0 0.0
      %9630 = vmatmul.mubr.f32.gmra.mrb[0].mxu0 %v9454
      %v9631 = vpop.f32.mrb[0].mxu0
      %v9632 = vadd.f32 0.0, %v9631
      %v9633 = vpop.f32.mrb[0].mxu0
      %9634 = vmatprep.mubr.f32.mxu0 0.0
      %9635 = vmatmul.mubr.f32.gmra.mrb[0].mxu0 %v9457
      %v9636 = vpop.f32.mrb[0].mxu0
      %v9637 = vadd.f32 0.0, %v9636
      %v9638 = vpop.f32.mrb[0].mxu0
      %9639 = vmatprep.mubr.f32.mxu0 0.0
      %9640 = vmatmul.mubr.f32.gmra.mrb[0].mxu0 %v9460
      %v9641 = vpop.f32.mrb[0].mxu0
      %v9642 = vadd.f32 0.0, %v9641
      %v9643 = vpop.f32.mrb[0].mxu0
      %9644 = vmatprep.mubr.f32.mxu0 0.0
      %9645 = vmatmul.mubr.f32.gmra.mrb[0].mxu0 %v9463
      %v9646 = vpop.f32.mrb[0].mxu0
      %v9647 = vadd.f32 0.0, %v9646
      %v9648 = vpop.f32.mrb[0].mxu0
      %9649 = vmatprep.mubr.f32.mxu0 0.0
      %9650 = vmatmul.mubr.f32.gmra.mrb[0].mxu0 %v9466
      %v9651 = vpop.f32.mrb[0].mxu0
      %v9652 = vadd.f32 0.0, %v9651
      %v9653 = vpop.f32.mrb[0].mxu0
      %9654 = vmatprep.mubr.f32.mxu0 0.0
      %9655 = vmatmul.mubr.f32.gmra.mrb[0].mxu0 %v9469
      %v9656 = vpop.f32.mrb[0].mxu0
      %v9657 = vadd.f32 0.0, %v9656
      %v9658 = vpop.f32.mrb[0].mxu0
      %9659 = vmatprep.mubr.f32.mxu0 0.0
      %9660 = vmatmul.mubr.f32.gmra.mrb[0].mxu0 %v9472
      %v9661 = vpop.f32.mrb[0].mxu0
      %v9662 = vadd.f32 0.0, %v9661
      %v9663 = vpop.f32.mrb[0].mxu0
      %9664 = vmatprep.mubr.f32.mxu0 0.0
      %9665 = vmatmul.mubr.f32.gmra.mrb[0].mxu0 %v9475
      %v9666 = vpop.f32.mrb[0].mxu0
      %v9667 = vadd.f32 0.0, %v9666
      %v9668 = vpop.f32.mrb[0].mxu0
      %9669 = vmatprep.mubr.f32.mxu0 0.0
      %9670 = vmatmul.mubr.f32.gmra.mrb[0].mxu0 %v9478
      %v9671 = vpop.f32.mrb[0].mxu0
      %v9672 = vadd.f32 0.0, %v9671
      %v9673 = vpop.f32.mrb[0].mxu0
      %9674 = vmatprep.mubr.f32.mxu0 0.0
      %9675 = vmatmul.mubr.f32.gmra.mrb[0].mxu0 %v9481
      %v9676 = vpop.f32.mrb[0].mxu0
      %v9677 = vadd.f32 0.0, %v9676
      %v9678 = vpop.f32.mrb[0].mxu0
      %9679 = vmatprep.mubr.f32.mxu0 0.0
      %9680 = vmatmul.mubr.f32.gmra.mrb[0].mxu0 %v9484
      %v9681 = vpop.f32.mrb[0].mxu0
      %v9682 = vadd.f32 0.0, %v9681
      %v9683 = vpop.f32.mrb[0].mxu0
      %9684 = vmatprep.mubr.f32.mxu0 0.0
      %9685 = vmatmul.mubr.f32.gmra.mrb[0].mxu0 %v9487
      %v9686 = vpop.f32.mrb[0].mxu0
      %v9687 = vadd.f32 0.0, %v9686
      %v9688 = vpop.f32.mrb[0].mxu0
      %9689 = vmatprep.mubr.f32.mxu0 0.0
      %9690 = vmatmul.mubr.f32.gmra.mrb[0].mxu0 %v9490
      %v9691 = vpop.f32.mrb[0].mxu0
      %v9692 = vadd.f32 0.0, %v9691
      %v9693 = vpop.f32.mrb[0].mxu0
      %9694 = vmatprep.mubr.f32.mxu0 0.0
      %9695 = vmatmul.mubr.f32.gmra.mrb[0].mxu0 %v9493
      %v9696 = vpop.f32.mrb[0].mxu0
      %v9697 = vadd.f32 0.0, %v9696
      %v9698 = vpop.f32.mrb[0].mxu0
      %9699 = vmatprep.mubr.f32.mxu0 0.0
      %9700 = vmatmul.mubr.f32.gmra.mrb[0].mxu0 %v9496
      %v9701 = vpop.f32.mrb[0].mxu0
      %v9702 = vadd.f32 0.0, %v9701
      %v9703 = vpop.f32.mrb[0].mxu0
      %9704 = vmatprep.mubr.f32.mxu0 0.0
      %9705 = vmatmul.mubr.f32.gmra.mrb[0].mxu0 %v9499
      %v9706 = vpop.f32.mrb[0].mxu0
      %v9707 = vadd.f32 0.0, %v9706
      %v9708 = vpop.f32.mrb[0].mxu0
      %9709 = vmatprep.mubr.f32.mxu0 0.0
      %9710 = vmatmul.mubr.f32.gmra.mrb[0].mxu0 %v9502
      %v9711 = vpop.f32.mrb[0].mxu0
      %v9712 = vadd.f32 0.0, %v9711
      %v9713 = vpop.f32.mrb[0].mxu0
      %9714 = vmatprep.mubr.f32.mxu0 0.0
      %9715 = vmatmul.mubr.f32.gmra.mrb[0].mxu0 %v9505
      %v9716 = vpop.f32.mrb[0].mxu0
      %v9717 = vadd.f32 0.0, %v9716
      %v9718 = vpop.f32.mrb[0].mxu0
      %9719 = vmatprep.mubr.f32.mxu0 0.0
      %9720 = vmatmul.mubr.f32.gmra.mrb[0].mxu0 %v9508
      %v9721 = vpop.f32.mrb[0].mxu0
      %v9722 = vadd.f32 0.0, %v9721
      %v9723 = vpop.f32.mrb[0].mxu0
      %9724 = vmatprep.mubr.f32.mxu0 0.0
      %9725 = vmatmul.mubr.f32.gmra.mrb[0].mxu0 %v9511
      %v9726 = vpop.f32.mrb[0].mxu0
      %v9727 = vadd.f32 0.0, %v9726
      %v9728 = vpop.f32.mrb[0].mxu0
      %9729 = vmatprep.mubr.f32.mxu0 0.0
      %9730 = vmatmul.mubr.f32.gmra.mrb[0].mxu0 %v9514
      %v9731 = vpop.f32.mrb[0].mxu0
      %v9732 = vadd.f32 0.0, %v9731
      %v9733 = vpop.f32.mrb[0].mxu0
      %9734 = vmatprep.mubr.f32.mxu0 0.0
      %9735 = vmatmul.mubr.f32.gmra.mrb[0].mxu0 %v9517
      %v9736 = vpop.f32.mrb[0].mxu0
      %v9737 = vadd.f32 0.0, %v9736
      %v9738 = vpop.f32.mrb[0].mxu0
      %9739 = vmatprep.mubr.f32.mxu0 0.0
      %9740 = vmatmul.mubr.f32.gmra.mrb[0].mxu0 %v9520
      %v9741 = vpop.f32.mrb[0].mxu0
      %v9742 = vadd.f32 0.0, %v9741
      %v9743 = vpop.f32.mrb[0].mxu0
      %9744 = vmatprep.mubr.f32.mxu0 0.0
      %9745 = vmatmul.mubr.f32.gmra.mrb[0].mxu0 %v9523
      %v9746 = vpop.f32.mrb[0].mxu0
      %v9747 = vadd.f32 0.0, %v9746
      %v9748 = vpop.f32.mrb[0].mxu0
      %9749 = vdwg.mxu0
      %v9750 = vadd.f32 %v9363, %v9592
      %v9751 = vadd.f32 %v9364, %v9597
      %v9752 = vadd.f32 %v9365, %v9602
      %v9753 = vadd.f32 %v9366, %v9607
      %v9754 = vadd.f32 %v9367, %v9612
      %v9755 = vadd.f32 %v9368, %v9617
      %v9756 = vadd.f32 %v9369, %v9622
      %v9757 = vadd.f32 %v9370, %v9627
      %v9758 = vadd.f32 %v9371, %v9632
      %v9759 = vadd.f32 %v9372, %v9637
      %v9760 = vadd.f32 %v9373, %v9642
      %v9761 = vadd.f32 %v9374, %v9647
      %v9762 = vadd.f32 %v9375, %v9652
      %v9763 = vadd.f32 %v9376, %v9657
      %v9764 = vadd.f32 %v9377, %v9662
      %v9765 = vadd.f32 %v9378, %v9667
      %v9766 = vadd.f32 %v9379, %v9672
      %v9767 = vadd.f32 %v9380, %v9677
      %v9768 = vadd.f32 %v9381, %v9682
      %v9769 = vadd.f32 %v9382, %v9687
      %v9770 = vadd.f32 %v9383, %v9692
      %v9771 = vadd.f32 %v9384, %v9697
      %v9772 = vadd.f32 %v9385, %v9702
      %v9773 = vadd.f32 %v9386, %v9707
      %v9774 = vadd.f32 %v9387, %v9712
      %v9775 = vadd.f32 %v9388, %v9717
      %v9776 = vadd.f32 %v9389, %v9722
      %v9777 = vadd.f32 %v9390, %v9727
      %v9778 = vadd.f32 %v9391, %v9732
      %v9779 = vadd.f32 %v9392, %v9737
      %v9780 = vadd.f32 %v9393, %v9742
      %v9781 = vadd.f32 %v9394, %v9747
      %s9782 = scalar_lea.vmem %s13, 32
      %v9783 = vld [vmem:[%s9782] sm:$0xff]
      %v9785 = vsel %vm3091, %v8139, 0
      %v9788 = vsel %vm3091, %v8140, 0
      %v9791 = vsel %vm3091, %v8141, 0
      %v9794 = vsel %vm3091, %v8142, 0
      %v9797 = vsel %vm3091, %v8143, 0
      %v9800 = vsel %vm3091, %v8144, 0
      %v9803 = vsel %vm3091, %v8145, 0
      %v9806 = vsel %vm3091, %v8146, 0
      %v9809 = vsel %vm3091, %v8147, 0
      %v9812 = vsel %vm3091, %v8148, 0
      %v9815 = vsel %vm3091, %v8149, 0
      %v9818 = vsel %vm3091, %v8150, 0
      %v9821 = vsel %vm3091, %v8151, 0
      %v9824 = vsel %vm3091, %v8152, 0
      %v9827 = vsel %vm3091, %v8153, 0
      %v9830 = vsel %vm3091, %v8154, 0
      %v9833 = vsel %vm3091, %v8155, 0
      %v9836 = vsel %vm3091, %v8156, 0
      %v9839 = vsel %vm3091, %v8157, 0
      %v9842 = vsel %vm3091, %v8158, 0
      %v9845 = vsel %vm3091, %v8159, 0
      %v9848 = vsel %vm3091, %v8160, 0
      %v9851 = vsel %vm3091, %v8161, 0
      %v9854 = vsel %vm3091, %v8162, 0
      %v9857 = vsel %vm3091, %v8163, 0
      %v9860 = vsel %vm3091, %v8164, 0
      %v9863 = vsel %vm3091, %v8165, 0
      %v9866 = vsel %vm3091, %v8166, 0
      %v9869 = vsel %vm3091, %v8167, 0
      %v9872 = vsel %vm3091, %v8168, 0
      %v9875 = vsel %vm3091, %v8169, 0
      %v9878 = vsel %vm3091, %v8170, 0
      %9880 = vmatprep.subr.mxu0 0.0
      %9881 = vmatpush1.msra.mxu0 %v9783
      %9882 = vmatprep.subr.mxu0 0.0
      %9883 = vmatpush1.msra.mxu0 0.0
      %9884 = vmatprep.subr.mxu0 0.0
      %9885 = vmatpush1.msra.mxu0 0.0
      %9886 = vmatprep.subr.mxu0 0.0
      %9887 = vmatpush1.msra.mxu0 0.0
      %9888 = vmatprep.subr.mxu0 0.0
      %9889 = vmatpush1.msra.mxu0 0.0
      %9890 = vmatprep.subr.mxu0 0.0
      %9891 = vmatpush1.msra.mxu0 0.0
      %9892 = vmatprep.subr.mxu0 0.0
      %9893 = vmatpush1.msra.mxu0 0.0
      %9894 = vmatprep.subr.mxu0 0.0
      %9895 = vmatpush1.msra.mxu0 0.0
      %9896 = vmatprep.subr.mxu0 0.0
      %9897 = vmatpush1.msra.mxu0 0.0
      %9898 = vmatprep.subr.mxu0 0.0
      %9899 = vmatpush1.msra.mxu0 0.0
      %9900 = vmatprep.subr.mxu0 0.0
      %9901 = vmatpush1.msra.mxu0 0.0
      %9902 = vmatprep.subr.mxu0 0.0
      %9903 = vmatpush1.msra.mxu0 0.0
      %9904 = vmatprep.subr.mxu0 0.0
      %9905 = vmatpush1.msra.mxu0 0.0
      %9906 = vmatprep.subr.mxu0 0.0
      %9907 = vmatpush1.msra.mxu0 0.0
      %9908 = vmatprep.subr.mxu0 0.0
      %9909 = vmatpush1.msra.mxu0 0.0
      %9910 = vmatprep.subr.mxu0 0.0
      %9911 = vmatpush1.msra.mxu0 0.0
      %9912 = vmatprep.subr.mxu0 0.0
      %9913 = vmatpush1.msra.mxu0 0.0
      %9914 = vmatprep.subr.mxu0 0.0
      %9915 = vmatpush1.msra.mxu0 0.0
      %9916 = vmatprep.subr.mxu0 0.0
      %9917 = vmatpush1.msra.mxu0 0.0
      %9918 = vmatprep.subr.mxu0 0.0
      %9919 = vmatpush1.msra.mxu0 0.0
      %9920 = vmatprep.subr.mxu0 0.0
      %9921 = vmatpush1.msra.mxu0 0.0
      %9922 = vmatprep.subr.mxu0 0.0
      %9923 = vmatpush1.msra.mxu0 0.0
      %9924 = vmatprep.subr.mxu0 0.0
      %9925 = vmatpush1.msra.mxu0 0.0
      %9926 = vmatprep.subr.mxu0 0.0
      %9927 = vmatpush1.msra.mxu0 0.0
      %9928 = vmatprep.subr.mxu0 0.0
      %9929 = vmatpush1.msra.mxu0 0.0
      %9930 = vmatprep.subr.mxu0 0.0
      %9931 = vmatpush1.msra.mxu0 0.0
      %9932 = vmatprep.subr.mxu0 0.0
      %9933 = vmatpush1.msra.mxu0 0.0
      %9934 = vmatprep.subr.mxu0 0.0
      %9935 = vmatpush1.msra.mxu0 0.0
      %9936 = vmatprep.subr.mxu0 0.0
      %9937 = vmatpush1.msra.mxu0 0.0
      %9938 = vmatprep.subr.mxu0 0.0
      %9939 = vmatpush1.msra.mxu0 0.0
      %9940 = vmatprep.subr.mxu0 0.0
      %9941 = vmatpush1.msra.mxu0 0.0
      %9942 = vmatprep.subr.mxu0 0.0
      %9943 = vmatpush1.msra.mxu0 0.0
      %9944 = vmatprep.mubr.f32.mxu0 0.0
      %9945 = vmatmul.mubr.f32.gmra.mrb[0].mxu0 %v9785
      %v9946 = vpop.f32.mrb[0].mxu0
      %v9947 = vadd.f32 0.0, %v9946
      %v9948 = vpop.f32.mrb[0].mxu0
      %9949 = vmatprep.mubr.f32.mxu0 0.0
      %9950 = vmatmul.mubr.f32.gmra.mrb[0].mxu0 %v9788
      %v9951 = vpop.f32.mrb[0].mxu0
      %v9952 = vadd.f32 0.0, %v9951
      %v9953 = vpop.f32.mrb[0].mxu0
      %9954 = vmatprep.mubr.f32.mxu0 0.0
      %9955 = vmatmul.mubr.f32.gmra.mrb[0].mxu0 %v9791
      %v9956 = vpop.f32.mrb[0].mxu0
      %v9957 = vadd.f32 0.0, %v9956
      %v9958 = vpop.f32.mrb[0].mxu0
      %9959 = vmatprep.mubr.f32.mxu0 0.0
      %9960 = vmatmul.mubr.f32.gmra.mrb[0].mxu0 %v9794
      %v9961 = vpop.f32.mrb[0].mxu0
      %v9962 = vadd.f32 0.0, %v9961
      %v9963 = vpop.f32.mrb[0].mxu0
      %9964 = vmatprep.mubr.f32.mxu0 0.0
      %9965 = vmatmul.mubr.f32.gmra.mrb[0].mxu0 %v9797
      %v9966 = vpop.f32.mrb[0].mxu0
      %v9967 = vadd.f32 0.0, %v9966
      %v9968 = vpop.f32.mrb[0].mxu0
      %9969 = vmatprep.mubr.f32.mxu0 0.0
      %9970 = vmatmul.mubr.f32.gmra.mrb[0].mxu0 %v9800
      %v9971 = vpop.f32.mrb[0].mxu0
      %v9972 = vadd.f32 0.0, %v9971
      %v9973 = vpop.f32.mrb[0].mxu0
      %9974 = vmatprep.mubr.f32.mxu0 0.0
      %9975 = vmatmul.mubr.f32.gmra.mrb[0].mxu0 %v9803
      %v9976 = vpop.f32.mrb[0].mxu0
      %v9977 = vadd.f32 0.0, %v9976
      %v9978 = vpop.f32.mrb[0].mxu0
      %9979 = vmatprep.mubr.f32.mxu0 0.0
      %9980 = vmatmul.mubr.f32.gmra.mrb[0].mxu0 %v9806
      %v9981 = vpop.f32.mrb[0].mxu0
      %v9982 = vadd.f32 0.0, %v9981
      %v9983 = vpop.f32.mrb[0].mxu0
      %9984 = vmatprep.mubr.f32.mxu0 0.0
      %9985 = vmatmul.mubr.f32.gmra.mrb[0].mxu0 %v9809
      %v9986 = vpop.f32.mrb[0].mxu0
      %v9987 = vadd.f32 0.0, %v9986
      %v9988 = vpop.f32.mrb[0].mxu0
      %9989 = vmatprep.mubr.f32.mxu0 0.0
      %9990 = vmatmul.mubr.f32.gmra.mrb[0].mxu0 %v9812
      %v9991 = vpop.f32.mrb[0].mxu0
      %v9992 = vadd.f32 0.0, %v9991
      %v9993 = vpop.f32.mrb[0].mxu0
      %9994 = vmatprep.mubr.f32.mxu0 0.0
      %9995 = vmatmul.mubr.f32.gmra.mrb[0].mxu0 %v9815
      %v9996 = vpop.f32.mrb[0].mxu0
      %v9997 = vadd.f32 0.0, %v9996
      %v9998 = vpop.f32.mrb[0].mxu0
      %9999 = vmatprep.mubr.f32.mxu0 0.0
      %10000 = vmatmul.mubr.f32.gmra.mrb[0].mxu0 %v9818
      %v10001 = vpop.f32.mrb[0].mxu0
      %v10002 = vadd.f32 0.0, %v10001
      %v10003 = vpop.f32.mrb[0].mxu0
      %10004 = vmatprep.mubr.f32.mxu0 0.0
      %10005 = vmatmul.mubr.f32.gmra.mrb[0].mxu0 %v9821
      %v10006 = vpop.f32.mrb[0].mxu0
      %v10007 = vadd.f32 0.0, %v10006
      %v10008 = vpop.f32.mrb[0].mxu0
      %10009 = vmatprep.mubr.f32.mxu0 0.0
      %10010 = vmatmul.mubr.f32.gmra.mrb[0].mxu0 %v9824
      %v10011 = vpop.f32.mrb[0].mxu0
      %v10012 = vadd.f32 0.0, %v10011
      %v10013 = vpop.f32.mrb[0].mxu0
      %10014 = vmatprep.mubr.f32.mxu0 0.0
      %10015 = vmatmul.mubr.f32.gmra.mrb[0].mxu0 %v9827
      %v10016 = vpop.f32.mrb[0].mxu0
      %v10017 = vadd.f32 0.0, %v10016
      %v10018 = vpop.f32.mrb[0].mxu0
      %10019 = vmatprep.mubr.f32.mxu0 0.0
      %10020 = vmatmul.mubr.f32.gmra.mrb[0].mxu0 %v9830
      %v10021 = vpop.f32.mrb[0].mxu0
      %v10022 = vadd.f32 0.0, %v10021
      %v10023 = vpop.f32.mrb[0].mxu0
      %10024 = vmatprep.mubr.f32.mxu0 0.0
      %10025 = vmatmul.mubr.f32.gmra.mrb[0].mxu0 %v9833
      %v10026 = vpop.f32.mrb[0].mxu0
      %v10027 = vadd.f32 0.0, %v10026
      %v10028 = vpop.f32.mrb[0].mxu0
      %10029 = vmatprep.mubr.f32.mxu0 0.0
      %10030 = vmatmul.mubr.f32.gmra.mrb[0].mxu0 %v9836
      %v10031 = vpop.f32.mrb[0].mxu0
      %v10032 = vadd.f32 0.0, %v10031
      %v10033 = vpop.f32.mrb[0].mxu0
      %10034 = vmatprep.mubr.f32.mxu0 0.0
      %10035 = vmatmul.mubr.f32.gmra.mrb[0].mxu0 %v9839
      %v10036 = vpop.f32.mrb[0].mxu0
      %v10037 = vadd.f32 0.0, %v10036
      %v10038 = vpop.f32.mrb[0].mxu0
      %10039 = vmatprep.mubr.f32.mxu0 0.0
      %10040 = vmatmul.mubr.f32.gmra.mrb[0].mxu0 %v9842
      %v10041 = vpop.f32.mrb[0].mxu0
      %v10042 = vadd.f32 0.0, %v10041
      %v10043 = vpop.f32.mrb[0].mxu0
      %10044 = vmatprep.mubr.f32.mxu0 0.0
      %10045 = vmatmul.mubr.f32.gmra.mrb[0].mxu0 %v9845
      %v10046 = vpop.f32.mrb[0].mxu0
      %v10047 = vadd.f32 0.0, %v10046
      %v10048 = vpop.f32.mrb[0].mxu0
      %10049 = vmatprep.mubr.f32.mxu0 0.0
      %10050 = vmatmul.mubr.f32.gmra.mrb[0].mxu0 %v9848
      %v10051 = vpop.f32.mrb[0].mxu0
      %v10052 = vadd.f32 0.0, %v10051
      %v10053 = vpop.f32.mrb[0].mxu0
      %10054 = vmatprep.mubr.f32.mxu0 0.0
      %10055 = vmatmul.mubr.f32.gmra.mrb[0].mxu0 %v9851
      %v10056 = vpop.f32.mrb[0].mxu0
      %v10057 = vadd.f32 0.0, %v10056
      %v10058 = vpop.f32.mrb[0].mxu0
      %10059 = vmatprep.mubr.f32.mxu0 0.0
      %10060 = vmatmul.mubr.f32.gmra.mrb[0].mxu0 %v9854
      %v10061 = vpop.f32.mrb[0].mxu0
      %v10062 = vadd.f32 0.0, %v10061
      %v10063 = vpop.f32.mrb[0].mxu0
      %10064 = vmatprep.mubr.f32.mxu0 0.0
      %10065 = vmatmul.mubr.f32.gmra.mrb[0].mxu0 %v9857
      %v10066 = vpop.f32.mrb[0].mxu0
      %v10067 = vadd.f32 0.0, %v10066
      %v10068 = vpop.f32.mrb[0].mxu0
      %10069 = vmatprep.mubr.f32.mxu0 0.0
      %10070 = vmatmul.mubr.f32.gmra.mrb[0].mxu0 %v9860
      %v10071 = vpop.f32.mrb[0].mxu0
      %v10072 = vadd.f32 0.0, %v10071
      %v10073 = vpop.f32.mrb[0].mxu0
      %10074 = vmatprep.mubr.f32.mxu0 0.0
      %10075 = vmatmul.mubr.f32.gmra.mrb[0].mxu0 %v9863
      %v10076 = vpop.f32.mrb[0].mxu0
      %v10077 = vadd.f32 0.0, %v10076
      %v10078 = vpop.f32.mrb[0].mxu0
      %10079 = vmatprep.mubr.f32.mxu0 0.0
      %10080 = vmatmul.mubr.f32.gmra.mrb[0].mxu0 %v9866
      %v10081 = vpop.f32.mrb[0].mxu0
      %v10082 = vadd.f32 0.0, %v10081
      %v10083 = vpop.f32.mrb[0].mxu0
      %10084 = vmatprep.mubr.f32.mxu0 0.0
      %10085 = vmatmul.mubr.f32.gmra.mrb[0].mxu0 %v9869
      %v10086 = vpop.f32.mrb[0].mxu0
      %v10087 = vadd.f32 0.0, %v10086
      %v10088 = vpop.f32.mrb[0].mxu0
      %10089 = vmatprep.mubr.f32.mxu0 0.0
      %10090 = vmatmul.mubr.f32.gmra.mrb[0].mxu0 %v9872
      %v10091 = vpop.f32.mrb[0].mxu0
      %v10092 = vadd.f32 0.0, %v10091
      %v10093 = vpop.f32.mrb[0].mxu0
      %10094 = vmatprep.mubr.f32.mxu0 0.0
      %10095 = vmatmul.mubr.f32.gmra.mrb[0].mxu0 %v9875
      %v10096 = vpop.f32.mrb[0].mxu0
      %v10097 = vadd.f32 0.0, %v10096
      %v10098 = vpop.f32.mrb[0].mxu0
      %10099 = vmatprep.mubr.f32.mxu0 0.0
      %10100 = vmatmul.mubr.f32.gmra.mrb[0].mxu0 %v9878
      %v10101 = vpop.f32.mrb[0].mxu0
      %v10102 = vadd.f32 0.0, %v10101
      %v10103 = vpop.f32.mrb[0].mxu0
      %10104 = vdwg.mxu0
      %v10105 = vadd.f32 %v9750, %v9947
      %v10106 = vadd.f32 %v9751, %v9952
      %v10107 = vadd.f32 %v9752, %v9957
      %v10108 = vadd.f32 %v9753, %v9962
      %v10109 = vadd.f32 %v9754, %v9967
      %v10110 = vadd.f32 %v9755, %v9972
      %v10111 = vadd.f32 %v9756, %v9977
      %v10112 = vadd.f32 %v9757, %v9982
      %v10113 = vadd.f32 %v9758, %v9987
      %v10114 = vadd.f32 %v9759, %v9992
      %v10115 = vadd.f32 %v9760, %v9997
      %v10116 = vadd.f32 %v9761, %v10002
      %v10117 = vadd.f32 %v9762, %v10007
      %v10118 = vadd.f32 %v9763, %v10012
      %v10119 = vadd.f32 %v9764, %v10017
      %v10120 = vadd.f32 %v9765, %v10022
      %v10121 = vadd.f32 %v9766, %v10027
      %v10122 = vadd.f32 %v9767, %v10032
      %v10123 = vadd.f32 %v9768, %v10037
      %v10124 = vadd.f32 %v9769, %v10042
      %v10125 = vadd.f32 %v9770, %v10047
      %v10126 = vadd.f32 %v9771, %v10052
      %v10127 = vadd.f32 %v9772, %v10057
      %v10128 = vadd.f32 %v9773, %v10062
      %v10129 = vadd.f32 %v9774, %v10067
      %v10130 = vadd.f32 %v9775, %v10072
      %v10131 = vadd.f32 %v9776, %v10077
      %v10132 = vadd.f32 %v9777, %v10082
      %v10133 = vadd.f32 %v9778, %v10087
      %v10134 = vadd.f32 %v9779, %v10092
      %v10135 = vadd.f32 %v9780, %v10097
      %v10136 = vadd.f32 %v9781, %v10102
      %v10137 = vmul.f32 %v9006, %v5251
      %v10138 = vmul.f32 %v9005, %v5256
      %v10139 = vmul.f32 %v9004, %v5261
      %v10140 = vmul.f32 %v9003, %v5266
      %v10141 = vmul.f32 %v9002, %v5271
      %v10142 = vmul.f32 %v9001, %v5276
      %v10143 = vmul.f32 %v9000, %v5281
      %v10144 = vmul.f32 %v8999, %v5286
      %v10145 = vmul.f32 %v8998, %v5291
      %v10146 = vmul.f32 %v8997, %v5296
      %v10147 = vmul.f32 %v8996, %v5301
      %v10148 = vmul.f32 %v8995, %v5306
      %v10149 = vmul.f32 %v8994, %v5311
      %v10150 = vmul.f32 %v8993, %v5316
      %v10151 = vmul.f32 %v8992, %v5321
      %v10152 = vmul.f32 %v8991, %v5326
      %v10153 = vmul.f32 %v8990, %v5331
      %v10154 = vmul.f32 %v8989, %v5336
      %v10155 = vmul.f32 %v8988, %v5341
      %v10156 = vmul.f32 %v8987, %v5346
      %v10157 = vmul.f32 %v8986, %v5351
      %v10158 = vmul.f32 %v8985, %v5356
      %v10159 = vmul.f32 %v8984, %v5361
      %v10160 = vmul.f32 %v8983, %v5366
      %v10161 = vmul.f32 %v8982, %v5371
      %v10162 = vmul.f32 %v8981, %v5376
      %v10163 = vmul.f32 %v8980, %v5381
      %v10164 = vmul.f32 %v8979, %v5386
      %v10165 = vmul.f32 %v8978, %v5391
      %v10166 = vmul.f32 %v8977, %v5396
      %v10167 = vmul.f32 %v8976, %v5401
      %v10168 = vmul.f32 %v9007, %v5406
      %s10169 = scalar_lea.vmem %s13, 40
      %v10170 = vld [vmem:[%s10169] sm:$0xff]
      %v10172 = vsel %vm3091, %v10137, 0
      %v10175 = vsel %vm3091, %v10138, 0
      %v10178 = vsel %vm3091, %v10139, 0
      %v10181 = vsel %vm3091, %v10140, 0
      %v10184 = vsel %vm3091, %v10141, 0
      %v10187 = vsel %vm3091, %v10142, 0
      %v10190 = vsel %vm3091, %v10143, 0
      %v10193 = vsel %vm3091, %v10144, 0
      %v10196 = vsel %vm3091, %v10145, 0
      %v10199 = vsel %vm3091, %v10146, 0
      %v10202 = vsel %vm3091, %v10147, 0
      %v10205 = vsel %vm3091, %v10148, 0
      %v10208 = vsel %vm3091, %v10149, 0
      %v10211 = vsel %vm3091, %v10150, 0
      %v10214 = vsel %vm3091, %v10151, 0
      %v10217 = vsel %vm3091, %v10152, 0
      %v10220 = vsel %vm3091, %v10153, 0
      %v10223 = vsel %vm3091, %v10154, 0
      %v10226 = vsel %vm3091, %v10155, 0
      %v10229 = vsel %vm3091, %v10156, 0
      %v10232 = vsel %vm3091, %v10157, 0
      %v10235 = vsel %vm3091, %v10158, 0
      %v10238 = vsel %vm3091, %v10159, 0
      %v10241 = vsel %vm3091, %v10160, 0
      %v10244 = vsel %vm3091, %v10161, 0
      %v10247 = vsel %vm3091, %v10162, 0
      %v10250 = vsel %vm3091, %v10163, 0
      %v10253 = vsel %vm3091, %v10164, 0
      %v10256 = vsel %vm3091, %v10165, 0
      %v10259 = vsel %vm3091, %v10166, 0
      %v10262 = vsel %vm3091, %v10167, 0
      %v10265 = vsel %vm3091, %v10168, 0
      %10267 = vmatprep.subr.mxu0 0.0
      %10268 = vmatpush1.msra.mxu0 %v10170
      %10269 = vmatprep.subr.mxu0 0.0
      %10270 = vmatpush1.msra.mxu0 0.0
      %10271 = vmatprep.subr.mxu0 0.0
      %10272 = vmatpush1.msra.mxu0 0.0
      %10273 = vmatprep.subr.mxu0 0.0
      %10274 = vmatpush1.msra.mxu0 0.0
      %10275 = vmatprep.subr.mxu0 0.0
      %10276 = vmatpush1.msra.mxu0 0.0
      %10277 = vmatprep.subr.mxu0 0.0
      %10278 = vmatpush1.msra.mxu0 0.0
      %10279 = vmatprep.subr.mxu0 0.0
      %10280 = vmatpush1.msra.mxu0 0.0
      %10281 = vmatprep.subr.mxu0 0.0
      %10282 = vmatpush1.msra.mxu0 0.0
      %10283 = vmatprep.subr.mxu0 0.0
      %10284 = vmatpush1.msra.mxu0 0.0
      %10285 = vmatprep.subr.mxu0 0.0
      %10286 = vmatpush1.msra.mxu0 0.0
      %10287 = vmatprep.subr.mxu0 0.0
      %10288 = vmatpush1.msra.mxu0 0.0
      %10289 = vmatprep.subr.mxu0 0.0
      %10290 = vmatpush1.msra.mxu0 0.0
      %10291 = vmatprep.subr.mxu0 0.0
      %10292 = vmatpush1.msra.mxu0 0.0
      %10293 = vmatprep.subr.mxu0 0.0
      %10294 = vmatpush1.msra.mxu0 0.0
      %10295 = vmatprep.subr.mxu0 0.0
      %10296 = vmatpush1.msra.mxu0 0.0
      %10297 = vmatprep.subr.mxu0 0.0
      %10298 = vmatpush1.msra.mxu0 0.0
      %10299 = vmatprep.subr.mxu0 0.0
      %10300 = vmatpush1.msra.mxu0 0.0
      %10301 = vmatprep.subr.mxu0 0.0
      %10302 = vmatpush1.msra.mxu0 0.0
      %10303 = vmatprep.subr.mxu0 0.0
      %10304 = vmatpush1.msra.mxu0 0.0
      %10305 = vmatprep.subr.mxu0 0.0
      %10306 = vmatpush1.msra.mxu0 0.0
      %10307 = vmatprep.subr.mxu0 0.0
      %10308 = vmatpush1.msra.mxu0 0.0
      %10309 = vmatprep.subr.mxu0 0.0
      %10310 = vmatpush1.msra.mxu0 0.0
      %10311 = vmatprep.subr.mxu0 0.0
      %10312 = vmatpush1.msra.mxu0 0.0
      %10313 = vmatprep.subr.mxu0 0.0
      %10314 = vmatpush1.msra.mxu0 0.0
      %10315 = vmatprep.subr.mxu0 0.0
      %10316 = vmatpush1.msra.mxu0 0.0
      %10317 = vmatprep.subr.mxu0 0.0
      %10318 = vmatpush1.msra.mxu0 0.0
      %10319 = vmatprep.subr.mxu0 0.0
      %10320 = vmatpush1.msra.mxu0 0.0
      %10321 = vmatprep.subr.mxu0 0.0
      %10322 = vmatpush1.msra.mxu0 0.0
      %10323 = vmatprep.subr.mxu0 0.0
      %10324 = vmatpush1.msra.mxu0 0.0
      %10325 = vmatprep.subr.mxu0 0.0
      %10326 = vmatpush1.msra.mxu0 0.0
      %10327 = vmatprep.subr.mxu0 0.0
      %10328 = vmatpush1.msra.mxu0 0.0
      %10329 = vmatprep.subr.mxu0 0.0
      %10330 = vmatpush1.msra.mxu0 0.0
      %10331 = vmatprep.mubr.f32.mxu0 0.0
      %10332 = vmatmul.mubr.f32.gmra.mrb[0].mxu0 %v10172
      %v10333 = vpop.f32.mrb[0].mxu0
      %v10334 = vadd.f32 0.0, %v10333
      %v10335 = vpop.f32.mrb[0].mxu0
      %10336 = vmatprep.mubr.f32.mxu0 0.0
      %10337 = vmatmul.mubr.f32.gmra.mrb[0].mxu0 %v10175
      %v10338 = vpop.f32.mrb[0].mxu0
      %v10339 = vadd.f32 0.0, %v10338
      %v10340 = vpop.f32.mrb[0].mxu0
      %10341 = vmatprep.mubr.f32.mxu0 0.0
      %10342 = vmatmul.mubr.f32.gmra.mrb[0].mxu0 %v10178
      %v10343 = vpop.f32.mrb[0].mxu0
      %v10344 = vadd.f32 0.0, %v10343
      %v10345 = vpop.f32.mrb[0].mxu0
      %10346 = vmatprep.mubr.f32.mxu0 0.0
      %10347 = vmatmul.mubr.f32.gmra.mrb[0].mxu0 %v10181
      %v10348 = vpop.f32.mrb[0].mxu0
      %v10349 = vadd.f32 0.0, %v10348
      %v10350 = vpop.f32.mrb[0].mxu0
      %10351 = vmatprep.mubr.f32.mxu0 0.0
      %10352 = vmatmul.mubr.f32.gmra.mrb[0].mxu0 %v10184
      %v10353 = vpop.f32.mrb[0].mxu0
      %v10354 = vadd.f32 0.0, %v10353
      %v10355 = vpop.f32.mrb[0].mxu0
      %10356 = vmatprep.mubr.f32.mxu0 0.0
      %10357 = vmatmul.mubr.f32.gmra.mrb[0].mxu0 %v10187
      %v10358 = vpop.f32.mrb[0].mxu0
      %v10359 = vadd.f32 0.0, %v10358
      %v10360 = vpop.f32.mrb[0].mxu0
      %10361 = vmatprep.mubr.f32.mxu0 0.0
      %10362 = vmatmul.mubr.f32.gmra.mrb[0].mxu0 %v10190
      %v10363 = vpop.f32.mrb[0].mxu0
      %v10364 = vadd.f32 0.0, %v10363
      %v10365 = vpop.f32.mrb[0].mxu0
      %10366 = vmatprep.mubr.f32.mxu0 0.0
      %10367 = vmatmul.mubr.f32.gmra.mrb[0].mxu0 %v10193
      %v10368 = vpop.f32.mrb[0].mxu0
      %v10369 = vadd.f32 0.0, %v10368
      %v10370 = vpop.f32.mrb[0].mxu0
      %10371 = vmatprep.mubr.f32.mxu0 0.0
      %10372 = vmatmul.mubr.f32.gmra.mrb[0].mxu0 %v10196
      %v10373 = vpop.f32.mrb[0].mxu0
      %v10374 = vadd.f32 0.0, %v10373
      %v10375 = vpop.f32.mrb[0].mxu0
      %10376 = vmatprep.mubr.f32.mxu0 0.0
      %10377 = vmatmul.mubr.f32.gmra.mrb[0].mxu0 %v10199
      %v10378 = vpop.f32.mrb[0].mxu0
      %v10379 = vadd.f32 0.0, %v10378
      %v10380 = vpop.f32.mrb[0].mxu0
      %10381 = vmatprep.mubr.f32.mxu0 0.0
      %10382 = vmatmul.mubr.f32.gmra.mrb[0].mxu0 %v10202
      %v10383 = vpop.f32.mrb[0].mxu0
      %v10384 = vadd.f32 0.0, %v10383
      %v10385 = vpop.f32.mrb[0].mxu0
      %10386 = vmatprep.mubr.f32.mxu0 0.0
      %10387 = vmatmul.mubr.f32.gmra.mrb[0].mxu0 %v10205
      %v10388 = vpop.f32.mrb[0].mxu0
      %v10389 = vadd.f32 0.0, %v10388
      %v10390 = vpop.f32.mrb[0].mxu0
      %10391 = vmatprep.mubr.f32.mxu0 0.0
      %10392 = vmatmul.mubr.f32.gmra.mrb[0].mxu0 %v10208
      %v10393 = vpop.f32.mrb[0].mxu0
      %v10394 = vadd.f32 0.0, %v10393
      %v10395 = vpop.f32.mrb[0].mxu0
      %10396 = vmatprep.mubr.f32.mxu0 0.0
      %10397 = vmatmul.mubr.f32.gmra.mrb[0].mxu0 %v10211
      %v10398 = vpop.f32.mrb[0].mxu0
      %v10399 = vadd.f32 0.0, %v10398
      %v10400 = vpop.f32.mrb[0].mxu0
      %10401 = vmatprep.mubr.f32.mxu0 0.0
      %10402 = vmatmul.mubr.f32.gmra.mrb[0].mxu0 %v10214
      %v10403 = vpop.f32.mrb[0].mxu0
      %v10404 = vadd.f32 0.0, %v10403
      %v10405 = vpop.f32.mrb[0].mxu0
      %10406 = vmatprep.mubr.f32.mxu0 0.0
      %10407 = vmatmul.mubr.f32.gmra.mrb[0].mxu0 %v10217
      %v10408 = vpop.f32.mrb[0].mxu0
      %v10409 = vadd.f32 0.0, %v10408
      %v10410 = vpop.f32.mrb[0].mxu0
      %10411 = vmatprep.mubr.f32.mxu0 0.0
      %10412 = vmatmul.mubr.f32.gmra.mrb[0].mxu0 %v10220
      %v10413 = vpop.f32.mrb[0].mxu0
      %v10414 = vadd.f32 0.0, %v10413
      %v10415 = vpop.f32.mrb[0].mxu0
      %10416 = vmatprep.mubr.f32.mxu0 0.0
      %10417 = vmatmul.mubr.f32.gmra.mrb[0].mxu0 %v10223
      %v10418 = vpop.f32.mrb[0].mxu0
      %v10419 = vadd.f32 0.0, %v10418
      %v10420 = vpop.f32.mrb[0].mxu0
      %10421 = vmatprep.mubr.f32.mxu0 0.0
      %10422 = vmatmul.mubr.f32.gmra.mrb[0].mxu0 %v10226
      %v10423 = vpop.f32.mrb[0].mxu0
      %v10424 = vadd.f32 0.0, %v10423
      %v10425 = vpop.f32.mrb[0].mxu0
      %10426 = vmatprep.mubr.f32.mxu0 0.0
      %10427 = vmatmul.mubr.f32.gmra.mrb[0].mxu0 %v10229
      %v10428 = vpop.f32.mrb[0].mxu0
      %v10429 = vadd.f32 0.0, %v10428
      %v10430 = vpop.f32.mrb[0].mxu0
      %10431 = vmatprep.mubr.f32.mxu0 0.0
      %10432 = vmatmul.mubr.f32.gmra.mrb[0].mxu0 %v10232
      %v10433 = vpop.f32.mrb[0].mxu0
      %v10434 = vadd.f32 0.0, %v10433
      %v10435 = vpop.f32.mrb[0].mxu0
      %10436 = vmatprep.mubr.f32.mxu0 0.0
      %10437 = vmatmul.mubr.f32.gmra.mrb[0].mxu0 %v10235
      %v10438 = vpop.f32.mrb[0].mxu0
      %v10439 = vadd.f32 0.0, %v10438
      %v10440 = vpop.f32.mrb[0].mxu0
      %10441 = vmatprep.mubr.f32.mxu0 0.0
      %10442 = vmatmul.mubr.f32.gmra.mrb[0].mxu0 %v10238
      %v10443 = vpop.f32.mrb[0].mxu0
      %v10444 = vadd.f32 0.0, %v10443
      %v10445 = vpop.f32.mrb[0].mxu0
      %10446 = vmatprep.mubr.f32.mxu0 0.0
      %10447 = vmatmul.mubr.f32.gmra.mrb[0].mxu0 %v10241
      %v10448 = vpop.f32.mrb[0].mxu0
      %v10449 = vadd.f32 0.0, %v10448
      %v10450 = vpop.f32.mrb[0].mxu0
      %10451 = vmatprep.mubr.f32.mxu0 0.0
      %10452 = vmatmul.mubr.f32.gmra.mrb[0].mxu0 %v10244
      %v10453 = vpop.f32.mrb[0].mxu0
      %v10454 = vadd.f32 0.0, %v10453
      %v10455 = vpop.f32.mrb[0].mxu0
      %10456 = vmatprep.mubr.f32.mxu0 0.0
      %10457 = vmatmul.mubr.f32.gmra.mrb[0].mxu0 %v10247
      %v10458 = vpop.f32.mrb[0].mxu0
      %v10459 = vadd.f32 0.0, %v10458
      %v10460 = vpop.f32.mrb[0].mxu0
      %10461 = vmatprep.mubr.f32.mxu0 0.0
      %10462 = vmatmul.mubr.f32.gmra.mrb[0].mxu0 %v10250
      %v10463 = vpop.f32.mrb[0].mxu0
      %v10464 = vadd.f32 0.0, %v10463
      %v10465 = vpop.f32.mrb[0].mxu0
      %10466 = vmatprep.mubr.f32.mxu0 0.0
      %10467 = vmatmul.mubr.f32.gmra.mrb[0].mxu0 %v10253
      %v10468 = vpop.f32.mrb[0].mxu0
      %v10469 = vadd.f32 0.0, %v10468
      %v10470 = vpop.f32.mrb[0].mxu0
      %10471 = vmatprep.mubr.f32.mxu0 0.0
      %10472 = vmatmul.mubr.f32.gmra.mrb[0].mxu0 %v10256
      %v10473 = vpop.f32.mrb[0].mxu0
      %v10474 = vadd.f32 0.0, %v10473
      %v10475 = vpop.f32.mrb[0].mxu0
      %10476 = vmatprep.mubr.f32.mxu0 0.0
      %10477 = vmatmul.mubr.f32.gmra.mrb[0].mxu0 %v10259
      %v10478 = vpop.f32.mrb[0].mxu0
      %v10479 = vadd.f32 0.0, %v10478
      %v10480 = vpop.f32.mrb[0].mxu0
      %10481 = vmatprep.mubr.f32.mxu0 0.0
      %10482 = vmatmul.mubr.f32.gmra.mrb[0].mxu0 %v10262
      %v10483 = vpop.f32.mrb[0].mxu0
      %v10484 = vadd.f32 0.0, %v10483
      %v10485 = vpop.f32.mrb[0].mxu0
      %10486 = vmatprep.mubr.f32.mxu0 0.0
      %10487 = vmatmul.mubr.f32.gmra.mrb[0].mxu0 %v10265
      %v10488 = vpop.f32.mrb[0].mxu0
      %v10489 = vadd.f32 0.0, %v10488
      %v10490 = vpop.f32.mrb[0].mxu0
      %10491 = vdwg.mxu0
      %v10492 = vadd.f32 %v10105, %v10334
      %v10493 = vadd.f32 %v10106, %v10339
      %v10494 = vadd.f32 %v10107, %v10344
      %v10495 = vadd.f32 %v10108, %v10349
      %v10496 = vadd.f32 %v10109, %v10354
      %v10497 = vadd.f32 %v10110, %v10359
      %v10498 = vadd.f32 %v10111, %v10364
      %v10499 = vadd.f32 %v10112, %v10369
      %v10500 = vadd.f32 %v10113, %v10374
      %v10501 = vadd.f32 %v10114, %v10379
      %v10502 = vadd.f32 %v10115, %v10384
      %v10503 = vadd.f32 %v10116, %v10389
      %v10504 = vadd.f32 %v10117, %v10394
      %v10505 = vadd.f32 %v10118, %v10399
      %v10506 = vadd.f32 %v10119, %v10404
      %v10507 = vadd.f32 %v10120, %v10409
      %v10508 = vadd.f32 %v10121, %v10414
      %v10509 = vadd.f32 %v10122, %v10419
      %v10510 = vadd.f32 %v10123, %v10424
      %v10511 = vadd.f32 %v10124, %v10429
      %v10512 = vadd.f32 %v10125, %v10434
      %v10513 = vadd.f32 %v10126, %v10439
      %v10514 = vadd.f32 %v10127, %v10444
      %v10515 = vadd.f32 %v10128, %v10449
      %v10516 = vadd.f32 %v10129, %v10454
      %v10517 = vadd.f32 %v10130, %v10459
      %v10518 = vadd.f32 %v10131, %v10464
      %v10519 = vadd.f32 %v10132, %v10469
      %v10520 = vadd.f32 %v10133, %v10474
      %v10521 = vadd.f32 %v10134, %v10479
      %v10522 = vadd.f32 %v10135, %v10484
      %v10523 = vadd.f32 %v10136, %v10489
      %v10524 = vmul.f32 %v8232, %v5798
      %v10525 = vmul.f32 %v8231, %v5803
      %v10526 = vmul.f32 %v8230, %v5808
      %v10527 = vmul.f32 %v8229, %v5813
      %v10528 = vmul.f32 %v8228, %v5818
      %v10529 = vmul.f32 %v8227, %v5823
      %v10530 = vmul.f32 %v8226, %v5828
      %v10531 = vmul.f32 %v8225, %v5833
      %v10532 = vmul.f32 %v8224, %v5838
      %v10533 = vmul.f32 %v8223, %v5843
      %v10534 = vmul.f32 %v8222, %v5848
      %v10535 = vmul.f32 %v8221, %v5853
      %v10536 = vmul.f32 %v8220, %v5858
      %v10537 = vmul.f32 %v8219, %v5863
      %v10538 = vmul.f32 %v8218, %v5868
      %v10539 = vmul.f32 %v8217, %v5873
      %v10540 = vmul.f32 %v8216, %v5878
      %v10541 = vmul.f32 %v8215, %v5883
      %v10542 = vmul.f32 %v8214, %v5888
      %v10543 = vmul.f32 %v8213, %v5893
      %v10544 = vmul.f32 %v8212, %v5898
      %v10545 = vmul.f32 %v8211, %v5903
      %v10546 = vmul.f32 %v8210, %v5908
      %v10547 = vmul.f32 %v8209, %v5913
      %v10548 = vmul.f32 %v8208, %v5918
      %v10549 = vmul.f32 %v8207, %v5923
      %v10550 = vmul.f32 %v8206, %v5928
      %v10551 = vmul.f32 %v8205, %v5933
      %v10552 = vmul.f32 %v8204, %v5938
      %v10553 = vmul.f32 %v8203, %v5943
      %v10554 = vmul.f32 %v8234, %v5948
      %v10555 = vmul.f32 %v8233, %v5953
      %s10556 = scalar_lea.vmem %s13, 48
      %v10557 = vld [vmem:[%s10556] sm:$0xff]
      %v10559 = vsel %vm3091, %v10524, 0
      %v10562 = vsel %vm3091, %v10525, 0
      %v10565 = vsel %vm3091, %v10526, 0
      %v10568 = vsel %vm3091, %v10527, 0
      %v10571 = vsel %vm3091, %v10528, 0
      %v10574 = vsel %vm3091, %v10529, 0
      %v10577 = vsel %vm3091, %v10530, 0
      %v10580 = vsel %vm3091, %v10531, 0
      %v10583 = vsel %vm3091, %v10532, 0
      %v10586 = vsel %vm3091, %v10533, 0
      %v10589 = vsel %vm3091, %v10534, 0
      %v10592 = vsel %vm3091, %v10535, 0
      %v10595 = vsel %vm3091, %v10536, 0
      %v10598 = vsel %vm3091, %v10537, 0
      %v10601 = vsel %vm3091, %v10538, 0
      %v10604 = vsel %vm3091, %v10539, 0
      %v10607 = vsel %vm3091, %v10540, 0
      %v10610 = vsel %vm3091, %v10541, 0
      %v10613 = vsel %vm3091, %v10542, 0
      %v10616 = vsel %vm3091, %v10543, 0
      %v10619 = vsel %vm3091, %v10544, 0
      %v10622 = vsel %vm3091, %v10545, 0
      %v10625 = vsel %vm3091, %v10546, 0
      %v10628 = vsel %vm3091, %v10547, 0
      %v10631 = vsel %vm3091, %v10548, 0
      %v10634 = vsel %vm3091, %v10549, 0
      %v10637 = vsel %vm3091, %v10550, 0
      %v10640 = vsel %vm3091, %v10551, 0
      %v10643 = vsel %vm3091, %v10552, 0
      %v10646 = vsel %vm3091, %v10553, 0
      %v10649 = vsel %vm3091, %v10554, 0
      %v10652 = vsel %vm3091, %v10555, 0
      %10654 = vmatprep.subr.mxu0 0.0
      %10655 = vmatpush1.msra.mxu0 %v10557
      %10656 = vmatprep.subr.mxu0 0.0
      %10657 = vmatpush1.msra.mxu0 0.0
      %10658 = vmatprep.subr.mxu0 0.0
      %10659 = vmatpush1.msra.mxu0 0.0
      %10660 = vmatprep.subr.mxu0 0.0
      %10661 = vmatpush1.msra.mxu0 0.0
      %10662 = vmatprep.subr.mxu0 0.0
      %10663 = vmatpush1.msra.mxu0 0.0
      %10664 = vmatprep.subr.mxu0 0.0
      %10665 = vmatpush1.msra.mxu0 0.0
      %10666 = vmatprep.subr.mxu0 0.0
      %10667 = vmatpush1.msra.mxu0 0.0
      %10668 = vmatprep.subr.mxu0 0.0
      %10669 = vmatpush1.msra.mxu0 0.0
      %10670 = vmatprep.subr.mxu0 0.0
      %10671 = vmatpush1.msra.mxu0 0.0
      %10672 = vmatprep.subr.mxu0 0.0
      %10673 = vmatpush1.msra.mxu0 0.0
      %10674 = vmatprep.subr.mxu0 0.0
      %10675 = vmatpush1.msra.mxu0 0.0
      %10676 = vmatprep.subr.mxu0 0.0
      %10677 = vmatpush1.msra.mxu0 0.0
      %10678 = vmatprep.subr.mxu0 0.0
      %10679 = vmatpush1.msra.mxu0 0.0
      %10680 = vmatprep.subr.mxu0 0.0
      %10681 = vmatpush1.msra.mxu0 0.0
      %10682 = vmatprep.subr.mxu0 0.0
      %10683 = vmatpush1.msra.mxu0 0.0
      %10684 = vmatprep.subr.mxu0 0.0
      %10685 = vmatpush1.msra.mxu0 0.0
      %10686 = vmatprep.subr.mxu0 0.0
      %10687 = vmatpush1.msra.mxu0 0.0
      %10688 = vmatprep.subr.mxu0 0.0
      %10689 = vmatpush1.msra.mxu0 0.0
      %10690 = vmatprep.subr.mxu0 0.0
      %10691 = vmatpush1.msra.mxu0 0.0
      %10692 = vmatprep.subr.mxu0 0.0
      %10693 = vmatpush1.msra.mxu0 0.0
      %10694 = vmatprep.subr.mxu0 0.0
      %10695 = vmatpush1.msra.mxu0 0.0
      %10696 = vmatprep.subr.mxu0 0.0
      %10697 = vmatpush1.msra.mxu0 0.0
      %10698 = vmatprep.subr.mxu0 0.0
      %10699 = vmatpush1.msra.mxu0 0.0
      %10700 = vmatprep.subr.mxu0 0.0
      %10701 = vmatpush1.msra.mxu0 0.0
      %10702 = vmatprep.subr.mxu0 0.0
      %10703 = vmatpush1.msra.mxu0 0.0
      %10704 = vmatprep.subr.mxu0 0.0
      %10705 = vmatpush1.msra.mxu0 0.0
      %10706 = vmatprep.subr.mxu0 0.0
      %10707 = vmatpush1.msra.mxu0 0.0
      %10708 = vmatprep.subr.mxu0 0.0
      %10709 = vmatpush1.msra.mxu0 0.0
      %10710 = vmatprep.subr.mxu0 0.0
      %10711 = vmatpush1.msra.mxu0 0.0
      %10712 = vmatprep.subr.mxu0 0.0
      %10713 = vmatpush1.msra.mxu0 0.0
      %10714 = vmatprep.subr.mxu0 0.0
      %10715 = vmatpush1.msra.mxu0 0.0
      %10716 = vmatprep.subr.mxu0 0.0
      %10717 = vmatpush1.msra.mxu0 0.0
      %10718 = vmatprep.mubr.f32.mxu0 0.0
      %10719 = vmatmul.mubr.f32.gmra.mrb[0].mxu0 %v10559
      %v10720 = vpop.f32.mrb[0].mxu0
      %v10721 = vadd.f32 0.0, %v10720
      %v10722 = vpop.f32.mrb[0].mxu0
      %10723 = vmatprep.mubr.f32.mxu0 0.0
      %10724 = vmatmul.mubr.f32.gmra.mrb[0].mxu0 %v10562
      %v10725 = vpop.f32.mrb[0].mxu0
      %v10726 = vadd.f32 0.0, %v10725
      %v10727 = vpop.f32.mrb[0].mxu0
      %10728 = vmatprep.mubr.f32.mxu0 0.0
      %10729 = vmatmul.mubr.f32.gmra.mrb[0].mxu0 %v10565
      %v10730 = vpop.f32.mrb[0].mxu0
      %v10731 = vadd.f32 0.0, %v10730
      %v10732 = vpop.f32.mrb[0].mxu0
      %10733 = vmatprep.mubr.f32.mxu0 0.0
      %10734 = vmatmul.mubr.f32.gmra.mrb[0].mxu0 %v10568
      %v10735 = vpop.f32.mrb[0].mxu0
      %v10736 = vadd.f32 0.0, %v10735
      %v10737 = vpop.f32.mrb[0].mxu0
      %10738 = vmatprep.mubr.f32.mxu0 0.0
      %10739 = vmatmul.mubr.f32.gmra.mrb[0].mxu0 %v10571
      %v10740 = vpop.f32.mrb[0].mxu0
      %v10741 = vadd.f32 0.0, %v10740
      %v10742 = vpop.f32.mrb[0].mxu0
      %10743 = vmatprep.mubr.f32.mxu0 0.0
      %10744 = vmatmul.mubr.f32.gmra.mrb[0].mxu0 %v10574
      %v10745 = vpop.f32.mrb[0].mxu0
      %v10746 = vadd.f32 0.0, %v10745
      %v10747 = vpop.f32.mrb[0].mxu0
      %10748 = vmatprep.mubr.f32.mxu0 0.0
      %10749 = vmatmul.mubr.f32.gmra.mrb[0].mxu0 %v10577
      %v10750 = vpop.f32.mrb[0].mxu0
      %v10751 = vadd.f32 0.0, %v10750
      %v10752 = vpop.f32.mrb[0].mxu0
      %10753 = vmatprep.mubr.f32.mxu0 0.0
      %10754 = vmatmul.mubr.f32.gmra.mrb[0].mxu0 %v10580
      %v10755 = vpop.f32.mrb[0].mxu0
      %v10756 = vadd.f32 0.0, %v10755
      %v10757 = vpop.f32.mrb[0].mxu0
      %10758 = vmatprep.mubr.f32.mxu0 0.0
      %10759 = vmatmul.mubr.f32.gmra.mrb[0].mxu0 %v10583
      %v10760 = vpop.f32.mrb[0].mxu0
      %v10761 = vadd.f32 0.0, %v10760
      %v10762 = vpop.f32.mrb[0].mxu0
      %10763 = vmatprep.mubr.f32.mxu0 0.0
      %10764 = vmatmul.mubr.f32.gmra.mrb[0].mxu0 %v10586
      %v10765 = vpop.f32.mrb[0].mxu0
      %v10766 = vadd.f32 0.0, %v10765
      %v10767 = vpop.f32.mrb[0].mxu0
      %10768 = vmatprep.mubr.f32.mxu0 0.0
      %10769 = vmatmul.mubr.f32.gmra.mrb[0].mxu0 %v10589
      %v10770 = vpop.f32.mrb[0].mxu0
      %v10771 = vadd.f32 0.0, %v10770
      %v10772 = vpop.f32.mrb[0].mxu0
      %10773 = vmatprep.mubr.f32.mxu0 0.0
      %10774 = vmatmul.mubr.f32.gmra.mrb[0].mxu0 %v10592
      %v10775 = vpop.f32.mrb[0].mxu0
      %v10776 = vadd.f32 0.0, %v10775
      %v10777 = vpop.f32.mrb[0].mxu0
      %10778 = vmatprep.mubr.f32.mxu0 0.0
      %10779 = vmatmul.mubr.f32.gmra.mrb[0].mxu0 %v10595
      %v10780 = vpop.f32.mrb[0].mxu0
      %v10781 = vadd.f32 0.0, %v10780
      %v10782 = vpop.f32.mrb[0].mxu0
      %10783 = vmatprep.mubr.f32.mxu0 0.0
      %10784 = vmatmul.mubr.f32.gmra.mrb[0].mxu0 %v10598
      %v10785 = vpop.f32.mrb[0].mxu0
      %v10786 = vadd.f32 0.0, %v10785
      %v10787 = vpop.f32.mrb[0].mxu0
      %10788 = vmatprep.mubr.f32.mxu0 0.0
      %10789 = vmatmul.mubr.f32.gmra.mrb[0].mxu0 %v10601
      %v10790 = vpop.f32.mrb[0].mxu0
      %v10791 = vadd.f32 0.0, %v10790
      %v10792 = vpop.f32.mrb[0].mxu0
      %10793 = vmatprep.mubr.f32.mxu0 0.0
      %10794 = vmatmul.mubr.f32.gmra.mrb[0].mxu0 %v10604
      %v10795 = vpop.f32.mrb[0].mxu0
      %v10796 = vadd.f32 0.0, %v10795
      %v10797 = vpop.f32.mrb[0].mxu0
      %10798 = vmatprep.mubr.f32.mxu0 0.0
      %10799 = vmatmul.mubr.f32.gmra.mrb[0].mxu0 %v10607
      %v10800 = vpop.f32.mrb[0].mxu0
      %v10801 = vadd.f32 0.0, %v10800
      %v10802 = vpop.f32.mrb[0].mxu0
      %10803 = vmatprep.mubr.f32.mxu0 0.0
      %10804 = vmatmul.mubr.f32.gmra.mrb[0].mxu0 %v10610
      %v10805 = vpop.f32.mrb[0].mxu0
      %v10806 = vadd.f32 0.0, %v10805
      %v10807 = vpop.f32.mrb[0].mxu0
      %10808 = vmatprep.mubr.f32.mxu0 0.0
      %10809 = vmatmul.mubr.f32.gmra.mrb[0].mxu0 %v10613
      %v10810 = vpop.f32.mrb[0].mxu0
      %v10811 = vadd.f32 0.0, %v10810
      %v10812 = vpop.f32.mrb[0].mxu0
      %10813 = vmatprep.mubr.f32.mxu0 0.0
      %10814 = vmatmul.mubr.f32.gmra.mrb[0].mxu0 %v10616
      %v10815 = vpop.f32.mrb[0].mxu0
      %v10816 = vadd.f32 0.0, %v10815
      %v10817 = vpop.f32.mrb[0].mxu0
      %10818 = vmatprep.mubr.f32.mxu0 0.0
      %10819 = vmatmul.mubr.f32.gmra.mrb[0].mxu0 %v10619
      %v10820 = vpop.f32.mrb[0].mxu0
      %v10821 = vadd.f32 0.0, %v10820
      %v10822 = vpop.f32.mrb[0].mxu0
      %10823 = vmatprep.mubr.f32.mxu0 0.0
      %10824 = vmatmul.mubr.f32.gmra.mrb[0].mxu0 %v10622
      %v10825 = vpop.f32.mrb[0].mxu0
      %v10826 = vadd.f32 0.0, %v10825
      %v10827 = vpop.f32.mrb[0].mxu0
      %10828 = vmatprep.mubr.f32.mxu0 0.0
      %10829 = vmatmul.mubr.f32.gmra.mrb[0].mxu0 %v10625
      %v10830 = vpop.f32.mrb[0].mxu0
      %v10831 = vadd.f32 0.0, %v10830
      %v10832 = vpop.f32.mrb[0].mxu0
      %10833 = vmatprep.mubr.f32.mxu0 0.0
      %10834 = vmatmul.mubr.f32.gmra.mrb[0].mxu0 %v10628
      %v10835 = vpop.f32.mrb[0].mxu0
      %v10836 = vadd.f32 0.0, %v10835
      %v10837 = vpop.f32.mrb[0].mxu0
      %10838 = vmatprep.mubr.f32.mxu0 0.0
      %10839 = vmatmul.mubr.f32.gmra.mrb[0].mxu0 %v10631
      %v10840 = vpop.f32.mrb[0].mxu0
      %v10841 = vadd.f32 0.0, %v10840
      %v10842 = vpop.f32.mrb[0].mxu0
      %10843 = vmatprep.mubr.f32.mxu0 0.0
      %10844 = vmatmul.mubr.f32.gmra.mrb[0].mxu0 %v10634
      %v10845 = vpop.f32.mrb[0].mxu0
      %v10846 = vadd.f32 0.0, %v10845
      %v10847 = vpop.f32.mrb[0].mxu0
      %10848 = vmatprep.mubr.f32.mxu0 0.0
      %10849 = vmatmul.mubr.f32.gmra.mrb[0].mxu0 %v10637
      %v10850 = vpop.f32.mrb[0].mxu0
      %v10851 = vadd.f32 0.0, %v10850
      %v10852 = vpop.f32.mrb[0].mxu0
      %10853 = vmatprep.mubr.f32.mxu0 0.0
      %10854 = vmatmul.mubr.f32.gmra.mrb[0].mxu0 %v10640
      %v10855 = vpop.f32.mrb[0].mxu0
      %v10856 = vadd.f32 0.0, %v10855
      %v10857 = vpop.f32.mrb[0].mxu0
      %10858 = vmatprep.mubr.f32.mxu0 0.0
      %10859 = vmatmul.mubr.f32.gmra.mrb[0].mxu0 %v10643
      %v10860 = vpop.f32.mrb[0].mxu0
      %v10861 = vadd.f32 0.0, %v10860
      %v10862 = vpop.f32.mrb[0].mxu0
      %10863 = vmatprep.mubr.f32.mxu0 0.0
      %10864 = vmatmul.mubr.f32.gmra.mrb[0].mxu0 %v10646
      %v10865 = vpop.f32.mrb[0].mxu0
      %v10866 = vadd.f32 0.0, %v10865
      %v10867 = vpop.f32.mrb[0].mxu0
      %10868 = vmatprep.mubr.f32.mxu0 0.0
      %10869 = vmatmul.mubr.f32.gmra.mrb[0].mxu0 %v10649
      %v10870 = vpop.f32.mrb[0].mxu0
      %v10871 = vadd.f32 0.0, %v10870
      %v10872 = vpop.f32.mrb[0].mxu0
      %10873 = vmatprep.mubr.f32.mxu0 0.0
      %10874 = vmatmul.mubr.f32.gmra.mrb[0].mxu0 %v10652
      %v10875 = vpop.f32.mrb[0].mxu0
      %v10876 = vadd.f32 0.0, %v10875
      %v10877 = vpop.f32.mrb[0].mxu0
      %10878 = vdwg.mxu0
      %v10879 = vadd.f32 %v10492, %v10721
      %v10880 = vadd.f32 %v10493, %v10726
      %v10881 = vadd.f32 %v10494, %v10731
      %v10882 = vadd.f32 %v10495, %v10736
      %v10883 = vadd.f32 %v10496, %v10741
      %v10884 = vadd.f32 %v10497, %v10746
      %v10885 = vadd.f32 %v10498, %v10751
      %v10886 = vadd.f32 %v10499, %v10756
      %v10887 = vadd.f32 %v10500, %v10761
      %v10888 = vadd.f32 %v10501, %v10766
      %v10889 = vadd.f32 %v10502, %v10771
      %v10890 = vadd.f32 %v10503, %v10776
      %v10891 = vadd.f32 %v10504, %v10781
      %v10892 = vadd.f32 %v10505, %v10786
      %v10893 = vadd.f32 %v10506, %v10791
      %v10894 = vadd.f32 %v10507, %v10796
      %v10895 = vadd.f32 %v10508, %v10801
      %v10896 = vadd.f32 %v10509, %v10806
      %v10897 = vadd.f32 %v10510, %v10811
      %v10898 = vadd.f32 %v10511, %v10816
      %v10899 = vadd.f32 %v10512, %v10821
      %v10900 = vadd.f32 %v10513, %v10826
      %v10901 = vadd.f32 %v10514, %v10831
      %v10902 = vadd.f32 %v10515, %v10836
      %v10903 = vadd.f32 %v10516, %v10841
      %v10904 = vadd.f32 %v10517, %v10846
      %v10905 = vadd.f32 %v10518, %v10851
      %v10906 = vadd.f32 %v10519, %v10856
      %v10907 = vadd.f32 %v10520, %v10861
      %v10908 = vadd.f32 %v10521, %v10866
      %v10909 = vadd.f32 %v10522, %v10871
      %v10910 = vadd.f32 %v10523, %v10876
      %v10911 = vmul.f32 %v8141, %v6345
      %v10912 = vmul.f32 %v8142, %v6350
      %v10913 = vmul.f32 %v8143, %v6355
      %v10914 = vmul.f32 %v8144, %v6360
      %v10915 = vmul.f32 %v8145, %v6365
      %v10916 = vmul.f32 %v8146, %v6370
      %v10917 = vmul.f32 %v8147, %v6375
      %v10918 = vmul.f32 %v8148, %v6380
      %v10919 = vmul.f32 %v8149, %v6385
      %v10920 = vmul.f32 %v8150, %v6390
      %v10921 = vmul.f32 %v8151, %v6395
      %v10922 = vmul.f32 %v8152, %v6400
      %v10923 = vmul.f32 %v8153, %v6405
      %v10924 = vmul.f32 %v8154, %v6410
      %v10925 = vmul.f32 %v8155, %v6415
      %v10926 = vmul.f32 %v8156, %v6420
      %v10927 = vmul.f32 %v8157, %v6425
      %v10928 = vmul.f32 %v8158, %v6430
      %v10929 = vmul.f32 %v8159, %v6435
      %v10930 = vmul.f32 %v8160, %v6440
      %v10931 = vmul.f32 %v8161, %v6445
      %v10932 = vmul.f32 %v8162, %v6450
      %v10933 = vmul.f32 %v8163, %v6455
      %v10934 = vmul.f32 %v8164, %v6460
      %v10935 = vmul.f32 %v8165, %v6465
      %v10936 = vmul.f32 %v8166, %v6470
      %v10937 = vmul.f32 %v8167, %v6475
      %v10938 = vmul.f32 %v8168, %v6480
      %v10939 = vmul.f32 %v8169, %v6485
      %v10940 = vmul.f32 %v8170, %v6490
      %v10941 = vmul.f32 %v8139, %v6495
      %v10942 = vmul.f32 %v8140, %v6500
      %s10943 = scalar_lea.vmem %s13, 56
      %v10944 = vld [vmem:[%s10943] sm:$0xff]
      %v10946 = vsel %vm3091, %v10911, 0
      %v10949 = vsel %vm3091, %v10912, 0
      %v10952 = vsel %vm3091, %v10913, 0
      %v10955 = vsel %vm3091, %v10914, 0
      %v10958 = vsel %vm3091, %v10915, 0
      %v10961 = vsel %vm3091, %v10916, 0
      %v10964 = vsel %vm3091, %v10917, 0
      %v10967 = vsel %vm3091, %v10918, 0
      %v10970 = vsel %vm3091, %v10919, 0
      %v10973 = vsel %vm3091, %v10920, 0
      %v10976 = vsel %vm3091, %v10921, 0
      %v10979 = vsel %vm3091, %v10922, 0
      %v10982 = vsel %vm3091, %v10923, 0
      %v10985 = vsel %vm3091, %v10924, 0
      %v10988 = vsel %vm3091, %v10925, 0
      %v10991 = vsel %vm3091, %v10926, 0
      %v10994 = vsel %vm3091, %v10927, 0
      %v10997 = vsel %vm3091, %v10928, 0
      %v11000 = vsel %vm3091, %v10929, 0
      %v11003 = vsel %vm3091, %v10930, 0
      %v11006 = vsel %vm3091, %v10931, 0
      %v11009 = vsel %vm3091, %v10932, 0
      %v11012 = vsel %vm3091, %v10933, 0
      %v11015 = vsel %vm3091, %v10934, 0
      %v11018 = vsel %vm3091, %v10935, 0
      %v11021 = vsel %vm3091, %v10936, 0
      %v11024 = vsel %vm3091, %v10937, 0
      %v11027 = vsel %vm3091, %v10938, 0
      %v11030 = vsel %vm3091, %v10939, 0
      %v11033 = vsel %vm3091, %v10940, 0
      %v11036 = vsel %vm3091, %v10941, 0
      %v11039 = vsel %vm3091, %v10942, 0
      %11041 = vmatprep.subr.mxu0 0.0
      %11042 = vmatpush1.msra.mxu0 %v10944
      %11043 = vmatprep.subr.mxu0 0.0
      %11044 = vmatpush1.msra.mxu0 0.0
      %11045 = vmatprep.subr.mxu0 0.0
      %11046 = vmatpush1.msra.mxu0 0.0
      %11047 = vmatprep.subr.mxu0 0.0
      %11048 = vmatpush1.msra.mxu0 0.0
      %11049 = vmatprep.subr.mxu0 0.0
      %11050 = vmatpush1.msra.mxu0 0.0
      %11051 = vmatprep.subr.mxu0 0.0
      %11052 = vmatpush1.msra.mxu0 0.0
      %11053 = vmatprep.subr.mxu0 0.0
      %11054 = vmatpush1.msra.mxu0 0.0
      %11055 = vmatprep.subr.mxu0 0.0
      %11056 = vmatpush1.msra.mxu0 0.0
      %11057 = vmatprep.subr.mxu0 0.0
      %11058 = vmatpush1.msra.mxu0 0.0
      %11059 = vmatprep.subr.mxu0 0.0
      %11060 = vmatpush1.msra.mxu0 0.0
      %11061 = vmatprep.subr.mxu0 0.0
      %11062 = vmatpush1.msra.mxu0 0.0
      %11063 = vmatprep.subr.mxu0 0.0
      %11064 = vmatpush1.msra.mxu0 0.0
      %11065 = vmatprep.subr.mxu0 0.0
      %11066 = vmatpush1.msra.mxu0 0.0
      %11067 = vmatprep.subr.mxu0 0.0
      %11068 = vmatpush1.msra.mxu0 0.0
      %11069 = vmatprep.subr.mxu0 0.0
      %11070 = vmatpush1.msra.mxu0 0.0
      %11071 = vmatprep.subr.mxu0 0.0
      %11072 = vmatpush1.msra.mxu0 0.0
      %11073 = vmatprep.subr.mxu0 0.0
      %11074 = vmatpush1.msra.mxu0 0.0
      %11075 = vmatprep.subr.mxu0 0.0
      %11076 = vmatpush1.msra.mxu0 0.0
      %11077 = vmatprep.subr.mxu0 0.0
      %11078 = vmatpush1.msra.mxu0 0.0
      %11079 = vmatprep.subr.mxu0 0.0
      %11080 = vmatpush1.msra.mxu0 0.0
      %11081 = vmatprep.subr.mxu0 0.0
      %11082 = vmatpush1.msra.mxu0 0.0
      %11083 = vmatprep.subr.mxu0 0.0
      %11084 = vmatpush1.msra.mxu0 0.0
      %11085 = vmatprep.subr.mxu0 0.0
      %11086 = vmatpush1.msra.mxu0 0.0
      %11087 = vmatprep.subr.mxu0 0.0
      %11088 = vmatpush1.msra.mxu0 0.0
      %11089 = vmatprep.subr.mxu0 0.0
      %11090 = vmatpush1.msra.mxu0 0.0
      %11091 = vmatprep.subr.mxu0 0.0
      %11092 = vmatpush1.msra.mxu0 0.0
      %11093 = vmatprep.subr.mxu0 0.0
      %11094 = vmatpush1.msra.mxu0 0.0
      %11095 = vmatprep.subr.mxu0 0.0
      %11096 = vmatpush1.msra.mxu0 0.0
      %11097 = vmatprep.subr.mxu0 0.0
      %11098 = vmatpush1.msra.mxu0 0.0
      %11099 = vmatprep.subr.mxu0 0.0
      %11100 = vmatpush1.msra.mxu0 0.0
      %11101 = vmatprep.subr.mxu0 0.0
      %11102 = vmatpush1.msra.mxu0 0.0
      %11103 = vmatprep.subr.mxu0 0.0
      %11104 = vmatpush1.msra.mxu0 0.0
      %11105 = vmatprep.mubr.f32.mxu0 0.0
      %11106 = vmatmul.mubr.f32.gmra.mrb[0].mxu0 %v10946
      %v11107 = vpop.f32.mrb[0].mxu0
      %v11108 = vadd.f32 0.0, %v11107
      %v11109 = vpop.f32.mrb[0].mxu0
      %11110 = vmatprep.mubr.f32.mxu0 0.0
      %11111 = vmatmul.mubr.f32.gmra.mrb[0].mxu0 %v10949
      %v11112 = vpop.f32.mrb[0].mxu0
      %v11113 = vadd.f32 0.0, %v11112
      %v11114 = vpop.f32.mrb[0].mxu0
      %11115 = vmatprep.mubr.f32.mxu0 0.0
      %11116 = vmatmul.mubr.f32.gmra.mrb[0].mxu0 %v10952
      %v11117 = vpop.f32.mrb[0].mxu0
      %v11118 = vadd.f32 0.0, %v11117
      %v11119 = vpop.f32.mrb[0].mxu0
      %11120 = vmatprep.mubr.f32.mxu0 0.0
      %11121 = vmatmul.mubr.f32.gmra.mrb[0].mxu0 %v10955
      %v11122 = vpop.f32.mrb[0].mxu0
      %v11123 = vadd.f32 0.0, %v11122
      %v11124 = vpop.f32.mrb[0].mxu0
      %11125 = vmatprep.mubr.f32.mxu0 0.0
      %11126 = vmatmul.mubr.f32.gmra.mrb[0].mxu0 %v10958
      %v11127 = vpop.f32.mrb[0].mxu0
      %v11128 = vadd.f32 0.0, %v11127
      %v11129 = vpop.f32.mrb[0].mxu0
      %11130 = vmatprep.mubr.f32.mxu0 0.0
      %11131 = vmatmul.mubr.f32.gmra.mrb[0].mxu0 %v10961
      %v11132 = vpop.f32.mrb[0].mxu0
      %v11133 = vadd.f32 0.0, %v11132
      %v11134 = vpop.f32.mrb[0].mxu0
      %11135 = vmatprep.mubr.f32.mxu0 0.0
      %11136 = vmatmul.mubr.f32.gmra.mrb[0].mxu0 %v10964
      %v11137 = vpop.f32.mrb[0].mxu0
      %v11138 = vadd.f32 0.0, %v11137
      %v11139 = vpop.f32.mrb[0].mxu0
      %11140 = vmatprep.mubr.f32.mxu0 0.0
      %11141 = vmatmul.mubr.f32.gmra.mrb[0].mxu0 %v10967
      %v11142 = vpop.f32.mrb[0].mxu0
      %v11143 = vadd.f32 0.0, %v11142
      %v11144 = vpop.f32.mrb[0].mxu0
      %11145 = vmatprep.mubr.f32.mxu0 0.0
      %11146 = vmatmul.mubr.f32.gmra.mrb[0].mxu0 %v10970
      %v11147 = vpop.f32.mrb[0].mxu0
      %v11148 = vadd.f32 0.0, %v11147
      %v11149 = vpop.f32.mrb[0].mxu0
      %11150 = vmatprep.mubr.f32.mxu0 0.0
      %11151 = vmatmul.mubr.f32.gmra.mrb[0].mxu0 %v10973
      %v11152 = vpop.f32.mrb[0].mxu0
      %v11153 = vadd.f32 0.0, %v11152
      %v11154 = vpop.f32.mrb[0].mxu0
      %11155 = vmatprep.mubr.f32.mxu0 0.0
      %11156 = vmatmul.mubr.f32.gmra.mrb[0].mxu0 %v10976
      %v11157 = vpop.f32.mrb[0].mxu0
      %v11158 = vadd.f32 0.0, %v11157
      %v11159 = vpop.f32.mrb[0].mxu0
      %11160 = vmatprep.mubr.f32.mxu0 0.0
      %11161 = vmatmul.mubr.f32.gmra.mrb[0].mxu0 %v10979
      %v11162 = vpop.f32.mrb[0].mxu0
      %v11163 = vadd.f32 0.0, %v11162
      %v11164 = vpop.f32.mrb[0].mxu0
      %11165 = vmatprep.mubr.f32.mxu0 0.0
      %11166 = vmatmul.mubr.f32.gmra.mrb[0].mxu0 %v10982
      %v11167 = vpop.f32.mrb[0].mxu0
      %v11168 = vadd.f32 0.0, %v11167
      %v11169 = vpop.f32.mrb[0].mxu0
      %11170 = vmatprep.mubr.f32.mxu0 0.0
      %11171 = vmatmul.mubr.f32.gmra.mrb[0].mxu0 %v10985
      %v11172 = vpop.f32.mrb[0].mxu0
      %v11173 = vadd.f32 0.0, %v11172
      %v11174 = vpop.f32.mrb[0].mxu0
      %11175 = vmatprep.mubr.f32.mxu0 0.0
      %11176 = vmatmul.mubr.f32.gmra.mrb[0].mxu0 %v10988
      %v11177 = vpop.f32.mrb[0].mxu0
      %v11178 = vadd.f32 0.0, %v11177
      %v11179 = vpop.f32.mrb[0].mxu0
      %11180 = vmatprep.mubr.f32.mxu0 0.0
      %11181 = vmatmul.mubr.f32.gmra.mrb[0].mxu0 %v10991
      %v11182 = vpop.f32.mrb[0].mxu0
      %v11183 = vadd.f32 0.0, %v11182
      %v11184 = vpop.f32.mrb[0].mxu0
      %11185 = vmatprep.mubr.f32.mxu0 0.0
      %11186 = vmatmul.mubr.f32.gmra.mrb[0].mxu0 %v10994
      %v11187 = vpop.f32.mrb[0].mxu0
      %v11188 = vadd.f32 0.0, %v11187
      %v11189 = vpop.f32.mrb[0].mxu0
      %11190 = vmatprep.mubr.f32.mxu0 0.0
      %11191 = vmatmul.mubr.f32.gmra.mrb[0].mxu0 %v10997
      %v11192 = vpop.f32.mrb[0].mxu0
      %v11193 = vadd.f32 0.0, %v11192
      %v11194 = vpop.f32.mrb[0].mxu0
      %11195 = vmatprep.mubr.f32.mxu0 0.0
      %11196 = vmatmul.mubr.f32.gmra.mrb[0].mxu0 %v11000
      %v11197 = vpop.f32.mrb[0].mxu0
      %v11198 = vadd.f32 0.0, %v11197
      %v11199 = vpop.f32.mrb[0].mxu0
      %11200 = vmatprep.mubr.f32.mxu0 0.0
      %11201 = vmatmul.mubr.f32.gmra.mrb[0].mxu0 %v11003
      %v11202 = vpop.f32.mrb[0].mxu0
      %v11203 = vadd.f32 0.0, %v11202
      %v11204 = vpop.f32.mrb[0].mxu0
      %11205 = vmatprep.mubr.f32.mxu0 0.0
      %11206 = vmatmul.mubr.f32.gmra.mrb[0].mxu0 %v11006
      %v11207 = vpop.f32.mrb[0].mxu0
      %v11208 = vadd.f32 0.0, %v11207
      %v11209 = vpop.f32.mrb[0].mxu0
      %11210 = vmatprep.mubr.f32.mxu0 0.0
      %11211 = vmatmul.mubr.f32.gmra.mrb[0].mxu0 %v11009
      %v11212 = vpop.f32.mrb[0].mxu0
      %v11213 = vadd.f32 0.0, %v11212
      %v11214 = vpop.f32.mrb[0].mxu0
      %11215 = vmatprep.mubr.f32.mxu0 0.0
      %11216 = vmatmul.mubr.f32.gmra.mrb[0].mxu0 %v11012
      %v11217 = vpop.f32.mrb[0].mxu0
      %v11218 = vadd.f32 0.0, %v11217
      %v11219 = vpop.f32.mrb[0].mxu0
      %11220 = vmatprep.mubr.f32.mxu0 0.0
      %11221 = vmatmul.mubr.f32.gmra.mrb[0].mxu0 %v11015
      %v11222 = vpop.f32.mrb[0].mxu0
      %v11223 = vadd.f32 0.0, %v11222
      %v11224 = vpop.f32.mrb[0].mxu0
      %11225 = vmatprep.mubr.f32.mxu0 0.0
      %11226 = vmatmul.mubr.f32.gmra.mrb[0].mxu0 %v11018
      %v11227 = vpop.f32.mrb[0].mxu0
      %v11228 = vadd.f32 0.0, %v11227
      %v11229 = vpop.f32.mrb[0].mxu0
      %11230 = vmatprep.mubr.f32.mxu0 0.0
      %11231 = vmatmul.mubr.f32.gmra.mrb[0].mxu0 %v11021
      %v11232 = vpop.f32.mrb[0].mxu0
      %v11233 = vadd.f32 0.0, %v11232
      %v11234 = vpop.f32.mrb[0].mxu0
      %11235 = vmatprep.mubr.f32.mxu0 0.0
      %11236 = vmatmul.mubr.f32.gmra.mrb[0].mxu0 %v11024
      %v11237 = vpop.f32.mrb[0].mxu0
      %v11238 = vadd.f32 0.0, %v11237
      %v11239 = vpop.f32.mrb[0].mxu0
      %11240 = vmatprep.mubr.f32.mxu0 0.0
      %11241 = vmatmul.mubr.f32.gmra.mrb[0].mxu0 %v11027
      %v11242 = vpop.f32.mrb[0].mxu0
      %v11243 = vadd.f32 0.0, %v11242
      %v11244 = vpop.f32.mrb[0].mxu0
      %11245 = vmatprep.mubr.f32.mxu0 0.0
      %11246 = vmatmul.mubr.f32.gmra.mrb[0].mxu0 %v11030
      %v11247 = vpop.f32.mrb[0].mxu0
      %v11248 = vadd.f32 0.0, %v11247
      %v11249 = vpop.f32.mrb[0].mxu0
      %11250 = vmatprep.mubr.f32.mxu0 0.0
      %11251 = vmatmul.mubr.f32.gmra.mrb[0].mxu0 %v11033
      %v11252 = vpop.f32.mrb[0].mxu0
      %v11253 = vadd.f32 0.0, %v11252
      %v11254 = vpop.f32.mrb[0].mxu0
      %11255 = vmatprep.mubr.f32.mxu0 0.0
      %11256 = vmatmul.mubr.f32.gmra.mrb[0].mxu0 %v11036
      %v11257 = vpop.f32.mrb[0].mxu0
      %v11258 = vadd.f32 0.0, %v11257
      %v11259 = vpop.f32.mrb[0].mxu0
      %11260 = vmatprep.mubr.f32.mxu0 0.0
      %11261 = vmatmul.mubr.f32.gmra.mrb[0].mxu0 %v11039
      %v11262 = vpop.f32.mrb[0].mxu0
      %v11263 = vadd.f32 0.0, %v11262
      %v11264 = vpop.f32.mrb[0].mxu0
      %11265 = vdwg.mxu0
      %v11266 = vadd.f32 %v10879, %v11108
      %v11267 = vadd.f32 %v10880, %v11113
      %v11268 = vadd.f32 %v10881, %v11118
      %v11269 = vadd.f32 %v10882, %v11123
      %v11270 = vadd.f32 %v10883, %v11128
      %v11271 = vadd.f32 %v10884, %v11133
      %v11272 = vadd.f32 %v10885, %v11138
      %v11273 = vadd.f32 %v10886, %v11143
      %v11274 = vadd.f32 %v10887, %v11148
      %v11275 = vadd.f32 %v10888, %v11153
      %v11276 = vadd.f32 %v10889, %v11158
      %v11277 = vadd.f32 %v10890, %v11163
      %v11278 = vadd.f32 %v10891, %v11168
      %v11279 = vadd.f32 %v10892, %v11173
      %v11280 = vadd.f32 %v10893, %v11178
      %v11281 = vadd.f32 %v10894, %v11183
      %v11282 = vadd.f32 %v10895, %v11188
      %v11283 = vadd.f32 %v10896, %v11193
      %v11284 = vadd.f32 %v10897, %v11198
      %v11285 = vadd.f32 %v10898, %v11203
      %v11286 = vadd.f32 %v10899, %v11208
      %v11287 = vadd.f32 %v10900, %v11213
      %v11288 = vadd.f32 %v10901, %v11218
      %v11289 = vadd.f32 %v10902, %v11223
      %v11290 = vadd.f32 %v10903, %v11228
      %v11291 = vadd.f32 %v10904, %v11233
      %v11292 = vadd.f32 %v10905, %v11238
      %v11293 = vadd.f32 %v10906, %v11243
      %v11294 = vadd.f32 %v10907, %v11248
      %v11295 = vadd.f32 %v10908, %v11253
      %v11296 = vadd.f32 %v10909, %v11258
      %v11297 = vadd.f32 %v10910, %v11263
      %v11298 = vmul.f32 %v9004, %v6892
      %v11299 = vmul.f32 %v9003, %v6897
      %v11300 = vmul.f32 %v9002, %v6902
      %v11301 = vmul.f32 %v9001, %v6907
      %v11302 = vmul.f32 %v9000, %v6912
      %v11303 = vmul.f32 %v8999, %v6917
      %v11304 = vmul.f32 %v8998, %v6922
      %v11305 = vmul.f32 %v8997, %v6927
      %v11306 = vmul.f32 %v8996, %v6932
      %v11307 = vmul.f32 %v8995, %v6937
      %v11308 = vmul.f32 %v8994, %v6942
      %v11309 = vmul.f32 %v8993, %v6947
      %v11310 = vmul.f32 %v8992, %v6952
      %v11311 = vmul.f32 %v8991, %v6957
      %v11312 = vmul.f32 %v8990, %v6962
      %v11313 = vmul.f32 %v8989, %v6967
      %v11314 = vmul.f32 %v8988, %v6972
      %v11315 = vmul.f32 %v8987, %v6977
      %v11316 = vmul.f32 %v8986, %v6982
      %v11317 = vmul.f32 %v8985, %v6987
      %v11318 = vmul.f32 %v8984, %v6992
      %v11319 = vmul.f32 %v8983, %v6997
      %v11320 = vmul.f32 %v8982, %v7002
      %v11321 = vmul.f32 %v8981, %v7007
      %v11322 = vmul.f32 %v8980, %v7012
      %v11323 = vmul.f32 %v8979, %v7017
      %v11324 = vmul.f32 %v8978, %v7022
      %v11325 = vmul.f32 %v8977, %v7027
      %v11326 = vmul.f32 %v8976, %v7032
      %v11327 = vmul.f32 %v9007, %v7037
      %v11328 = vmul.f32 %v9006, %v7042
      %v11329 = vmul.f32 %v9005, %v7047
      %s11330 = scalar_lea.vmem %s13, 64
      %v11331 = vld [vmem:[%s11330] sm:$0xff]
      %v11333 = vsel %vm3091, %v11298, 0
      %v11336 = vsel %vm3091, %v11299, 0
      %v11339 = vsel %vm3091, %v11300, 0
      %v11342 = vsel %vm3091, %v11301, 0
      %v11345 = vsel %vm3091, %v11302, 0
      %v11348 = vsel %vm3091, %v11303, 0
      %v11351 = vsel %vm3091, %v11304, 0
      %v11354 = vsel %vm3091, %v11305, 0
      %v11357 = vsel %vm3091, %v11306, 0
      %v11360 = vsel %vm3091, %v11307, 0
      %v11363 = vsel %vm3091, %v11308, 0
      %v11366 = vsel %vm3091, %v11309, 0
      %v11369 = vsel %vm3091, %v11310, 0
      %v11372 = vsel %vm3091, %v11311, 0
      %v11375 = vsel %vm3091, %v11312, 0
      %v11378 = vsel %vm3091, %v11313, 0
      %v11381 = vsel %vm3091, %v11314, 0
      %v11384 = vsel %vm3091, %v11315, 0
      %v11387 = vsel %vm3091, %v11316, 0
      %v11390 = vsel %vm3091, %v11317, 0
      %v11393 = vsel %vm3091, %v11318, 0
      %v11396 = vsel %vm3091, %v11319, 0
      %v11399 = vsel %vm3091, %v11320, 0
      %v11402 = vsel %vm3091, %v11321, 0
      %v11405 = vsel %vm3091, %v11322, 0
      %v11408 = vsel %vm3091, %v11323, 0
      %v11411 = vsel %vm3091, %v11324, 0
      %v11414 = vsel %vm3091, %v11325, 0
      %v11417 = vsel %vm3091, %v11326, 0
      %v11420 = vsel %vm3091, %v11327, 0
      %v11423 = vsel %vm3091, %v11328, 0
      %v11426 = vsel %vm3091, %v11329, 0
      %11428 = vmatprep.subr.mxu0 0.0
      %11429 = vmatpush1.msra.mxu0 %v11331
      %11430 = vmatprep.subr.mxu0 0.0
      %11431 = vmatpush1.msra.mxu0 0.0
      %11432 = vmatprep.subr.mxu0 0.0
      %11433 = vmatpush1.msra.mxu0 0.0
      %11434 = vmatprep.subr.mxu0 0.0
      %11435 = vmatpush1.msra.mxu0 0.0
      %11436 = vmatprep.subr.mxu0 0.0
      %11437 = vmatpush1.msra.mxu0 0.0
      %11438 = vmatprep.subr.mxu0 0.0
      %11439 = vmatpush1.msra.mxu0 0.0
      %11440 = vmatprep.subr.mxu0 0.0
      %11441 = vmatpush1.msra.mxu0 0.0
      %11442 = vmatprep.subr.mxu0 0.0
      %11443 = vmatpush1.msra.mxu0 0.0
      %11444 = vmatprep.subr.mxu0 0.0
      %11445 = vmatpush1.msra.mxu0 0.0
      %11446 = vmatprep.subr.mxu0 0.0
      %11447 = vmatpush1.msra.mxu0 0.0
      %11448 = vmatprep.subr.mxu0 0.0
      %11449 = vmatpush1.msra.mxu0 0.0
      %11450 = vmatprep.subr.mxu0 0.0
      %11451 = vmatpush1.msra.mxu0 0.0
      %11452 = vmatprep.subr.mxu0 0.0
      %11453 = vmatpush1.msra.mxu0 0.0
      %11454 = vmatprep.subr.mxu0 0.0
      %11455 = vmatpush1.msra.mxu0 0.0
      %11456 = vmatprep.subr.mxu0 0.0
      %11457 = vmatpush1.msra.mxu0 0.0
      %11458 = vmatprep.subr.mxu0 0.0
      %11459 = vmatpush1.msra.mxu0 0.0
      %11460 = vmatprep.subr.mxu0 0.0
      %11461 = vmatpush1.msra.mxu0 0.0
      %11462 = vmatprep.subr.mxu0 0.0
      %11463 = vmatpush1.msra.mxu0 0.0
      %11464 = vmatprep.subr.mxu0 0.0
      %11465 = vmatpush1.msra.mxu0 0.0
      %11466 = vmatprep.subr.mxu0 0.0
      %11467 = vmatpush1.msra.mxu0 0.0
      %11468 = vmatprep.subr.mxu0 0.0
      %11469 = vmatpush1.msra.mxu0 0.0
      %11470 = vmatprep.subr.mxu0 0.0
      %11471 = vmatpush1.msra.mxu0 0.0
      %11472 = vmatprep.subr.mxu0 0.0
      %11473 = vmatpush1.msra.mxu0 0.0
      %11474 = vmatprep.subr.mxu0 0.0
      %11475 = vmatpush1.msra.mxu0 0.0
      %11476 = vmatprep.subr.mxu0 0.0
      %11477 = vmatpush1.msra.mxu0 0.0
      %11478 = vmatprep.subr.mxu0 0.0
      %11479 = vmatpush1.msra.mxu0 0.0
      %11480 = vmatprep.subr.mxu0 0.0
      %11481 = vmatpush1.msra.mxu0 0.0
      %11482 = vmatprep.subr.mxu0 0.0
      %11483 = vmatpush1.msra.mxu0 0.0
      %11484 = vmatprep.subr.mxu0 0.0
      %11485 = vmatpush1.msra.mxu0 0.0
      %11486 = vmatprep.subr.mxu0 0.0
      %11487 = vmatpush1.msra.mxu0 0.0
      %11488 = vmatprep.subr.mxu0 0.0
      %11489 = vmatpush1.msra.mxu0 0.0
      %11490 = vmatprep.subr.mxu0 0.0
      %11491 = vmatpush1.msra.mxu0 0.0
      %11492 = vmatprep.mubr.f32.mxu0 0.0
      %11493 = vmatmul.mubr.f32.gmra.mrb[0].mxu0 %v11333
      %v11494 = vpop.f32.mrb[0].mxu0
      %v11495 = vadd.f32 0.0, %v11494
      %v11496 = vpop.f32.mrb[0].mxu0
      %11497 = vmatprep.mubr.f32.mxu0 0.0
      %11498 = vmatmul.mubr.f32.gmra.mrb[0].mxu0 %v11336
      %v11499 = vpop.f32.mrb[0].mxu0
      %v11500 = vadd.f32 0.0, %v11499
      %v11501 = vpop.f32.mrb[0].mxu0
      %11502 = vmatprep.mubr.f32.mxu0 0.0
      %11503 = vmatmul.mubr.f32.gmra.mrb[0].mxu0 %v11339
      %v11504 = vpop.f32.mrb[0].mxu0
      %v11505 = vadd.f32 0.0, %v11504
      %v11506 = vpop.f32.mrb[0].mxu0
      %11507 = vmatprep.mubr.f32.mxu0 0.0
      %11508 = vmatmul.mubr.f32.gmra.mrb[0].mxu0 %v11342
      %v11509 = vpop.f32.mrb[0].mxu0
      %v11510 = vadd.f32 0.0, %v11509
      %v11511 = vpop.f32.mrb[0].mxu0
      %11512 = vmatprep.mubr.f32.mxu0 0.0
      %11513 = vmatmul.mubr.f32.gmra.mrb[0].mxu0 %v11345
      %v11514 = vpop.f32.mrb[0].mxu0
      %v11515 = vadd.f32 0.0, %v11514
      %v11516 = vpop.f32.mrb[0].mxu0
      %11517 = vmatprep.mubr.f32.mxu0 0.0
      %11518 = vmatmul.mubr.f32.gmra.mrb[0].mxu0 %v11348
      %v11519 = vpop.f32.mrb[0].mxu0
      %v11520 = vadd.f32 0.0, %v11519
      %v11521 = vpop.f32.mrb[0].mxu0
      %11522 = vmatprep.mubr.f32.mxu0 0.0
      %11523 = vmatmul.mubr.f32.gmra.mrb[0].mxu0 %v11351
      %v11524 = vpop.f32.mrb[0].mxu0
      %v11525 = vadd.f32 0.0, %v11524
      %v11526 = vpop.f32.mrb[0].mxu0
      %11527 = vmatprep.mubr.f32.mxu0 0.0
      %11528 = vmatmul.mubr.f32.gmra.mrb[0].mxu0 %v11354
      %v11529 = vpop.f32.mrb[0].mxu0
      %v11530 = vadd.f32 0.0, %v11529
      %v11531 = vpop.f32.mrb[0].mxu0
      %11532 = vmatprep.mubr.f32.mxu0 0.0
      %11533 = vmatmul.mubr.f32.gmra.mrb[0].mxu0 %v11357
      %v11534 = vpop.f32.mrb[0].mxu0
      %v11535 = vadd.f32 0.0, %v11534
      %v11536 = vpop.f32.mrb[0].mxu0
      %11537 = vmatprep.mubr.f32.mxu0 0.0
      %11538 = vmatmul.mubr.f32.gmra.mrb[0].mxu0 %v11360
      %v11539 = vpop.f32.mrb[0].mxu0
      %v11540 = vadd.f32 0.0, %v11539
      %v11541 = vpop.f32.mrb[0].mxu0
      %11542 = vmatprep.mubr.f32.mxu0 0.0
      %11543 = vmatmul.mubr.f32.gmra.mrb[0].mxu0 %v11363
      %v11544 = vpop.f32.mrb[0].mxu0
      %v11545 = vadd.f32 0.0, %v11544
      %v11546 = vpop.f32.mrb[0].mxu0
      %11547 = vmatprep.mubr.f32.mxu0 0.0
      %11548 = vmatmul.mubr.f32.gmra.mrb[0].mxu0 %v11366
      %v11549 = vpop.f32.mrb[0].mxu0
      %v11550 = vadd.f32 0.0, %v11549
      %v11551 = vpop.f32.mrb[0].mxu0
      %11552 = vmatprep.mubr.f32.mxu0 0.0
      %11553 = vmatmul.mubr.f32.gmra.mrb[0].mxu0 %v11369
      %v11554 = vpop.f32.mrb[0].mxu0
      %v11555 = vadd.f32 0.0, %v11554
      %v11556 = vpop.f32.mrb[0].mxu0
      %11557 = vmatprep.mubr.f32.mxu0 0.0
      %11558 = vmatmul.mubr.f32.gmra.mrb[0].mxu0 %v11372
      %v11559 = vpop.f32.mrb[0].mxu0
      %v11560 = vadd.f32 0.0, %v11559
      %v11561 = vpop.f32.mrb[0].mxu0
      %11562 = vmatprep.mubr.f32.mxu0 0.0
      %11563 = vmatmul.mubr.f32.gmra.mrb[0].mxu0 %v11375
      %v11564 = vpop.f32.mrb[0].mxu0
      %v11565 = vadd.f32 0.0, %v11564
      %v11566 = vpop.f32.mrb[0].mxu0
      %11567 = vmatprep.mubr.f32.mxu0 0.0
      %11568 = vmatmul.mubr.f32.gmra.mrb[0].mxu0 %v11378
      %v11569 = vpop.f32.mrb[0].mxu0
      %v11570 = vadd.f32 0.0, %v11569
      %v11571 = vpop.f32.mrb[0].mxu0
      %11572 = vmatprep.mubr.f32.mxu0 0.0
      %11573 = vmatmul.mubr.f32.gmra.mrb[0].mxu0 %v11381
      %v11574 = vpop.f32.mrb[0].mxu0
      %v11575 = vadd.f32 0.0, %v11574
      %v11576 = vpop.f32.mrb[0].mxu0
      %11577 = vmatprep.mubr.f32.mxu0 0.0
      %11578 = vmatmul.mubr.f32.gmra.mrb[0].mxu0 %v11384
      %v11579 = vpop.f32.mrb[0].mxu0
      %v11580 = vadd.f32 0.0, %v11579
      %v11581 = vpop.f32.mrb[0].mxu0
      %11582 = vmatprep.mubr.f32.mxu0 0.0
      %11583 = vmatmul.mubr.f32.gmra.mrb[0].mxu0 %v11387
      %v11584 = vpop.f32.mrb[0].mxu0
      %v11585 = vadd.f32 0.0, %v11584
      %v11586 = vpop.f32.mrb[0].mxu0
      %11587 = vmatprep.mubr.f32.mxu0 0.0
      %11588 = vmatmul.mubr.f32.gmra.mrb[0].mxu0 %v11390
      %v11589 = vpop.f32.mrb[0].mxu0
      %v11590 = vadd.f32 0.0, %v11589
      %v11591 = vpop.f32.mrb[0].mxu0
      %11592 = vmatprep.mubr.f32.mxu0 0.0
      %11593 = vmatmul.mubr.f32.gmra.mrb[0].mxu0 %v11393
      %v11594 = vpop.f32.mrb[0].mxu0
      %v11595 = vadd.f32 0.0, %v11594
      %v11596 = vpop.f32.mrb[0].mxu0
      %11597 = vmatprep.mubr.f32.mxu0 0.0
      %11598 = vmatmul.mubr.f32.gmra.mrb[0].mxu0 %v11396
      %v11599 = vpop.f32.mrb[0].mxu0
      %v11600 = vadd.f32 0.0, %v11599
      %v11601 = vpop.f32.mrb[0].mxu0
      %11602 = vmatprep.mubr.f32.mxu0 0.0
      %11603 = vmatmul.mubr.f32.gmra.mrb[0].mxu0 %v11399
      %v11604 = vpop.f32.mrb[0].mxu0
      %v11605 = vadd.f32 0.0, %v11604
      %v11606 = vpop.f32.mrb[0].mxu0
      %11607 = vmatprep.mubr.f32.mxu0 0.0
      %11608 = vmatmul.mubr.f32.gmra.mrb[0].mxu0 %v11402
      %v11609 = vpop.f32.mrb[0].mxu0
      %v11610 = vadd.f32 0.0, %v11609
      %v11611 = vpop.f32.mrb[0].mxu0
      %11612 = vmatprep.mubr.f32.mxu0 0.0
      %11613 = vmatmul.mubr.f32.gmra.mrb[0].mxu0 %v11405
      %v11614 = vpop.f32.mrb[0].mxu0
      %v11615 = vadd.f32 0.0, %v11614
      %v11616 = vpop.f32.mrb[0].mxu0
      %11617 = vmatprep.mubr.f32.mxu0 0.0
      %11618 = vmatmul.mubr.f32.gmra.mrb[0].mxu0 %v11408
      %v11619 = vpop.f32.mrb[0].mxu0
      %v11620 = vadd.f32 0.0, %v11619
      %v11621 = vpop.f32.mrb[0].mxu0
      %11622 = vmatprep.mubr.f32.mxu0 0.0
      %11623 = vmatmul.mubr.f32.gmra.mrb[0].mxu0 %v11411
      %v11624 = vpop.f32.mrb[0].mxu0
      %v11625 = vadd.f32 0.0, %v11624
      %v11626 = vpop.f32.mrb[0].mxu0
      %11627 = vmatprep.mubr.f32.mxu0 0.0
      %11628 = vmatmul.mubr.f32.gmra.mrb[0].mxu0 %v11414
      %v11629 = vpop.f32.mrb[0].mxu0
      %v11630 = vadd.f32 0.0, %v11629
      %v11631 = vpop.f32.mrb[0].mxu0
      %11632 = vmatprep.mubr.f32.mxu0 0.0
      %11633 = vmatmul.mubr.f32.gmra.mrb[0].mxu0 %v11417
      %v11634 = vpop.f32.mrb[0].mxu0
      %v11635 = vadd.f32 0.0, %v11634
      %v11636 = vpop.f32.mrb[0].mxu0
      %11637 = vmatprep.mubr.f32.mxu0 0.0
      %11638 = vmatmul.mubr.f32.gmra.mrb[0].mxu0 %v11420
      %v11639 = vpop.f32.mrb[0].mxu0
      %v11640 = vadd.f32 0.0, %v11639
      %v11641 = vpop.f32.mrb[0].mxu0
      %11642 = vmatprep.mubr.f32.mxu0 0.0
      %11643 = vmatmul.mubr.f32.gmra.mrb[0].mxu0 %v11423
      %v11644 = vpop.f32.mrb[0].mxu0
      %v11645 = vadd.f32 0.0, %v11644
      %v11646 = vpop.f32.mrb[0].mxu0
      %11647 = vmatprep.mubr.f32.mxu0 0.0
      %11648 = vmatmul.mubr.f32.gmra.mrb[0].mxu0 %v11426
      %v11649 = vpop.f32.mrb[0].mxu0
      %v11650 = vadd.f32 0.0, %v11649
      %v11651 = vpop.f32.mrb[0].mxu0
      %11652 = vdwg.mxu0
      %v11653 = vadd.f32 %v11266, %v11495
      %v11654 = vadd.f32 %v11267, %v11500
      %v11655 = vadd.f32 %v11268, %v11505
      %v11656 = vadd.f32 %v11269, %v11510
      %v11657 = vadd.f32 %v11270, %v11515
      %v11658 = vadd.f32 %v11271, %v11520
      %v11659 = vadd.f32 %v11272, %v11525
      %v11660 = vadd.f32 %v11273, %v11530
      %v11661 = vadd.f32 %v11274, %v11535
      %v11662 = vadd.f32 %v11275, %v11540
      %v11663 = vadd.f32 %v11276, %v11545
      %v11664 = vadd.f32 %v11277, %v11550
      %v11665 = vadd.f32 %v11278, %v11555
      %v11666 = vadd.f32 %v11279, %v11560
      %v11667 = vadd.f32 %v11280, %v11565
      %v11668 = vadd.f32 %v11281, %v11570
      %v11669 = vadd.f32 %v11282, %v11575
      %v11670 = vadd.f32 %v11283, %v11580
      %v11671 = vadd.f32 %v11284, %v11585
      %v11672 = vadd.f32 %v11285, %v11590
      %v11673 = vadd.f32 %v11286, %v11595
      %v11674 = vadd.f32 %v11287, %v11600
      %v11675 = vadd.f32 %v11288, %v11605
      %v11676 = vadd.f32 %v11289, %v11610
      %v11677 = vadd.f32 %v11290, %v11615
      %v11678 = vadd.f32 %v11291, %v11620
      %v11679 = vadd.f32 %v11292, %v11625
      %v11680 = vadd.f32 %v11293, %v11630
      %v11681 = vadd.f32 %v11294, %v11635
      %v11682 = vadd.f32 %v11295, %v11640
      %v11683 = vadd.f32 %v11296, %v11645
      %v11684 = vadd.f32 %v11297, %v11650
      %11717 = vrot.lane.b32.xlu0 %v11653, 8
      %v11718 = vpop.permute.xlu0 %11717
      %11719 = vrot.lane.b32.xlu0 %v11654, 8
      %v11720 = vpop.permute.xlu0 %11719
      %11721 = vrot.lane.b32.xlu0 %v11655, 8
      %v11722 = vpop.permute.xlu0 %11721
      %11723 = vrot.lane.b32.xlu0 %v11656, 8
      %v11724 = vpop.permute.xlu0 %11723
      %11725 = vrot.lane.b32.xlu0 %v11657, 8
      %v11726 = vpop.permute.xlu0 %11725
      %11727 = vrot.lane.b32.xlu0 %v11658, 8
      %v11728 = vpop.permute.xlu0 %11727
      %11729 = vrot.lane.b32.xlu0 %v11659, 8
      %v11730 = vpop.permute.xlu0 %11729
      %11731 = vrot.lane.b32.xlu0 %v11660, 8
      %v11732 = vpop.permute.xlu0 %11731
      %11733 = vrot.lane.b32.xlu0 %v11661, 8
      %v11734 = vpop.permute.xlu0 %11733
      %11735 = vrot.lane.b32.xlu0 %v11662, 8
      %v11736 = vpop.permute.xlu0 %11735
      %11737 = vrot.lane.b32.xlu0 %v11663, 8
      %v11738 = vpop.permute.xlu0 %11737
      %11739 = vrot.lane.b32.xlu0 %v11664, 8
      %v11740 = vpop.permute.xlu0 %11739
      %11741 = vrot.lane.b32.xlu0 %v11665, 8
      %v11742 = vpop.permute.xlu0 %11741
      %11743 = vrot.lane.b32.xlu0 %v11666, 8
      %v11744 = vpop.permute.xlu0 %11743
      %11745 = vrot.lane.b32.xlu0 %v11667, 8
      %v11746 = vpop.permute.xlu0 %11745
      %11747 = vrot.lane.b32.xlu0 %v11668, 8
      %v11748 = vpop.permute.xlu0 %11747
      %11749 = vrot.lane.b32.xlu0 %v11669, 8
      %v11750 = vpop.permute.xlu0 %11749
      %11751 = vrot.lane.b32.xlu0 %v11670, 8
      %v11752 = vpop.permute.xlu0 %11751
      %11753 = vrot.lane.b32.xlu0 %v11671, 8
      %v11754 = vpop.permute.xlu0 %11753
      %11755 = vrot.lane.b32.xlu0 %v11672, 8
      %v11756 = vpop.permute.xlu0 %11755
      %11757 = vrot.lane.b32.xlu0 %v11673, 8
      %v11758 = vpop.permute.xlu0 %11757
      %11759 = vrot.lane.b32.xlu0 %v11674, 8
      %v11760 = vpop.permute.xlu0 %11759
      %11761 = vrot.lane.b32.xlu0 %v11675, 8
      %v11762 = vpop.permute.xlu0 %11761
      %11763 = vrot.lane.b32.xlu0 %v11676, 8
      %v11764 = vpop.permute.xlu0 %11763
      %11765 = vrot.lane.b32.xlu0 %v11677, 8
      %v11766 = vpop.permute.xlu0 %11765
      %11767 = vrot.lane.b32.xlu0 %v11678, 8
      %v11768 = vpop.permute.xlu0 %11767
      %11769 = vrot.lane.b32.xlu0 %v11679, 8
      %v11770 = vpop.permute.xlu0 %11769
      %11771 = vrot.lane.b32.xlu0 %v11680, 8
      %v11772 = vpop.permute.xlu0 %11771
      %11773 = vrot.lane.b32.xlu0 %v11681, 8
      %v11774 = vpop.permute.xlu0 %11773
      %11775 = vrot.lane.b32.xlu0 %v11682, 8
      %v11776 = vpop.permute.xlu0 %11775
      %11777 = vrot.lane.b32.xlu0 %v11683, 8
      %v11778 = vpop.permute.xlu0 %11777
      %11779 = vrot.lane.b32.xlu0 %v11684, 8
      %v11780 = vpop.permute.xlu0 %11779
      %vm11813 = vcmask 97344
      %11814 = vst.msk [vmem:[%s521] sm:$0xff] %vm11813, %v11718
      %11815 = vst.msk [vmem:[%s521 + $0x8] sm:$0xff] %vm11813, %v11720
      %11816 = vst.msk [vmem:[%s521 + $0x10] sm:$0xff] %vm11813, %v11722
      %11817 = vst.msk [vmem:[%s521 + $0x18] sm:$0xff] %vm11813, %v11724
      %11818 = vst.msk [vmem:[%s521 + $0x20] sm:$0xff] %vm11813, %v11726
      %11819 = vst.msk [vmem:[%s521 + $0x28] sm:$0xff] %vm11813, %v11728
      %11820 = vst.msk [vmem:[%s521 + $0x30] sm:$0xff] %vm11813, %v11730
      %11821 = vst.msk [vmem:[%s521 + $0x38] sm:$0xff] %vm11813, %v11732
      %11822 = vst.msk [vmem:[%s521 + $0x40] sm:$0xff] %vm11813, %v11734
      %11823 = vst.msk [vmem:[%s521 + $0x48] sm:$0xff] %vm11813, %v11736
      %11824 = vst.msk [vmem:[%s521 + $0x50] sm:$0xff] %vm11813, %v11738
      %11825 = vst.msk [vmem:[%s521 + $0x58] sm:$0xff] %vm11813, %v11740
      %11826 = vst.msk [vmem:[%s521 + $0x60] sm:$0xff] %vm11813, %v11742
      %11827 = vst.msk [vmem:[%s521 + $0x68] sm:$0xff] %vm11813, %v11744
      %11828 = vst.msk [vmem:[%s521 + $0x70] sm:$0xff] %vm11813, %v11746
      %11829 = vst.msk [vmem:[%s521 + $0x78] sm:$0xff] %vm11813, %v11748
      %11830 = vst.msk [vmem:[%s521 + $0x80] sm:$0xff] %vm11813, %v11750
      %11831 = vst.msk [vmem:[%s521 + $0x88] sm:$0xff] %vm11813, %v11752
      %11832 = vst.msk [vmem:[%s521 + $0x90] sm:$0xff] %vm11813, %v11754
      %11833 = vst.msk [vmem:[%s521 + $0x98] sm:$0xff] %vm11813, %v11756
      %11834 = vst.msk [vmem:[%s521 + $0xa0] sm:$0xff] %vm11813, %v11758
      %11835 = vst.msk [vmem:[%s521 + $0xa8] sm:$0xff] %vm11813, %v11760
      %11836 = vst.msk [vmem:[%s521 + $0xb0] sm:$0xff] %vm11813, %v11762
      %11837 = vst.msk [vmem:[%s521 + $0xb8] sm:$0xff] %vm11813, %v11764
      %11838 = vst.msk [vmem:[%s521 + $0xc0] sm:$0xff] %vm11813, %v11766
      %11839 = vst.msk [vmem:[%s521 + $0xc8] sm:$0xff] %vm11813, %v11768
      %11840 = vst.msk [vmem:[%s521 + $0xd0] sm:$0xff] %vm11813, %v11770
      %11841 = vst.msk [vmem:[%s521 + $0xd8] sm:$0xff] %vm11813, %v11772
      %11842 = vst.msk [vmem:[%s521 + $0xe0] sm:$0xff] %vm11813, %v11774
      %11843 = vst.msk [vmem:[%s521 + $0xe8] sm:$0xff] %vm11813, %v11776
      %11844 = vst.msk [vmem:[%s521 + $0xf0] sm:$0xff] %vm11813, %v11778
      %11845 = vst.msk [vmem:[%s521 + $0xf8] sm:$0xff] %vm11813, %v11780
      %v11846 = vld [vmem:[%s521] sm:$0xff]
      %v11847 = vld [vmem:[%s521 + $0x8] sm:$0xff]
      %v11848 = vld [vmem:[%s521 + $0x10] sm:$0xff]
      %v11849 = vld [vmem:[%s521 + $0x18] sm:$0xff]
      %v11850 = vld [vmem:[%s521 + $0x20] sm:$0xff]
      %v11851 = vld [vmem:[%s521 + $0x28] sm:$0xff]
      %v11852 = vld [vmem:[%s521 + $0x30] sm:$0xff]
      %v11853 = vld [vmem:[%s521 + $0x38] sm:$0xff]
      %v11854 = vld [vmem:[%s521 + $0x40] sm:$0xff]
      %v11855 = vld [vmem:[%s521 + $0x48] sm:$0xff]
      %v11856 = vld [vmem:[%s521 + $0x50] sm:$0xff]
      %v11857 = vld [vmem:[%s521 + $0x58] sm:$0xff]
      %v11858 = vld [vmem:[%s521 + $0x60] sm:$0xff]
      %v11859 = vld [vmem:[%s521 + $0x68] sm:$0xff]
      %v11860 = vld [vmem:[%s521 + $0x70] sm:$0xff]
      %v11861 = vld [vmem:[%s521 + $0x78] sm:$0xff]
      %v11862 = vld [vmem:[%s521 + $0x80] sm:$0xff]
      %v11863 = vld [vmem:[%s521 + $0x88] sm:$0xff]
      %v11864 = vld [vmem:[%s521 + $0x90] sm:$0xff]
      %v11865 = vld [vmem:[%s521 + $0x98] sm:$0xff]
      %v11866 = vld [vmem:[%s521 + $0xa0] sm:$0xff]
      %v11867 = vld [vmem:[%s521 + $0xa8] sm:$0xff]
      %v11868 = vld [vmem:[%s521 + $0xb0] sm:$0xff]
      %v11869 = vld [vmem:[%s521 + $0xb8] sm:$0xff]
      %v11870 = vld [vmem:[%s521 + $0xc0] sm:$0xff]
      %v11871 = vld [vmem:[%s521 + $0xc8] sm:$0xff]
      %v11872 = vld [vmem:[%s521 + $0xd0] sm:$0xff]
      %v11873 = vld [vmem:[%s521 + $0xd8] sm:$0xff]
      %v11874 = vld [vmem:[%s521 + $0xe0] sm:$0xff]
      %v11875 = vld [vmem:[%s521 + $0xe8] sm:$0xff]
      %v11876 = vld [vmem:[%s521 + $0xf0] sm:$0xff]
      %v11877 = vld [vmem:[%s521 + $0xf8] sm:$0xff]
      %v11878 = vld [vmem:[%s14] sm:$0x1]
      %v11880 = vlaneseq
      %v11881 = vshrl.u32 %v11880, 7
      %v11882 = vsub.s32 0, %v11881
      %v11883 = vrot.slane %v11878, %v11882
      %v11885 = vmul.f32 %v11846, %v11883
      %v11886 = vmul.f32 %v11847, %v11883
      %v11887 = vmul.f32 %v11848, %v11883
      %v11888 = vmul.f32 %v11849, %v11883
      %v11889 = vmul.f32 %v11850, %v11883
      %v11890 = vmul.f32 %v11851, %v11883
      %v11891 = vmul.f32 %v11852, %v11883
      %v11892 = vmul.f32 %v11853, %v11883
      %v11893 = vmul.f32 %v11854, %v11883
      %v11894 = vmul.f32 %v11855, %v11883
      %v11895 = vmul.f32 %v11856, %v11883
      %v11896 = vmul.f32 %v11857, %v11883
      %v11897 = vmul.f32 %v11858, %v11883
      %v11898 = vmul.f32 %v11859, %v11883
      %v11899 = vmul.f32 %v11860, %v11883
      %v11900 = vmul.f32 %v11861, %v11883
      %v11901 = vmul.f32 %v11862, %v11883
      %v11902 = vmul.f32 %v11863, %v11883
      %v11903 = vmul.f32 %v11864, %v11883
      %v11904 = vmul.f32 %v11865, %v11883
      %v11905 = vmul.f32 %v11866, %v11883
      %v11906 = vmul.f32 %v11867, %v11883
      %v11907 = vmul.f32 %v11868, %v11883
      %v11908 = vmul.f32 %v11869, %v11883
      %v11909 = vmul.f32 %v11870, %v11883
      %v11910 = vmul.f32 %v11871, %v11883
      %v11911 = vmul.f32 %v11872, %v11883
      %v11912 = vmul.f32 %v11873, %v11883
      %v11913 = vmul.f32 %v11874, %v11883
      %v11914 = vmul.f32 %v11875, %v11883
      %v11915 = vmul.f32 %v11876, %v11883
      %v11916 = vmul.f32 %v11877, %v11883
      %v11917 = vld [vmem:[%s15] sm:$0x1]
      %v11919 = vlaneseq
      %v11920 = vshrl.u32 %v11919, 7
      %v11921 = vsub.s32 0, %v11920
      %v11922 = vrot.slane %v11917, %v11921
      %v11924 = vadd.f32 %v11885, %v11922
      %v11925 = vadd.f32 %v11886, %v11922
      %v11926 = vadd.f32 %v11887, %v11922
      %v11927 = vadd.f32 %v11888, %v11922
      %v11928 = vadd.f32 %v11889, %v11922
      %v11929 = vadd.f32 %v11890, %v11922
      %v11930 = vadd.f32 %v11891, %v11922
      %v11931 = vadd.f32 %v11892, %v11922
      %v11932 = vadd.f32 %v11893, %v11922
      %v11933 = vadd.f32 %v11894, %v11922
      %v11934 = vadd.f32 %v11895, %v11922
      %v11935 = vadd.f32 %v11896, %v11922
      %v11936 = vadd.f32 %v11897, %v11922
      %v11937 = vadd.f32 %v11898, %v11922
      %v11938 = vadd.f32 %v11899, %v11922
      %v11939 = vadd.f32 %v11900, %v11922
      %v11940 = vadd.f32 %v11901, %v11922
      %v11941 = vadd.f32 %v11902, %v11922
      %v11942 = vadd.f32 %v11903, %v11922
      %v11943 = vadd.f32 %v11904, %v11922
      %v11944 = vadd.f32 %v11905, %v11922
      %v11945 = vadd.f32 %v11906, %v11922
      %v11946 = vadd.f32 %v11907, %v11922
      %v11947 = vadd.f32 %v11908, %v11922
      %v11948 = vadd.f32 %v11909, %v11922
      %v11949 = vadd.f32 %v11910, %v11922
      %v11950 = vadd.f32 %v11911, %v11922
      %v11951 = vadd.f32 %v11912, %v11922
      %v11952 = vadd.f32 %v11913, %v11922
      %v11953 = vadd.f32 %v11914, %v11922
      %v11954 = vadd.f32 %v11915, %v11922
      %v11955 = vadd.f32 %v11916, %v11922
      %v11956 = vmax.f32 %v11924, 0.0
      %v11957 = vmax.f32 %v11925, 0.0
      %v11958 = vmax.f32 %v11926, 0.0
      %v11959 = vmax.f32 %v11927, 0.0
      %v11960 = vmax.f32 %v11928, 0.0
      %v11961 = vmax.f32 %v11929, 0.0
      %v11962 = vmax.f32 %v11930, 0.0
      %v11963 = vmax.f32 %v11931, 0.0
      %v11964 = vmax.f32 %v11932, 0.0
      %v11965 = vmax.f32 %v11933, 0.0
      %v11966 = vmax.f32 %v11934, 0.0
      %v11967 = vmax.f32 %v11935, 0.0
      %v11968 = vmax.f32 %v11936, 0.0
      %v11969 = vmax.f32 %v11937, 0.0
      %v11970 = vmax.f32 %v11938, 0.0
      %v11971 = vmax.f32 %v11939, 0.0
      %v11972 = vmax.f32 %v11940, 0.0
      %v11973 = vmax.f32 %v11941, 0.0
      %v11974 = vmax.f32 %v11942, 0.0
      %v11975 = vmax.f32 %v11943, 0.0
      %v11976 = vmax.f32 %v11944, 0.0
      %v11977 = vmax.f32 %v11945, 0.0
      %v11978 = vmax.f32 %v11946, 0.0
      %v11979 = vmax.f32 %v11947, 0.0
      %v11980 = vmax.f32 %v11948, 0.0
      %v11981 = vmax.f32 %v11949, 0.0
      %v11982 = vmax.f32 %v11950, 0.0
      %v11983 = vmax.f32 %v11951, 0.0
      %v11984 = vmax.f32 %v11952, 0.0
      %v11985 = vmax.f32 %v11953, 0.0
      %v11986 = vmax.f32 %v11954, 0.0
      %v11987 = vmax.f32 %v11955, 0.0
      %vm11988 = vcmask 97280
      %11989 = vst.msk [vmem:[%s521] sm:$0xff] %vm11988, %v11956
      %11990 = vst.msk [vmem:[%s521 + $0x8] sm:$0xff] %vm11988, %v11957
      %11991 = vst.msk [vmem:[%s521 + $0x10] sm:$0xff] %vm11988, %v11958
      %11992 = vst.msk [vmem:[%s521 + $0x18] sm:$0xff] %vm11988, %v11959
      %11993 = vst.msk [vmem:[%s521 + $0x20] sm:$0xff] %vm11988, %v11960
      %11994 = vst.msk [vmem:[%s521 + $0x28] sm:$0xff] %vm11988, %v11961
      %11995 = vst.msk [vmem:[%s521 + $0x30] sm:$0xff] %vm11988, %v11962
      %11996 = vst.msk [vmem:[%s521 + $0x38] sm:$0xff] %vm11988, %v11963
      %11997 = vst.msk [vmem:[%s521 + $0x40] sm:$0xff] %vm11988, %v11964
      %11998 = vst.msk [vmem:[%s521 + $0x48] sm:$0xff] %vm11988, %v11965
      %11999 = vst.msk [vmem:[%s521 + $0x50] sm:$0xff] %vm11988, %v11966
      %12000 = vst.msk [vmem:[%s521 + $0x58] sm:$0xff] %vm11988, %v11967
      %12001 = vst.msk [vmem:[%s521 + $0x60] sm:$0xff] %vm11988, %v11968
      %12002 = vst.msk [vmem:[%s521 + $0x68] sm:$0xff] %vm11988, %v11969
      %12003 = vst.msk [vmem:[%s521 + $0x70] sm:$0xff] %vm11988, %v11970
      %12004 = vst.msk [vmem:[%s521 + $0x78] sm:$0xff] %vm11988, %v11971
      %12005 = vst.msk [vmem:[%s521 + $0x80] sm:$0xff] %vm11988, %v11972
      %12006 = vst.msk [vmem:[%s521 + $0x88] sm:$0xff] %vm11988, %v11973
      %12007 = vst.msk [vmem:[%s521 + $0x90] sm:$0xff] %vm11988, %v11974
      %12008 = vst.msk [vmem:[%s521 + $0x98] sm:$0xff] %vm11988, %v11975
      %12009 = vst.msk [vmem:[%s521 + $0xa0] sm:$0xff] %vm11988, %v11976
      %12010 = vst.msk [vmem:[%s521 + $0xa8] sm:$0xff] %vm11988, %v11977
      %12011 = vst.msk [vmem:[%s521 + $0xb0] sm:$0xff] %vm11988, %v11978
      %12012 = vst.msk [vmem:[%s521 + $0xb8] sm:$0xff] %vm11988, %v11979
      %12013 = vst.msk [vmem:[%s521 + $0xc0] sm:$0xff] %vm11988, %v11980
      %12014 = vst.msk [vmem:[%s521 + $0xc8] sm:$0xff] %vm11988, %v11981
      %12015 = vst.msk [vmem:[%s521 + $0xd0] sm:$0xff] %vm11988, %v11982
      %12016 = vst.msk [vmem:[%s521 + $0xd8] sm:$0xff] %vm11988, %v11983
      %12017 = vst.msk [vmem:[%s521 + $0xe0] sm:$0xff] %vm11988, %v11984
      %12018 = vst.msk [vmem:[%s521 + $0xe8] sm:$0xff] %vm11988, %v11985
      %12019 = vst.msk [vmem:[%s521 + $0xf0] sm:$0xff] %vm11988, %v11986
      %12020 = vst.msk [vmem:[%s521 + $0xf8] sm:$0xff] %vm11988, %v11987
      %p12021 = scmp.lt.s32.totalorder %s27, 1
      %s12022 = scalar_select %p12021, %s27, 1
      %s12023 = smul.addr %s12022, 32
      %s12024 = smul.addr %s12023, 8
      %s12025 = scalar_lea.vmem %s16, %s12024
      // Predicated region
      $region85: #{tpu_custom_call.1} parent=83 // pred_check
        %p12026 = pneg %p386
      $region86: #{tpu_custom_call.1} parent=83 // pred_check_branch
        %12028 = sbr.rel (%p12026) target = $region88
      $region87: #{tpu_custom_call.1} parent=83 // pred_region
        _
      $region88: #{tpu_custom_call.1} parent=83 // pred_fallthru
        _
    $region84: #{tpu_custom_call.1} parent=5 // pred_fallthru
      _
    %p12029 = scmp.le.s32.totalorder 2, %s22
    // Predicated region
    $region89: #{tpu_custom_call.1} parent=5 // pred_check
      %p12030 = pneg %p12029
    $region90: #{tpu_custom_call.1} parent=5 // pred_check_branch
      %12032 = sbr.rel (%p12030) target = $region92
    $region91: #{tpu_custom_call.1} parent=5 // pred_region
      %s12033 = ssub.s32 %s22, 2
      // Predicated region
      $region93: #{tpu_custom_call.1} parent=91 // pred_check
        %p12034 = pneg %p392
      $region94: #{tpu_custom_call.1} parent=91 // pred_check_branch
        %12036 = sbr.rel (%p12034) target = $region96
      $region95: #{tpu_custom_call.1} parent=91 // pred_region
        %p12037 = scmp.lt.s32.totalorder %s28, 1
        %s12038 = scalar_select %p12037, %s28, 1
        %s12039 = smul.addr %s12038, 32
        %s12040 = smul.addr %s12039, 8
        %s12041 = scalar_lea.vmem %s16, %s12040
      $region96: #{tpu_custom_call.1} parent=91 // pred_fallthru
        _
    $region92: #{tpu_custom_call.1} parent=5 // pred_fallthru
      _
  $region6: #{tpu_custom_call.1} parent=0 // loop_footer
    %s26 = sadd.s32 1, %s22
  $region7: #{tpu_custom_call.1} parent=0 // loop_footer_branch
    %21 = sbr.rel target = $region3
  $region8: #{tpu_custom_call.1} parent=0 // loop_exit
    _

</llo_original>
